<compile_context>
chip_gen: v7x
topology: tpu7x:2x2x1
jax: 0.10.0
libtpu: 0.0.40
codegen_flags: <defaults>
</compile_context>

<pallas_src>
import functools

import jax
import jax.numpy as jnp
from jax.experimental import pallas as pl
from jax.experimental.pallas import tpu as pltpu


# ---------------------------------------------------------------------------
# Kernel
# ---------------------------------------------------------------------------
def _basic_block_kernel(x_ref, w1_ref, s1_ref, b1_ref, w2_ref, s2_ref, b2_ref,
                        out_ref, xt_ref, xp_ref, xcat_ref, acc_ref,
                        *, H, W, C, Cp):
    """Fused BasicBlock for one batch element (NCHW at HBM, NHWC inside).

    x_ref:    (1, C, H*W)         input tile (true channel count, lane-dense H*W)
    w*_ref:   (3, 3*Cp, Cp)       conv weights, K ordered as (dx, ci), dy-major
    s*/b*:    (1, Cp)             folded BN scale / bias (zero in padded lanes)
    out_ref:  (1, C, H*W)
    xt_ref:   (Cp, H*W)           channel-padded staging buffer (NCHW layout)
    xp_ref:   (H+2, W+2, Cp)      zero-padded NHWC activation buffer (both convs)
    xcat_ref: (H+2, W, 3*Cp)      dx-unrolled im2col-along-W buffer
    acc_ref:  (H*W, Cp)           f32 accumulator
    """
    f32 = jnp.float32
    HW = H * W

    def conv3x3_bn(w_ref, s_ref, b_ref):
        # Build xcat[a, w, dx*Cp + ci] = xp[a, w + dx, ci]  (3 shifted copies,
        # done ONCE per conv instead of 9 full-patch materializations).
        for dx in range(3):
            xcat_ref[:, :, dx * Cp:(dx + 1) * Cp] = xp_ref[:, dx:dx + W, :]
        # 3 deep matmuls (M=H*W, K=3*Cp, N=Cp), one per kernel row dy,
        # accumulated in the VMEM scratch. Static leading-axis weight index.
        for dy in range(3):
            patch = xcat_ref[dy:dy + H, :, :].reshape(HW, 3 * Cp)
            contrib = jnp.dot(patch, w_ref[dy], preferred_element_type=f32)
            if dy == 0:
                acc_ref[...] = contrib
            else:
                acc_ref[...] += contrib
        return acc_ref[...] * s_ref[...] + b_ref[...]      # (H*W, Cp) f32

    # --- stage NCHW input -> channel-padded NHWC with zero halo --------------
    # Both zero-fills are a handful of vreg stores per image; done every grid
    # step so correctness never depends on per-core scratch initialization.
    xt_ref[...] = jnp.zeros_like(xt_ref)                    # padded channel rows = 0
    xt_ref[:C, :] = x_ref[0].astype(f32)
    xp_ref[...] = jnp.zeros_like(xp_ref)                    # halo stays zero
    # One aligned (Cp, H*W) -> (H*W, Cp) transpose; reshape is layout-preserving
    # because W % 8 == 0 and Cp % 128 == 0.
    xp_ref[1:H + 1, 1:W + 1, :] = xt_ref[...].T.reshape(H, W, Cp)

    # --- conv1 + bn1 + relu (intermediate stays in VMEM) ---------------------
    o1 = jnp.maximum(conv3x3_bn(w1_ref, s1_ref, b1_ref), 0.0)
    xp_ref[1:H + 1, 1:W + 1, :] = o1.reshape(H, W, Cp)      # padded lanes stay 0

    # --- conv2 + bn2 + residual add + relu (lane-dense NCHW epilogue) --------
    o2t = conv3x3_bn(w2_ref, s2_ref, b2_ref).T              # (Cp, H*W) aligned transpose
    res = o2t[:C, :] + x_ref[0].astype(f32)                 # residual in (C, H*W)
    out_ref[0] = jnp.maximum(res, 0.0).astype(out_ref.dtype)


# ---------------------------------------------------------------------------
# Wrapper
# ---------------------------------------------------------------------------
def basic_block_forward(x_nchw, params):
    """BasicBlock forward. x_nchw: (N, C, H, W) like PyTorch."""
    N, C, H, W = x_nchw.shape
    assert params["planes"] == params["inplanes"] == C, (
        "stride>1 / downsample path not implemented (inplanes must equal planes)")
    assert W % 8 == 0, "kernel assumes W is a multiple of 8 (sublane alignment)"
    Cp = params["cp"]
    HW = H * W  # H*W multiple of 128 gives fully unmasked lane-dense HBM I/O

    # Free collapse (no data movement, no transpose): NCHW <-> (N, C, H*W).
    x = x_nchw.reshape(N, C, HW)

    kernel = functools.partial(_basic_block_kernel, H=H, W=W, C=C, Cp=Cp)
    out = pl.pallas_call(
        kernel,
        out_shape=jax.ShapeDtypeStruct((N, C, HW), x.dtype),
        grid_spec=pltpu.PrefetchScalarGridSpec(
            num_scalar_prefetch=0,
            grid=(N,),
            in_specs=[
                pl.BlockSpec((1, C, HW), lambda n: (n, 0, 0)),
                pl.BlockSpec((3, 3 * Cp, Cp), lambda n: (0, 0, 0)),
                pl.BlockSpec((1, Cp), lambda n: (0, 0)),
                pl.BlockSpec((1, Cp), lambda n: (0, 0)),
                pl.BlockSpec((3, 3 * Cp, Cp), lambda n: (0, 0, 0)),
                pl.BlockSpec((1, Cp), lambda n: (0, 0)),
                pl.BlockSpec((1, Cp), lambda n: (0, 0)),
            ],
            out_specs=pl.BlockSpec((1, C, HW), lambda n: (n, 0, 0)),
            scratch_shapes=[
                pltpu.VMEM((Cp, HW), jnp.float32),             # NCHW staging (ch-padded)
                pltpu.VMEM((H + 2, W + 2, Cp), jnp.float32),   # padded NHWC tile
                pltpu.VMEM((H + 2, W, 3 * Cp), jnp.float32),   # dx-unrolled im2col
                pltpu.VMEM((HW, Cp), jnp.float32),             # f32 accumulator
            ],
        ),
        compiler_params=pltpu.CompilerParams(
            dimension_semantics=("parallel",),       # shard batch across TCs (v7x)
            vmem_limit_bytes=32 * 1024 * 1024,       # few MiB used; safe on v5e/v6e/v7x
        ),
    )(x, params["w1"], params["scale1"], params["bias1"],
      params["w2"], params["scale2"], params["bias2"])

    return out.reshape(N, C, H, W)


# ---------------------------------------------------------------------------
# Parameter setup (deterministic, synthetic)
# ---------------------------------------------------------------------------
def _fold_bn(gamma, beta, rmean, rvar, eps=1e-5):
    scale = gamma / jnp.sqrt(rvar + eps)
    bias = beta - rmean * scale
    return scale, bias                         # 1-D (C,)


def _prep_conv_w(w_oihw, cin_p, cout_p):
    # torch (Cout, Cin, 3, 3) -> (3[dy], 3*Cin_p, Cout_p); K ordered (dx, ci).
    cout, cin = w_oihw.shape[0], w_oihw.shape[1]
    w = jnp.transpose(w_oihw, (2, 3, 1, 0))                     # (dy, dx, ci, co)
    w = jnp.pad(w, ((0, 0), (0, 0), (0, cin_p - cin), (0, cout_p - cout)))
    return w.reshape(3, 3 * cin_p, cout_p)


def _prep_affine(vec, cout_p):
    # zero in padded lanes so padded channels stay exactly 0 through relu/residual
    return jnp.pad(vec, (0, cout_p - vec.shape[0]))[None, :]    # (1, Cout_p)


def make_params(key, inplanes, planes):
    assert inplanes == planes, "downsample path not implemented"
    Cp = -(-max(inplanes, planes) // 128) * 128                 # lane-dense pad
    ks = jax.random.split(key, 10)
    w1 = jax.random.normal(ks[0], (planes, inplanes, 3, 3), jnp.float32) * 0.1
    w2 = jax.random.normal(ks[1], (planes, planes, 3, 3), jnp.float32) * 0.1
    g1 = jax.random.normal(ks[2], (planes,), jnp.float32) * 0.1 + 1.0
    b1 = jax.random.normal(ks[3], (planes,), jnp.float32) * 0.1
    m1 = jax.random.normal(ks[4], (planes,), jnp.float32) * 0.1
    v1 = jnp.abs(jax.random.normal(ks[5], (planes,), jnp.float32)) * 0.1 + 0.5
    g2 = jax.random.normal(ks[6], (planes,), jnp.float32) * 0.1 + 1.0
    b2 = jax.random.normal(ks[7], (planes,), jnp.float32) * 0.1
    m2 = jax.random.normal(ks[8], (planes,), jnp.float32) * 0.1
    v2 = jnp.abs(jax.random.normal(ks[9], (planes,), jnp.float32)) * 0.1 + 0.5
    s1, bb1 = _fold_bn(g1, b1, m1, v1)
    s2, bb2 = _fold_bn(g2, b2, m2, v2)
    params = dict(
        w1=_prep_conv_w(w1, Cp, Cp), w2=_prep_conv_w(w2, Cp, Cp),
        scale1=_prep_affine(s1, Cp), bias1=_prep_affine(bb1, Cp),
        scale2=_prep_affine(s2, Cp), bias2=_prep_affine(bb2, Cp),
        inplanes=inplanes, planes=planes, cp=Cp)
    raw = dict(w1=w1, w2=w2, s1=s1, b1=bb1, s2=s2, b2=bb2)
    return params, raw


# ---------------------------------------------------------------------------
# Pure-JAX reference (correctness check)
# ---------------------------------------------------------------------------
def reference_basic_block(x, raw):
    def conv(x, w):
        return jax.lax.conv_general_dilated(
            x, w, window_strides=(1, 1), padding=((1, 1), (1, 1)),
            dimension_numbers=("NCHW", "OIHW", "NCHW"))

    out = conv(x, raw["w1"])
    out = out * raw["s1"][None, :, None, None] + raw["b1"][None, :, None, None]
    out = jnp.maximum(out, 0.0)
    out = conv(out, raw["w2"])
    out = out * raw["s2"][None, :, None, None] + raw["b2"][None, :, None, None]
    out = out + x
    return jnp.maximum(out, 0.0)


# ---------------------------------------------------------------------------
if __name__ == "__main__":
    key = jax.random.PRNGKey(0)
    kx, kp = jax.random.split(key)

    N, C, H, W = 2, 4, 16, 16      # inplanes == planes, so the residual adds directly
    x = jax.random.normal(kx, (N, C, H, W), jnp.float32)
    params, raw = make_params(kp, inplanes=C, planes=C)

    out = jax.block_until_ready(basic_block_forward(x, params))
    ref = jax.block_until_ready(reference_basic_block(x, raw))

    assert out.shape == ref.shape == (N, C, H, W)
    max_err = float(jnp.max(jnp.abs(out - ref)))
    assert jnp.allclose(out, ref, atol=1e-4, rtol=1e-4), max_err

    print("KERNEL_OK")
</pallas_src>

<mosaic_0001>
module attributes {stable_mosaic.version = 11 : i64} {
  func.func @_basic_block_kernel(%arg0: i32, %arg1: memref<1x4x256xf32, #tpu.memory_space<vmem>>, %arg2: memref<3x384x128xf32, #tpu.memory_space<vmem>>, %arg3: memref<1x128xf32, #tpu.memory_space<vmem>>, %arg4: memref<1x128xf32, #tpu.memory_space<vmem>>, %arg5: memref<3x384x128xf32, #tpu.memory_space<vmem>>, %arg6: memref<1x128xf32, #tpu.memory_space<vmem>>, %arg7: memref<1x128xf32, #tpu.memory_space<vmem>>, %arg8: memref<1x4x256xf32, #tpu.memory_space<vmem>>, %arg9: memref<128x256xf32, #tpu.memory_space<vmem>>, %arg10: memref<18x18x128xf32, #tpu.memory_space<vmem>>, %arg11: memref<18x16x384xf32, #tpu.memory_space<vmem>>, %arg12: memref<256x128xf32, #tpu.memory_space<vmem>>) attributes {dimension_semantics = [#tpu.dimension_semantics<parallel>], iteration_bounds = array<i64: 2>, scalar_prefetch = 0 : i64, scratch_operands = 4 : i64, tpu.core_type = #tpu.core_type<tc>, window_params = [{transform_indices = @transform_0, window_bounds = array<i64: 1, 4, 256>}, {pipeline_mode = #tpu.pipeline_mode<synchronous>, transform_indices = @transform_1, window_bounds = array<i64: 3, 384, 128>}, {pipeline_mode = #tpu.pipeline_mode<synchronous>, transform_indices = @transform_2, window_bounds = array<i64: 1, 128>}, {pipeline_mode = #tpu.pipeline_mode<synchronous>, transform_indices = @transform_3, window_bounds = array<i64: 1, 128>}, {pipeline_mode = #tpu.pipeline_mode<synchronous>, transform_indices = @transform_4, window_bounds = array<i64: 3, 384, 128>}, {pipeline_mode = #tpu.pipeline_mode<synchronous>, transform_indices = @transform_5, window_bounds = array<i64: 1, 128>}, {pipeline_mode = #tpu.pipeline_mode<synchronous>, transform_indices = @transform_6, window_bounds = array<i64: 1, 128>}, {transform_indices = @transform_7, window_bounds = array<i64: 1, 4, 256>}]} {
    %cst = arith.constant 0.000000e+00 : f32
    %0 = vector.broadcast %cst : f32 to vector<128x256xf32>
    %c0 = arith.constant 0 : index
    %c0_0 = arith.constant 0 : index
    %1 = vector.load %arg9[%c0, %c0_0] : memref<128x256xf32, #tpu.memory_space<vmem>>, vector<128x256xf32>
    tpu.vector_store %arg9[%c0, %c0_0], %0 {strides = array<i32>} : memref<128x256xf32, #tpu.memory_space<vmem>>, vector<128x256xf32>,
    %c0_1 = arith.constant 0 : index
    %c0_2 = arith.constant 0 : index
    %c0_3 = arith.constant 0 : index
    %2 = vector.load %arg1[%c0_1, %c0_2, %c0_3] : memref<1x4x256xf32, #tpu.memory_space<vmem>>, vector<1x4x256xf32>
    %3 = vector.shape_cast %2 : vector<1x4x256xf32> to vector<4x256xf32>
    %c0_4 = arith.constant 0 : index
    %c0_5 = arith.constant 0 : index
    %4 = vector.load %arg9[%c0_4, %c0_5] : memref<128x256xf32, #tpu.memory_space<vmem>>, vector<4x256xf32>
    tpu.vector_store %arg9[%c0_4, %c0_5], %3 {strides = array<i32>} : memref<128x256xf32, #tpu.memory_space<vmem>>, vector<4x256xf32>,
    %cst_6 = arith.constant 0.000000e+00 : f32
    %5 = vector.broadcast %cst_6 : f32 to vector<18x18x128xf32>
    %c0_7 = arith.constant 0 : index
    %c0_8 = arith.constant 0 : index
    %c0_9 = arith.constant 0 : index
    %6 = vector.load %arg10[%c0_7, %c0_8, %c0_9] : memref<18x18x128xf32, #tpu.memory_space<vmem>>, vector<18x18x128xf32>
    tpu.vector_store %arg10[%c0_7, %c0_8, %c0_9], %5 {strides = array<i32>} : memref<18x18x128xf32, #tpu.memory_space<vmem>>, vector<18x18x128xf32>,
    %c0_10 = arith.constant 0 : index
    %c0_11 = arith.constant 0 : index
    %7 = vector.load %arg9[%c0_10, %c0_11] : memref<128x256xf32, #tpu.memory_space<vmem>>, vector<128x256xf32>
    %8 = tpu.transpose %7, [1, 0] : vector<128x256xf32> -> vector<256x128xf32>
    %9 = vector.shape_cast %8 : vector<256x128xf32> to vector<16x16x128xf32>
    %c1 = arith.constant 1 : index
    %c1_12 = arith.constant 1 : index
    %c0_13 = arith.constant 0 : index
    %10 = vector.load %arg10[%c1, %c1_12, %c0_13] : memref<18x18x128xf32, #tpu.memory_space<vmem>>, vector<16x16x128xf32>
    tpu.vector_store %arg10[%c1, %c1_12, %c0_13], %9 {strides = array<i32>} : memref<18x18x128xf32, #tpu.memory_space<vmem>>, vector<16x16x128xf32>,
    %c0_14 = arith.constant 0 : index
    %c0_15 = arith.constant 0 : index
    %c0_16 = arith.constant 0 : index
    %11 = vector.load %arg10[%c0_14, %c0_15, %c0_16] : memref<18x18x128xf32, #tpu.memory_space<vmem>>, vector<18x16x128xf32>
    %c0_17 = arith.constant 0 : index
    %c0_18 = arith.constant 0 : index
    %c0_19 = arith.constant 0 : index
    %12 = vector.load %arg11[%c0_17, %c0_18, %c0_19] : memref<18x16x384xf32, #tpu.memory_space<vmem>>, vector<18x16x128xf32>
    tpu.vector_store %arg11[%c0_17, %c0_18, %c0_19], %11 {strides = array<i32>} : memref<18x16x384xf32, #tpu.memory_space<vmem>>, vector<18x16x128xf32>,
    %c0_20 = arith.constant 0 : index
    %c1_21 = arith.constant 1 : index
    %c0_22 = arith.constant 0 : index
    %13 = vector.load %arg10[%c0_20, %c1_21, %c0_22] : memref<18x18x128xf32, #tpu.memory_space<vmem>>, vector<18x16x128xf32>
    %c0_23 = arith.constant 0 : index
    %c0_24 = arith.constant 0 : index
    %c128 = arith.constant 128 : index
    %14 = vector.load %arg11[%c0_23, %c0_24, %c128] : memref<18x16x384xf32, #tpu.memory_space<vmem>>, vector<18x16x128xf32>
    tpu.vector_store %arg11[%c0_23, %c0_24, %c128], %13 {strides = array<i32>} : memref<18x16x384xf32, #tpu.memory_space<vmem>>, vector<18x16x128xf32>,
    %c0_25 = arith.constant 0 : index
    %c2 = arith.constant 2 : index
    %c0_26 = arith.constant 0 : index
    %15 = vector.load %arg10[%c0_25, %c2, %c0_26] : memref<18x18x128xf32, #tpu.memory_space<vmem>>, vector<18x16x128xf32>
    %c0_27 = arith.constant 0 : index
    %c0_28 = arith.constant 0 : index
    %c256 = arith.constant 256 : index
    %16 = vector.load %arg11[%c0_27, %c0_28, %c256] : memref<18x16x384xf32, #tpu.memory_space<vmem>>, vector<18x16x128xf32>
    tpu.vector_store %arg11[%c0_27, %c0_28, %c256], %15 {strides = array<i32>} : memref<18x16x384xf32, #tpu.memory_space<vmem>>, vector<18x16x128xf32>,
    %c0_29 = arith.constant 0 : index
    %c0_30 = arith.constant 0 : index
    %c0_31 = arith.constant 0 : index
    %17 = vector.load %arg11[%c0_29, %c0_30, %c0_31] : memref<18x16x384xf32, #tpu.memory_space<vmem>>, vector<16x16x384xf32>
    %18 = vector.shape_cast %17 : vector<16x16x384xf32> to vector<256x384xf32>
    %c0_32 = arith.constant 0 : index
    %c0_33 = arith.constant 0 : index
    %c0_34 = arith.constant 0 : index
    %19 = vector.load %arg2[%c0_32, %c0_33, %c0_34] : memref<3x384x128xf32, #tpu.memory_space<vmem>>, vector<1x384x128xf32>
    %20 = vector.shape_cast %19 : vector<1x384x128xf32> to vector<384x128xf32>
    %cst_35 = arith.constant dense<0.000000e+00> : vector<256x128xf32>
    %21 = tpu.matmul %18, %20, %cst_35 {dimension_numbers = #tpu.dot_dimension_numbers<[1], [0], [0], [1], [0, 0, 1, 1], [], []>} : vector<256x384xf32>, vector<384x128xf32>, vector<256x128xf32> -> vector<256x128xf32>
    %c0_36 = arith.constant 0 : index
    %c0_37 = arith.constant 0 : index
    %22 = vector.load %arg12[%c0_36, %c0_37] : memref<256x128xf32, #tpu.memory_space<vmem>>, vector<256x128xf32>
    tpu.vector_store %arg12[%c0_36, %c0_37], %21 {strides = array<i32>} : memref<256x128xf32, #tpu.memory_space<vmem>>, vector<256x128xf32>,
    %c1_38 = arith.constant 1 : index
    %c0_39 = arith.constant 0 : index
    %c0_40 = arith.constant 0 : index
    %23 = vector.load %arg11[%c1_38, %c0_39, %c0_40] : memref<18x16x384xf32, #tpu.memory_space<vmem>>, vector<16x16x384xf32>
    %24 = vector.shape_cast %23 : vector<16x16x384xf32> to vector<256x384xf32>
    %c1_41 = arith.constant 1 : index
    %c0_42 = arith.constant 0 : index
    %c0_43 = arith.constant 0 : index
    %25 = vector.load %arg2[%c1_41, %c0_42, %c0_43] : memref<3x384x128xf32, #tpu.memory_space<vmem>>, vector<1x384x128xf32>
    %26 = vector.shape_cast %25 : vector<1x384x128xf32> to vector<384x128xf32>
    %cst_44 = arith.constant dense<0.000000e+00> : vector<256x128xf32>
    %27 = tpu.matmul %24, %26, %cst_44 {dimension_numbers = #tpu.dot_dimension_numbers<[1], [0], [0], [1], [0, 0, 1, 1], [], []>} : vector<256x384xf32>, vector<384x128xf32>, vector<256x128xf32> -> vector<256x128xf32>
    %c0_45 = arith.constant 0 : index
    %c0_46 = arith.constant 0 : index
    %28 = vector.load %arg12[%c0_45, %c0_46] : memref<256x128xf32, #tpu.memory_space<vmem>>, vector<256x128xf32>
    %29 = arith.addf %28, %27 : vector<256x128xf32>
    %c0_47 = arith.constant 0 : index
    %c0_48 = arith.constant 0 : index
    %30 = vector.load %arg12[%c0_47, %c0_48] : memref<256x128xf32, #tpu.memory_space<vmem>>, vector<256x128xf32>
    tpu.vector_store %arg12[%c0_47, %c0_48], %29 {strides = array<i32>} : memref<256x128xf32, #tpu.memory_space<vmem>>, vector<256x128xf32>,
    %c2_49 = arith.constant 2 : index
    %c0_50 = arith.constant 0 : index
    %c0_51 = arith.constant 0 : index
    %31 = vector.load %arg11[%c2_49, %c0_50, %c0_51] : memref<18x16x384xf32, #tpu.memory_space<vmem>>, vector<16x16x384xf32>
    %32 = vector.shape_cast %31 : vector<16x16x384xf32> to vector<256x384xf32>
    %c2_52 = arith.constant 2 : index
    %c0_53 = arith.constant 0 : index
    %c0_54 = arith.constant 0 : index
    %33 = vector.load %arg2[%c2_52, %c0_53, %c0_54] : memref<3x384x128xf32, #tpu.memory_space<vmem>>, vector<1x384x128xf32>
    %34 = vector.shape_cast %33 : vector<1x384x128xf32> to vector<384x128xf32>
    %cst_55 = arith.constant dense<0.000000e+00> : vector<256x128xf32>
    %35 = tpu.matmul %32, %34, %cst_55 {dimension_numbers = #tpu.dot_dimension_numbers<[1], [0], [0], [1], [0, 0, 1, 1], [], []>} : vector<256x384xf32>, vector<384x128xf32>, vector<256x128xf32> -> vector<256x128xf32>
    %c0_56 = arith.constant 0 : index
    %c0_57 = arith.constant 0 : index
    %36 = vector.load %arg12[%c0_56, %c0_57] : memref<256x128xf32, #tpu.memory_space<vmem>>, vector<256x128xf32>
    %37 = arith.addf %36, %35 : vector<256x128xf32>
    %c0_58 = arith.constant 0 : index
    %c0_59 = arith.constant 0 : index
    %38 = vector.load %arg12[%c0_58, %c0_59] : memref<256x128xf32, #tpu.memory_space<vmem>>, vector<256x128xf32>
    tpu.vector_store %arg12[%c0_58, %c0_59], %37 {strides = array<i32>} : memref<256x128xf32, #tpu.memory_space<vmem>>, vector<256x128xf32>,
    %c0_60 = arith.constant 0 : index
    %c0_61 = arith.constant 0 : index
    %39 = vector.load %arg12[%c0_60, %c0_61] : memref<256x128xf32, #tpu.memory_space<vmem>>, vector<256x128xf32>
    %c0_62 = arith.constant 0 : index
    %c0_63 = arith.constant 0 : index
    %40 = vector.load %arg3[%c0_62, %c0_63] : memref<1x128xf32, #tpu.memory_space<vmem>>, vector<1x128xf32>
    %41 = vector.broadcast %40 : vector<1x128xf32> to vector<256x128xf32>
    %42 = arith.mulf %39, %41 : vector<256x128xf32>
    %c0_64 = arith.constant 0 : index
    %c0_65 = arith.constant 0 : index
    %43 = vector.load %arg4[%c0_64, %c0_65] : memref<1x128xf32, #tpu.memory_space<vmem>>, vector<1x128xf32>
    %44 = vector.broadcast %43 : vector<1x128xf32> to vector<256x128xf32>
    %45 = arith.addf %42, %44 : vector<256x128xf32>
    %cst_66 = arith.constant 0.000000e+00 : f32
    %46 = vector.broadcast %cst_66 : f32 to vector<256x128xf32>
    %47 = arith.maximumf %45, %46 : vector<256x128xf32>
    %48 = vector.shape_cast %47 : vector<256x128xf32> to vector<16x16x128xf32>
    %c1_67 = arith.constant 1 : index
    %c1_68 = arith.constant 1 : index
    %c0_69 = arith.constant 0 : index
    %49 = vector.load %arg10[%c1_67, %c1_68, %c0_69] : memref<18x18x128xf32, #tpu.memory_space<vmem>>, vector<16x16x128xf32>
    tpu.vector_store %arg10[%c1_67, %c1_68, %c0_69], %48 {strides = array<i32>} : memref<18x18x128xf32, #tpu.memory_space<vmem>>, vector<16x16x128xf32>,
    %c0_70 = arith.constant 0 : index
    %c0_71 = arith.constant 0 : index
    %c0_72 = arith.constant 0 : index
    %50 = vector.load %arg10[%c0_70, %c0_71, %c0_72] : memref<18x18x128xf32, #tpu.memory_space<vmem>>, vector<18x16x128xf32>
    %c0_73 = arith.constant 0 : index
    %c0_74 = arith.constant 0 : index
    %c0_75 = arith.constant 0 : index
    %51 = vector.load %arg11[%c0_73, %c0_74, %c0_75] : memref<18x16x384xf32, #tpu.memory_space<vmem>>, vector<18x16x128xf32>
    tpu.vector_store %arg11[%c0_73, %c0_74, %c0_75], %50 {strides = array<i32>} : memref<18x16x384xf32, #tpu.memory_space<vmem>>, vector<18x16x128xf32>,
    %c0_76 = arith.constant 0 : index
    %c1_77 = arith.constant 1 : index
    %c0_78 = arith.constant 0 : index
    %52 = vector.load %arg10[%c0_76, %c1_77, %c0_78] : memref<18x18x128xf32, #tpu.memory_space<vmem>>, vector<18x16x128xf32>
    %c0_79 = arith.constant 0 : index
    %c0_80 = arith.constant 0 : index
    %c128_81 = arith.constant 128 : index
    %53 = vector.load %arg11[%c0_79, %c0_80, %c128_81] : memref<18x16x384xf32, #tpu.memory_space<vmem>>, vector<18x16x128xf32>
    tpu.vector_store %arg11[%c0_79, %c0_80, %c128_81], %52 {strides = array<i32>} : memref<18x16x384xf32, #tpu.memory_space<vmem>>, vector<18x16x128xf32>,
    %c0_82 = arith.constant 0 : index
    %c2_83 = arith.constant 2 : index
    %c0_84 = arith.constant 0 : index
    %54 = vector.load %arg10[%c0_82, %c2_83, %c0_84] : memref<18x18x128xf32, #tpu.memory_space<vmem>>, vector<18x16x128xf32>
    %c0_85 = arith.constant 0 : index
    %c0_86 = arith.constant 0 : index
    %c256_87 = arith.constant 256 : index
    %55 = vector.load %arg11[%c0_85, %c0_86, %c256_87] : memref<18x16x384xf32, #tpu.memory_space<vmem>>, vector<18x16x128xf32>
    tpu.vector_store %arg11[%c0_85, %c0_86, %c256_87], %54 {strides = array<i32>} : memref<18x16x384xf32, #tpu.memory_space<vmem>>, vector<18x16x128xf32>,
    %c0_88 = arith.constant 0 : index
    %c0_89 = arith.constant 0 : index
    %c0_90 = arith.constant 0 : index
    %56 = vector.load %arg11[%c0_88, %c0_89, %c0_90] : memref<18x16x384xf32, #tpu.memory_space<vmem>>, vector<16x16x384xf32>
    %57 = vector.shape_cast %56 : vector<16x16x384xf32> to vector<256x384xf32>
    %c0_91 = arith.constant 0 : index
    %c0_92 = arith.constant 0 : index
    %c0_93 = arith.constant 0 : index
    %58 = vector.load %arg5[%c0_91, %c0_92, %c0_93] : memref<3x384x128xf32, #tpu.memory_space<vmem>>, vector<1x384x128xf32>
    %59 = vector.shape_cast %58 : vector<1x384x128xf32> to vector<384x128xf32>
    %cst_94 = arith.constant dense<0.000000e+00> : vector<256x128xf32>
    %60 = tpu.matmul %57, %59, %cst_94 {dimension_numbers = #tpu.dot_dimension_numbers<[1], [0], [0], [1], [0, 0, 1, 1], [], []>} : vector<256x384xf32>, vector<384x128xf32>, vector<256x128xf32> -> vector<256x128xf32>
    %c0_95 = arith.constant 0 : index
    %c0_96 = arith.constant 0 : index
    %61 = vector.load %arg12[%c0_95, %c0_96] : memref<256x128xf32, #tpu.memory_space<vmem>>, vector<256x128xf32>
    tpu.vector_store %arg12[%c0_95, %c0_96], %60 {strides = array<i32>} : memref<256x128xf32, #tpu.memory_space<vmem>>, vector<256x128xf32>,
    %c1_97 = arith.constant 1 : index
    %c0_98 = arith.constant 0 : index
    %c0_99 = arith.constant 0 : index
    %62 = vector.load %arg11[%c1_97, %c0_98, %c0_99] : memref<18x16x384xf32, #tpu.memory_space<vmem>>, vector<16x16x384xf32>
    %63 = vector.shape_cast %62 : vector<16x16x384xf32> to vector<256x384xf32>
    %c1_100 = arith.constant 1 : index
    %c0_101 = arith.constant 0 : index
    %c0_102 = arith.constant 0 : index
    %64 = vector.load %arg5[%c1_100, %c0_101, %c0_102] : memref<3x384x128xf32, #tpu.memory_space<vmem>>, vector<1x384x128xf32>
    %65 = vector.shape_cast %64 : vector<1x384x128xf32> to vector<384x128xf32>
    %cst_103 = arith.constant dense<0.000000e+00> : vector<256x128xf32>
    %66 = tpu.matmul %63, %65, %cst_103 {dimension_numbers = #tpu.dot_dimension_numbers<[1], [0], [0], [1], [0, 0, 1, 1], [], []>} : vector<256x384xf32>, vector<384x128xf32>, vector<256x128xf32> -> vector<256x128xf32>
    %c0_104 = arith.constant 0 : index
    %c0_105 = arith.constant 0 : index
    %67 = vector.load %arg12[%c0_104, %c0_105] : memref<256x128xf32, #tpu.memory_space<vmem>>, vector<256x128xf32>
    %68 = arith.addf %67, %66 : vector<256x128xf32>
    %c0_106 = arith.constant 0 : index
    %c0_107 = arith.constant 0 : index
    %69 = vector.load %arg12[%c0_106, %c0_107] : memref<256x128xf32, #tpu.memory_space<vmem>>, vector<256x128xf32>
    tpu.vector_store %arg12[%c0_106, %c0_107], %68 {strides = array<i32>} : memref<256x128xf32, #tpu.memory_space<vmem>>, vector<256x128xf32>,
    %c2_108 = arith.constant 2 : index
    %c0_109 = arith.constant 0 : index
    %c0_110 = arith.constant 0 : index
    %70 = vector.load %arg11[%c2_108, %c0_109, %c0_110] : memref<18x16x384xf32, #tpu.memory_space<vmem>>, vector<16x16x384xf32>
    %71 = vector.shape_cast %70 : vector<16x16x384xf32> to vector<256x384xf32>
    %c2_111 = arith.constant 2 : index
    %c0_112 = arith.constant 0 : index
    %c0_113 = arith.constant 0 : index
    %72 = vector.load %arg5[%c2_111, %c0_112, %c0_113] : memref<3x384x128xf32, #tpu.memory_space<vmem>>, vector<1x384x128xf32>
    %73 = vector.shape_cast %72 : vector<1x384x128xf32> to vector<384x128xf32>
    %cst_114 = arith.constant dense<0.000000e+00> : vector<256x128xf32>
    %74 = tpu.matmul %71, %73, %cst_114 {dimension_numbers = #tpu.dot_dimension_numbers<[1], [0], [0], [1], [0, 0, 1, 1], [], []>} : vector<256x384xf32>, vector<384x128xf32>, vector<256x128xf32> -> vector<256x128xf32>
    %c0_115 = arith.constant 0 : index
    %c0_116 = arith.constant 0 : index
    %75 = vector.load %arg12[%c0_115, %c0_116] : memref<256x128xf32, #tpu.memory_space<vmem>>, vector<256x128xf32>
    %76 = arith.addf %75, %74 : vector<256x128xf32>
    %c0_117 = arith.constant 0 : index
    %c0_118 = arith.constant 0 : index
    %77 = vector.load %arg12[%c0_117, %c0_118] : memref<256x128xf32, #tpu.memory_space<vmem>>, vector<256x128xf32>
    tpu.vector_store %arg12[%c0_117, %c0_118], %76 {strides = array<i32>} : memref<256x128xf32, #tpu.memory_space<vmem>>, vector<256x128xf32>,
    %c0_119 = arith.constant 0 : index
    %c0_120 = arith.constant 0 : index
    %78 = vector.load %arg12[%c0_119, %c0_120] : memref<256x128xf32, #tpu.memory_space<vmem>>, vector<256x128xf32>
    %c0_121 = arith.constant 0 : index
    %c0_122 = arith.constant 0 : index
    %79 = vector.load %arg6[%c0_121, %c0_122] : memref<1x128xf32, #tpu.memory_space<vmem>>, vector<1x128xf32>
    %80 = vector.broadcast %79 : vector<1x128xf32> to vector<256x128xf32>
    %81 = arith.mulf %78, %80 : vector<256x128xf32>
    %c0_123 = arith.constant 0 : index
    %c0_124 = arith.constant 0 : index
    %82 = vector.load %arg7[%c0_123, %c0_124] : memref<1x128xf32, #tpu.memory_space<vmem>>, vector<1x128xf32>
    %83 = vector.broadcast %82 : vector<1x128xf32> to vector<256x128xf32>
    %84 = arith.addf %81, %83 : vector<256x128xf32>
    %85 = tpu.transpose %84, [1, 0] : vector<256x128xf32> -> vector<128x256xf32>
    %86 = vector.extract_strided_slice %85 {offsets = [0, 0], sizes = [4, 256], strides = [1, 1]} : vector<128x256xf32> to vector<4x256xf32>
    %c0_125 = arith.constant 0 : index
    %c0_126 = arith.constant 0 : index
    %c0_127 = arith.constant 0 : index
    %87 = vector.load %arg1[%c0_125, %c0_126, %c0_127] : memref<1x4x256xf32, #tpu.memory_space<vmem>>, vector<1x4x256xf32>
    %88 = vector.shape_cast %87 : vector<1x4x256xf32> to vector<4x256xf32>
    %89 = arith.addf %86, %88 : vector<4x256xf32>
    %cst_128 = arith.constant 0.000000e+00 : f32
    %90 = vector.broadcast %cst_128 : f32 to vector<4x256xf32>
    %91 = arith.maximumf %89, %90 : vector<4x256xf32>
    %c0_129 = arith.constant 0 : index
    %c0_130 = arith.constant 0 : index
    %c0_131 = arith.constant 0 : index
    %92 = vector.load %arg8[%c0_129, %c0_130, %c0_131] : memref<1x4x256xf32, #tpu.memory_space<vmem>>, vector<1x4x256xf32>
    %93 = vector.shape_cast %92 : vector<1x4x256xf32> to vector<4x256xf32>
    %94 = vector.shape_cast %91 : vector<4x256xf32> to vector<1x4x256xf32>
    tpu.vector_store %arg8[%c0_129, %c0_130, %c0_131], %94 {strides = array<i32>} : memref<1x4x256xf32, #tpu.memory_space<vmem>>, vector<1x4x256xf32>,
    return
  }
  func.func @transform_0(%arg0: i32) -> (i32, i32, i32) {
    %c0_i32 = arith.constant 0 : i32
    %c0_i32_0 = arith.constant 0 : i32
    %c0_i32_1 = arith.constant 0 : i32
    return %arg0, %c0_i32, %c0_i32_0 : i32, i32, i32
  }
  func.func @transform_1(%arg0: i32) -> (i32, i32, i32) {
    %c0_i32 = arith.constant 0 : i32
    %c0_i32_0 = arith.constant 0 : i32
    %c0_i32_1 = arith.constant 0 : i32
    %c0_i32_2 = arith.constant 0 : i32
    return %c0_i32, %c0_i32_0, %c0_i32_1 : i32, i32, i32
  }
  func.func @transform_2(%arg0: i32) -> (i32, i32) {
    %c0_i32 = arith.constant 0 : i32
    %c0_i32_0 = arith.constant 0 : i32
    %c0_i32_1 = arith.constant 0 : i32
    return %c0_i32, %c0_i32_0 : i32, i32
  }
  func.func @transform_3(%arg0: i32) -> (i32, i32) {
    %c0_i32 = arith.constant 0 : i32
    %c0_i32_0 = arith.constant 0 : i32
    %c0_i32_1 = arith.constant 0 : i32
    return %c0_i32, %c0_i32_0 : i32, i32
  }
  func.func @transform_4(%arg0: i32) -> (i32, i32, i32) {
    %c0_i32 = arith.constant 0 : i32
    %c0_i32_0 = arith.constant 0 : i32
    %c0_i32_1 = arith.constant 0 : i32
    %c0_i32_2 = arith.constant 0 : i32
    return %c0_i32, %c0_i32_0, %c0_i32_1 : i32, i32, i32
  }
  func.func @transform_5(%arg0: i32) -> (i32, i32) {
    %c0_i32 = arith.constant 0 : i32
    %c0_i32_0 = arith.constant 0 : i32
    %c0_i32_1 = arith.constant 0 : i32
    return %c0_i32, %c0_i32_0 : i32, i32
  }
  func.func @transform_6(%arg0: i32) -> (i32, i32) {
    %c0_i32 = arith.constant 0 : i32
    %c0_i32_0 = arith.constant 0 : i32
    %c0_i32_1 = arith.constant 0 : i32
    return %c0_i32, %c0_i32_0 : i32, i32
  }
  func.func @transform_7(%arg0: i32) -> (i32, i32, i32) {
    %c0_i32 = arith.constant 0 : i32
    %c0_i32_0 = arith.constant 0 : i32
    %c0_i32_1 = arith.constant 0 : i32
    return %arg0, %c0_i32, %c0_i32_0 : i32, i32, i32
  }
}

</mosaic_0001>

<llo_original>
// kernel: tpu_custom_call.1
$region0: #{tpu_custom_call.1}
  #allocation0 [shape = 'u32[]', space=smem, size = 0x4, offset = 0x4, fixed_abs, tag = 'smem constant byte address 0x4 - core index']
  #allocation1 [shape = 'u32[144,128]{1,0:T(1,128)}', space=vmem, size = 0x12000, scoped, tag = 'internal scratch']
  #allocation2 [shape = 'f32[128,256]{1,0:T(8,128)}', space=vmem, size = 0x20000, scoped, tag = 'scratch operand']
  #allocation3 [shape = 'f32[18,18,128]{2,1,0:T(8,128)}', space=vmem, size = 0x36000, scoped, tag = 'scratch operand']
  #allocation4 [shape = 'f32[18,16,384]{2,1,0:T(8,128)}', space=vmem, size = 0x6c000, scoped, tag = 'scratch operand']
  #allocation5 [shape = 'f32[256,128]{1,0:T(8,128)}', space=vmem, size = 0x20000, scoped, tag = 'scratch operand']
  %s0 = inlined_call_operand.hbm [shape: f32[2,4,256], index: 0, kind: input, shape index: {}]
  %s1 = inlined_call_operand.hbm [shape: f32[3,384,128], index: 1, kind: input, shape index: {}]
  %s2 = inlined_call_operand.vmem [shape: f32[1,128], index: 2, kind: input, shape index: {}]
  %s3 = inlined_call_operand.vmem [shape: f32[1,128], index: 3, kind: input, shape index: {}]
  %s4 = inlined_call_operand.hbm [shape: f32[3,384,128], index: 4, kind: input, shape index: {}]
  %s5 = inlined_call_operand.vmem [shape: f32[1,128], index: 5, kind: input, shape index: {}]
  %s6 = inlined_call_operand.vmem [shape: f32[1,128], index: 6, kind: input, shape index: {}]
  %s7 = inlined_call_operand.hbm [shape: f32[2,4,256], index: 7, kind: output, shape index: {}]
  %s8 = sld [smem:[#allocation0]]
  $region73: #{tpu_custom_call.1} parent=0
    _
  %s10 = ssub.s32 1, %s8
  %s11 = scalar_select 0, %s10, %s8
  $region1: #{tpu_custom_call.1} parent=0
    #allocation6 [shape = 'u8[8192]{0}', space=vmem, size = 0x2000, scoped, tag = 'input window, operand 0']
    #allocation7 [shape = 's32[2]{0}', space=sflag, size = 0x8, scoped, tag = 'scoped memory for tpu_custom_call.1']
    #allocation8 [shape = 's32[2]{0}', space=sflag, size = 0x8, scoped, tag = 'scoped memory for tpu_custom_call.1']
    #allocation9 [shape = 'u8[589824]{0}', space=vmem, size = 0x90000, scoped, tag = 'input window, operand 1, single buffered']
    #allocation10 [shape = 's32[1]{0}', space=sflag, size = 0x4, scoped, tag = 'scoped memory for tpu_custom_call.1']
    #allocation11 [shape = 'u8[589824]{0}', space=vmem, size = 0x90000, scoped, tag = 'input window, operand 4, single buffered']
    #allocation12 [shape = 'u8[8192]{0}', space=vmem, size = 0x2000, scoped, tag = 'output window, operand 0']
    %12 = vsyncpa [#allocation7], 0
    %s13 = scalar_lea.sflag [#allocation7], 1
    %14 = vsyncpa %s13, 0
    %15 = vsyncpa [#allocation10], 0
    %16 = vsyncpa [#allocation8], 0
    %s17 = scalar_lea.sflag [#allocation8], 1
    %18 = vsyncpa %s17, 0
    loop: start=0, step=1, limit=4
    $region2: #{tpu_custom_call.1} parent=1 // loop_pre_header
      _
    $region3: #{tpu_custom_call.1} parent=1 // loop_header
      %s20 = sphi 0, %s24
      %p21 = scmp.ge.s32.totalorder %s20, 4
      %s30 = sphi 0, %s32
      %s33 = sphi 0, %s30
      %s34 = sphi 0, %s33
      %s50 = sphi 0, %s34
      %s54 = sphi 0, %s54
      %s56 = sphi 0, %s54
      %s57 = sphi 0, %s56
      %s71 = sphi 0, %s57
      %s75 = sphi 0, %s75
      %s77 = sphi 0, %s75
      %s78 = sphi 0, %s77
      %s92 = sphi 0, %s78
      %s96 = sphi 0, %s96
      %s98 = sphi 0, %s96
      %s99 = sphi 0, %s98
      %s113 = sphi 0, %s99
      %s117 = sphi 0, %s117
      %s119 = sphi 0, %s117
      %s120 = sphi 0, %s119
      %s134 = sphi 0, %s120
      %s138 = sphi 0, %s138
      %s140 = sphi 0, %s138
      %s141 = sphi 0, %s140
      %s155 = sphi 0, %s141
      %s159 = sphi 0, %s159
      %s161 = sphi 0, %s159
      %s162 = sphi 0, %s161
      %s176 = sphi 0, %s162
      %s182 = sphi 0, %s184
      %s185 = sphi 0, %s182
      %s186 = sphi 0, %s185
      %s202 = sphi 0, %s186
    $region4: #{tpu_custom_call.1} parent=1 // loop_header_branch
      %23 = sbr.rel (%p21) target = $region8
    $region5: #{tpu_custom_call.1} parent=1 // loop_body
      %s25 = ssub.s32 %s20, 1
      %s26 = ssub.s32 %s20, 2
      %s27 = sadd.s32 %s20, 1
      %s28 = ssub.s32 %s20, %s27
      %p29 = scmp.eq.s32.totalorder %s28, 0
      %s31 = sadd.s32 %s30, 1
      %s32 = scalar_select %p29, %s30, %s31
      %p35 = pneg %p29
      %p36 = scmp.eq.s32.totalorder %s20, 1
      %p37 = por %p35, %p36
      %p38 = scmp.ne.s32.totalorder %s30, %s33
      %p39 = scmp.eq.s32.totalorder %s20, 0
      %p40 = por %p38, %p39
      %p41 = scmp.ne.s32.totalorder %s30, %s33
      %p42 = scmp.eq.s32.totalorder %s25, 1
      %p43 = por %p41, %p42
      %p44 = scmp.ne.s32.totalorder %s33, %s34
      %p45 = scmp.eq.s32.totalorder %s25, 0
      %p46 = por %p44, %p45
      %p47 = scmp.ne.s32.totalorder %s33, %s34
      %p48 = scmp.eq.s32.totalorder %s26, 1
      %p49 = por %p47, %p48
      %p51 = scmp.ne.s32.totalorder %s34, %s50
      %p52 = scmp.eq.s32.totalorder %s26, 0
      %p53 = por %p51, %p52
      %s55 = sadd.s32 %s54, 1
      %p58 = scmp.eq.s32.totalorder %s20, 1
      %p59 = scmp.ne.s32.totalorder %s54, %s56
      %p60 = scmp.eq.s32.totalorder %s20, 0
      %p61 = por %p59, %p60
      %p62 = scmp.ne.s32.totalorder %s54, %s56
      %p63 = scmp.eq.s32.totalorder %s25, 1
      %p64 = por %p62, %p63
      %p65 = scmp.ne.s32.totalorder %s56, %s57
      %p66 = scmp.eq.s32.totalorder %s25, 0
      %p67 = por %p65, %p66
      %p68 = scmp.ne.s32.totalorder %s56, %s57
      %p69 = scmp.eq.s32.totalorder %s26, 1
      %p70 = por %p68, %p69
      %p72 = scmp.ne.s32.totalorder %s57, %s71
      %p73 = scmp.eq.s32.totalorder %s26, 0
      %p74 = por %p72, %p73
      %s76 = sadd.s32 %s75, 1
      %p79 = scmp.eq.s32.totalorder %s20, 1
      %p80 = scmp.ne.s32.totalorder %s75, %s77
      %p81 = scmp.eq.s32.totalorder %s20, 0
      %p82 = por %p80, %p81
      %p83 = scmp.ne.s32.totalorder %s75, %s77
      %p84 = scmp.eq.s32.totalorder %s25, 1
      %p85 = por %p83, %p84
      %p86 = scmp.ne.s32.totalorder %s77, %s78
      %p87 = scmp.eq.s32.totalorder %s25, 0
      %p88 = por %p86, %p87
      %p89 = scmp.ne.s32.totalorder %s77, %s78
      %p90 = scmp.eq.s32.totalorder %s26, 1
      %p91 = por %p89, %p90
      %p93 = scmp.ne.s32.totalorder %s78, %s92
      %p94 = scmp.eq.s32.totalorder %s26, 0
      %p95 = por %p93, %p94
      %s97 = sadd.s32 %s96, 1
      %p100 = scmp.eq.s32.totalorder %s20, 1
      %p101 = scmp.ne.s32.totalorder %s96, %s98
      %p102 = scmp.eq.s32.totalorder %s20, 0
      %p103 = por %p101, %p102
      %p104 = scmp.ne.s32.totalorder %s96, %s98
      %p105 = scmp.eq.s32.totalorder %s25, 1
      %p106 = por %p104, %p105
      %p107 = scmp.ne.s32.totalorder %s98, %s99
      %p108 = scmp.eq.s32.totalorder %s25, 0
      %p109 = por %p107, %p108
      %p110 = scmp.ne.s32.totalorder %s98, %s99
      %p111 = scmp.eq.s32.totalorder %s26, 1
      %p112 = por %p110, %p111
      %p114 = scmp.ne.s32.totalorder %s99, %s113
      %p115 = scmp.eq.s32.totalorder %s26, 0
      %p116 = por %p114, %p115
      %s118 = sadd.s32 %s117, 1
      %p121 = scmp.eq.s32.totalorder %s20, 1
      %p122 = scmp.ne.s32.totalorder %s117, %s119
      %p123 = scmp.eq.s32.totalorder %s20, 0
      %p124 = por %p122, %p123
      %p125 = scmp.ne.s32.totalorder %s117, %s119
      %p126 = scmp.eq.s32.totalorder %s25, 1
      %p127 = por %p125, %p126
      %p128 = scmp.ne.s32.totalorder %s119, %s120
      %p129 = scmp.eq.s32.totalorder %s25, 0
      %p130 = por %p128, %p129
      %p131 = scmp.ne.s32.totalorder %s119, %s120
      %p132 = scmp.eq.s32.totalorder %s26, 1
      %p133 = por %p131, %p132
      %p135 = scmp.ne.s32.totalorder %s120, %s134
      %p136 = scmp.eq.s32.totalorder %s26, 0
      %p137 = por %p135, %p136
      %s139 = sadd.s32 %s138, 1
      %p142 = scmp.eq.s32.totalorder %s20, 1
      %p143 = scmp.ne.s32.totalorder %s138, %s140
      %p144 = scmp.eq.s32.totalorder %s20, 0
      %p145 = por %p143, %p144
      %p146 = scmp.ne.s32.totalorder %s138, %s140
      %p147 = scmp.eq.s32.totalorder %s25, 1
      %p148 = por %p146, %p147
      %p149 = scmp.ne.s32.totalorder %s140, %s141
      %p150 = scmp.eq.s32.totalorder %s25, 0
      %p151 = por %p149, %p150
      %p152 = scmp.ne.s32.totalorder %s140, %s141
      %p153 = scmp.eq.s32.totalorder %s26, 1
      %p154 = por %p152, %p153
      %p156 = scmp.ne.s32.totalorder %s141, %s155
      %p157 = scmp.eq.s32.totalorder %s26, 0
      %p158 = por %p156, %p157
      %s160 = sadd.s32 %s159, 1
      %p163 = scmp.eq.s32.totalorder %s20, 1
      %p164 = scmp.ne.s32.totalorder %s159, %s161
      %p165 = scmp.eq.s32.totalorder %s20, 0
      %p166 = por %p164, %p165
      %p167 = scmp.ne.s32.totalorder %s159, %s161
      %p168 = scmp.eq.s32.totalorder %s25, 1
      %p169 = por %p167, %p168
      %p170 = scmp.ne.s32.totalorder %s161, %s162
      %p171 = scmp.eq.s32.totalorder %s25, 0
      %p172 = por %p170, %p171
      %p173 = scmp.ne.s32.totalorder %s161, %s162
      %p174 = scmp.eq.s32.totalorder %s26, 1
      %p175 = por %p173, %p174
      %p177 = scmp.ne.s32.totalorder %s162, %s176
      %p178 = scmp.eq.s32.totalorder %s26, 0
      %p179 = por %p177, %p178
      %s180 = ssub.s32 %s20, %s27
      %p181 = scmp.eq.s32.totalorder %s180, 0
      %s183 = sadd.s32 %s182, 1
      %s184 = scalar_select %p181, %s182, %s183
      %p187 = pneg %p181
      %p188 = scmp.eq.s32.totalorder %s20, 1
      %p189 = por %p187, %p188
      %p190 = scmp.ne.s32.totalorder %s182, %s185
      %p191 = scmp.eq.s32.totalorder %s20, 0
      %p192 = por %p190, %p191
      %p193 = scmp.ne.s32.totalorder %s182, %s185
      %p194 = scmp.eq.s32.totalorder %s25, 1
      %p195 = por %p193, %p194
      %p196 = scmp.ne.s32.totalorder %s185, %s186
      %p197 = scmp.eq.s32.totalorder %s25, 0
      %p198 = por %p196, %p197
      %p199 = scmp.ne.s32.totalorder %s185, %s186
      %p200 = scmp.eq.s32.totalorder %s26, 1
      %p201 = por %p199, %p200
      %p203 = scmp.ne.s32.totalorder %s186, %s202
      %p204 = scmp.eq.s32.totalorder %s26, 0
      %p205 = por %p203, %p204
      %p206 = scmp.le.s32.totalorder 1, %s20
      %p207 = scmp.lt.s32.totalorder %s20, 3
      %p208 = pnand %p206, %p207
      %p209 = pneg %p208
      // Predicated region
      $region9: #{tpu_custom_call.1} parent=5 // pred_check
        _
      $region10: #{tpu_custom_call.1} parent=5 // pred_check_branch
        %211 = sbr.rel (%p208) target = $region12
      $region11: #{tpu_custom_call.1} parent=5 // pred_region
        %s212 = ssub.s32 %s20, 1
        // Predicated region
        $region13: #{tpu_custom_call.1} parent=11 // pred_check
          %p213 = pneg %p67
        $region14: #{tpu_custom_call.1} parent=11 // pred_check_branch
          %215 = sbr.rel (%p213) target = $region16
        $region15: #{tpu_custom_call.1} parent=11 // pred_region
          %s217 = ssub.s32 18432, 18432
          %218 = vsyncadd [#allocation10], %s217
          %s219 = sshll.u32 [#allocation9], 4
          %s220 = int_to_ptr.vmem [resolvable:$true] %s219
          %225 = dma.hbm_to_vmem [thread:$0]  %s1, 18432, %s220, [#allocation10], 128, 128, 8
        $region16: #{tpu_custom_call.1} parent=11 // pred_fallthru
          _
        // Predicated region
        $region17: #{tpu_custom_call.1} parent=11 // pred_check
          %p226 = pneg %p88
        $region18: #{tpu_custom_call.1} parent=11 // pred_check_branch
          %228 = sbr.rel (%p226) target = $region20
        $region19: #{tpu_custom_call.1} parent=11 // pred_region
          _
        $region20: #{tpu_custom_call.1} parent=11 // pred_fallthru
          _
        // Predicated region
        $region21: #{tpu_custom_call.1} parent=11 // pred_check
          %p229 = pneg %p109
        $region22: #{tpu_custom_call.1} parent=11 // pred_check_branch
          %231 = sbr.rel (%p229) target = $region24
        $region23: #{tpu_custom_call.1} parent=11 // pred_region
          _
        $region24: #{tpu_custom_call.1} parent=11 // pred_fallthru
          _
        // Predicated region
        $region25: #{tpu_custom_call.1} parent=11 // pred_check
          %p232 = pneg %p130
        $region26: #{tpu_custom_call.1} parent=11 // pred_check_branch
          %234 = sbr.rel (%p232) target = $region28
        $region27: #{tpu_custom_call.1} parent=11 // pred_region
          %s236 = ssub.s32 18432, 18432
          %237 = vsyncadd [#allocation10], %s236
          %s238 = sshll.u32 [#allocation11], 4
          %s239 = int_to_ptr.vmem [resolvable:$true] %s238
          %244 = dma.hbm_to_vmem [thread:$0]  %s4, 18432, %s239, [#allocation10], 128, 128, 8
        $region28: #{tpu_custom_call.1} parent=11 // pred_fallthru
          _
        // Predicated region
        $region29: #{tpu_custom_call.1} parent=11 // pred_check
          %p245 = pneg %p151
        $region30: #{tpu_custom_call.1} parent=11 // pred_check_branch
          %247 = sbr.rel (%p245) target = $region32
        $region31: #{tpu_custom_call.1} parent=11 // pred_region
          _
        $region32: #{tpu_custom_call.1} parent=11 // pred_fallthru
          _
        // Predicated region
        $region33: #{tpu_custom_call.1} parent=11 // pred_check
          %p248 = pneg %p172
        $region34: #{tpu_custom_call.1} parent=11 // pred_check_branch
          %250 = sbr.rel (%p248) target = $region36
        $region35: #{tpu_custom_call.1} parent=11 // pred_region
          _
        $region36: #{tpu_custom_call.1} parent=11 // pred_fallthru
          _
      $region12: #{tpu_custom_call.1} parent=5 // pred_fallthru
        _
      %p251 = scmp.lt.s32.totalorder %s20, 2
      // Predicated region
      $region37: #{tpu_custom_call.1} parent=5 // pred_check
        %p252 = pneg %p251
      $region38: #{tpu_custom_call.1} parent=5 // pred_check_branch
        %254 = sbr.rel (%p252) target = $region40
      $region39: #{tpu_custom_call.1} parent=5 // pred_region
        // Predicated region
        $region41: #{tpu_custom_call.1} parent=39 // pred_check
          %p255 = pneg %p40
        $region42: #{tpu_custom_call.1} parent=39 // pred_check_branch
          %257 = sbr.rel (%p255) target = $region44
        $region43: #{tpu_custom_call.1} parent=39 // pred_region
          %s258 = sand.u32 %s30, 1
          %s259 = scalar_lea.sflag [#allocation7], %s258
          %s260 = sand.u32 %s30, 1
          %s261 = smul.addr %s260, 8
          %s262 = scalar_lea.vmem [#allocation6], %s261
          %s264 = ssub.s32 128, 128
          %265 = vsyncadd %s259, %s264
          %s266 = smul.addr %s20, 2
          %s267 = smul.addr %s266, 64
          %s268 = scalar_lea.hbm %s0, %s267
          %s270 = sshll.u32 %s262, 4
          %s271 = int_to_ptr.vmem [resolvable:$true] %s270
          %273 = dma.hbm_to_vmem [thread:$0]  %s268, 128, %s271, %s259
        $region44: #{tpu_custom_call.1} parent=39 // pred_fallthru
          _
      $region40: #{tpu_custom_call.1} parent=5 // pred_fallthru
        _
      %p274 = scmp.le.s32.totalorder 1, %s20
      %p275 = scmp.lt.s32.totalorder %s20, 3
      %p276 = pnand %p274, %p275
      %p277 = pneg %p276
      // Predicated region
      $region45: #{tpu_custom_call.1} parent=5 // pred_check
        _
      $region46: #{tpu_custom_call.1} parent=5 // pred_check_branch
        %279 = sbr.rel (%p276) target = $region48
      $region47: #{tpu_custom_call.1} parent=5 // pred_region
        %s280 = ssub.s32 %s20, 1
        %s281 = sand.u32 %s33, 1
        %s282 = scalar_lea.sflag [#allocation7], %s281
        %s283 = sand.u32 %s33, 1
        %s284 = smul.addr %s283, 8
        %s285 = scalar_lea.vmem [#allocation6], %s284
        // Predicated region
        $region49: #{tpu_custom_call.1} parent=47 // pred_check
          %p286 = pneg %p46
        $region50: #{tpu_custom_call.1} parent=47 // pred_check_branch
          %288 = sbr.rel (%p286) target = $region52
        $region51: #{tpu_custom_call.1} parent=47 // pred_region
          %289 = dma.done %s282, 128
        $region52: #{tpu_custom_call.1} parent=47 // pred_fallthru
          _
        // Predicated region
        $region53: #{tpu_custom_call.1} parent=47 // pred_check
          %p290 = pneg %p67
        $region54: #{tpu_custom_call.1} parent=47 // pred_check_branch
          %292 = sbr.rel (%p290) target = $region56
        $region55: #{tpu_custom_call.1} parent=47 // pred_region
          %293 = dma.done [#allocation10], 18432
        $region56: #{tpu_custom_call.1} parent=47 // pred_fallthru
          _
        // Predicated region
        $region57: #{tpu_custom_call.1} parent=47 // pred_check
          %p294 = pneg %p130
        $region58: #{tpu_custom_call.1} parent=47 // pred_check_branch
          %296 = sbr.rel (%p294) target = $region60
        $region59: #{tpu_custom_call.1} parent=47 // pred_region
          %297 = dma.done [#allocation10], 18432
        $region60: #{tpu_custom_call.1} parent=47 // pred_fallthru
          _
        %s298 = sand.u32 %s33, 1
        %s299 = scalar_lea.sflag [#allocation7], %s298
        %s300 = sand.u32 %s33, 1
        %s301 = smul.addr %s300, 8
        %s302 = scalar_lea.vmem [#allocation6], %s301
        %p303 = pneg %p46
        %p304 = pneg %p43
        %p305 = pneg %p67
        %p306 = pneg %p64
        %p307 = pneg %p88
        %p308 = pneg %p85
        %p309 = pneg %p109
        %p310 = pneg %p106
        %p311 = pneg %p130
        %p312 = pneg %p127
        %p313 = pneg %p151
        %p314 = pneg %p148
        %p315 = pneg %p172
        %p316 = pneg %p169
        %p317 = pneg %p198
        %p318 = pneg %p195
        %s319 = sand.u32 %s185, 1
        %s320 = scalar_lea.sflag [#allocation8], %s319
        %s321 = sand.u32 %s185, 1
        %s322 = smul.addr %s321, 8
        %s323 = scalar_lea.vmem [#allocation12], %s322
        %324 = vst [vmem:[#allocation2] sm:$0xff] 0.0
        %325 = vst [vmem:[#allocation2 + $0x8] sm:$0xff] 0.0
        %326 = vst [vmem:[#allocation2 + $0x10] sm:$0xff] 0.0
        %327 = vst [vmem:[#allocation2 + $0x18] sm:$0xff] 0.0
        %328 = vst [vmem:[#allocation2 + $0x20] sm:$0xff] 0.0
        %329 = vst [vmem:[#allocation2 + $0x28] sm:$0xff] 0.0
        %330 = vst [vmem:[#allocation2 + $0x30] sm:$0xff] 0.0
        %331 = vst [vmem:[#allocation2 + $0x38] sm:$0xff] 0.0
        %332 = vst [vmem:[#allocation2 + $0x40] sm:$0xff] 0.0
        %333 = vst [vmem:[#allocation2 + $0x48] sm:$0xff] 0.0
        %334 = vst [vmem:[#allocation2 + $0x50] sm:$0xff] 0.0
        %335 = vst [vmem:[#allocation2 + $0x58] sm:$0xff] 0.0
        %336 = vst [vmem:[#allocation2 + $0x60] sm:$0xff] 0.0
        %337 = vst [vmem:[#allocation2 + $0x68] sm:$0xff] 0.0
        %338 = vst [vmem:[#allocation2 + $0x70] sm:$0xff] 0.0
        %339 = vst [vmem:[#allocation2 + $0x78] sm:$0xff] 0.0
        %340 = vst [vmem:[#allocation2 + $0x80] sm:$0xff] 0.0
        %341 = vst [vmem:[#allocation2 + $0x88] sm:$0xff] 0.0
        %342 = vst [vmem:[#allocation2 + $0x90] sm:$0xff] 0.0
        %343 = vst [vmem:[#allocation2 + $0x98] sm:$0xff] 0.0
        %344 = vst [vmem:[#allocation2 + $0xa0] sm:$0xff] 0.0
        %345 = vst [vmem:[#allocation2 + $0xa8] sm:$0xff] 0.0
        %346 = vst [vmem:[#allocation2 + $0xb0] sm:$0xff] 0.0
        %347 = vst [vmem:[#allocation2 + $0xb8] sm:$0xff] 0.0
        %348 = vst [vmem:[#allocation2 + $0xc0] sm:$0xff] 0.0
        %349 = vst [vmem:[#allocation2 + $0xc8] sm:$0xff] 0.0
        %350 = vst [vmem:[#allocation2 + $0xd0] sm:$0xff] 0.0
        %351 = vst [vmem:[#allocation2 + $0xd8] sm:$0xff] 0.0
        %352 = vst [vmem:[#allocation2 + $0xe0] sm:$0xff] 0.0
        %353 = vst [vmem:[#allocation2 + $0xe8] sm:$0xff] 0.0
        %354 = vst [vmem:[#allocation2 + $0xf0] sm:$0xff] 0.0
        %355 = vst [vmem:[#allocation2 + $0xf8] sm:$0xff] 0.0
        %v356 = vld [vmem:[%s285] sm:$0xff]
        %v358 = vcombine.high %v356, %v356
        %360 = vst [vmem:[#allocation2] sm:$0xf] %v356
        %361 = vst [vmem:[#allocation2 + $0x8] sm:$0xf] %v358
        %362 = vst [vmem:[#allocation3] sm:$0xff] 0.0
        %363 = vst [vmem:[#allocation3 + $0x8] sm:$0xff] 0.0
        %364 = vst [vmem:[#allocation3 + $0x10] sm:$0x3] 0.0
        %365 = vst [vmem:[#allocation3 + $0x18] sm:$0xff] 0.0
        %366 = vst [vmem:[#allocation3 + $0x20] sm:$0xff] 0.0
        %367 = vst [vmem:[#allocation3 + $0x28] sm:$0x3] 0.0
        %368 = vst [vmem:[#allocation3 + $0x30] sm:$0xff] 0.0
        %369 = vst [vmem:[#allocation3 + $0x38] sm:$0xff] 0.0
        %370 = vst [vmem:[#allocation3 + $0x40] sm:$0x3] 0.0
        %371 = vst [vmem:[#allocation3 + $0x48] sm:$0xff] 0.0
        %372 = vst [vmem:[#allocation3 + $0x50] sm:$0xff] 0.0
        %373 = vst [vmem:[#allocation3 + $0x58] sm:$0x3] 0.0
        %374 = vst [vmem:[#allocation3 + $0x60] sm:$0xff] 0.0
        %375 = vst [vmem:[#allocation3 + $0x68] sm:$0xff] 0.0
        %376 = vst [vmem:[#allocation3 + $0x70] sm:$0x3] 0.0
        %377 = vst [vmem:[#allocation3 + $0x78] sm:$0xff] 0.0
        %378 = vst [vmem:[#allocation3 + $0x80] sm:$0xff] 0.0
        %379 = vst [vmem:[#allocation3 + $0x88] sm:$0x3] 0.0
        %380 = vst [vmem:[#allocation3 + $0x90] sm:$0xff] 0.0
        %381 = vst [vmem:[#allocation3 + $0x98] sm:$0xff] 0.0
        %382 = vst [vmem:[#allocation3 + $0xa0] sm:$0x3] 0.0
        %383 = vst [vmem:[#allocation3 + $0xa8] sm:$0xff] 0.0
        %384 = vst [vmem:[#allocation3 + $0xb0] sm:$0xff] 0.0
        %385 = vst [vmem:[#allocation3 + $0xb8] sm:$0x3] 0.0
        %386 = vst [vmem:[#allocation3 + $0xc0] sm:$0xff] 0.0
        %387 = vst [vmem:[#allocation3 + $0xc8] sm:$0xff] 0.0
        %388 = vst [vmem:[#allocation3 + $0xd0] sm:$0x3] 0.0
        %389 = vst [vmem:[#allocation3 + $0xd8] sm:$0xff] 0.0
        %390 = vst [vmem:[#allocation3 + $0xe0] sm:$0xff] 0.0
        %391 = vst [vmem:[#allocation3 + $0xe8] sm:$0x3] 0.0
        %392 = vst [vmem:[#allocation3 + $0xf0] sm:$0xff] 0.0
        %393 = vst [vmem:[#allocation3 + $0xf8] sm:$0xff] 0.0
        %394 = vst [vmem:[#allocation3 + $0x100] sm:$0x3] 0.0
        %395 = vst [vmem:[#allocation3 + $0x108] sm:$0xff] 0.0
        %396 = vst [vmem:[#allocation3 + $0x110] sm:$0xff] 0.0
        %397 = vst [vmem:[#allocation3 + $0x118] sm:$0x3] 0.0
        %398 = vst [vmem:[#allocation3 + $0x120] sm:$0xff] 0.0
        %399 = vst [vmem:[#allocation3 + $0x128] sm:$0xff] 0.0
        %400 = vst [vmem:[#allocation3 + $0x130] sm:$0x3] 0.0
        %401 = vst [vmem:[#allocation3 + $0x138] sm:$0xff] 0.0
        %402 = vst [vmem:[#allocation3 + $0x140] sm:$0xff] 0.0
        %403 = vst [vmem:[#allocation3 + $0x148] sm:$0x3] 0.0
        %404 = vst [vmem:[#allocation3 + $0x150] sm:$0xff] 0.0
        %405 = vst [vmem:[#allocation3 + $0x158] sm:$0xff] 0.0
        %406 = vst [vmem:[#allocation3 + $0x160] sm:$0x3] 0.0
        %407 = vst [vmem:[#allocation3 + $0x168] sm:$0xff] 0.0
        %408 = vst [vmem:[#allocation3 + $0x170] sm:$0xff] 0.0
        %409 = vst [vmem:[#allocation3 + $0x178] sm:$0x3] 0.0
        %410 = vst [vmem:[#allocation3 + $0x180] sm:$0xff] 0.0
        %411 = vst [vmem:[#allocation3 + $0x188] sm:$0xff] 0.0
        %412 = vst [vmem:[#allocation3 + $0x190] sm:$0x3] 0.0
        %413 = vst [vmem:[#allocation3 + $0x198] sm:$0xff] 0.0
        %414 = vst [vmem:[#allocation3 + $0x1a0] sm:$0xff] 0.0
        %415 = vst [vmem:[#allocation3 + $0x1a8] sm:$0x3] 0.0
        %v416 = vld [vmem:[#allocation2] sm:$0xff]
        %v417 = vld [vmem:[#allocation2 + $0x8] sm:$0xff]
        %v418 = vld [vmem:[#allocation2 + $0x10] sm:$0xff]
        %v419 = vld [vmem:[#allocation2 + $0x18] sm:$0xff]
        %v420 = vld [vmem:[#allocation2 + $0x20] sm:$0xff]
        %v421 = vld [vmem:[#allocation2 + $0x28] sm:$0xff]
        %v422 = vld [vmem:[#allocation2 + $0x30] sm:$0xff]
        %v423 = vld [vmem:[#allocation2 + $0x38] sm:$0xff]
        %v424 = vld [vmem:[#allocation2 + $0x40] sm:$0xff]
        %v425 = vld [vmem:[#allocation2 + $0x48] sm:$0xff]
        %v426 = vld [vmem:[#allocation2 + $0x50] sm:$0xff]
        %v427 = vld [vmem:[#allocation2 + $0x58] sm:$0xff]
        %v428 = vld [vmem:[#allocation2 + $0x60] sm:$0xff]
        %v429 = vld [vmem:[#allocation2 + $0x68] sm:$0xff]
        %v430 = vld [vmem:[#allocation2 + $0x70] sm:$0xff]
        %v431 = vld [vmem:[#allocation2 + $0x78] sm:$0xff]
        %v432 = vld [vmem:[#allocation2 + $0x80] sm:$0xff]
        %v433 = vld [vmem:[#allocation2 + $0x88] sm:$0xff]
        %v434 = vld [vmem:[#allocation2 + $0x90] sm:$0xff]
        %v435 = vld [vmem:[#allocation2 + $0x98] sm:$0xff]
        %v436 = vld [vmem:[#allocation2 + $0xa0] sm:$0xff]
        %v437 = vld [vmem:[#allocation2 + $0xa8] sm:$0xff]
        %v438 = vld [vmem:[#allocation2 + $0xb0] sm:$0xff]
        %v439 = vld [vmem:[#allocation2 + $0xb8] sm:$0xff]
        %v440 = vld [vmem:[#allocation2 + $0xc0] sm:$0xff]
        %v441 = vld [vmem:[#allocation2 + $0xc8] sm:$0xff]
        %v442 = vld [vmem:[#allocation2 + $0xd0] sm:$0xff]
        %v443 = vld [vmem:[#allocation2 + $0xd8] sm:$0xff]
        %v444 = vld [vmem:[#allocation2 + $0xe0] sm:$0xff]
        %v445 = vld [vmem:[#allocation2 + $0xe8] sm:$0xff]
        %v446 = vld [vmem:[#allocation2 + $0xf0] sm:$0xff]
        %v447 = vld [vmem:[#allocation2 + $0xf8] sm:$0xff]
        %448 = vxpose.xlu0.b32.start [1/16] %v416, 128
        %449 = vxpose.xlu0.b32.cont [2/16] %v418, 128
        %450 = vxpose.xlu0.b32.cont [3/16] %v420, 128
        %451 = vxpose.xlu0.b32.cont [4/16] %v422, 128
        %452 = vxpose.xlu0.b32.cont [5/16] %v424, 128
        %453 = vxpose.xlu0.b32.cont [6/16] %v426, 128
        %454 = vxpose.xlu0.b32.cont [7/16] %v428, 128
        %455 = vxpose.xlu0.b32.cont [8/16] %v430, 128
        %456 = vxpose.xlu0.b32.cont [9/16] %v432, 128
        %457 = vxpose.xlu0.b32.cont [10/16] %v434, 128
        %458 = vxpose.xlu0.b32.cont [11/16] %v436, 128
        %459 = vxpose.xlu0.b32.cont [12/16] %v438, 128
        %460 = vxpose.xlu0.b32.cont [13/16] %v440, 128
        %461 = vxpose.xlu0.b32.cont [14/16] %v442, 128
        %462 = vxpose.xlu0.b32.cont [15/16] %v444, 128
        %463 = vxpose.xlu0.b32.end [16/16] %v446, 128
        %v464 = vpop.trf.xlu0
        %v465 = vpop.trf.xlu0
        %v466 = vpop.trf.xlu0
        %v467 = vpop.trf.xlu0
        %v468 = vpop.trf.xlu0
        %v469 = vpop.trf.xlu0
        %v470 = vpop.trf.xlu0
        %v471 = vpop.trf.xlu0
        %v472 = vpop.trf.xlu0
        %v473 = vpop.trf.xlu0
        %v474 = vpop.trf.xlu0
        %v475 = vpop.trf.xlu0
        %v476 = vpop.trf.xlu0
        %v477 = vpop.trf.xlu0
        %v478 = vpop.trf.xlu0
        %v479 = vpop.trf.xlu0
        %480 = vxpose.xlu0.b32.start [1/16] %v417, 128
        %481 = vxpose.xlu0.b32.cont [2/16] %v419, 128
        %482 = vxpose.xlu0.b32.cont [3/16] %v421, 128
        %483 = vxpose.xlu0.b32.cont [4/16] %v423, 128
        %484 = vxpose.xlu0.b32.cont [5/16] %v425, 128
        %485 = vxpose.xlu0.b32.cont [6/16] %v427, 128
        %486 = vxpose.xlu0.b32.cont [7/16] %v429, 128
        %487 = vxpose.xlu0.b32.cont [8/16] %v431, 128
        %488 = vxpose.xlu0.b32.cont [9/16] %v433, 128
        %489 = vxpose.xlu0.b32.cont [10/16] %v435, 128
        %490 = vxpose.xlu0.b32.cont [11/16] %v437, 128
        %491 = vxpose.xlu0.b32.cont [12/16] %v439, 128
        %492 = vxpose.xlu0.b32.cont [13/16] %v441, 128
        %493 = vxpose.xlu0.b32.cont [14/16] %v443, 128
        %494 = vxpose.xlu0.b32.cont [15/16] %v445, 128
        %495 = vxpose.xlu0.b32.end [16/16] %v447, 128
        %v496 = vpop.trf.xlu0
        %v497 = vpop.trf.xlu0
        %v498 = vpop.trf.xlu0
        %v499 = vpop.trf.xlu0
        %v500 = vpop.trf.xlu0
        %v501 = vpop.trf.xlu0
        %v502 = vpop.trf.xlu0
        %v503 = vpop.trf.xlu0
        %v504 = vpop.trf.xlu0
        %v505 = vpop.trf.xlu0
        %v506 = vpop.trf.xlu0
        %v507 = vpop.trf.xlu0
        %v508 = vpop.trf.xlu0
        %v509 = vpop.trf.xlu0
        %v510 = vpop.trf.xlu0
        %v511 = vpop.trf.xlu0
        %s512 = scalar_lea.vmem [#allocation3], 24
        %513 = vst [vmem:[%s512 + $0x1] sm:$0xff] %v464
        %514 = vst [vmem:[%s512 + $0x9] sm:$0xff] %v465
        %515 = vst [vmem:[%s512 + $0x19] sm:$0xff] %v466
        %516 = vst [vmem:[%s512 + $0x21] sm:$0xff] %v467
        %517 = vst [vmem:[%s512 + $0x31] sm:$0xff] %v468
        %518 = vst [vmem:[%s512 + $0x39] sm:$0xff] %v469
        %519 = vst [vmem:[%s512 + $0x49] sm:$0xff] %v470
        %520 = vst [vmem:[%s512 + $0x51] sm:$0xff] %v471
        %521 = vst [vmem:[%s512 + $0x61] sm:$0xff] %v472
        %522 = vst [vmem:[%s512 + $0x69] sm:$0xff] %v473
        %523 = vst [vmem:[%s512 + $0x79] sm:$0xff] %v474
        %524 = vst [vmem:[%s512 + $0x81] sm:$0xff] %v475
        %525 = vst [vmem:[%s512 + $0x91] sm:$0xff] %v476
        %526 = vst [vmem:[%s512 + $0x99] sm:$0xff] %v477
        %527 = vst [vmem:[%s512 + $0xa9] sm:$0xff] %v478
        %528 = vst [vmem:[%s512 + $0xb1] sm:$0xff] %v479
        %529 = vst [vmem:[%s512 + $0xc1] sm:$0xff] %v496
        %530 = vst [vmem:[%s512 + $0xc9] sm:$0xff] %v497
        %531 = vst [vmem:[%s512 + $0xd9] sm:$0xff] %v498
        %532 = vst [vmem:[%s512 + $0xe1] sm:$0xff] %v499
        %533 = vst [vmem:[%s512 + $0xf1] sm:$0xff] %v500
        %534 = vst [vmem:[%s512 + $0xf9] sm:$0xff] %v501
        %535 = vst [vmem:[%s512 + $0x109] sm:$0xff] %v502
        %536 = vst [vmem:[%s512 + $0x111] sm:$0xff] %v503
        %537 = vst [vmem:[%s512 + $0x121] sm:$0xff] %v504
        %538 = vst [vmem:[%s512 + $0x129] sm:$0xff] %v505
        %539 = vst [vmem:[%s512 + $0x139] sm:$0xff] %v506
        %540 = vst [vmem:[%s512 + $0x141] sm:$0xff] %v507
        %541 = vst [vmem:[%s512 + $0x151] sm:$0xff] %v508
        %542 = vst [vmem:[%s512 + $0x159] sm:$0xff] %v509
        %543 = vst [vmem:[%s512 + $0x169] sm:$0xff] %v510
        %544 = vst [vmem:[%s512 + $0x171] sm:$0xff] %v511
        %v545 = vld [vmem:[#allocation3] sm:$0xff]
        %v546 = vld [vmem:[#allocation3 + $0x8] sm:$0xff]
        %v547 = vld [vmem:[#allocation3 + $0x18] sm:$0xff]
        %v548 = vld [vmem:[#allocation3 + $0x20] sm:$0xff]
        %v549 = vld [vmem:[#allocation3 + $0x30] sm:$0xff]
        %v550 = vld [vmem:[#allocation3 + $0x38] sm:$0xff]
        %v551 = vld [vmem:[#allocation3 + $0x48] sm:$0xff]
        %v552 = vld [vmem:[#allocation3 + $0x50] sm:$0xff]
        %v553 = vld [vmem:[#allocation3 + $0x60] sm:$0xff]
        %v554 = vld [vmem:[#allocation3 + $0x68] sm:$0xff]
        %v555 = vld [vmem:[#allocation3 + $0x78] sm:$0xff]
        %v556 = vld [vmem:[#allocation3 + $0x80] sm:$0xff]
        %v557 = vld [vmem:[#allocation3 + $0x90] sm:$0xff]
        %v558 = vld [vmem:[#allocation3 + $0x98] sm:$0xff]
        %v559 = vld [vmem:[#allocation3 + $0xa8] sm:$0xff]
        %v560 = vld [vmem:[#allocation3 + $0xb0] sm:$0xff]
        %v561 = vld [vmem:[#allocation3 + $0xc0] sm:$0xff]
        %v562 = vld [vmem:[#allocation3 + $0xc8] sm:$0xff]
        %v563 = vld [vmem:[#allocation3 + $0xd8] sm:$0xff]
        %v564 = vld [vmem:[#allocation3 + $0xe0] sm:$0xff]
        %v565 = vld [vmem:[#allocation3 + $0xf0] sm:$0xff]
        %v566 = vld [vmem:[#allocation3 + $0xf8] sm:$0xff]
        %v567 = vld [vmem:[#allocation3 + $0x108] sm:$0xff]
        %v568 = vld [vmem:[#allocation3 + $0x110] sm:$0xff]
        %v569 = vld [vmem:[#allocation3 + $0x120] sm:$0xff]
        %v570 = vld [vmem:[#allocation3 + $0x128] sm:$0xff]
        %v571 = vld [vmem:[#allocation3 + $0x138] sm:$0xff]
        %v572 = vld [vmem:[#allocation3 + $0x140] sm:$0xff]
        %v573 = vld [vmem:[#allocation3 + $0x150] sm:$0xff]
        %v574 = vld [vmem:[#allocation3 + $0x158] sm:$0xff]
        %v575 = vld [vmem:[#allocation3 + $0x168] sm:$0xff]
        %v576 = vld [vmem:[#allocation3 + $0x170] sm:$0xff]
        %v577 = vld [vmem:[#allocation3 + $0x180] sm:$0xff]
        %v578 = vld [vmem:[#allocation3 + $0x188] sm:$0xff]
        %v579 = vld [vmem:[#allocation3 + $0x198] sm:$0xff]
        %v580 = vld [vmem:[#allocation3 + $0x1a0] sm:$0xff]
        %581 = vst [vmem:[#allocation4] sm:$0xff] %v545
        %582 = vst [vmem:[#allocation4 + $0x18] sm:$0xff] %v546
        %583 = vst [vmem:[#allocation4 + $0x30] sm:$0xff] %v547
        %584 = vst [vmem:[#allocation4 + $0x48] sm:$0xff] %v548
        %585 = vst [vmem:[#allocation4 + $0x60] sm:$0xff] %v549
        %586 = vst [vmem:[#allocation4 + $0x78] sm:$0xff] %v550
        %587 = vst [vmem:[#allocation4 + $0x90] sm:$0xff] %v551
        %588 = vst [vmem:[#allocation4 + $0xa8] sm:$0xff] %v552
        %589 = vst [vmem:[#allocation4 + $0xc0] sm:$0xff] %v553
        %590 = vst [vmem:[#allocation4 + $0xd8] sm:$0xff] %v554
        %591 = vst [vmem:[#allocation4 + $0xf0] sm:$0xff] %v555
        %592 = vst [vmem:[#allocation4 + $0x108] sm:$0xff] %v556
        %593 = vst [vmem:[#allocation4 + $0x120] sm:$0xff] %v557
        %594 = vst [vmem:[#allocation4 + $0x138] sm:$0xff] %v558
        %595 = vst [vmem:[#allocation4 + $0x150] sm:$0xff] %v559
        %596 = vst [vmem:[#allocation4 + $0x168] sm:$0xff] %v560
        %597 = vst [vmem:[#allocation4 + $0x180] sm:$0xff] %v561
        %598 = vst [vmem:[#allocation4 + $0x198] sm:$0xff] %v562
        %599 = vst [vmem:[#allocation4 + $0x1b0] sm:$0xff] %v563
        %600 = vst [vmem:[#allocation4 + $0x1c8] sm:$0xff] %v564
        %601 = vst [vmem:[#allocation4 + $0x1e0] sm:$0xff] %v565
        %602 = vst [vmem:[#allocation4 + $0x1f8] sm:$0xff] %v566
        %603 = vst [vmem:[#allocation4 + $0x210] sm:$0xff] %v567
        %604 = vst [vmem:[#allocation4 + $0x228] sm:$0xff] %v568
        %605 = vst [vmem:[#allocation4 + $0x240] sm:$0xff] %v569
        %606 = vst [vmem:[#allocation4 + $0x258] sm:$0xff] %v570
        %607 = vst [vmem:[#allocation4 + $0x270] sm:$0xff] %v571
        %608 = vst [vmem:[#allocation4 + $0x288] sm:$0xff] %v572
        %609 = vst [vmem:[#allocation4 + $0x2a0] sm:$0xff] %v573
        %610 = vst [vmem:[#allocation4 + $0x2b8] sm:$0xff] %v574
        %611 = vst [vmem:[#allocation4 + $0x2d0] sm:$0xff] %v575
        %612 = vst [vmem:[#allocation4 + $0x2e8] sm:$0xff] %v576
        %613 = vst [vmem:[#allocation4 + $0x300] sm:$0xff] %v577
        %614 = vst [vmem:[#allocation4 + $0x318] sm:$0xff] %v578
        %615 = vst [vmem:[#allocation4 + $0x330] sm:$0xff] %v579
        %616 = vst [vmem:[#allocation4 + $0x348] sm:$0xff] %v580
        %v617 = vld [vmem:[#allocation3 + $0x1] sm:$0xff]
        %v618 = vld [vmem:[#allocation3 + $0x9] sm:$0xff]
        %v619 = vld [vmem:[#allocation3 + $0x19] sm:$0xff]
        %v620 = vld [vmem:[#allocation3 + $0x21] sm:$0xff]
        %v621 = vld [vmem:[#allocation3 + $0x31] sm:$0xff]
        %v622 = vld [vmem:[#allocation3 + $0x39] sm:$0xff]
        %v623 = vld [vmem:[#allocation3 + $0x49] sm:$0xff]
        %v624 = vld [vmem:[#allocation3 + $0x51] sm:$0xff]
        %v625 = vld [vmem:[#allocation3 + $0x61] sm:$0xff]
        %v626 = vld [vmem:[#allocation3 + $0x69] sm:$0xff]
        %v627 = vld [vmem:[#allocation3 + $0x79] sm:$0xff]
        %v628 = vld [vmem:[#allocation3 + $0x81] sm:$0xff]
        %v629 = vld [vmem:[#allocation3 + $0x91] sm:$0xff]
        %v630 = vld [vmem:[#allocation3 + $0x99] sm:$0xff]
        %v631 = vld [vmem:[#allocation3 + $0xa9] sm:$0xff]
        %v632 = vld [vmem:[#allocation3 + $0xb1] sm:$0xff]
        %v633 = vld [vmem:[#allocation3 + $0xc1] sm:$0xff]
        %v634 = vld [vmem:[#allocation3 + $0xc9] sm:$0xff]
        %v635 = vld [vmem:[#allocation3 + $0xd9] sm:$0xff]
        %v636 = vld [vmem:[#allocation3 + $0xe1] sm:$0xff]
        %v637 = vld [vmem:[#allocation3 + $0xf1] sm:$0xff]
        %v638 = vld [vmem:[#allocation3 + $0xf9] sm:$0xff]
        %v639 = vld [vmem:[#allocation3 + $0x109] sm:$0xff]
        %v640 = vld [vmem:[#allocation3 + $0x111] sm:$0xff]
        %v641 = vld [vmem:[#allocation3 + $0x121] sm:$0xff]
        %v642 = vld [vmem:[#allocation3 + $0x129] sm:$0xff]
        %v643 = vld [vmem:[#allocation3 + $0x139] sm:$0xff]
        %v644 = vld [vmem:[#allocation3 + $0x141] sm:$0xff]
        %v645 = vld [vmem:[#allocation3 + $0x151] sm:$0xff]
        %v646 = vld [vmem:[#allocation3 + $0x159] sm:$0xff]
        %v647 = vld [vmem:[#allocation3 + $0x169] sm:$0xff]
        %v648 = vld [vmem:[#allocation3 + $0x171] sm:$0xff]
        %v649 = vld [vmem:[#allocation3 + $0x181] sm:$0xff]
        %v650 = vld [vmem:[#allocation3 + $0x189] sm:$0xff]
        %v651 = vld [vmem:[#allocation3 + $0x199] sm:$0xff]
        %v652 = vld [vmem:[#allocation3 + $0x1a1] sm:$0xff]
        %653 = vst [vmem:[#allocation4 + $0x8] sm:$0xff] %v617
        %654 = vst [vmem:[#allocation4 + $0x20] sm:$0xff] %v618
        %655 = vst [vmem:[#allocation4 + $0x38] sm:$0xff] %v619
        %656 = vst [vmem:[#allocation4 + $0x50] sm:$0xff] %v620
        %657 = vst [vmem:[#allocation4 + $0x68] sm:$0xff] %v621
        %658 = vst [vmem:[#allocation4 + $0x80] sm:$0xff] %v622
        %659 = vst [vmem:[#allocation4 + $0x98] sm:$0xff] %v623
        %660 = vst [vmem:[#allocation4 + $0xb0] sm:$0xff] %v624
        %661 = vst [vmem:[#allocation4 + $0xc8] sm:$0xff] %v625
        %662 = vst [vmem:[#allocation4 + $0xe0] sm:$0xff] %v626
        %663 = vst [vmem:[#allocation4 + $0xf8] sm:$0xff] %v627
        %664 = vst [vmem:[#allocation4 + $0x110] sm:$0xff] %v628
        %665 = vst [vmem:[#allocation4 + $0x128] sm:$0xff] %v629
        %666 = vst [vmem:[#allocation4 + $0x140] sm:$0xff] %v630
        %667 = vst [vmem:[#allocation4 + $0x158] sm:$0xff] %v631
        %668 = vst [vmem:[#allocation4 + $0x170] sm:$0xff] %v632
        %669 = vst [vmem:[#allocation4 + $0x188] sm:$0xff] %v633
        %670 = vst [vmem:[#allocation4 + $0x1a0] sm:$0xff] %v634
        %671 = vst [vmem:[#allocation4 + $0x1b8] sm:$0xff] %v635
        %672 = vst [vmem:[#allocation4 + $0x1d0] sm:$0xff] %v636
        %673 = vst [vmem:[#allocation4 + $0x1e8] sm:$0xff] %v637
        %674 = vst [vmem:[#allocation4 + $0x200] sm:$0xff] %v638
        %675 = vst [vmem:[#allocation4 + $0x218] sm:$0xff] %v639
        %676 = vst [vmem:[#allocation4 + $0x230] sm:$0xff] %v640
        %677 = vst [vmem:[#allocation4 + $0x248] sm:$0xff] %v641
        %678 = vst [vmem:[#allocation4 + $0x260] sm:$0xff] %v642
        %679 = vst [vmem:[#allocation4 + $0x278] sm:$0xff] %v643
        %680 = vst [vmem:[#allocation4 + $0x290] sm:$0xff] %v644
        %681 = vst [vmem:[#allocation4 + $0x2a8] sm:$0xff] %v645
        %682 = vst [vmem:[#allocation4 + $0x2c0] sm:$0xff] %v646
        %683 = vst [vmem:[#allocation4 + $0x2d8] sm:$0xff] %v647
        %684 = vst [vmem:[#allocation4 + $0x2f0] sm:$0xff] %v648
        %685 = vst [vmem:[#allocation4 + $0x308] sm:$0xff] %v649
        %686 = vst [vmem:[#allocation4 + $0x320] sm:$0xff] %v650
        %687 = vst [vmem:[#allocation4 + $0x338] sm:$0xff] %v651
        %688 = vst [vmem:[#allocation4 + $0x350] sm:$0xff] %v652
        %v689 = vld [vmem:[#allocation3 + $0x2] sm:$0xff]
        %v690 = vld [vmem:[#allocation3 + $0xa] sm:$0xff]
        %v691 = vld [vmem:[#allocation3 + $0x1a] sm:$0xff]
        %v692 = vld [vmem:[#allocation3 + $0x22] sm:$0xff]
        %v693 = vld [vmem:[#allocation3 + $0x32] sm:$0xff]
        %v694 = vld [vmem:[#allocation3 + $0x3a] sm:$0xff]
        %v695 = vld [vmem:[#allocation3 + $0x4a] sm:$0xff]
        %v696 = vld [vmem:[#allocation3 + $0x52] sm:$0xff]
        %v697 = vld [vmem:[#allocation3 + $0x62] sm:$0xff]
        %v698 = vld [vmem:[#allocation3 + $0x6a] sm:$0xff]
        %v699 = vld [vmem:[#allocation3 + $0x7a] sm:$0xff]
        %v700 = vld [vmem:[#allocation3 + $0x82] sm:$0xff]
        %v701 = vld [vmem:[#allocation3 + $0x92] sm:$0xff]
        %v702 = vld [vmem:[#allocation3 + $0x9a] sm:$0xff]
        %v703 = vld [vmem:[#allocation3 + $0xaa] sm:$0xff]
        %v704 = vld [vmem:[#allocation3 + $0xb2] sm:$0xff]
        %v705 = vld [vmem:[#allocation3 + $0xc2] sm:$0xff]
        %v706 = vld [vmem:[#allocation3 + $0xca] sm:$0xff]
        %v707 = vld [vmem:[#allocation3 + $0xda] sm:$0xff]
        %v708 = vld [vmem:[#allocation3 + $0xe2] sm:$0xff]
        %v709 = vld [vmem:[#allocation3 + $0xf2] sm:$0xff]
        %v710 = vld [vmem:[#allocation3 + $0xfa] sm:$0xff]
        %v711 = vld [vmem:[#allocation3 + $0x10a] sm:$0xff]
        %v712 = vld [vmem:[#allocation3 + $0x112] sm:$0xff]
        %v713 = vld [vmem:[#allocation3 + $0x122] sm:$0xff]
        %v714 = vld [vmem:[#allocation3 + $0x12a] sm:$0xff]
        %v715 = vld [vmem:[#allocation3 + $0x13a] sm:$0xff]
        %v716 = vld [vmem:[#allocation3 + $0x142] sm:$0xff]
        %v717 = vld [vmem:[#allocation3 + $0x152] sm:$0xff]
        %v718 = vld [vmem:[#allocation3 + $0x15a] sm:$0xff]
        %v719 = vld [vmem:[#allocation3 + $0x16a] sm:$0xff]
        %v720 = vld [vmem:[#allocation3 + $0x172] sm:$0xff]
        %v721 = vld [vmem:[#allocation3 + $0x182] sm:$0xff]
        %v722 = vld [vmem:[#allocation3 + $0x18a] sm:$0xff]
        %v723 = vld [vmem:[#allocation3 + $0x19a] sm:$0xff]
        %v724 = vld [vmem:[#allocation3 + $0x1a2] sm:$0xff]
        %725 = vst [vmem:[#allocation4 + $0x10] sm:$0xff] %v689
        %726 = vst [vmem:[#allocation4 + $0x28] sm:$0xff] %v690
        %727 = vst [vmem:[#allocation4 + $0x40] sm:$0xff] %v691
        %728 = vst [vmem:[#allocation4 + $0x58] sm:$0xff] %v692
        %729 = vst [vmem:[#allocation4 + $0x70] sm:$0xff] %v693
        %730 = vst [vmem:[#allocation4 + $0x88] sm:$0xff] %v694
        %731 = vst [vmem:[#allocation4 + $0xa0] sm:$0xff] %v695
        %732 = vst [vmem:[#allocation4 + $0xb8] sm:$0xff] %v696
        %733 = vst [vmem:[#allocation4 + $0xd0] sm:$0xff] %v697
        %734 = vst [vmem:[#allocation4 + $0xe8] sm:$0xff] %v698
        %735 = vst [vmem:[#allocation4 + $0x100] sm:$0xff] %v699
        %736 = vst [vmem:[#allocation4 + $0x118] sm:$0xff] %v700
        %737 = vst [vmem:[#allocation4 + $0x130] sm:$0xff] %v701
        %738 = vst [vmem:[#allocation4 + $0x148] sm:$0xff] %v702
        %739 = vst [vmem:[#allocation4 + $0x160] sm:$0xff] %v703
        %740 = vst [vmem:[#allocation4 + $0x178] sm:$0xff] %v704
        %741 = vst [vmem:[#allocation4 + $0x190] sm:$0xff] %v705
        %742 = vst [vmem:[#allocation4 + $0x1a8] sm:$0xff] %v706
        %743 = vst [vmem:[#allocation4 + $0x1c0] sm:$0xff] %v707
        %744 = vst [vmem:[#allocation4 + $0x1d8] sm:$0xff] %v708
        %745 = vst [vmem:[#allocation4 + $0x1f0] sm:$0xff] %v709
        %746 = vst [vmem:[#allocation4 + $0x208] sm:$0xff] %v710
        %747 = vst [vmem:[#allocation4 + $0x220] sm:$0xff] %v711
        %748 = vst [vmem:[#allocation4 + $0x238] sm:$0xff] %v712
        %749 = vst [vmem:[#allocation4 + $0x250] sm:$0xff] %v713
        %750 = vst [vmem:[#allocation4 + $0x268] sm:$0xff] %v714
        %751 = vst [vmem:[#allocation4 + $0x280] sm:$0xff] %v715
        %752 = vst [vmem:[#allocation4 + $0x298] sm:$0xff] %v716
        %753 = vst [vmem:[#allocation4 + $0x2b0] sm:$0xff] %v717
        %754 = vst [vmem:[#allocation4 + $0x2c8] sm:$0xff] %v718
        %755 = vst [vmem:[#allocation4 + $0x2e0] sm:$0xff] %v719
        %756 = vst [vmem:[#allocation4 + $0x2f8] sm:$0xff] %v720
        %757 = vst [vmem:[#allocation4 + $0x310] sm:$0xff] %v721
        %758 = vst [vmem:[#allocation4 + $0x328] sm:$0xff] %v722
        %759 = vst [vmem:[#allocation4 + $0x340] sm:$0xff] %v723
        %760 = vst [vmem:[#allocation4 + $0x358] sm:$0xff] %v724
        %v761 = vld [vmem:[#allocation4] sm:$0xff]
        %v762 = vld [vmem:[#allocation4 + $0x8] sm:$0xff]
        %v763 = vld [vmem:[#allocation4 + $0x10] sm:$0xff]
        %v764 = vld [vmem:[#allocation4 + $0x18] sm:$0xff]
        %v765 = vld [vmem:[#allocation4 + $0x20] sm:$0xff]
        %v766 = vld [vmem:[#allocation4 + $0x28] sm:$0xff]
        %v767 = vld [vmem:[#allocation4 + $0x30] sm:$0xff]
        %v768 = vld [vmem:[#allocation4 + $0x38] sm:$0xff]
        %v769 = vld [vmem:[#allocation4 + $0x40] sm:$0xff]
        %v770 = vld [vmem:[#allocation4 + $0x48] sm:$0xff]
        %v771 = vld [vmem:[#allocation4 + $0x50] sm:$0xff]
        %v772 = vld [vmem:[#allocation4 + $0x58] sm:$0xff]
        %v773 = vld [vmem:[#allocation4 + $0x60] sm:$0xff]
        %v774 = vld [vmem:[#allocation4 + $0x68] sm:$0xff]
        %v775 = vld [vmem:[#allocation4 + $0x70] sm:$0xff]
        %v776 = vld [vmem:[#allocation4 + $0x78] sm:$0xff]
        %v777 = vld [vmem:[#allocation4 + $0x80] sm:$0xff]
        %v778 = vld [vmem:[#allocation4 + $0x88] sm:$0xff]
        %v779 = vld [vmem:[#allocation4 + $0x90] sm:$0xff]
        %v780 = vld [vmem:[#allocation4 + $0x98] sm:$0xff]
        %v781 = vld [vmem:[#allocation4 + $0xa0] sm:$0xff]
        %v782 = vld [vmem:[#allocation4 + $0xa8] sm:$0xff]
        %v783 = vld [vmem:[#allocation4 + $0xb0] sm:$0xff]
        %v784 = vld [vmem:[#allocation4 + $0xb8] sm:$0xff]
        %v785 = vld [vmem:[#allocation4 + $0xc0] sm:$0xff]
        %v786 = vld [vmem:[#allocation4 + $0xc8] sm:$0xff]
        %v787 = vld [vmem:[#allocation4 + $0xd0] sm:$0xff]
        %v788 = vld [vmem:[#allocation4 + $0xd8] sm:$0xff]
        %v789 = vld [vmem:[#allocation4 + $0xe0] sm:$0xff]
        %v790 = vld [vmem:[#allocation4 + $0xe8] sm:$0xff]
        %v791 = vld [vmem:[#allocation4 + $0xf0] sm:$0xff]
        %v792 = vld [vmem:[#allocation4 + $0xf8] sm:$0xff]
        %v793 = vld [vmem:[#allocation4 + $0x100] sm:$0xff]
        %v794 = vld [vmem:[#allocation4 + $0x108] sm:$0xff]
        %v795 = vld [vmem:[#allocation4 + $0x110] sm:$0xff]
        %v796 = vld [vmem:[#allocation4 + $0x118] sm:$0xff]
        %v797 = vld [vmem:[#allocation4 + $0x120] sm:$0xff]
        %v798 = vld [vmem:[#allocation4 + $0x128] sm:$0xff]
        %v799 = vld [vmem:[#allocation4 + $0x130] sm:$0xff]
        %v800 = vld [vmem:[#allocation4 + $0x138] sm:$0xff]
        %v801 = vld [vmem:[#allocation4 + $0x140] sm:$0xff]
        %v802 = vld [vmem:[#allocation4 + $0x148] sm:$0xff]
        %v803 = vld [vmem:[#allocation4 + $0x150] sm:$0xff]
        %v804 = vld [vmem:[#allocation4 + $0x158] sm:$0xff]
        %v805 = vld [vmem:[#allocation4 + $0x160] sm:$0xff]
        %v806 = vld [vmem:[#allocation4 + $0x168] sm:$0xff]
        %v807 = vld [vmem:[#allocation4 + $0x170] sm:$0xff]
        %v808 = vld [vmem:[#allocation4 + $0x178] sm:$0xff]
        %v809 = vld [vmem:[#allocation4 + $0x180] sm:$0xff]
        %v810 = vld [vmem:[#allocation4 + $0x188] sm:$0xff]
        %v811 = vld [vmem:[#allocation4 + $0x190] sm:$0xff]
        %v812 = vld [vmem:[#allocation4 + $0x198] sm:$0xff]
        %v813 = vld [vmem:[#allocation4 + $0x1a0] sm:$0xff]
        %v814 = vld [vmem:[#allocation4 + $0x1a8] sm:$0xff]
        %v815 = vld [vmem:[#allocation4 + $0x1b0] sm:$0xff]
        %v816 = vld [vmem:[#allocation4 + $0x1b8] sm:$0xff]
        %v817 = vld [vmem:[#allocation4 + $0x1c0] sm:$0xff]
        %v818 = vld [vmem:[#allocation4 + $0x1c8] sm:$0xff]
        %v819 = vld [vmem:[#allocation4 + $0x1d0] sm:$0xff]
        %v820 = vld [vmem:[#allocation4 + $0x1d8] sm:$0xff]
        %v821 = vld [vmem:[#allocation4 + $0x1e0] sm:$0xff]
        %v822 = vld [vmem:[#allocation4 + $0x1e8] sm:$0xff]
        %v823 = vld [vmem:[#allocation4 + $0x1f0] sm:$0xff]
        %v824 = vld [vmem:[#allocation4 + $0x1f8] sm:$0xff]
        %v825 = vld [vmem:[#allocation4 + $0x200] sm:$0xff]
        %v826 = vld [vmem:[#allocation4 + $0x208] sm:$0xff]
        %v827 = vld [vmem:[#allocation4 + $0x210] sm:$0xff]
        %v828 = vld [vmem:[#allocation4 + $0x218] sm:$0xff]
        %v829 = vld [vmem:[#allocation4 + $0x220] sm:$0xff]
        %v830 = vld [vmem:[#allocation4 + $0x228] sm:$0xff]
        %v831 = vld [vmem:[#allocation4 + $0x230] sm:$0xff]
        %v832 = vld [vmem:[#allocation4 + $0x238] sm:$0xff]
        %v833 = vld [vmem:[#allocation4 + $0x240] sm:$0xff]
        %v834 = vld [vmem:[#allocation4 + $0x248] sm:$0xff]
        %v835 = vld [vmem:[#allocation4 + $0x250] sm:$0xff]
        %v836 = vld [vmem:[#allocation4 + $0x258] sm:$0xff]
        %v837 = vld [vmem:[#allocation4 + $0x260] sm:$0xff]
        %v838 = vld [vmem:[#allocation4 + $0x268] sm:$0xff]
        %v839 = vld [vmem:[#allocation4 + $0x270] sm:$0xff]
        %v840 = vld [vmem:[#allocation4 + $0x278] sm:$0xff]
        %v841 = vld [vmem:[#allocation4 + $0x280] sm:$0xff]
        %v842 = vld [vmem:[#allocation4 + $0x288] sm:$0xff]
        %v843 = vld [vmem:[#allocation4 + $0x290] sm:$0xff]
        %v844 = vld [vmem:[#allocation4 + $0x298] sm:$0xff]
        %v845 = vld [vmem:[#allocation4 + $0x2a0] sm:$0xff]
        %v846 = vld [vmem:[#allocation4 + $0x2a8] sm:$0xff]
        %v847 = vld [vmem:[#allocation4 + $0x2b0] sm:$0xff]
        %v848 = vld [vmem:[#allocation4 + $0x2b8] sm:$0xff]
        %v849 = vld [vmem:[#allocation4 + $0x2c0] sm:$0xff]
        %v850 = vld [vmem:[#allocation4 + $0x2c8] sm:$0xff]
        %v851 = vld [vmem:[#allocation4 + $0x2d0] sm:$0xff]
        %v852 = vld [vmem:[#allocation4 + $0x2d8] sm:$0xff]
        %v853 = vld [vmem:[#allocation4 + $0x2e0] sm:$0xff]
        %v854 = vld [vmem:[#allocation4 + $0x2e8] sm:$0xff]
        %v855 = vld [vmem:[#allocation4 + $0x2f0] sm:$0xff]
        %v856 = vld [vmem:[#allocation4 + $0x2f8] sm:$0xff]
        %v857 = vld [vmem:[#allocation9] sm:$0xff]
        %v858 = vld [vmem:[#allocation9 + $0x8] sm:$0xff]
        %v859 = vld [vmem:[#allocation9 + $0x10] sm:$0xff]
        %v860 = vld [vmem:[#allocation9 + $0x18] sm:$0xff]
        %v861 = vld [vmem:[#allocation9 + $0x20] sm:$0xff]
        %v862 = vld [vmem:[#allocation9 + $0x28] sm:$0xff]
        %v863 = vld [vmem:[#allocation9 + $0x30] sm:$0xff]
        %v864 = vld [vmem:[#allocation9 + $0x38] sm:$0xff]
        %v865 = vld [vmem:[#allocation9 + $0x40] sm:$0xff]
        %v866 = vld [vmem:[#allocation9 + $0x48] sm:$0xff]
        %v867 = vld [vmem:[#allocation9 + $0x50] sm:$0xff]
        %v868 = vld [vmem:[#allocation9 + $0x58] sm:$0xff]
        %v869 = vld [vmem:[#allocation9 + $0x60] sm:$0xff]
        %v870 = vld [vmem:[#allocation9 + $0x68] sm:$0xff]
        %v871 = vld [vmem:[#allocation9 + $0x70] sm:$0xff]
        %v872 = vld [vmem:[#allocation9 + $0x78] sm:$0xff]
        %v873 = vld [vmem:[#allocation9 + $0x80] sm:$0xff]
        %v874 = vld [vmem:[#allocation9 + $0x88] sm:$0xff]
        %v875 = vld [vmem:[#allocation9 + $0x90] sm:$0xff]
        %v876 = vld [vmem:[#allocation9 + $0x98] sm:$0xff]
        %v877 = vld [vmem:[#allocation9 + $0xa0] sm:$0xff]
        %v878 = vld [vmem:[#allocation9 + $0xa8] sm:$0xff]
        %v879 = vld [vmem:[#allocation9 + $0xb0] sm:$0xff]
        %v880 = vld [vmem:[#allocation9 + $0xb8] sm:$0xff]
        %v881 = vld [vmem:[#allocation9 + $0xc0] sm:$0xff]
        %v882 = vld [vmem:[#allocation9 + $0xc8] sm:$0xff]
        %v883 = vld [vmem:[#allocation9 + $0xd0] sm:$0xff]
        %v884 = vld [vmem:[#allocation9 + $0xd8] sm:$0xff]
        %v885 = vld [vmem:[#allocation9 + $0xe0] sm:$0xff]
        %v886 = vld [vmem:[#allocation9 + $0xe8] sm:$0xff]
        %v887 = vld [vmem:[#allocation9 + $0xf0] sm:$0xff]
        %v888 = vld [vmem:[#allocation9 + $0xf8] sm:$0xff]
        %v889 = vld [vmem:[#allocation9 + $0x100] sm:$0xff]
        %v890 = vld [vmem:[#allocation9 + $0x108] sm:$0xff]
        %v891 = vld [vmem:[#allocation9 + $0x110] sm:$0xff]
        %v892 = vld [vmem:[#allocation9 + $0x118] sm:$0xff]
        %v893 = vld [vmem:[#allocation9 + $0x120] sm:$0xff]
        %v894 = vld [vmem:[#allocation9 + $0x128] sm:$0xff]
        %v895 = vld [vmem:[#allocation9 + $0x130] sm:$0xff]
        %v896 = vld [vmem:[#allocation9 + $0x138] sm:$0xff]
        %v897 = vld [vmem:[#allocation9 + $0x140] sm:$0xff]
        %v898 = vld [vmem:[#allocation9 + $0x148] sm:$0xff]
        %v899 = vld [vmem:[#allocation9 + $0x150] sm:$0xff]
        %v900 = vld [vmem:[#allocation9 + $0x158] sm:$0xff]
        %v901 = vld [vmem:[#allocation9 + $0x160] sm:$0xff]
        %v902 = vld [vmem:[#allocation9 + $0x168] sm:$0xff]
        %v903 = vld [vmem:[#allocation9 + $0x170] sm:$0xff]
        %v904 = vld [vmem:[#allocation9 + $0x178] sm:$0xff]
        %905 = vmatprep.subr.mxu0 0.0
        %906 = vmatpush1.msra.mxu0 %v857
        %907 = vmatprep.subr.mxu0 0.0
        %908 = vmatpush1.msra.mxu0 %v858
        %909 = vmatprep.subr.mxu0 0.0
        %910 = vmatpush1.msra.mxu0 %v859
        %911 = vmatprep.subr.mxu0 0.0
        %912 = vmatpush1.msra.mxu0 %v860
        %913 = vmatprep.subr.mxu0 0.0
        %914 = vmatpush1.msra.mxu0 %v861
        %915 = vmatprep.subr.mxu0 0.0
        %916 = vmatpush1.msra.mxu0 %v862
        %917 = vmatprep.subr.mxu0 0.0
        %918 = vmatpush1.msra.mxu0 %v863
        %919 = vmatprep.subr.mxu0 0.0
        %920 = vmatpush1.msra.mxu0 %v864
        %921 = vmatprep.subr.mxu0 0.0
        %922 = vmatpush1.msra.mxu0 %v865
        %923 = vmatprep.subr.mxu0 0.0
        %924 = vmatpush1.msra.mxu0 %v866
        %925 = vmatprep.subr.mxu0 0.0
        %926 = vmatpush1.msra.mxu0 %v867
        %927 = vmatprep.subr.mxu0 0.0
        %928 = vmatpush1.msra.mxu0 %v868
        %929 = vmatprep.subr.mxu0 0.0
        %930 = vmatpush1.msra.mxu0 %v869
        %931 = vmatprep.subr.mxu0 0.0
        %932 = vmatpush1.msra.mxu0 %v870
        %933 = vmatprep.subr.mxu0 0.0
        %934 = vmatpush1.msra.mxu0 %v871
        %935 = vmatprep.subr.mxu0 0.0
        %936 = vmatpush1.msra.mxu0 %v872
        %937 = vmatprep.subr.mxu0 0.0
        %938 = vmatpush1.msra.mxu0 %v873
        %939 = vmatprep.subr.mxu0 0.0
        %940 = vmatpush1.msra.mxu0 %v874
        %941 = vmatprep.subr.mxu0 0.0
        %942 = vmatpush1.msra.mxu0 %v875
        %943 = vmatprep.subr.mxu0 0.0
        %944 = vmatpush1.msra.mxu0 %v876
        %945 = vmatprep.subr.mxu0 0.0
        %946 = vmatpush1.msra.mxu0 %v877
        %947 = vmatprep.subr.mxu0 0.0
        %948 = vmatpush1.msra.mxu0 %v878
        %949 = vmatprep.subr.mxu0 0.0
        %950 = vmatpush1.msra.mxu0 %v879
        %951 = vmatprep.subr.mxu0 0.0
        %952 = vmatpush1.msra.mxu0 %v880
        %953 = vmatprep.subr.mxu0 0.0
        %954 = vmatpush1.msra.mxu0 %v881
        %955 = vmatprep.subr.mxu0 0.0
        %956 = vmatpush1.msra.mxu0 %v882
        %957 = vmatprep.subr.mxu0 0.0
        %958 = vmatpush1.msra.mxu0 %v883
        %959 = vmatprep.subr.mxu0 0.0
        %960 = vmatpush1.msra.mxu0 %v884
        %961 = vmatprep.subr.mxu0 0.0
        %962 = vmatpush1.msra.mxu0 %v885
        %963 = vmatprep.subr.mxu0 0.0
        %964 = vmatpush1.msra.mxu0 %v886
        %965 = vmatprep.subr.mxu0 0.0
        %966 = vmatpush1.msra.mxu0 %v887
        %967 = vmatprep.subr.mxu0 0.0
        %968 = vmatpush1.msra.mxu0 %v888
        %969 = vmatprep.mubr.f32.mxu0 %v762
        %970 = vmatmul.mubr.f32.gmra.mrb[0].mxu0 %v761
        %v971 = vpop.f32.mrb[0].mxu0
        %v972 = vadd.f32 0.0, %v971
        %v973 = vpop.f32.mrb[0].mxu0
        %974 = vmatprep.mubr.f32.mxu0 %v765
        %975 = vmatmul.mubr.f32.gmra.mrb[0].mxu0 %v764
        %v976 = vpop.f32.mrb[0].mxu0
        %v977 = vadd.f32 0.0, %v976
        %v978 = vpop.f32.mrb[0].mxu0
        %979 = vmatprep.mubr.f32.mxu0 %v768
        %980 = vmatmul.mubr.f32.gmra.mrb[0].mxu0 %v767
        %v981 = vpop.f32.mrb[0].mxu0
        %v982 = vadd.f32 0.0, %v981
        %v983 = vpop.f32.mrb[0].mxu0
        %984 = vmatprep.mubr.f32.mxu0 %v771
        %985 = vmatmul.mubr.f32.gmra.mrb[0].mxu0 %v770
        %v986 = vpop.f32.mrb[0].mxu0
        %v987 = vadd.f32 0.0, %v986
        %v988 = vpop.f32.mrb[0].mxu0
        %989 = vmatprep.mubr.f32.mxu0 %v774
        %990 = vmatmul.mubr.f32.gmra.mrb[0].mxu0 %v773
        %v991 = vpop.f32.mrb[0].mxu0
        %v992 = vadd.f32 0.0, %v991
        %v993 = vpop.f32.mrb[0].mxu0
        %994 = vmatprep.mubr.f32.mxu0 %v777
        %995 = vmatmul.mubr.f32.gmra.mrb[0].mxu0 %v776
        %v996 = vpop.f32.mrb[0].mxu0
        %v997 = vadd.f32 0.0, %v996
        %v998 = vpop.f32.mrb[0].mxu0
        %999 = vmatprep.mubr.f32.mxu0 %v780
        %1000 = vmatmul.mubr.f32.gmra.mrb[0].mxu0 %v779
        %v1001 = vpop.f32.mrb[0].mxu0
        %v1002 = vadd.f32 0.0, %v1001
        %v1003 = vpop.f32.mrb[0].mxu0
        %1004 = vmatprep.mubr.f32.mxu0 %v783
        %1005 = vmatmul.mubr.f32.gmra.mrb[0].mxu0 %v782
        %v1006 = vpop.f32.mrb[0].mxu0
        %v1007 = vadd.f32 0.0, %v1006
        %v1008 = vpop.f32.mrb[0].mxu0
        %1009 = vmatprep.mubr.f32.mxu0 %v786
        %1010 = vmatmul.mubr.f32.gmra.mrb[0].mxu0 %v785
        %v1011 = vpop.f32.mrb[0].mxu0
        %v1012 = vadd.f32 0.0, %v1011
        %v1013 = vpop.f32.mrb[0].mxu0
        %1014 = vmatprep.mubr.f32.mxu0 %v789
        %1015 = vmatmul.mubr.f32.gmra.mrb[0].mxu0 %v788
        %v1016 = vpop.f32.mrb[0].mxu0
        %v1017 = vadd.f32 0.0, %v1016
        %v1018 = vpop.f32.mrb[0].mxu0
        %1019 = vmatprep.mubr.f32.mxu0 %v792
        %1020 = vmatmul.mubr.f32.gmra.mrb[0].mxu0 %v791
        %v1021 = vpop.f32.mrb[0].mxu0
        %v1022 = vadd.f32 0.0, %v1021
        %v1023 = vpop.f32.mrb[0].mxu0
        %1024 = vmatprep.mubr.f32.mxu0 %v795
        %1025 = vmatmul.mubr.f32.gmra.mrb[0].mxu0 %v794
        %v1026 = vpop.f32.mrb[0].mxu0
        %v1027 = vadd.f32 0.0, %v1026
        %v1028 = vpop.f32.mrb[0].mxu0
        %1029 = vmatprep.mubr.f32.mxu0 %v798
        %1030 = vmatmul.mubr.f32.gmra.mrb[0].mxu0 %v797
        %v1031 = vpop.f32.mrb[0].mxu0
        %v1032 = vadd.f32 0.0, %v1031
        %v1033 = vpop.f32.mrb[0].mxu0
        %1034 = vmatprep.mubr.f32.mxu0 %v801
        %1035 = vmatmul.mubr.f32.gmra.mrb[0].mxu0 %v800
        %v1036 = vpop.f32.mrb[0].mxu0
        %v1037 = vadd.f32 0.0, %v1036
        %v1038 = vpop.f32.mrb[0].mxu0
        %1039 = vmatprep.mubr.f32.mxu0 %v804
        %1040 = vmatmul.mubr.f32.gmra.mrb[0].mxu0 %v803
        %v1041 = vpop.f32.mrb[0].mxu0
        %v1042 = vadd.f32 0.0, %v1041
        %v1043 = vpop.f32.mrb[0].mxu0
        %1044 = vmatprep.mubr.f32.mxu0 %v807
        %1045 = vmatmul.mubr.f32.gmra.mrb[0].mxu0 %v806
        %v1046 = vpop.f32.mrb[0].mxu0
        %v1047 = vadd.f32 0.0, %v1046
        %v1048 = vpop.f32.mrb[0].mxu0
        %1049 = vmatprep.mubr.f32.mxu0 %v810
        %1050 = vmatmul.mubr.f32.gmra.mrb[0].mxu0 %v809
        %v1051 = vpop.f32.mrb[0].mxu0
        %v1052 = vadd.f32 0.0, %v1051
        %v1053 = vpop.f32.mrb[0].mxu0
        %1054 = vmatprep.mubr.f32.mxu0 %v813
        %1055 = vmatmul.mubr.f32.gmra.mrb[0].mxu0 %v812
        %v1056 = vpop.f32.mrb[0].mxu0
        %v1057 = vadd.f32 0.0, %v1056
        %v1058 = vpop.f32.mrb[0].mxu0
        %1059 = vmatprep.mubr.f32.mxu0 %v816
        %1060 = vmatmul.mubr.f32.gmra.mrb[0].mxu0 %v815
        %v1061 = vpop.f32.mrb[0].mxu0
        %v1062 = vadd.f32 0.0, %v1061
        %v1063 = vpop.f32.mrb[0].mxu0
        %1064 = vmatprep.mubr.f32.mxu0 %v819
        %1065 = vmatmul.mubr.f32.gmra.mrb[0].mxu0 %v818
        %v1066 = vpop.f32.mrb[0].mxu0
        %v1067 = vadd.f32 0.0, %v1066
        %v1068 = vpop.f32.mrb[0].mxu0
        %1069 = vmatprep.mubr.f32.mxu0 %v822
        %1070 = vmatmul.mubr.f32.gmra.mrb[0].mxu0 %v821
        %v1071 = vpop.f32.mrb[0].mxu0
        %v1072 = vadd.f32 0.0, %v1071
        %v1073 = vpop.f32.mrb[0].mxu0
        %1074 = vmatprep.mubr.f32.mxu0 %v825
        %1075 = vmatmul.mubr.f32.gmra.mrb[0].mxu0 %v824
        %v1076 = vpop.f32.mrb[0].mxu0
        %v1077 = vadd.f32 0.0, %v1076
        %v1078 = vpop.f32.mrb[0].mxu0
        %1079 = vmatprep.mubr.f32.mxu0 %v828
        %1080 = vmatmul.mubr.f32.gmra.mrb[0].mxu0 %v827
        %v1081 = vpop.f32.mrb[0].mxu0
        %v1082 = vadd.f32 0.0, %v1081
        %v1083 = vpop.f32.mrb[0].mxu0
        %1084 = vmatprep.mubr.f32.mxu0 %v831
        %1085 = vmatmul.mubr.f32.gmra.mrb[0].mxu0 %v830
        %v1086 = vpop.f32.mrb[0].mxu0
        %v1087 = vadd.f32 0.0, %v1086
        %v1088 = vpop.f32.mrb[0].mxu0
        %1089 = vmatprep.mubr.f32.mxu0 %v834
        %1090 = vmatmul.mubr.f32.gmra.mrb[0].mxu0 %v833
        %v1091 = vpop.f32.mrb[0].mxu0
        %v1092 = vadd.f32 0.0, %v1091
        %v1093 = vpop.f32.mrb[0].mxu0
        %1094 = vmatprep.mubr.f32.mxu0 %v837
        %1095 = vmatmul.mubr.f32.gmra.mrb[0].mxu0 %v836
        %v1096 = vpop.f32.mrb[0].mxu0
        %v1097 = vadd.f32 0.0, %v1096
        %v1098 = vpop.f32.mrb[0].mxu0
        %1099 = vmatprep.mubr.f32.mxu0 %v840
        %1100 = vmatmul.mubr.f32.gmra.mrb[0].mxu0 %v839
        %v1101 = vpop.f32.mrb[0].mxu0
        %v1102 = vadd.f32 0.0, %v1101
        %v1103 = vpop.f32.mrb[0].mxu0
        %1104 = vmatprep.mubr.f32.mxu0 %v843
        %1105 = vmatmul.mubr.f32.gmra.mrb[0].mxu0 %v842
        %v1106 = vpop.f32.mrb[0].mxu0
        %v1107 = vadd.f32 0.0, %v1106
        %v1108 = vpop.f32.mrb[0].mxu0
        %1109 = vmatprep.mubr.f32.mxu0 %v846
        %1110 = vmatmul.mubr.f32.gmra.mrb[0].mxu0 %v845
        %v1111 = vpop.f32.mrb[0].mxu0
        %v1112 = vadd.f32 0.0, %v1111
        %v1113 = vpop.f32.mrb[0].mxu0
        %1114 = vmatprep.mubr.f32.mxu0 %v849
        %1115 = vmatmul.mubr.f32.gmra.mrb[0].mxu0 %v848
        %v1116 = vpop.f32.mrb[0].mxu0
        %v1117 = vadd.f32 0.0, %v1116
        %v1118 = vpop.f32.mrb[0].mxu0
        %1119 = vmatprep.mubr.f32.mxu0 %v852
        %1120 = vmatmul.mubr.f32.gmra.mrb[0].mxu0 %v851
        %v1121 = vpop.f32.mrb[0].mxu0
        %v1122 = vadd.f32 0.0, %v1121
        %v1123 = vpop.f32.mrb[0].mxu0
        %1124 = vmatprep.mubr.f32.mxu0 %v855
        %1125 = vmatmul.mubr.f32.gmra.mrb[0].mxu0 %v854
        %v1126 = vpop.f32.mrb[0].mxu0
        %v1127 = vadd.f32 0.0, %v1126
        %v1128 = vpop.f32.mrb[0].mxu0
        %1129 = vdwg.mxu0
        %1130 = vmatprep.subr.mxu0 0.0
        %1131 = vmatpush1.msra.mxu0 %v889
        %1132 = vmatprep.subr.mxu0 0.0
        %1133 = vmatpush1.msra.mxu0 %v890
        %1134 = vmatprep.subr.mxu0 0.0
        %1135 = vmatpush1.msra.mxu0 %v891
        %1136 = vmatprep.subr.mxu0 0.0
        %1137 = vmatpush1.msra.mxu0 %v892
        %1138 = vmatprep.subr.mxu0 0.0
        %1139 = vmatpush1.msra.mxu0 %v893
        %1140 = vmatprep.subr.mxu0 0.0
        %1141 = vmatpush1.msra.mxu0 %v894
        %1142 = vmatprep.subr.mxu0 0.0
        %1143 = vmatpush1.msra.mxu0 %v895
        %1144 = vmatprep.subr.mxu0 0.0
        %1145 = vmatpush1.msra.mxu0 %v896
        %1146 = vmatprep.subr.mxu0 0.0
        %1147 = vmatpush1.msra.mxu0 %v897
        %1148 = vmatprep.subr.mxu0 0.0
        %1149 = vmatpush1.msra.mxu0 %v898
        %1150 = vmatprep.subr.mxu0 0.0
        %1151 = vmatpush1.msra.mxu0 %v899
        %1152 = vmatprep.subr.mxu0 0.0
        %1153 = vmatpush1.msra.mxu0 %v900
        %1154 = vmatprep.subr.mxu0 0.0
        %1155 = vmatpush1.msra.mxu0 %v901
        %1156 = vmatprep.subr.mxu0 0.0
        %1157 = vmatpush1.msra.mxu0 %v902
        %1158 = vmatprep.subr.mxu0 0.0
        %1159 = vmatpush1.msra.mxu0 %v903
        %1160 = vmatprep.subr.mxu0 0.0
        %1161 = vmatpush1.msra.mxu0 %v904
        %1162 = vmatprep.subr.mxu0 0.0
        %1163 = vmatpush1.msra.mxu0 0.0
        %1164 = vmatprep.subr.mxu0 0.0
        %1165 = vmatpush1.msra.mxu0 0.0
        %1166 = vmatprep.subr.mxu0 0.0
        %1167 = vmatpush1.msra.mxu0 0.0
        %1168 = vmatprep.subr.mxu0 0.0
        %1169 = vmatpush1.msra.mxu0 0.0
        %1170 = vmatprep.subr.mxu0 0.0
        %1171 = vmatpush1.msra.mxu0 0.0
        %1172 = vmatprep.subr.mxu0 0.0
        %1173 = vmatpush1.msra.mxu0 0.0
        %1174 = vmatprep.subr.mxu0 0.0
        %1175 = vmatpush1.msra.mxu0 0.0
        %1176 = vmatprep.subr.mxu0 0.0
        %1177 = vmatpush1.msra.mxu0 0.0
        %1178 = vmatprep.subr.mxu0 0.0
        %1179 = vmatpush1.msra.mxu0 0.0
        %1180 = vmatprep.subr.mxu0 0.0
        %1181 = vmatpush1.msra.mxu0 0.0
        %1182 = vmatprep.subr.mxu0 0.0
        %1183 = vmatpush1.msra.mxu0 0.0
        %1184 = vmatprep.subr.mxu0 0.0
        %1185 = vmatpush1.msra.mxu0 0.0
        %1186 = vmatprep.subr.mxu0 0.0
        %1187 = vmatpush1.msra.mxu0 0.0
        %1188 = vmatprep.subr.mxu0 0.0
        %1189 = vmatpush1.msra.mxu0 0.0
        %1190 = vmatprep.subr.mxu0 0.0
        %1191 = vmatpush1.msra.mxu0 0.0
        %1192 = vmatprep.subr.mxu0 0.0
        %1193 = vmatpush1.msra.mxu0 0.0
        %1194 = vmatprep.mubr.f32.mxu0 0.0
        %1195 = vmatmul.mubr.f32.gmra.mrb[0].mxu0 %v763
        %v1196 = vpop.f32.mrb[0].mxu0
        %v1197 = vadd.f32 %v972, %v1196
        %v1198 = vpop.f32.mrb[0].mxu0
        %1199 = vmatprep.mubr.f32.mxu0 0.0
        %1200 = vmatmul.mubr.f32.gmra.mrb[0].mxu0 %v766
        %v1201 = vpop.f32.mrb[0].mxu0
        %v1202 = vadd.f32 %v977, %v1201
        %v1203 = vpop.f32.mrb[0].mxu0
        %1204 = vmatprep.mubr.f32.mxu0 0.0
        %1205 = vmatmul.mubr.f32.gmra.mrb[0].mxu0 %v769
        %v1206 = vpop.f32.mrb[0].mxu0
        %v1207 = vadd.f32 %v982, %v1206
        %v1208 = vpop.f32.mrb[0].mxu0
        %1209 = vmatprep.mubr.f32.mxu0 0.0
        %1210 = vmatmul.mubr.f32.gmra.mrb[0].mxu0 %v772
        %v1211 = vpop.f32.mrb[0].mxu0
        %v1212 = vadd.f32 %v987, %v1211
        %v1213 = vpop.f32.mrb[0].mxu0
        %1214 = vmatprep.mubr.f32.mxu0 0.0
        %1215 = vmatmul.mubr.f32.gmra.mrb[0].mxu0 %v775
        %v1216 = vpop.f32.mrb[0].mxu0
        %v1217 = vadd.f32 %v992, %v1216
        %v1218 = vpop.f32.mrb[0].mxu0
        %1219 = vmatprep.mubr.f32.mxu0 0.0
        %1220 = vmatmul.mubr.f32.gmra.mrb[0].mxu0 %v778
        %v1221 = vpop.f32.mrb[0].mxu0
        %v1222 = vadd.f32 %v997, %v1221
        %v1223 = vpop.f32.mrb[0].mxu0
        %1224 = vmatprep.mubr.f32.mxu0 0.0
        %1225 = vmatmul.mubr.f32.gmra.mrb[0].mxu0 %v781
        %v1226 = vpop.f32.mrb[0].mxu0
        %v1227 = vadd.f32 %v1002, %v1226
        %v1228 = vpop.f32.mrb[0].mxu0
        %1229 = vmatprep.mubr.f32.mxu0 0.0
        %1230 = vmatmul.mubr.f32.gmra.mrb[0].mxu0 %v784
        %v1231 = vpop.f32.mrb[0].mxu0
        %v1232 = vadd.f32 %v1007, %v1231
        %v1233 = vpop.f32.mrb[0].mxu0
        %1234 = vmatprep.mubr.f32.mxu0 0.0
        %1235 = vmatmul.mubr.f32.gmra.mrb[0].mxu0 %v787
        %v1236 = vpop.f32.mrb[0].mxu0
        %v1237 = vadd.f32 %v1012, %v1236
        %v1238 = vpop.f32.mrb[0].mxu0
        %1239 = vmatprep.mubr.f32.mxu0 0.0
        %1240 = vmatmul.mubr.f32.gmra.mrb[0].mxu0 %v790
        %v1241 = vpop.f32.mrb[0].mxu0
        %v1242 = vadd.f32 %v1017, %v1241
        %v1243 = vpop.f32.mrb[0].mxu0
        %1244 = vmatprep.mubr.f32.mxu0 0.0
        %1245 = vmatmul.mubr.f32.gmra.mrb[0].mxu0 %v793
        %v1246 = vpop.f32.mrb[0].mxu0
        %v1247 = vadd.f32 %v1022, %v1246
        %v1248 = vpop.f32.mrb[0].mxu0
        %1249 = vmatprep.mubr.f32.mxu0 0.0
        %1250 = vmatmul.mubr.f32.gmra.mrb[0].mxu0 %v796
        %v1251 = vpop.f32.mrb[0].mxu0
        %v1252 = vadd.f32 %v1027, %v1251
        %v1253 = vpop.f32.mrb[0].mxu0
        %1254 = vmatprep.mubr.f32.mxu0 0.0
        %1255 = vmatmul.mubr.f32.gmra.mrb[0].mxu0 %v799
        %v1256 = vpop.f32.mrb[0].mxu0
        %v1257 = vadd.f32 %v1032, %v1256
        %v1258 = vpop.f32.mrb[0].mxu0
        %1259 = vmatprep.mubr.f32.mxu0 0.0
        %1260 = vmatmul.mubr.f32.gmra.mrb[0].mxu0 %v802
        %v1261 = vpop.f32.mrb[0].mxu0
        %v1262 = vadd.f32 %v1037, %v1261
        %v1263 = vpop.f32.mrb[0].mxu0
        %1264 = vmatprep.mubr.f32.mxu0 0.0
        %1265 = vmatmul.mubr.f32.gmra.mrb[0].mxu0 %v805
        %v1266 = vpop.f32.mrb[0].mxu0
        %v1267 = vadd.f32 %v1042, %v1266
        %v1268 = vpop.f32.mrb[0].mxu0
        %1269 = vmatprep.mubr.f32.mxu0 0.0
        %1270 = vmatmul.mubr.f32.gmra.mrb[0].mxu0 %v808
        %v1271 = vpop.f32.mrb[0].mxu0
        %v1272 = vadd.f32 %v1047, %v1271
        %v1273 = vpop.f32.mrb[0].mxu0
        %1274 = vmatprep.mubr.f32.mxu0 0.0
        %1275 = vmatmul.mubr.f32.gmra.mrb[0].mxu0 %v811
        %v1276 = vpop.f32.mrb[0].mxu0
        %v1277 = vadd.f32 %v1052, %v1276
        %v1278 = vpop.f32.mrb[0].mxu0
        %1279 = vmatprep.mubr.f32.mxu0 0.0
        %1280 = vmatmul.mubr.f32.gmra.mrb[0].mxu0 %v814
        %v1281 = vpop.f32.mrb[0].mxu0
        %v1282 = vadd.f32 %v1057, %v1281
        %v1283 = vpop.f32.mrb[0].mxu0
        %1284 = vmatprep.mubr.f32.mxu0 0.0
        %1285 = vmatmul.mubr.f32.gmra.mrb[0].mxu0 %v817
        %v1286 = vpop.f32.mrb[0].mxu0
        %v1287 = vadd.f32 %v1062, %v1286
        %v1288 = vpop.f32.mrb[0].mxu0
        %1289 = vmatprep.mubr.f32.mxu0 0.0
        %1290 = vmatmul.mubr.f32.gmra.mrb[0].mxu0 %v820
        %v1291 = vpop.f32.mrb[0].mxu0
        %v1292 = vadd.f32 %v1067, %v1291
        %v1293 = vpop.f32.mrb[0].mxu0
        %1294 = vmatprep.mubr.f32.mxu0 0.0
        %1295 = vmatmul.mubr.f32.gmra.mrb[0].mxu0 %v823
        %v1296 = vpop.f32.mrb[0].mxu0
        %v1297 = vadd.f32 %v1072, %v1296
        %v1298 = vpop.f32.mrb[0].mxu0
        %1299 = vmatprep.mubr.f32.mxu0 0.0
        %1300 = vmatmul.mubr.f32.gmra.mrb[0].mxu0 %v826
        %v1301 = vpop.f32.mrb[0].mxu0
        %v1302 = vadd.f32 %v1077, %v1301
        %v1303 = vpop.f32.mrb[0].mxu0
        %1304 = vmatprep.mubr.f32.mxu0 0.0
        %1305 = vmatmul.mubr.f32.gmra.mrb[0].mxu0 %v829
        %v1306 = vpop.f32.mrb[0].mxu0
        %v1307 = vadd.f32 %v1082, %v1306
        %v1308 = vpop.f32.mrb[0].mxu0
        %1309 = vmatprep.mubr.f32.mxu0 0.0
        %1310 = vmatmul.mubr.f32.gmra.mrb[0].mxu0 %v832
        %v1311 = vpop.f32.mrb[0].mxu0
        %v1312 = vadd.f32 %v1087, %v1311
        %v1313 = vpop.f32.mrb[0].mxu0
        %1314 = vmatprep.mubr.f32.mxu0 0.0
        %1315 = vmatmul.mubr.f32.gmra.mrb[0].mxu0 %v835
        %v1316 = vpop.f32.mrb[0].mxu0
        %v1317 = vadd.f32 %v1092, %v1316
        %v1318 = vpop.f32.mrb[0].mxu0
        %1319 = vmatprep.mubr.f32.mxu0 0.0
        %1320 = vmatmul.mubr.f32.gmra.mrb[0].mxu0 %v838
        %v1321 = vpop.f32.mrb[0].mxu0
        %v1322 = vadd.f32 %v1097, %v1321
        %v1323 = vpop.f32.mrb[0].mxu0
        %1324 = vmatprep.mubr.f32.mxu0 0.0
        %1325 = vmatmul.mubr.f32.gmra.mrb[0].mxu0 %v841
        %v1326 = vpop.f32.mrb[0].mxu0
        %v1327 = vadd.f32 %v1102, %v1326
        %v1328 = vpop.f32.mrb[0].mxu0
        %1329 = vmatprep.mubr.f32.mxu0 0.0
        %1330 = vmatmul.mubr.f32.gmra.mrb[0].mxu0 %v844
        %v1331 = vpop.f32.mrb[0].mxu0
        %v1332 = vadd.f32 %v1107, %v1331
        %v1333 = vpop.f32.mrb[0].mxu0
        %1334 = vmatprep.mubr.f32.mxu0 0.0
        %1335 = vmatmul.mubr.f32.gmra.mrb[0].mxu0 %v847
        %v1336 = vpop.f32.mrb[0].mxu0
        %v1337 = vadd.f32 %v1112, %v1336
        %v1338 = vpop.f32.mrb[0].mxu0
        %1339 = vmatprep.mubr.f32.mxu0 0.0
        %1340 = vmatmul.mubr.f32.gmra.mrb[0].mxu0 %v850
        %v1341 = vpop.f32.mrb[0].mxu0
        %v1342 = vadd.f32 %v1117, %v1341
        %v1343 = vpop.f32.mrb[0].mxu0
        %1344 = vmatprep.mubr.f32.mxu0 0.0
        %1345 = vmatmul.mubr.f32.gmra.mrb[0].mxu0 %v853
        %v1346 = vpop.f32.mrb[0].mxu0
        %v1347 = vadd.f32 %v1122, %v1346
        %v1348 = vpop.f32.mrb[0].mxu0
        %1349 = vmatprep.mubr.f32.mxu0 0.0
        %1350 = vmatmul.mubr.f32.gmra.mrb[0].mxu0 %v856
        %v1351 = vpop.f32.mrb[0].mxu0
        %v1352 = vadd.f32 %v1127, %v1351
        %v1353 = vpop.f32.mrb[0].mxu0
        %1354 = vdwg.mxu0
        %1355 = vst [vmem:[#allocation5] sm:$0xff] %v1197
        %1356 = vst [vmem:[#allocation5 + $0x8] sm:$0xff] %v1202
        %1357 = vst [vmem:[#allocation5 + $0x10] sm:$0xff] %v1207
        %1358 = vst [vmem:[#allocation5 + $0x18] sm:$0xff] %v1212
        %1359 = vst [vmem:[#allocation5 + $0x20] sm:$0xff] %v1217
        %1360 = vst [vmem:[#allocation5 + $0x28] sm:$0xff] %v1222
        %1361 = vst [vmem:[#allocation5 + $0x30] sm:$0xff] %v1227
        %1362 = vst [vmem:[#allocation5 + $0x38] sm:$0xff] %v1232
        %1363 = vst [vmem:[#allocation5 + $0x40] sm:$0xff] %v1237
        %1364 = vst [vmem:[#allocation5 + $0x48] sm:$0xff] %v1242
        %1365 = vst [vmem:[#allocation5 + $0x50] sm:$0xff] %v1247
        %1366 = vst [vmem:[#allocation5 + $0x58] sm:$0xff] %v1252
        %1367 = vst [vmem:[#allocation5 + $0x60] sm:$0xff] %v1257
        %1368 = vst [vmem:[#allocation5 + $0x68] sm:$0xff] %v1262
        %1369 = vst [vmem:[#allocation5 + $0x70] sm:$0xff] %v1267
        %1370 = vst [vmem:[#allocation5 + $0x78] sm:$0xff] %v1272
        %1371 = vst [vmem:[#allocation5 + $0x80] sm:$0xff] %v1277
        %1372 = vst [vmem:[#allocation5 + $0x88] sm:$0xff] %v1282
        %1373 = vst [vmem:[#allocation5 + $0x90] sm:$0xff] %v1287
        %1374 = vst [vmem:[#allocation5 + $0x98] sm:$0xff] %v1292
        %1375 = vst [vmem:[#allocation5 + $0xa0] sm:$0xff] %v1297
        %1376 = vst [vmem:[#allocation5 + $0xa8] sm:$0xff] %v1302
        %1377 = vst [vmem:[#allocation5 + $0xb0] sm:$0xff] %v1307
        %1378 = vst [vmem:[#allocation5 + $0xb8] sm:$0xff] %v1312
        %1379 = vst [vmem:[#allocation5 + $0xc0] sm:$0xff] %v1317
        %1380 = vst [vmem:[#allocation5 + $0xc8] sm:$0xff] %v1322
        %1381 = vst [vmem:[#allocation5 + $0xd0] sm:$0xff] %v1327
        %1382 = vst [vmem:[#allocation5 + $0xd8] sm:$0xff] %v1332
        %1383 = vst [vmem:[#allocation5 + $0xe0] sm:$0xff] %v1337
        %1384 = vst [vmem:[#allocation5 + $0xe8] sm:$0xff] %v1342
        %1385 = vst [vmem:[#allocation5 + $0xf0] sm:$0xff] %v1347
        %1386 = vst [vmem:[#allocation5 + $0xf8] sm:$0xff] %v1352
        %s1387 = scalar_lea.vmem [#allocation4], 48
        %v1388 = vld [vmem:[%s1387] sm:$0xff]
        %v1389 = vld [vmem:[%s1387 + $0x8] sm:$0xff]
        %v1390 = vld [vmem:[%s1387 + $0x10] sm:$0xff]
        %v1391 = vld [vmem:[%s1387 + $0x18] sm:$0xff]
        %v1392 = vld [vmem:[%s1387 + $0x20] sm:$0xff]
        %v1393 = vld [vmem:[%s1387 + $0x28] sm:$0xff]
        %v1394 = vld [vmem:[%s1387 + $0x30] sm:$0xff]
        %v1395 = vld [vmem:[%s1387 + $0x38] sm:$0xff]
        %v1396 = vld [vmem:[%s1387 + $0x40] sm:$0xff]
        %v1397 = vld [vmem:[%s1387 + $0x48] sm:$0xff]
        %v1398 = vld [vmem:[%s1387 + $0x50] sm:$0xff]
        %v1399 = vld [vmem:[%s1387 + $0x58] sm:$0xff]
        %v1400 = vld [vmem:[%s1387 + $0x60] sm:$0xff]
        %v1401 = vld [vmem:[%s1387 + $0x68] sm:$0xff]
        %v1402 = vld [vmem:[%s1387 + $0x70] sm:$0xff]
        %v1403 = vld [vmem:[%s1387 + $0x78] sm:$0xff]
        %v1404 = vld [vmem:[%s1387 + $0x80] sm:$0xff]
        %v1405 = vld [vmem:[%s1387 + $0x88] sm:$0xff]
        %v1406 = vld [vmem:[%s1387 + $0x90] sm:$0xff]
        %v1407 = vld [vmem:[%s1387 + $0x98] sm:$0xff]
        %v1408 = vld [vmem:[%s1387 + $0xa0] sm:$0xff]
        %v1409 = vld [vmem:[%s1387 + $0xa8] sm:$0xff]
        %v1410 = vld [vmem:[%s1387 + $0xb0] sm:$0xff]
        %v1411 = vld [vmem:[%s1387 + $0xb8] sm:$0xff]
        %v1412 = vld [vmem:[%s1387 + $0xc0] sm:$0xff]
        %v1413 = vld [vmem:[%s1387 + $0xc8] sm:$0xff]
        %v1414 = vld [vmem:[%s1387 + $0xd0] sm:$0xff]
        %v1415 = vld [vmem:[%s1387 + $0xd8] sm:$0xff]
        %v1416 = vld [vmem:[%s1387 + $0xe0] sm:$0xff]
        %v1417 = vld [vmem:[%s1387 + $0xe8] sm:$0xff]
        %v1418 = vld [vmem:[%s1387 + $0xf0] sm:$0xff]
        %v1419 = vld [vmem:[%s1387 + $0xf8] sm:$0xff]
        %v1420 = vld [vmem:[%s1387 + $0x100] sm:$0xff]
        %v1421 = vld [vmem:[%s1387 + $0x108] sm:$0xff]
        %v1422 = vld [vmem:[%s1387 + $0x110] sm:$0xff]
        %v1423 = vld [vmem:[%s1387 + $0x118] sm:$0xff]
        %v1424 = vld [vmem:[%s1387 + $0x120] sm:$0xff]
        %v1425 = vld [vmem:[%s1387 + $0x128] sm:$0xff]
        %v1426 = vld [vmem:[%s1387 + $0x130] sm:$0xff]
        %v1427 = vld [vmem:[%s1387 + $0x138] sm:$0xff]
        %v1428 = vld [vmem:[%s1387 + $0x140] sm:$0xff]
        %v1429 = vld [vmem:[%s1387 + $0x148] sm:$0xff]
        %v1430 = vld [vmem:[%s1387 + $0x150] sm:$0xff]
        %v1431 = vld [vmem:[%s1387 + $0x158] sm:$0xff]
        %v1432 = vld [vmem:[%s1387 + $0x160] sm:$0xff]
        %v1433 = vld [vmem:[%s1387 + $0x168] sm:$0xff]
        %v1434 = vld [vmem:[%s1387 + $0x170] sm:$0xff]
        %v1435 = vld [vmem:[%s1387 + $0x178] sm:$0xff]
        %v1436 = vld [vmem:[%s1387 + $0x180] sm:$0xff]
        %v1437 = vld [vmem:[%s1387 + $0x188] sm:$0xff]
        %v1438 = vld [vmem:[%s1387 + $0x190] sm:$0xff]
        %v1439 = vld [vmem:[%s1387 + $0x198] sm:$0xff]
        %v1440 = vld [vmem:[%s1387 + $0x1a0] sm:$0xff]
        %v1441 = vld [vmem:[%s1387 + $0x1a8] sm:$0xff]
        %v1442 = vld [vmem:[%s1387 + $0x1b0] sm:$0xff]
        %v1443 = vld [vmem:[%s1387 + $0x1b8] sm:$0xff]
        %v1444 = vld [vmem:[%s1387 + $0x1c0] sm:$0xff]
        %v1445 = vld [vmem:[%s1387 + $0x1c8] sm:$0xff]
        %v1446 = vld [vmem:[%s1387 + $0x1d0] sm:$0xff]
        %v1447 = vld [vmem:[%s1387 + $0x1d8] sm:$0xff]
        %v1448 = vld [vmem:[%s1387 + $0x1e0] sm:$0xff]
        %v1449 = vld [vmem:[%s1387 + $0x1e8] sm:$0xff]
        %v1450 = vld [vmem:[%s1387 + $0x1f0] sm:$0xff]
        %v1451 = vld [vmem:[%s1387 + $0x1f8] sm:$0xff]
        %v1452 = vld [vmem:[%s1387 + $0x200] sm:$0xff]
        %v1453 = vld [vmem:[%s1387 + $0x208] sm:$0xff]
        %v1454 = vld [vmem:[%s1387 + $0x210] sm:$0xff]
        %v1455 = vld [vmem:[%s1387 + $0x218] sm:$0xff]
        %v1456 = vld [vmem:[%s1387 + $0x220] sm:$0xff]
        %v1457 = vld [vmem:[%s1387 + $0x228] sm:$0xff]
        %v1458 = vld [vmem:[%s1387 + $0x230] sm:$0xff]
        %v1459 = vld [vmem:[%s1387 + $0x238] sm:$0xff]
        %v1460 = vld [vmem:[%s1387 + $0x240] sm:$0xff]
        %v1461 = vld [vmem:[%s1387 + $0x248] sm:$0xff]
        %v1462 = vld [vmem:[%s1387 + $0x250] sm:$0xff]
        %v1463 = vld [vmem:[%s1387 + $0x258] sm:$0xff]
        %v1464 = vld [vmem:[%s1387 + $0x260] sm:$0xff]
        %v1465 = vld [vmem:[%s1387 + $0x268] sm:$0xff]
        %v1466 = vld [vmem:[%s1387 + $0x270] sm:$0xff]
        %v1467 = vld [vmem:[%s1387 + $0x278] sm:$0xff]
        %v1468 = vld [vmem:[%s1387 + $0x280] sm:$0xff]
        %v1469 = vld [vmem:[%s1387 + $0x288] sm:$0xff]
        %v1470 = vld [vmem:[%s1387 + $0x290] sm:$0xff]
        %v1471 = vld [vmem:[%s1387 + $0x298] sm:$0xff]
        %v1472 = vld [vmem:[%s1387 + $0x2a0] sm:$0xff]
        %v1473 = vld [vmem:[%s1387 + $0x2a8] sm:$0xff]
        %v1474 = vld [vmem:[%s1387 + $0x2b0] sm:$0xff]
        %v1475 = vld [vmem:[%s1387 + $0x2b8] sm:$0xff]
        %v1476 = vld [vmem:[%s1387 + $0x2c0] sm:$0xff]
        %v1477 = vld [vmem:[%s1387 + $0x2c8] sm:$0xff]
        %v1478 = vld [vmem:[%s1387 + $0x2d0] sm:$0xff]
        %v1479 = vld [vmem:[%s1387 + $0x2d8] sm:$0xff]
        %v1480 = vld [vmem:[%s1387 + $0x2e0] sm:$0xff]
        %v1481 = vld [vmem:[%s1387 + $0x2e8] sm:$0xff]
        %v1482 = vld [vmem:[%s1387 + $0x2f0] sm:$0xff]
        %v1483 = vld [vmem:[%s1387 + $0x2f8] sm:$0xff]
        %s1484 = scalar_lea.vmem [#allocation9], 384
        %v1485 = vld [vmem:[%s1484] sm:$0xff]
        %v1486 = vld [vmem:[%s1484 + $0x8] sm:$0xff]
        %v1487 = vld [vmem:[%s1484 + $0x10] sm:$0xff]
        %v1488 = vld [vmem:[%s1484 + $0x18] sm:$0xff]
        %v1489 = vld [vmem:[%s1484 + $0x20] sm:$0xff]
        %v1490 = vld [vmem:[%s1484 + $0x28] sm:$0xff]
        %v1491 = vld [vmem:[%s1484 + $0x30] sm:$0xff]
        %v1492 = vld [vmem:[%s1484 + $0x38] sm:$0xff]
        %v1493 = vld [vmem:[%s1484 + $0x40] sm:$0xff]
        %v1494 = vld [vmem:[%s1484 + $0x48] sm:$0xff]
        %v1495 = vld [vmem:[%s1484 + $0x50] sm:$0xff]
        %v1496 = vld [vmem:[%s1484 + $0x58] sm:$0xff]
        %v1497 = vld [vmem:[%s1484 + $0x60] sm:$0xff]
        %v1498 = vld [vmem:[%s1484 + $0x68] sm:$0xff]
        %v1499 = vld [vmem:[%s1484 + $0x70] sm:$0xff]
        %v1500 = vld [vmem:[%s1484 + $0x78] sm:$0xff]
        %v1501 = vld [vmem:[%s1484 + $0x80] sm:$0xff]
        %v1502 = vld [vmem:[%s1484 + $0x88] sm:$0xff]
        %v1503 = vld [vmem:[%s1484 + $0x90] sm:$0xff]
        %v1504 = vld [vmem:[%s1484 + $0x98] sm:$0xff]
        %v1505 = vld [vmem:[%s1484 + $0xa0] sm:$0xff]
        %v1506 = vld [vmem:[%s1484 + $0xa8] sm:$0xff]
        %v1507 = vld [vmem:[%s1484 + $0xb0] sm:$0xff]
        %v1508 = vld [vmem:[%s1484 + $0xb8] sm:$0xff]
        %v1509 = vld [vmem:[%s1484 + $0xc0] sm:$0xff]
        %v1510 = vld [vmem:[%s1484 + $0xc8] sm:$0xff]
        %v1511 = vld [vmem:[%s1484 + $0xd0] sm:$0xff]
        %v1512 = vld [vmem:[%s1484 + $0xd8] sm:$0xff]
        %v1513 = vld [vmem:[%s1484 + $0xe0] sm:$0xff]
        %v1514 = vld [vmem:[%s1484 + $0xe8] sm:$0xff]
        %v1515 = vld [vmem:[%s1484 + $0xf0] sm:$0xff]
        %v1516 = vld [vmem:[%s1484 + $0xf8] sm:$0xff]
        %v1517 = vld [vmem:[%s1484 + $0x100] sm:$0xff]
        %v1518 = vld [vmem:[%s1484 + $0x108] sm:$0xff]
        %v1519 = vld [vmem:[%s1484 + $0x110] sm:$0xff]
        %v1520 = vld [vmem:[%s1484 + $0x118] sm:$0xff]
        %v1521 = vld [vmem:[%s1484 + $0x120] sm:$0xff]
        %v1522 = vld [vmem:[%s1484 + $0x128] sm:$0xff]
        %v1523 = vld [vmem:[%s1484 + $0x130] sm:$0xff]
        %v1524 = vld [vmem:[%s1484 + $0x138] sm:$0xff]
        %v1525 = vld [vmem:[%s1484 + $0x140] sm:$0xff]
        %v1526 = vld [vmem:[%s1484 + $0x148] sm:$0xff]
        %v1527 = vld [vmem:[%s1484 + $0x150] sm:$0xff]
        %v1528 = vld [vmem:[%s1484 + $0x158] sm:$0xff]
        %v1529 = vld [vmem:[%s1484 + $0x160] sm:$0xff]
        %v1530 = vld [vmem:[%s1484 + $0x168] sm:$0xff]
        %v1531 = vld [vmem:[%s1484 + $0x170] sm:$0xff]
        %v1532 = vld [vmem:[%s1484 + $0x178] sm:$0xff]
        %1533 = vmatprep.subr.mxu0 0.0
        %1534 = vmatpush1.msra.mxu0 %v1485
        %1535 = vmatprep.subr.mxu0 0.0
        %1536 = vmatpush1.msra.mxu0 %v1486
        %1537 = vmatprep.subr.mxu0 0.0
        %1538 = vmatpush1.msra.mxu0 %v1487
        %1539 = vmatprep.subr.mxu0 0.0
        %1540 = vmatpush1.msra.mxu0 %v1488
        %1541 = vmatprep.subr.mxu0 0.0
        %1542 = vmatpush1.msra.mxu0 %v1489
        %1543 = vmatprep.subr.mxu0 0.0
        %1544 = vmatpush1.msra.mxu0 %v1490
        %1545 = vmatprep.subr.mxu0 0.0
        %1546 = vmatpush1.msra.mxu0 %v1491
        %1547 = vmatprep.subr.mxu0 0.0
        %1548 = vmatpush1.msra.mxu0 %v1492
        %1549 = vmatprep.subr.mxu0 0.0
        %1550 = vmatpush1.msra.mxu0 %v1493
        %1551 = vmatprep.subr.mxu0 0.0
        %1552 = vmatpush1.msra.mxu0 %v1494
        %1553 = vmatprep.subr.mxu0 0.0
        %1554 = vmatpush1.msra.mxu0 %v1495
        %1555 = vmatprep.subr.mxu0 0.0
        %1556 = vmatpush1.msra.mxu0 %v1496
        %1557 = vmatprep.subr.mxu0 0.0
        %1558 = vmatpush1.msra.mxu0 %v1497
        %1559 = vmatprep.subr.mxu0 0.0
        %1560 = vmatpush1.msra.mxu0 %v1498
        %1561 = vmatprep.subr.mxu0 0.0
        %1562 = vmatpush1.msra.mxu0 %v1499
        %1563 = vmatprep.subr.mxu0 0.0
        %1564 = vmatpush1.msra.mxu0 %v1500
        %1565 = vmatprep.subr.mxu0 0.0
        %1566 = vmatpush1.msra.mxu0 %v1501
        %1567 = vmatprep.subr.mxu0 0.0
        %1568 = vmatpush1.msra.mxu0 %v1502
        %1569 = vmatprep.subr.mxu0 0.0
        %1570 = vmatpush1.msra.mxu0 %v1503
        %1571 = vmatprep.subr.mxu0 0.0
        %1572 = vmatpush1.msra.mxu0 %v1504
        %1573 = vmatprep.subr.mxu0 0.0
        %1574 = vmatpush1.msra.mxu0 %v1505
        %1575 = vmatprep.subr.mxu0 0.0
        %1576 = vmatpush1.msra.mxu0 %v1506
        %1577 = vmatprep.subr.mxu0 0.0
        %1578 = vmatpush1.msra.mxu0 %v1507
        %1579 = vmatprep.subr.mxu0 0.0
        %1580 = vmatpush1.msra.mxu0 %v1508
        %1581 = vmatprep.subr.mxu0 0.0
        %1582 = vmatpush1.msra.mxu0 %v1509
        %1583 = vmatprep.subr.mxu0 0.0
        %1584 = vmatpush1.msra.mxu0 %v1510
        %1585 = vmatprep.subr.mxu0 0.0
        %1586 = vmatpush1.msra.mxu0 %v1511
        %1587 = vmatprep.subr.mxu0 0.0
        %1588 = vmatpush1.msra.mxu0 %v1512
        %1589 = vmatprep.subr.mxu0 0.0
        %1590 = vmatpush1.msra.mxu0 %v1513
        %1591 = vmatprep.subr.mxu0 0.0
        %1592 = vmatpush1.msra.mxu0 %v1514
        %1593 = vmatprep.subr.mxu0 0.0
        %1594 = vmatpush1.msra.mxu0 %v1515
        %1595 = vmatprep.subr.mxu0 0.0
        %1596 = vmatpush1.msra.mxu0 %v1516
        %1597 = vmatprep.mubr.f32.mxu0 %v1389
        %1598 = vmatmul.mubr.f32.gmra.mrb[0].mxu0 %v1388
        %v1599 = vpop.f32.mrb[0].mxu0
        %v1600 = vadd.f32 0.0, %v1599
        %v1601 = vpop.f32.mrb[0].mxu0
        %1602 = vmatprep.mubr.f32.mxu0 %v1392
        %1603 = vmatmul.mubr.f32.gmra.mrb[0].mxu0 %v1391
        %v1604 = vpop.f32.mrb[0].mxu0
        %v1605 = vadd.f32 0.0, %v1604
        %v1606 = vpop.f32.mrb[0].mxu0
        %1607 = vmatprep.mubr.f32.mxu0 %v1395
        %1608 = vmatmul.mubr.f32.gmra.mrb[0].mxu0 %v1394
        %v1609 = vpop.f32.mrb[0].mxu0
        %v1610 = vadd.f32 0.0, %v1609
        %v1611 = vpop.f32.mrb[0].mxu0
        %1612 = vmatprep.mubr.f32.mxu0 %v1398
        %1613 = vmatmul.mubr.f32.gmra.mrb[0].mxu0 %v1397
        %v1614 = vpop.f32.mrb[0].mxu0
        %v1615 = vadd.f32 0.0, %v1614
        %v1616 = vpop.f32.mrb[0].mxu0
        %1617 = vmatprep.mubr.f32.mxu0 %v1401
        %1618 = vmatmul.mubr.f32.gmra.mrb[0].mxu0 %v1400
        %v1619 = vpop.f32.mrb[0].mxu0
        %v1620 = vadd.f32 0.0, %v1619
        %v1621 = vpop.f32.mrb[0].mxu0
        %1622 = vmatprep.mubr.f32.mxu0 %v1404
        %1623 = vmatmul.mubr.f32.gmra.mrb[0].mxu0 %v1403
        %v1624 = vpop.f32.mrb[0].mxu0
        %v1625 = vadd.f32 0.0, %v1624
        %v1626 = vpop.f32.mrb[0].mxu0
        %1627 = vmatprep.mubr.f32.mxu0 %v1407
        %1628 = vmatmul.mubr.f32.gmra.mrb[0].mxu0 %v1406
        %v1629 = vpop.f32.mrb[0].mxu0
        %v1630 = vadd.f32 0.0, %v1629
        %v1631 = vpop.f32.mrb[0].mxu0
        %1632 = vmatprep.mubr.f32.mxu0 %v1410
        %1633 = vmatmul.mubr.f32.gmra.mrb[0].mxu0 %v1409
        %v1634 = vpop.f32.mrb[0].mxu0
        %v1635 = vadd.f32 0.0, %v1634
        %v1636 = vpop.f32.mrb[0].mxu0
        %1637 = vmatprep.mubr.f32.mxu0 %v1413
        %1638 = vmatmul.mubr.f32.gmra.mrb[0].mxu0 %v1412
        %v1639 = vpop.f32.mrb[0].mxu0
        %v1640 = vadd.f32 0.0, %v1639
        %v1641 = vpop.f32.mrb[0].mxu0
        %1642 = vmatprep.mubr.f32.mxu0 %v1416
        %1643 = vmatmul.mubr.f32.gmra.mrb[0].mxu0 %v1415
        %v1644 = vpop.f32.mrb[0].mxu0
        %v1645 = vadd.f32 0.0, %v1644
        %v1646 = vpop.f32.mrb[0].mxu0
        %1647 = vmatprep.mubr.f32.mxu0 %v1419
        %1648 = vmatmul.mubr.f32.gmra.mrb[0].mxu0 %v1418
        %v1649 = vpop.f32.mrb[0].mxu0
        %v1650 = vadd.f32 0.0, %v1649
        %v1651 = vpop.f32.mrb[0].mxu0
        %1652 = vmatprep.mubr.f32.mxu0 %v1422
        %1653 = vmatmul.mubr.f32.gmra.mrb[0].mxu0 %v1421
        %v1654 = vpop.f32.mrb[0].mxu0
        %v1655 = vadd.f32 0.0, %v1654
        %v1656 = vpop.f32.mrb[0].mxu0
        %1657 = vmatprep.mubr.f32.mxu0 %v1425
        %1658 = vmatmul.mubr.f32.gmra.mrb[0].mxu0 %v1424
        %v1659 = vpop.f32.mrb[0].mxu0
        %v1660 = vadd.f32 0.0, %v1659
        %v1661 = vpop.f32.mrb[0].mxu0
        %1662 = vmatprep.mubr.f32.mxu0 %v1428
        %1663 = vmatmul.mubr.f32.gmra.mrb[0].mxu0 %v1427
        %v1664 = vpop.f32.mrb[0].mxu0
        %v1665 = vadd.f32 0.0, %v1664
        %v1666 = vpop.f32.mrb[0].mxu0
        %1667 = vmatprep.mubr.f32.mxu0 %v1431
        %1668 = vmatmul.mubr.f32.gmra.mrb[0].mxu0 %v1430
        %v1669 = vpop.f32.mrb[0].mxu0
        %v1670 = vadd.f32 0.0, %v1669
        %v1671 = vpop.f32.mrb[0].mxu0
        %1672 = vmatprep.mubr.f32.mxu0 %v1434
        %1673 = vmatmul.mubr.f32.gmra.mrb[0].mxu0 %v1433
        %v1674 = vpop.f32.mrb[0].mxu0
        %v1675 = vadd.f32 0.0, %v1674
        %v1676 = vpop.f32.mrb[0].mxu0
        %1677 = vmatprep.mubr.f32.mxu0 %v1437
        %1678 = vmatmul.mubr.f32.gmra.mrb[0].mxu0 %v1436
        %v1679 = vpop.f32.mrb[0].mxu0
        %v1680 = vadd.f32 0.0, %v1679
        %v1681 = vpop.f32.mrb[0].mxu0
        %1682 = vmatprep.mubr.f32.mxu0 %v1440
        %1683 = vmatmul.mubr.f32.gmra.mrb[0].mxu0 %v1439
        %v1684 = vpop.f32.mrb[0].mxu0
        %v1685 = vadd.f32 0.0, %v1684
        %v1686 = vpop.f32.mrb[0].mxu0
        %1687 = vmatprep.mubr.f32.mxu0 %v1443
        %1688 = vmatmul.mubr.f32.gmra.mrb[0].mxu0 %v1442
        %v1689 = vpop.f32.mrb[0].mxu0
        %v1690 = vadd.f32 0.0, %v1689
        %v1691 = vpop.f32.mrb[0].mxu0
        %1692 = vmatprep.mubr.f32.mxu0 %v1446
        %1693 = vmatmul.mubr.f32.gmra.mrb[0].mxu0 %v1445
        %v1694 = vpop.f32.mrb[0].mxu0
        %v1695 = vadd.f32 0.0, %v1694
        %v1696 = vpop.f32.mrb[0].mxu0
        %1697 = vmatprep.mubr.f32.mxu0 %v1449
        %1698 = vmatmul.mubr.f32.gmra.mrb[0].mxu0 %v1448
        %v1699 = vpop.f32.mrb[0].mxu0
        %v1700 = vadd.f32 0.0, %v1699
        %v1701 = vpop.f32.mrb[0].mxu0
        %1702 = vmatprep.mubr.f32.mxu0 %v1452
        %1703 = vmatmul.mubr.f32.gmra.mrb[0].mxu0 %v1451
        %v1704 = vpop.f32.mrb[0].mxu0
        %v1705 = vadd.f32 0.0, %v1704
        %v1706 = vpop.f32.mrb[0].mxu0
        %1707 = vmatprep.mubr.f32.mxu0 %v1455
        %1708 = vmatmul.mubr.f32.gmra.mrb[0].mxu0 %v1454
        %v1709 = vpop.f32.mrb[0].mxu0
        %v1710 = vadd.f32 0.0, %v1709
        %v1711 = vpop.f32.mrb[0].mxu0
        %1712 = vmatprep.mubr.f32.mxu0 %v1458
        %1713 = vmatmul.mubr.f32.gmra.mrb[0].mxu0 %v1457
        %v1714 = vpop.f32.mrb[0].mxu0
        %v1715 = vadd.f32 0.0, %v1714
        %v1716 = vpop.f32.mrb[0].mxu0
        %1717 = vmatprep.mubr.f32.mxu0 %v1461
        %1718 = vmatmul.mubr.f32.gmra.mrb[0].mxu0 %v1460
        %v1719 = vpop.f32.mrb[0].mxu0
        %v1720 = vadd.f32 0.0, %v1719
        %v1721 = vpop.f32.mrb[0].mxu0
        %1722 = vmatprep.mubr.f32.mxu0 %v1464
        %1723 = vmatmul.mubr.f32.gmra.mrb[0].mxu0 %v1463
        %v1724 = vpop.f32.mrb[0].mxu0
        %v1725 = vadd.f32 0.0, %v1724
        %v1726 = vpop.f32.mrb[0].mxu0
        %1727 = vmatprep.mubr.f32.mxu0 %v1467
        %1728 = vmatmul.mubr.f32.gmra.mrb[0].mxu0 %v1466
        %v1729 = vpop.f32.mrb[0].mxu0
        %v1730 = vadd.f32 0.0, %v1729
        %v1731 = vpop.f32.mrb[0].mxu0
        %1732 = vmatprep.mubr.f32.mxu0 %v1470
        %1733 = vmatmul.mubr.f32.gmra.mrb[0].mxu0 %v1469
        %v1734 = vpop.f32.mrb[0].mxu0
        %v1735 = vadd.f32 0.0, %v1734
        %v1736 = vpop.f32.mrb[0].mxu0
        %1737 = vmatprep.mubr.f32.mxu0 %v1473
        %1738 = vmatmul.mubr.f32.gmra.mrb[0].mxu0 %v1472
        %v1739 = vpop.f32.mrb[0].mxu0
        %v1740 = vadd.f32 0.0, %v1739
        %v1741 = vpop.f32.mrb[0].mxu0
        %1742 = vmatprep.mubr.f32.mxu0 %v1476
        %1743 = vmatmul.mubr.f32.gmra.mrb[0].mxu0 %v1475
        %v1744 = vpop.f32.mrb[0].mxu0
        %v1745 = vadd.f32 0.0, %v1744
        %v1746 = vpop.f32.mrb[0].mxu0
        %1747 = vmatprep.mubr.f32.mxu0 %v1479
        %1748 = vmatmul.mubr.f32.gmra.mrb[0].mxu0 %v1478
        %v1749 = vpop.f32.mrb[0].mxu0
        %v1750 = vadd.f32 0.0, %v1749
        %v1751 = vpop.f32.mrb[0].mxu0
        %1752 = vmatprep.mubr.f32.mxu0 %v1482
        %1753 = vmatmul.mubr.f32.gmra.mrb[0].mxu0 %v1481
        %v1754 = vpop.f32.mrb[0].mxu0
        %v1755 = vadd.f32 0.0, %v1754
        %v1756 = vpop.f32.mrb[0].mxu0
        %1757 = vdwg.mxu0
        %1758 = vmatprep.subr.mxu0 0.0
        %1759 = vmatpush1.msra.mxu0 %v1517
        %1760 = vmatprep.subr.mxu0 0.0
        %1761 = vmatpush1.msra.mxu0 %v1518
        %1762 = vmatprep.subr.mxu0 0.0
        %1763 = vmatpush1.msra.mxu0 %v1519
        %1764 = vmatprep.subr.mxu0 0.0
        %1765 = vmatpush1.msra.mxu0 %v1520
        %1766 = vmatprep.subr.mxu0 0.0
        %1767 = vmatpush1.msra.mxu0 %v1521
        %1768 = vmatprep.subr.mxu0 0.0
        %1769 = vmatpush1.msra.mxu0 %v1522
        %1770 = vmatprep.subr.mxu0 0.0
        %1771 = vmatpush1.msra.mxu0 %v1523
        %1772 = vmatprep.subr.mxu0 0.0
        %1773 = vmatpush1.msra.mxu0 %v1524
        %1774 = vmatprep.subr.mxu0 0.0
        %1775 = vmatpush1.msra.mxu0 %v1525
        %1776 = vmatprep.subr.mxu0 0.0
        %1777 = vmatpush1.msra.mxu0 %v1526
        %1778 = vmatprep.subr.mxu0 0.0
        %1779 = vmatpush1.msra.mxu0 %v1527
        %1780 = vmatprep.subr.mxu0 0.0
        %1781 = vmatpush1.msra.mxu0 %v1528
        %1782 = vmatprep.subr.mxu0 0.0
        %1783 = vmatpush1.msra.mxu0 %v1529
        %1784 = vmatprep.subr.mxu0 0.0
        %1785 = vmatpush1.msra.mxu0 %v1530
        %1786 = vmatprep.subr.mxu0 0.0
        %1787 = vmatpush1.msra.mxu0 %v1531
        %1788 = vmatprep.subr.mxu0 0.0
        %1789 = vmatpush1.msra.mxu0 %v1532
        %1790 = vmatprep.subr.mxu0 0.0
        %1791 = vmatpush1.msra.mxu0 0.0
        %1792 = vmatprep.subr.mxu0 0.0
        %1793 = vmatpush1.msra.mxu0 0.0
        %1794 = vmatprep.subr.mxu0 0.0
        %1795 = vmatpush1.msra.mxu0 0.0
        %1796 = vmatprep.subr.mxu0 0.0
        %1797 = vmatpush1.msra.mxu0 0.0
        %1798 = vmatprep.subr.mxu0 0.0
        %1799 = vmatpush1.msra.mxu0 0.0
        %1800 = vmatprep.subr.mxu0 0.0
        %1801 = vmatpush1.msra.mxu0 0.0
        %1802 = vmatprep.subr.mxu0 0.0
        %1803 = vmatpush1.msra.mxu0 0.0
        %1804 = vmatprep.subr.mxu0 0.0
        %1805 = vmatpush1.msra.mxu0 0.0
        %1806 = vmatprep.subr.mxu0 0.0
        %1807 = vmatpush1.msra.mxu0 0.0
        %1808 = vmatprep.subr.mxu0 0.0
        %1809 = vmatpush1.msra.mxu0 0.0
        %1810 = vmatprep.subr.mxu0 0.0
        %1811 = vmatpush1.msra.mxu0 0.0
        %1812 = vmatprep.subr.mxu0 0.0
        %1813 = vmatpush1.msra.mxu0 0.0
        %1814 = vmatprep.subr.mxu0 0.0
        %1815 = vmatpush1.msra.mxu0 0.0
        %1816 = vmatprep.subr.mxu0 0.0
        %1817 = vmatpush1.msra.mxu0 0.0
        %1818 = vmatprep.subr.mxu0 0.0
        %1819 = vmatpush1.msra.mxu0 0.0
        %1820 = vmatprep.subr.mxu0 0.0
        %1821 = vmatpush1.msra.mxu0 0.0
        %1822 = vmatprep.mubr.f32.mxu0 0.0
        %1823 = vmatmul.mubr.f32.gmra.mrb[0].mxu0 %v1390
        %v1824 = vpop.f32.mrb[0].mxu0
        %v1825 = vadd.f32 %v1600, %v1824
        %v1826 = vpop.f32.mrb[0].mxu0
        %1827 = vmatprep.mubr.f32.mxu0 0.0
        %1828 = vmatmul.mubr.f32.gmra.mrb[0].mxu0 %v1393
        %v1829 = vpop.f32.mrb[0].mxu0
        %v1830 = vadd.f32 %v1605, %v1829
        %v1831 = vpop.f32.mrb[0].mxu0
        %1832 = vmatprep.mubr.f32.mxu0 0.0
        %1833 = vmatmul.mubr.f32.gmra.mrb[0].mxu0 %v1396
        %v1834 = vpop.f32.mrb[0].mxu0
        %v1835 = vadd.f32 %v1610, %v1834
        %v1836 = vpop.f32.mrb[0].mxu0
        %1837 = vmatprep.mubr.f32.mxu0 0.0
        %1838 = vmatmul.mubr.f32.gmra.mrb[0].mxu0 %v1399
        %v1839 = vpop.f32.mrb[0].mxu0
        %v1840 = vadd.f32 %v1615, %v1839
        %v1841 = vpop.f32.mrb[0].mxu0
        %1842 = vmatprep.mubr.f32.mxu0 0.0
        %1843 = vmatmul.mubr.f32.gmra.mrb[0].mxu0 %v1402
        %v1844 = vpop.f32.mrb[0].mxu0
        %v1845 = vadd.f32 %v1620, %v1844
        %v1846 = vpop.f32.mrb[0].mxu0
        %1847 = vmatprep.mubr.f32.mxu0 0.0
        %1848 = vmatmul.mubr.f32.gmra.mrb[0].mxu0 %v1405
        %v1849 = vpop.f32.mrb[0].mxu0
        %v1850 = vadd.f32 %v1625, %v1849
        %v1851 = vpop.f32.mrb[0].mxu0
        %1852 = vmatprep.mubr.f32.mxu0 0.0
        %1853 = vmatmul.mubr.f32.gmra.mrb[0].mxu0 %v1408
        %v1854 = vpop.f32.mrb[0].mxu0
        %v1855 = vadd.f32 %v1630, %v1854
        %v1856 = vpop.f32.mrb[0].mxu0
        %1857 = vmatprep.mubr.f32.mxu0 0.0
        %1858 = vmatmul.mubr.f32.gmra.mrb[0].mxu0 %v1411
        %v1859 = vpop.f32.mrb[0].mxu0
        %v1860 = vadd.f32 %v1635, %v1859
        %v1861 = vpop.f32.mrb[0].mxu0
        %1862 = vmatprep.mubr.f32.mxu0 0.0
        %1863 = vmatmul.mubr.f32.gmra.mrb[0].mxu0 %v1414
        %v1864 = vpop.f32.mrb[0].mxu0
        %v1865 = vadd.f32 %v1640, %v1864
        %v1866 = vpop.f32.mrb[0].mxu0
        %1867 = vmatprep.mubr.f32.mxu0 0.0
        %1868 = vmatmul.mubr.f32.gmra.mrb[0].mxu0 %v1417
        %v1869 = vpop.f32.mrb[0].mxu0
        %v1870 = vadd.f32 %v1645, %v1869
        %v1871 = vpop.f32.mrb[0].mxu0
        %1872 = vmatprep.mubr.f32.mxu0 0.0
        %1873 = vmatmul.mubr.f32.gmra.mrb[0].mxu0 %v1420
        %v1874 = vpop.f32.mrb[0].mxu0
        %v1875 = vadd.f32 %v1650, %v1874
        %v1876 = vpop.f32.mrb[0].mxu0
        %1877 = vmatprep.mubr.f32.mxu0 0.0
        %1878 = vmatmul.mubr.f32.gmra.mrb[0].mxu0 %v1423
        %v1879 = vpop.f32.mrb[0].mxu0
        %v1880 = vadd.f32 %v1655, %v1879
        %v1881 = vpop.f32.mrb[0].mxu0
        %1882 = vmatprep.mubr.f32.mxu0 0.0
        %1883 = vmatmul.mubr.f32.gmra.mrb[0].mxu0 %v1426
        %v1884 = vpop.f32.mrb[0].mxu0
        %v1885 = vadd.f32 %v1660, %v1884
        %v1886 = vpop.f32.mrb[0].mxu0
        %1887 = vmatprep.mubr.f32.mxu0 0.0
        %1888 = vmatmul.mubr.f32.gmra.mrb[0].mxu0 %v1429
        %v1889 = vpop.f32.mrb[0].mxu0
        %v1890 = vadd.f32 %v1665, %v1889
        %v1891 = vpop.f32.mrb[0].mxu0
        %1892 = vmatprep.mubr.f32.mxu0 0.0
        %1893 = vmatmul.mubr.f32.gmra.mrb[0].mxu0 %v1432
        %v1894 = vpop.f32.mrb[0].mxu0
        %v1895 = vadd.f32 %v1670, %v1894
        %v1896 = vpop.f32.mrb[0].mxu0
        %1897 = vmatprep.mubr.f32.mxu0 0.0
        %1898 = vmatmul.mubr.f32.gmra.mrb[0].mxu0 %v1435
        %v1899 = vpop.f32.mrb[0].mxu0
        %v1900 = vadd.f32 %v1675, %v1899
        %v1901 = vpop.f32.mrb[0].mxu0
        %1902 = vmatprep.mubr.f32.mxu0 0.0
        %1903 = vmatmul.mubr.f32.gmra.mrb[0].mxu0 %v1438
        %v1904 = vpop.f32.mrb[0].mxu0
        %v1905 = vadd.f32 %v1680, %v1904
        %v1906 = vpop.f32.mrb[0].mxu0
        %1907 = vmatprep.mubr.f32.mxu0 0.0
        %1908 = vmatmul.mubr.f32.gmra.mrb[0].mxu0 %v1441
        %v1909 = vpop.f32.mrb[0].mxu0
        %v1910 = vadd.f32 %v1685, %v1909
        %v1911 = vpop.f32.mrb[0].mxu0
        %1912 = vmatprep.mubr.f32.mxu0 0.0
        %1913 = vmatmul.mubr.f32.gmra.mrb[0].mxu0 %v1444
        %v1914 = vpop.f32.mrb[0].mxu0
        %v1915 = vadd.f32 %v1690, %v1914
        %v1916 = vpop.f32.mrb[0].mxu0
        %1917 = vmatprep.mubr.f32.mxu0 0.0
        %1918 = vmatmul.mubr.f32.gmra.mrb[0].mxu0 %v1447
        %v1919 = vpop.f32.mrb[0].mxu0
        %v1920 = vadd.f32 %v1695, %v1919
        %v1921 = vpop.f32.mrb[0].mxu0
        %1922 = vmatprep.mubr.f32.mxu0 0.0
        %1923 = vmatmul.mubr.f32.gmra.mrb[0].mxu0 %v1450
        %v1924 = vpop.f32.mrb[0].mxu0
        %v1925 = vadd.f32 %v1700, %v1924
        %v1926 = vpop.f32.mrb[0].mxu0
        %1927 = vmatprep.mubr.f32.mxu0 0.0
        %1928 = vmatmul.mubr.f32.gmra.mrb[0].mxu0 %v1453
        %v1929 = vpop.f32.mrb[0].mxu0
        %v1930 = vadd.f32 %v1705, %v1929
        %v1931 = vpop.f32.mrb[0].mxu0
        %1932 = vmatprep.mubr.f32.mxu0 0.0
        %1933 = vmatmul.mubr.f32.gmra.mrb[0].mxu0 %v1456
        %v1934 = vpop.f32.mrb[0].mxu0
        %v1935 = vadd.f32 %v1710, %v1934
        %v1936 = vpop.f32.mrb[0].mxu0
        %1937 = vmatprep.mubr.f32.mxu0 0.0
        %1938 = vmatmul.mubr.f32.gmra.mrb[0].mxu0 %v1459
        %v1939 = vpop.f32.mrb[0].mxu0
        %v1940 = vadd.f32 %v1715, %v1939
        %v1941 = vpop.f32.mrb[0].mxu0
        %1942 = vmatprep.mubr.f32.mxu0 0.0
        %1943 = vmatmul.mubr.f32.gmra.mrb[0].mxu0 %v1462
        %v1944 = vpop.f32.mrb[0].mxu0
        %v1945 = vadd.f32 %v1720, %v1944
        %v1946 = vpop.f32.mrb[0].mxu0
        %1947 = vmatprep.mubr.f32.mxu0 0.0
        %1948 = vmatmul.mubr.f32.gmra.mrb[0].mxu0 %v1465
        %v1949 = vpop.f32.mrb[0].mxu0
        %v1950 = vadd.f32 %v1725, %v1949
        %v1951 = vpop.f32.mrb[0].mxu0
        %1952 = vmatprep.mubr.f32.mxu0 0.0
        %1953 = vmatmul.mubr.f32.gmra.mrb[0].mxu0 %v1468
        %v1954 = vpop.f32.mrb[0].mxu0
        %v1955 = vadd.f32 %v1730, %v1954
        %v1956 = vpop.f32.mrb[0].mxu0
        %1957 = vmatprep.mubr.f32.mxu0 0.0
        %1958 = vmatmul.mubr.f32.gmra.mrb[0].mxu0 %v1471
        %v1959 = vpop.f32.mrb[0].mxu0
        %v1960 = vadd.f32 %v1735, %v1959
        %v1961 = vpop.f32.mrb[0].mxu0
        %1962 = vmatprep.mubr.f32.mxu0 0.0
        %1963 = vmatmul.mubr.f32.gmra.mrb[0].mxu0 %v1474
        %v1964 = vpop.f32.mrb[0].mxu0
        %v1965 = vadd.f32 %v1740, %v1964
        %v1966 = vpop.f32.mrb[0].mxu0
        %1967 = vmatprep.mubr.f32.mxu0 0.0
        %1968 = vmatmul.mubr.f32.gmra.mrb[0].mxu0 %v1477
        %v1969 = vpop.f32.mrb[0].mxu0
        %v1970 = vadd.f32 %v1745, %v1969
        %v1971 = vpop.f32.mrb[0].mxu0
        %1972 = vmatprep.mubr.f32.mxu0 0.0
        %1973 = vmatmul.mubr.f32.gmra.mrb[0].mxu0 %v1480
        %v1974 = vpop.f32.mrb[0].mxu0
        %v1975 = vadd.f32 %v1750, %v1974
        %v1976 = vpop.f32.mrb[0].mxu0
        %1977 = vmatprep.mubr.f32.mxu0 0.0
        %1978 = vmatmul.mubr.f32.gmra.mrb[0].mxu0 %v1483
        %v1979 = vpop.f32.mrb[0].mxu0
        %v1980 = vadd.f32 %v1755, %v1979
        %v1981 = vpop.f32.mrb[0].mxu0
        %1982 = vdwg.mxu0
        %v1983 = vld [vmem:[#allocation5] sm:$0xff]
        %v1984 = vld [vmem:[#allocation5 + $0x8] sm:$0xff]
        %v1985 = vld [vmem:[#allocation5 + $0x10] sm:$0xff]
        %v1986 = vld [vmem:[#allocation5 + $0x18] sm:$0xff]
        %v1987 = vld [vmem:[#allocation5 + $0x20] sm:$0xff]
        %v1988 = vld [vmem:[#allocation5 + $0x28] sm:$0xff]
        %v1989 = vld [vmem:[#allocation5 + $0x30] sm:$0xff]
        %v1990 = vld [vmem:[#allocation5 + $0x38] sm:$0xff]
        %v1991 = vld [vmem:[#allocation5 + $0x40] sm:$0xff]
        %v1992 = vld [vmem:[#allocation5 + $0x48] sm:$0xff]
        %v1993 = vld [vmem:[#allocation5 + $0x50] sm:$0xff]
        %v1994 = vld [vmem:[#allocation5 + $0x58] sm:$0xff]
        %v1995 = vld [vmem:[#allocation5 + $0x60] sm:$0xff]
        %v1996 = vld [vmem:[#allocation5 + $0x68] sm:$0xff]
        %v1997 = vld [vmem:[#allocation5 + $0x70] sm:$0xff]
        %v1998 = vld [vmem:[#allocation5 + $0x78] sm:$0xff]
        %v1999 = vld [vmem:[#allocation5 + $0x80] sm:$0xff]
        %v2000 = vld [vmem:[#allocation5 + $0x88] sm:$0xff]
        %v2001 = vld [vmem:[#allocation5 + $0x90] sm:$0xff]
        %v2002 = vld [vmem:[#allocation5 + $0x98] sm:$0xff]
        %v2003 = vld [vmem:[#allocation5 + $0xa0] sm:$0xff]
        %v2004 = vld [vmem:[#allocation5 + $0xa8] sm:$0xff]
        %v2005 = vld [vmem:[#allocation5 + $0xb0] sm:$0xff]
        %v2006 = vld [vmem:[#allocation5 + $0xb8] sm:$0xff]
        %v2007 = vld [vmem:[#allocation5 + $0xc0] sm:$0xff]
        %v2008 = vld [vmem:[#allocation5 + $0xc8] sm:$0xff]
        %v2009 = vld [vmem:[#allocation5 + $0xd0] sm:$0xff]
        %v2010 = vld [vmem:[#allocation5 + $0xd8] sm:$0xff]
        %v2011 = vld [vmem:[#allocation5 + $0xe0] sm:$0xff]
        %v2012 = vld [vmem:[#allocation5 + $0xe8] sm:$0xff]
        %v2013 = vld [vmem:[#allocation5 + $0xf0] sm:$0xff]
        %v2014 = vld [vmem:[#allocation5 + $0xf8] sm:$0xff]
        %v2015 = vadd.f32 %v1983, %v1825
        %v2016 = vadd.f32 %v1984, %v1830
        %v2017 = vadd.f32 %v1985, %v1835
        %v2018 = vadd.f32 %v1986, %v1840
        %v2019 = vadd.f32 %v1987, %v1845
        %v2020 = vadd.f32 %v1988, %v1850
        %v2021 = vadd.f32 %v1989, %v1855
        %v2022 = vadd.f32 %v1990, %v1860
        %v2023 = vadd.f32 %v1991, %v1865
        %v2024 = vadd.f32 %v1992, %v1870
        %v2025 = vadd.f32 %v1993, %v1875
        %v2026 = vadd.f32 %v1994, %v1880
        %v2027 = vadd.f32 %v1995, %v1885
        %v2028 = vadd.f32 %v1996, %v1890
        %v2029 = vadd.f32 %v1997, %v1895
        %v2030 = vadd.f32 %v1998, %v1900
        %v2031 = vadd.f32 %v1999, %v1905
        %v2032 = vadd.f32 %v2000, %v1910
        %v2033 = vadd.f32 %v2001, %v1915
        %v2034 = vadd.f32 %v2002, %v1920
        %v2035 = vadd.f32 %v2003, %v1925
        %v2036 = vadd.f32 %v2004, %v1930
        %v2037 = vadd.f32 %v2005, %v1935
        %v2038 = vadd.f32 %v2006, %v1940
        %v2039 = vadd.f32 %v2007, %v1945
        %v2040 = vadd.f32 %v2008, %v1950
        %v2041 = vadd.f32 %v2009, %v1955
        %v2042 = vadd.f32 %v2010, %v1960
        %v2043 = vadd.f32 %v2011, %v1965
        %v2044 = vadd.f32 %v2012, %v1970
        %v2045 = vadd.f32 %v2013, %v1975
        %v2046 = vadd.f32 %v2014, %v1980
        %2047 = vst [vmem:[#allocation5] sm:$0xff] %v2015
        %2048 = vst [vmem:[#allocation5 + $0x8] sm:$0xff] %v2016
        %2049 = vst [vmem:[#allocation5 + $0x10] sm:$0xff] %v2017
        %2050 = vst [vmem:[#allocation5 + $0x18] sm:$0xff] %v2018
        %2051 = vst [vmem:[#allocation5 + $0x20] sm:$0xff] %v2019
        %2052 = vst [vmem:[#allocation5 + $0x28] sm:$0xff] %v2020
        %2053 = vst [vmem:[#allocation5 + $0x30] sm:$0xff] %v2021
        %2054 = vst [vmem:[#allocation5 + $0x38] sm:$0xff] %v2022
        %2055 = vst [vmem:[#allocation5 + $0x40] sm:$0xff] %v2023
        %2056 = vst [vmem:[#allocation5 + $0x48] sm:$0xff] %v2024
        %2057 = vst [vmem:[#allocation5 + $0x50] sm:$0xff] %v2025
        %2058 = vst [vmem:[#allocation5 + $0x58] sm:$0xff] %v2026
        %2059 = vst [vmem:[#allocation5 + $0x60] sm:$0xff] %v2027
        %2060 = vst [vmem:[#allocation5 + $0x68] sm:$0xff] %v2028
        %2061 = vst [vmem:[#allocation5 + $0x70] sm:$0xff] %v2029
        %2062 = vst [vmem:[#allocation5 + $0x78] sm:$0xff] %v2030
        %2063 = vst [vmem:[#allocation5 + $0x80] sm:$0xff] %v2031
        %2064 = vst [vmem:[#allocation5 + $0x88] sm:$0xff] %v2032
        %2065 = vst [vmem:[#allocation5 + $0x90] sm:$0xff] %v2033
        %2066 = vst [vmem:[#allocation5 + $0x98] sm:$0xff] %v2034
        %2067 = vst [vmem:[#allocation5 + $0xa0] sm:$0xff] %v2035
        %2068 = vst [vmem:[#allocation5 + $0xa8] sm:$0xff] %v2036
        %2069 = vst [vmem:[#allocation5 + $0xb0] sm:$0xff] %v2037
        %2070 = vst [vmem:[#allocation5 + $0xb8] sm:$0xff] %v2038
        %2071 = vst [vmem:[#allocation5 + $0xc0] sm:$0xff] %v2039
        %2072 = vst [vmem:[#allocation5 + $0xc8] sm:$0xff] %v2040
        %2073 = vst [vmem:[#allocation5 + $0xd0] sm:$0xff] %v2041
        %2074 = vst [vmem:[#allocation5 + $0xd8] sm:$0xff] %v2042
        %2075 = vst [vmem:[#allocation5 + $0xe0] sm:$0xff] %v2043
        %2076 = vst [vmem:[#allocation5 + $0xe8] sm:$0xff] %v2044
        %2077 = vst [vmem:[#allocation5 + $0xf0] sm:$0xff] %v2045
        %2078 = vst [vmem:[#allocation5 + $0xf8] sm:$0xff] %v2046
        %s2079 = scalar_lea.vmem [#allocation4], 96
        %v2080 = vld [vmem:[%s2079] sm:$0xff]
        %v2081 = vld [vmem:[%s2079 + $0x8] sm:$0xff]
        %v2082 = vld [vmem:[%s2079 + $0x10] sm:$0xff]
        %v2083 = vld [vmem:[%s2079 + $0x18] sm:$0xff]
        %v2084 = vld [vmem:[%s2079 + $0x20] sm:$0xff]
        %v2085 = vld [vmem:[%s2079 + $0x28] sm:$0xff]
        %v2086 = vld [vmem:[%s2079 + $0x30] sm:$0xff]
        %v2087 = vld [vmem:[%s2079 + $0x38] sm:$0xff]
        %v2088 = vld [vmem:[%s2079 + $0x40] sm:$0xff]
        %v2089 = vld [vmem:[%s2079 + $0x48] sm:$0xff]
        %v2090 = vld [vmem:[%s2079 + $0x50] sm:$0xff]
        %v2091 = vld [vmem:[%s2079 + $0x58] sm:$0xff]
        %v2092 = vld [vmem:[%s2079 + $0x60] sm:$0xff]
        %v2093 = vld [vmem:[%s2079 + $0x68] sm:$0xff]
        %v2094 = vld [vmem:[%s2079 + $0x70] sm:$0xff]
        %v2095 = vld [vmem:[%s2079 + $0x78] sm:$0xff]
        %v2096 = vld [vmem:[%s2079 + $0x80] sm:$0xff]
        %v2097 = vld [vmem:[%s2079 + $0x88] sm:$0xff]
        %v2098 = vld [vmem:[%s2079 + $0x90] sm:$0xff]
        %v2099 = vld [vmem:[%s2079 + $0x98] sm:$0xff]
        %v2100 = vld [vmem:[%s2079 + $0xa0] sm:$0xff]
        %v2101 = vld [vmem:[%s2079 + $0xa8] sm:$0xff]
        %v2102 = vld [vmem:[%s2079 + $0xb0] sm:$0xff]
        %v2103 = vld [vmem:[%s2079 + $0xb8] sm:$0xff]
        %v2104 = vld [vmem:[%s2079 + $0xc0] sm:$0xff]
        %v2105 = vld [vmem:[%s2079 + $0xc8] sm:$0xff]
        %v2106 = vld [vmem:[%s2079 + $0xd0] sm:$0xff]
        %v2107 = vld [vmem:[%s2079 + $0xd8] sm:$0xff]
        %v2108 = vld [vmem:[%s2079 + $0xe0] sm:$0xff]
        %v2109 = vld [vmem:[%s2079 + $0xe8] sm:$0xff]
        %v2110 = vld [vmem:[%s2079 + $0xf0] sm:$0xff]
        %v2111 = vld [vmem:[%s2079 + $0xf8] sm:$0xff]
        %v2112 = vld [vmem:[%s2079 + $0x100] sm:$0xff]
        %v2113 = vld [vmem:[%s2079 + $0x108] sm:$0xff]
        %v2114 = vld [vmem:[%s2079 + $0x110] sm:$0xff]
        %v2115 = vld [vmem:[%s2079 + $0x118] sm:$0xff]
        %v2116 = vld [vmem:[%s2079 + $0x120] sm:$0xff]
        %v2117 = vld [vmem:[%s2079 + $0x128] sm:$0xff]
        %v2118 = vld [vmem:[%s2079 + $0x130] sm:$0xff]
        %v2119 = vld [vmem:[%s2079 + $0x138] sm:$0xff]
        %v2120 = vld [vmem:[%s2079 + $0x140] sm:$0xff]
        %v2121 = vld [vmem:[%s2079 + $0x148] sm:$0xff]
        %v2122 = vld [vmem:[%s2079 + $0x150] sm:$0xff]
        %v2123 = vld [vmem:[%s2079 + $0x158] sm:$0xff]
        %v2124 = vld [vmem:[%s2079 + $0x160] sm:$0xff]
        %v2125 = vld [vmem:[%s2079 + $0x168] sm:$0xff]
        %v2126 = vld [vmem:[%s2079 + $0x170] sm:$0xff]
        %v2127 = vld [vmem:[%s2079 + $0x178] sm:$0xff]
        %v2128 = vld [vmem:[%s2079 + $0x180] sm:$0xff]
        %v2129 = vld [vmem:[%s2079 + $0x188] sm:$0xff]
        %v2130 = vld [vmem:[%s2079 + $0x190] sm:$0xff]
        %v2131 = vld [vmem:[%s2079 + $0x198] sm:$0xff]
        %v2132 = vld [vmem:[%s2079 + $0x1a0] sm:$0xff]
        %v2133 = vld [vmem:[%s2079 + $0x1a8] sm:$0xff]
        %v2134 = vld [vmem:[%s2079 + $0x1b0] sm:$0xff]
        %v2135 = vld [vmem:[%s2079 + $0x1b8] sm:$0xff]
        %v2136 = vld [vmem:[%s2079 + $0x1c0] sm:$0xff]
        %v2137 = vld [vmem:[%s2079 + $0x1c8] sm:$0xff]
        %v2138 = vld [vmem:[%s2079 + $0x1d0] sm:$0xff]
        %v2139 = vld [vmem:[%s2079 + $0x1d8] sm:$0xff]
        %v2140 = vld [vmem:[%s2079 + $0x1e0] sm:$0xff]
        %v2141 = vld [vmem:[%s2079 + $0x1e8] sm:$0xff]
        %v2142 = vld [vmem:[%s2079 + $0x1f0] sm:$0xff]
        %v2143 = vld [vmem:[%s2079 + $0x1f8] sm:$0xff]
        %v2144 = vld [vmem:[%s2079 + $0x200] sm:$0xff]
        %v2145 = vld [vmem:[%s2079 + $0x208] sm:$0xff]
        %v2146 = vld [vmem:[%s2079 + $0x210] sm:$0xff]
        %v2147 = vld [vmem:[%s2079 + $0x218] sm:$0xff]
        %v2148 = vld [vmem:[%s2079 + $0x220] sm:$0xff]
        %v2149 = vld [vmem:[%s2079 + $0x228] sm:$0xff]
        %v2150 = vld [vmem:[%s2079 + $0x230] sm:$0xff]
        %v2151 = vld [vmem:[%s2079 + $0x238] sm:$0xff]
        %v2152 = vld [vmem:[%s2079 + $0x240] sm:$0xff]
        %v2153 = vld [vmem:[%s2079 + $0x248] sm:$0xff]
        %v2154 = vld [vmem:[%s2079 + $0x250] sm:$0xff]
        %v2155 = vld [vmem:[%s2079 + $0x258] sm:$0xff]
        %v2156 = vld [vmem:[%s2079 + $0x260] sm:$0xff]
        %v2157 = vld [vmem:[%s2079 + $0x268] sm:$0xff]
        %v2158 = vld [vmem:[%s2079 + $0x270] sm:$0xff]
        %v2159 = vld [vmem:[%s2079 + $0x278] sm:$0xff]
        %v2160 = vld [vmem:[%s2079 + $0x280] sm:$0xff]
        %v2161 = vld [vmem:[%s2079 + $0x288] sm:$0xff]
        %v2162 = vld [vmem:[%s2079 + $0x290] sm:$0xff]
        %v2163 = vld [vmem:[%s2079 + $0x298] sm:$0xff]
        %v2164 = vld [vmem:[%s2079 + $0x2a0] sm:$0xff]
        %v2165 = vld [vmem:[%s2079 + $0x2a8] sm:$0xff]
        %v2166 = vld [vmem:[%s2079 + $0x2b0] sm:$0xff]
        %v2167 = vld [vmem:[%s2079 + $0x2b8] sm:$0xff]
        %v2168 = vld [vmem:[%s2079 + $0x2c0] sm:$0xff]
        %v2169 = vld [vmem:[%s2079 + $0x2c8] sm:$0xff]
        %v2170 = vld [vmem:[%s2079 + $0x2d0] sm:$0xff]
        %v2171 = vld [vmem:[%s2079 + $0x2d8] sm:$0xff]
        %v2172 = vld [vmem:[%s2079 + $0x2e0] sm:$0xff]
        %v2173 = vld [vmem:[%s2079 + $0x2e8] sm:$0xff]
        %v2174 = vld [vmem:[%s2079 + $0x2f0] sm:$0xff]
        %v2175 = vld [vmem:[%s2079 + $0x2f8] sm:$0xff]
        %s2176 = scalar_lea.vmem [#allocation9], 768
        %v2177 = vld [vmem:[%s2176] sm:$0xff]
        %v2178 = vld [vmem:[%s2176 + $0x8] sm:$0xff]
        %v2179 = vld [vmem:[%s2176 + $0x10] sm:$0xff]
        %v2180 = vld [vmem:[%s2176 + $0x18] sm:$0xff]
        %v2181 = vld [vmem:[%s2176 + $0x20] sm:$0xff]
        %v2182 = vld [vmem:[%s2176 + $0x28] sm:$0xff]
        %v2183 = vld [vmem:[%s2176 + $0x30] sm:$0xff]
        %v2184 = vld [vmem:[%s2176 + $0x38] sm:$0xff]
        %v2185 = vld [vmem:[%s2176 + $0x40] sm:$0xff]
        %v2186 = vld [vmem:[%s2176 + $0x48] sm:$0xff]
        %v2187 = vld [vmem:[%s2176 + $0x50] sm:$0xff]
        %v2188 = vld [vmem:[%s2176 + $0x58] sm:$0xff]
        %v2189 = vld [vmem:[%s2176 + $0x60] sm:$0xff]
        %v2190 = vld [vmem:[%s2176 + $0x68] sm:$0xff]
        %v2191 = vld [vmem:[%s2176 + $0x70] sm:$0xff]
        %v2192 = vld [vmem:[%s2176 + $0x78] sm:$0xff]
        %v2193 = vld [vmem:[%s2176 + $0x80] sm:$0xff]
        %v2194 = vld [vmem:[%s2176 + $0x88] sm:$0xff]
        %v2195 = vld [vmem:[%s2176 + $0x90] sm:$0xff]
        %v2196 = vld [vmem:[%s2176 + $0x98] sm:$0xff]
        %v2197 = vld [vmem:[%s2176 + $0xa0] sm:$0xff]
        %v2198 = vld [vmem:[%s2176 + $0xa8] sm:$0xff]
        %v2199 = vld [vmem:[%s2176 + $0xb0] sm:$0xff]
        %v2200 = vld [vmem:[%s2176 + $0xb8] sm:$0xff]
        %v2201 = vld [vmem:[%s2176 + $0xc0] sm:$0xff]
        %v2202 = vld [vmem:[%s2176 + $0xc8] sm:$0xff]
        %v2203 = vld [vmem:[%s2176 + $0xd0] sm:$0xff]
        %v2204 = vld [vmem:[%s2176 + $0xd8] sm:$0xff]
        %v2205 = vld [vmem:[%s2176 + $0xe0] sm:$0xff]
        %v2206 = vld [vmem:[%s2176 + $0xe8] sm:$0xff]
        %v2207 = vld [vmem:[%s2176 + $0xf0] sm:$0xff]
        %v2208 = vld [vmem:[%s2176 + $0xf8] sm:$0xff]
        %v2209 = vld [vmem:[%s2176 + $0x100] sm:$0xff]
        %v2210 = vld [vmem:[%s2176 + $0x108] sm:$0xff]
        %v2211 = vld [vmem:[%s2176 + $0x110] sm:$0xff]
        %v2212 = vld [vmem:[%s2176 + $0x118] sm:$0xff]
        %v2213 = vld [vmem:[%s2176 + $0x120] sm:$0xff]
        %v2214 = vld [vmem:[%s2176 + $0x128] sm:$0xff]
        %v2215 = vld [vmem:[%s2176 + $0x130] sm:$0xff]
        %v2216 = vld [vmem:[%s2176 + $0x138] sm:$0xff]
        %v2217 = vld [vmem:[%s2176 + $0x140] sm:$0xff]
        %v2218 = vld [vmem:[%s2176 + $0x148] sm:$0xff]
        %v2219 = vld [vmem:[%s2176 + $0x150] sm:$0xff]
        %v2220 = vld [vmem:[%s2176 + $0x158] sm:$0xff]
        %v2221 = vld [vmem:[%s2176 + $0x160] sm:$0xff]
        %v2222 = vld [vmem:[%s2176 + $0x168] sm:$0xff]
        %v2223 = vld [vmem:[%s2176 + $0x170] sm:$0xff]
        %v2224 = vld [vmem:[%s2176 + $0x178] sm:$0xff]
        %2225 = vmatprep.subr.mxu0 0.0
        %2226 = vmatpush1.msra.mxu0 %v2177
        %2227 = vmatprep.subr.mxu0 0.0
        %2228 = vmatpush1.msra.mxu0 %v2178
        %2229 = vmatprep.subr.mxu0 0.0
        %2230 = vmatpush1.msra.mxu0 %v2179
        %2231 = vmatprep.subr.mxu0 0.0
        %2232 = vmatpush1.msra.mxu0 %v2180
        %2233 = vmatprep.subr.mxu0 0.0
        %2234 = vmatpush1.msra.mxu0 %v2181
        %2235 = vmatprep.subr.mxu0 0.0
        %2236 = vmatpush1.msra.mxu0 %v2182
        %2237 = vmatprep.subr.mxu0 0.0
        %2238 = vmatpush1.msra.mxu0 %v2183
        %2239 = vmatprep.subr.mxu0 0.0
        %2240 = vmatpush1.msra.mxu0 %v2184
        %2241 = vmatprep.subr.mxu0 0.0
        %2242 = vmatpush1.msra.mxu0 %v2185
        %2243 = vmatprep.subr.mxu0 0.0
        %2244 = vmatpush1.msra.mxu0 %v2186
        %2245 = vmatprep.subr.mxu0 0.0
        %2246 = vmatpush1.msra.mxu0 %v2187
        %2247 = vmatprep.subr.mxu0 0.0
        %2248 = vmatpush1.msra.mxu0 %v2188
        %2249 = vmatprep.subr.mxu0 0.0
        %2250 = vmatpush1.msra.mxu0 %v2189
        %2251 = vmatprep.subr.mxu0 0.0
        %2252 = vmatpush1.msra.mxu0 %v2190
        %2253 = vmatprep.subr.mxu0 0.0
        %2254 = vmatpush1.msra.mxu0 %v2191
        %2255 = vmatprep.subr.mxu0 0.0
        %2256 = vmatpush1.msra.mxu0 %v2192
        %2257 = vmatprep.subr.mxu0 0.0
        %2258 = vmatpush1.msra.mxu0 %v2193
        %2259 = vmatprep.subr.mxu0 0.0
        %2260 = vmatpush1.msra.mxu0 %v2194
        %2261 = vmatprep.subr.mxu0 0.0
        %2262 = vmatpush1.msra.mxu0 %v2195
        %2263 = vmatprep.subr.mxu0 0.0
        %2264 = vmatpush1.msra.mxu0 %v2196
        %2265 = vmatprep.subr.mxu0 0.0
        %2266 = vmatpush1.msra.mxu0 %v2197
        %2267 = vmatprep.subr.mxu0 0.0
        %2268 = vmatpush1.msra.mxu0 %v2198
        %2269 = vmatprep.subr.mxu0 0.0
        %2270 = vmatpush1.msra.mxu0 %v2199
        %2271 = vmatprep.subr.mxu0 0.0
        %2272 = vmatpush1.msra.mxu0 %v2200
        %2273 = vmatprep.subr.mxu0 0.0
        %2274 = vmatpush1.msra.mxu0 %v2201
        %2275 = vmatprep.subr.mxu0 0.0
        %2276 = vmatpush1.msra.mxu0 %v2202
        %2277 = vmatprep.subr.mxu0 0.0
        %2278 = vmatpush1.msra.mxu0 %v2203
        %2279 = vmatprep.subr.mxu0 0.0
        %2280 = vmatpush1.msra.mxu0 %v2204
        %2281 = vmatprep.subr.mxu0 0.0
        %2282 = vmatpush1.msra.mxu0 %v2205
        %2283 = vmatprep.subr.mxu0 0.0
        %2284 = vmatpush1.msra.mxu0 %v2206
        %2285 = vmatprep.subr.mxu0 0.0
        %2286 = vmatpush1.msra.mxu0 %v2207
        %2287 = vmatprep.subr.mxu0 0.0
        %2288 = vmatpush1.msra.mxu0 %v2208
        %2289 = vmatprep.mubr.f32.mxu0 %v2081
        %2290 = vmatmul.mubr.f32.gmra.mrb[0].mxu0 %v2080
        %v2291 = vpop.f32.mrb[0].mxu0
        %v2292 = vadd.f32 0.0, %v2291
        %v2293 = vpop.f32.mrb[0].mxu0
        %2294 = vmatprep.mubr.f32.mxu0 %v2084
        %2295 = vmatmul.mubr.f32.gmra.mrb[0].mxu0 %v2083
        %v2296 = vpop.f32.mrb[0].mxu0
        %v2297 = vadd.f32 0.0, %v2296
        %v2298 = vpop.f32.mrb[0].mxu0
        %2299 = vmatprep.mubr.f32.mxu0 %v2087
        %2300 = vmatmul.mubr.f32.gmra.mrb[0].mxu0 %v2086
        %v2301 = vpop.f32.mrb[0].mxu0
        %v2302 = vadd.f32 0.0, %v2301
        %v2303 = vpop.f32.mrb[0].mxu0
        %2304 = vmatprep.mubr.f32.mxu0 %v2090
        %2305 = vmatmul.mubr.f32.gmra.mrb[0].mxu0 %v2089
        %v2306 = vpop.f32.mrb[0].mxu0
        %v2307 = vadd.f32 0.0, %v2306
        %v2308 = vpop.f32.mrb[0].mxu0
        %2309 = vmatprep.mubr.f32.mxu0 %v2093
        %2310 = vmatmul.mubr.f32.gmra.mrb[0].mxu0 %v2092
        %v2311 = vpop.f32.mrb[0].mxu0
        %v2312 = vadd.f32 0.0, %v2311
        %v2313 = vpop.f32.mrb[0].mxu0
        %2314 = vmatprep.mubr.f32.mxu0 %v2096
        %2315 = vmatmul.mubr.f32.gmra.mrb[0].mxu0 %v2095
        %v2316 = vpop.f32.mrb[0].mxu0
        %v2317 = vadd.f32 0.0, %v2316
        %v2318 = vpop.f32.mrb[0].mxu0
        %2319 = vmatprep.mubr.f32.mxu0 %v2099
        %2320 = vmatmul.mubr.f32.gmra.mrb[0].mxu0 %v2098
        %v2321 = vpop.f32.mrb[0].mxu0
        %v2322 = vadd.f32 0.0, %v2321
        %v2323 = vpop.f32.mrb[0].mxu0
        %2324 = vmatprep.mubr.f32.mxu0 %v2102
        %2325 = vmatmul.mubr.f32.gmra.mrb[0].mxu0 %v2101
        %v2326 = vpop.f32.mrb[0].mxu0
        %v2327 = vadd.f32 0.0, %v2326
        %v2328 = vpop.f32.mrb[0].mxu0
        %2329 = vmatprep.mubr.f32.mxu0 %v2105
        %2330 = vmatmul.mubr.f32.gmra.mrb[0].mxu0 %v2104
        %v2331 = vpop.f32.mrb[0].mxu0
        %v2332 = vadd.f32 0.0, %v2331
        %v2333 = vpop.f32.mrb[0].mxu0
        %2334 = vmatprep.mubr.f32.mxu0 %v2108
        %2335 = vmatmul.mubr.f32.gmra.mrb[0].mxu0 %v2107
        %v2336 = vpop.f32.mrb[0].mxu0
        %v2337 = vadd.f32 0.0, %v2336
        %v2338 = vpop.f32.mrb[0].mxu0
        %2339 = vmatprep.mubr.f32.mxu0 %v2111
        %2340 = vmatmul.mubr.f32.gmra.mrb[0].mxu0 %v2110
        %v2341 = vpop.f32.mrb[0].mxu0
        %v2342 = vadd.f32 0.0, %v2341
        %v2343 = vpop.f32.mrb[0].mxu0
        %2344 = vmatprep.mubr.f32.mxu0 %v2114
        %2345 = vmatmul.mubr.f32.gmra.mrb[0].mxu0 %v2113
        %v2346 = vpop.f32.mrb[0].mxu0
        %v2347 = vadd.f32 0.0, %v2346
        %v2348 = vpop.f32.mrb[0].mxu0
        %2349 = vmatprep.mubr.f32.mxu0 %v2117
        %2350 = vmatmul.mubr.f32.gmra.mrb[0].mxu0 %v2116
        %v2351 = vpop.f32.mrb[0].mxu0
        %v2352 = vadd.f32 0.0, %v2351
        %v2353 = vpop.f32.mrb[0].mxu0
        %2354 = vmatprep.mubr.f32.mxu0 %v2120
        %2355 = vmatmul.mubr.f32.gmra.mrb[0].mxu0 %v2119
        %v2356 = vpop.f32.mrb[0].mxu0
        %v2357 = vadd.f32 0.0, %v2356
        %v2358 = vpop.f32.mrb[0].mxu0
        %2359 = vmatprep.mubr.f32.mxu0 %v2123
        %2360 = vmatmul.mubr.f32.gmra.mrb[0].mxu0 %v2122
        %v2361 = vpop.f32.mrb[0].mxu0
        %v2362 = vadd.f32 0.0, %v2361
        %v2363 = vpop.f32.mrb[0].mxu0
        %2364 = vmatprep.mubr.f32.mxu0 %v2126
        %2365 = vmatmul.mubr.f32.gmra.mrb[0].mxu0 %v2125
        %v2366 = vpop.f32.mrb[0].mxu0
        %v2367 = vadd.f32 0.0, %v2366
        %v2368 = vpop.f32.mrb[0].mxu0
        %2369 = vmatprep.mubr.f32.mxu0 %v2129
        %2370 = vmatmul.mubr.f32.gmra.mrb[0].mxu0 %v2128
        %v2371 = vpop.f32.mrb[0].mxu0
        %v2372 = vadd.f32 0.0, %v2371
        %v2373 = vpop.f32.mrb[0].mxu0
        %2374 = vmatprep.mubr.f32.mxu0 %v2132
        %2375 = vmatmul.mubr.f32.gmra.mrb[0].mxu0 %v2131
        %v2376 = vpop.f32.mrb[0].mxu0
        %v2377 = vadd.f32 0.0, %v2376
        %v2378 = vpop.f32.mrb[0].mxu0
        %2379 = vmatprep.mubr.f32.mxu0 %v2135
        %2380 = vmatmul.mubr.f32.gmra.mrb[0].mxu0 %v2134
        %v2381 = vpop.f32.mrb[0].mxu0
        %v2382 = vadd.f32 0.0, %v2381
        %v2383 = vpop.f32.mrb[0].mxu0
        %2384 = vmatprep.mubr.f32.mxu0 %v2138
        %2385 = vmatmul.mubr.f32.gmra.mrb[0].mxu0 %v2137
        %v2386 = vpop.f32.mrb[0].mxu0
        %v2387 = vadd.f32 0.0, %v2386
        %v2388 = vpop.f32.mrb[0].mxu0
        %2389 = vmatprep.mubr.f32.mxu0 %v2141
        %2390 = vmatmul.mubr.f32.gmra.mrb[0].mxu0 %v2140
        %v2391 = vpop.f32.mrb[0].mxu0
        %v2392 = vadd.f32 0.0, %v2391
        %v2393 = vpop.f32.mrb[0].mxu0
        %2394 = vmatprep.mubr.f32.mxu0 %v2144
        %2395 = vmatmul.mubr.f32.gmra.mrb[0].mxu0 %v2143
        %v2396 = vpop.f32.mrb[0].mxu0
        %v2397 = vadd.f32 0.0, %v2396
        %v2398 = vpop.f32.mrb[0].mxu0
        %2399 = vmatprep.mubr.f32.mxu0 %v2147
        %2400 = vmatmul.mubr.f32.gmra.mrb[0].mxu0 %v2146
        %v2401 = vpop.f32.mrb[0].mxu0
        %v2402 = vadd.f32 0.0, %v2401
        %v2403 = vpop.f32.mrb[0].mxu0
        %2404 = vmatprep.mubr.f32.mxu0 %v2150
        %2405 = vmatmul.mubr.f32.gmra.mrb[0].mxu0 %v2149
        %v2406 = vpop.f32.mrb[0].mxu0
        %v2407 = vadd.f32 0.0, %v2406
        %v2408 = vpop.f32.mrb[0].mxu0
        %2409 = vmatprep.mubr.f32.mxu0 %v2153
        %2410 = vmatmul.mubr.f32.gmra.mrb[0].mxu0 %v2152
        %v2411 = vpop.f32.mrb[0].mxu0
        %v2412 = vadd.f32 0.0, %v2411
        %v2413 = vpop.f32.mrb[0].mxu0
        %2414 = vmatprep.mubr.f32.mxu0 %v2156
        %2415 = vmatmul.mubr.f32.gmra.mrb[0].mxu0 %v2155
        %v2416 = vpop.f32.mrb[0].mxu0
        %v2417 = vadd.f32 0.0, %v2416
        %v2418 = vpop.f32.mrb[0].mxu0
        %2419 = vmatprep.mubr.f32.mxu0 %v2159
        %2420 = vmatmul.mubr.f32.gmra.mrb[0].mxu0 %v2158
        %v2421 = vpop.f32.mrb[0].mxu0
        %v2422 = vadd.f32 0.0, %v2421
        %v2423 = vpop.f32.mrb[0].mxu0
        %2424 = vmatprep.mubr.f32.mxu0 %v2162
        %2425 = vmatmul.mubr.f32.gmra.mrb[0].mxu0 %v2161
        %v2426 = vpop.f32.mrb[0].mxu0
        %v2427 = vadd.f32 0.0, %v2426
        %v2428 = vpop.f32.mrb[0].mxu0
        %2429 = vmatprep.mubr.f32.mxu0 %v2165
        %2430 = vmatmul.mubr.f32.gmra.mrb[0].mxu0 %v2164
        %v2431 = vpop.f32.mrb[0].mxu0
        %v2432 = vadd.f32 0.0, %v2431
        %v2433 = vpop.f32.mrb[0].mxu0
        %2434 = vmatprep.mubr.f32.mxu0 %v2168
        %2435 = vmatmul.mubr.f32.gmra.mrb[0].mxu0 %v2167
        %v2436 = vpop.f32.mrb[0].mxu0
        %v2437 = vadd.f32 0.0, %v2436
        %v2438 = vpop.f32.mrb[0].mxu0
        %2439 = vmatprep.mubr.f32.mxu0 %v2171
        %2440 = vmatmul.mubr.f32.gmra.mrb[0].mxu0 %v2170
        %v2441 = vpop.f32.mrb[0].mxu0
        %v2442 = vadd.f32 0.0, %v2441
        %v2443 = vpop.f32.mrb[0].mxu0
        %2444 = vmatprep.mubr.f32.mxu0 %v2174
        %2445 = vmatmul.mubr.f32.gmra.mrb[0].mxu0 %v2173
        %v2446 = vpop.f32.mrb[0].mxu0
        %v2447 = vadd.f32 0.0, %v2446
        %v2448 = vpop.f32.mrb[0].mxu0
        %2449 = vdwg.mxu0
        %2450 = vmatprep.subr.mxu0 0.0
        %2451 = vmatpush1.msra.mxu0 %v2209
        %2452 = vmatprep.subr.mxu0 0.0
        %2453 = vmatpush1.msra.mxu0 %v2210
        %2454 = vmatprep.subr.mxu0 0.0
        %2455 = vmatpush1.msra.mxu0 %v2211
        %2456 = vmatprep.subr.mxu0 0.0
        %2457 = vmatpush1.msra.mxu0 %v2212
        %2458 = vmatprep.subr.mxu0 0.0
        %2459 = vmatpush1.msra.mxu0 %v2213
        %2460 = vmatprep.subr.mxu0 0.0
        %2461 = vmatpush1.msra.mxu0 %v2214
        %2462 = vmatprep.subr.mxu0 0.0
        %2463 = vmatpush1.msra.mxu0 %v2215
        %2464 = vmatprep.subr.mxu0 0.0
        %2465 = vmatpush1.msra.mxu0 %v2216
        %2466 = vmatprep.subr.mxu0 0.0
        %2467 = vmatpush1.msra.mxu0 %v2217
        %2468 = vmatprep.subr.mxu0 0.0
        %2469 = vmatpush1.msra.mxu0 %v2218
        %2470 = vmatprep.subr.mxu0 0.0
        %2471 = vmatpush1.msra.mxu0 %v2219
        %2472 = vmatprep.subr.mxu0 0.0
        %2473 = vmatpush1.msra.mxu0 %v2220
        %2474 = vmatprep.subr.mxu0 0.0
        %2475 = vmatpush1.msra.mxu0 %v2221
        %2476 = vmatprep.subr.mxu0 0.0
        %2477 = vmatpush1.msra.mxu0 %v2222
        %2478 = vmatprep.subr.mxu0 0.0
        %2479 = vmatpush1.msra.mxu0 %v2223
        %2480 = vmatprep.subr.mxu0 0.0
        %2481 = vmatpush1.msra.mxu0 %v2224
        %2482 = vmatprep.subr.mxu0 0.0
        %2483 = vmatpush1.msra.mxu0 0.0
        %2484 = vmatprep.subr.mxu0 0.0
        %2485 = vmatpush1.msra.mxu0 0.0
        %2486 = vmatprep.subr.mxu0 0.0
        %2487 = vmatpush1.msra.mxu0 0.0
        %2488 = vmatprep.subr.mxu0 0.0
        %2489 = vmatpush1.msra.mxu0 0.0
        %2490 = vmatprep.subr.mxu0 0.0
        %2491 = vmatpush1.msra.mxu0 0.0
        %2492 = vmatprep.subr.mxu0 0.0
        %2493 = vmatpush1.msra.mxu0 0.0
        %2494 = vmatprep.subr.mxu0 0.0
        %2495 = vmatpush1.msra.mxu0 0.0
        %2496 = vmatprep.subr.mxu0 0.0
        %2497 = vmatpush1.msra.mxu0 0.0
        %2498 = vmatprep.subr.mxu0 0.0
        %2499 = vmatpush1.msra.mxu0 0.0
        %2500 = vmatprep.subr.mxu0 0.0
        %2501 = vmatpush1.msra.mxu0 0.0
        %2502 = vmatprep.subr.mxu0 0.0
        %2503 = vmatpush1.msra.mxu0 0.0
        %2504 = vmatprep.subr.mxu0 0.0
        %2505 = vmatpush1.msra.mxu0 0.0
        %2506 = vmatprep.subr.mxu0 0.0
        %2507 = vmatpush1.msra.mxu0 0.0
        %2508 = vmatprep.subr.mxu0 0.0
        %2509 = vmatpush1.msra.mxu0 0.0
        %2510 = vmatprep.subr.mxu0 0.0
        %2511 = vmatpush1.msra.mxu0 0.0
        %2512 = vmatprep.subr.mxu0 0.0
        %2513 = vmatpush1.msra.mxu0 0.0
        %2514 = vmatprep.mubr.f32.mxu0 0.0
        %2515 = vmatmul.mubr.f32.gmra.mrb[0].mxu0 %v2082
        %v2516 = vpop.f32.mrb[0].mxu0
        %v2517 = vadd.f32 %v2292, %v2516
        %v2518 = vpop.f32.mrb[0].mxu0
        %2519 = vmatprep.mubr.f32.mxu0 0.0
        %2520 = vmatmul.mubr.f32.gmra.mrb[0].mxu0 %v2085
        %v2521 = vpop.f32.mrb[0].mxu0
        %v2522 = vadd.f32 %v2297, %v2521
        %v2523 = vpop.f32.mrb[0].mxu0
        %2524 = vmatprep.mubr.f32.mxu0 0.0
        %2525 = vmatmul.mubr.f32.gmra.mrb[0].mxu0 %v2088
        %v2526 = vpop.f32.mrb[0].mxu0
        %v2527 = vadd.f32 %v2302, %v2526
        %v2528 = vpop.f32.mrb[0].mxu0
        %2529 = vmatprep.mubr.f32.mxu0 0.0
        %2530 = vmatmul.mubr.f32.gmra.mrb[0].mxu0 %v2091
        %v2531 = vpop.f32.mrb[0].mxu0
        %v2532 = vadd.f32 %v2307, %v2531
        %v2533 = vpop.f32.mrb[0].mxu0
        %2534 = vmatprep.mubr.f32.mxu0 0.0
        %2535 = vmatmul.mubr.f32.gmra.mrb[0].mxu0 %v2094
        %v2536 = vpop.f32.mrb[0].mxu0
        %v2537 = vadd.f32 %v2312, %v2536
        %v2538 = vpop.f32.mrb[0].mxu0
        %2539 = vmatprep.mubr.f32.mxu0 0.0
        %2540 = vmatmul.mubr.f32.gmra.mrb[0].mxu0 %v2097
        %v2541 = vpop.f32.mrb[0].mxu0
        %v2542 = vadd.f32 %v2317, %v2541
        %v2543 = vpop.f32.mrb[0].mxu0
        %2544 = vmatprep.mubr.f32.mxu0 0.0
        %2545 = vmatmul.mubr.f32.gmra.mrb[0].mxu0 %v2100
        %v2546 = vpop.f32.mrb[0].mxu0
        %v2547 = vadd.f32 %v2322, %v2546
        %v2548 = vpop.f32.mrb[0].mxu0
        %2549 = vmatprep.mubr.f32.mxu0 0.0
        %2550 = vmatmul.mubr.f32.gmra.mrb[0].mxu0 %v2103
        %v2551 = vpop.f32.mrb[0].mxu0
        %v2552 = vadd.f32 %v2327, %v2551
        %v2553 = vpop.f32.mrb[0].mxu0
        %2554 = vmatprep.mubr.f32.mxu0 0.0
        %2555 = vmatmul.mubr.f32.gmra.mrb[0].mxu0 %v2106
        %v2556 = vpop.f32.mrb[0].mxu0
        %v2557 = vadd.f32 %v2332, %v2556
        %v2558 = vpop.f32.mrb[0].mxu0
        %2559 = vmatprep.mubr.f32.mxu0 0.0
        %2560 = vmatmul.mubr.f32.gmra.mrb[0].mxu0 %v2109
        %v2561 = vpop.f32.mrb[0].mxu0
        %v2562 = vadd.f32 %v2337, %v2561
        %v2563 = vpop.f32.mrb[0].mxu0
        %2564 = vmatprep.mubr.f32.mxu0 0.0
        %2565 = vmatmul.mubr.f32.gmra.mrb[0].mxu0 %v2112
        %v2566 = vpop.f32.mrb[0].mxu0
        %v2567 = vadd.f32 %v2342, %v2566
        %v2568 = vpop.f32.mrb[0].mxu0
        %2569 = vmatprep.mubr.f32.mxu0 0.0
        %2570 = vmatmul.mubr.f32.gmra.mrb[0].mxu0 %v2115
        %v2571 = vpop.f32.mrb[0].mxu0
        %v2572 = vadd.f32 %v2347, %v2571
        %v2573 = vpop.f32.mrb[0].mxu0
        %2574 = vmatprep.mubr.f32.mxu0 0.0
        %2575 = vmatmul.mubr.f32.gmra.mrb[0].mxu0 %v2118
        %v2576 = vpop.f32.mrb[0].mxu0
        %v2577 = vadd.f32 %v2352, %v2576
        %v2578 = vpop.f32.mrb[0].mxu0
        %2579 = vmatprep.mubr.f32.mxu0 0.0
        %2580 = vmatmul.mubr.f32.gmra.mrb[0].mxu0 %v2121
        %v2581 = vpop.f32.mrb[0].mxu0
        %v2582 = vadd.f32 %v2357, %v2581
        %v2583 = vpop.f32.mrb[0].mxu0
        %2584 = vmatprep.mubr.f32.mxu0 0.0
        %2585 = vmatmul.mubr.f32.gmra.mrb[0].mxu0 %v2124
        %v2586 = vpop.f32.mrb[0].mxu0
        %v2587 = vadd.f32 %v2362, %v2586
        %v2588 = vpop.f32.mrb[0].mxu0
        %2589 = vmatprep.mubr.f32.mxu0 0.0
        %2590 = vmatmul.mubr.f32.gmra.mrb[0].mxu0 %v2127
        %v2591 = vpop.f32.mrb[0].mxu0
        %v2592 = vadd.f32 %v2367, %v2591
        %v2593 = vpop.f32.mrb[0].mxu0
        %2594 = vmatprep.mubr.f32.mxu0 0.0
        %2595 = vmatmul.mubr.f32.gmra.mrb[0].mxu0 %v2130
        %v2596 = vpop.f32.mrb[0].mxu0
        %v2597 = vadd.f32 %v2372, %v2596
        %v2598 = vpop.f32.mrb[0].mxu0
        %2599 = vmatprep.mubr.f32.mxu0 0.0
        %2600 = vmatmul.mubr.f32.gmra.mrb[0].mxu0 %v2133
        %v2601 = vpop.f32.mrb[0].mxu0
        %v2602 = vadd.f32 %v2377, %v2601
        %v2603 = vpop.f32.mrb[0].mxu0
        %2604 = vmatprep.mubr.f32.mxu0 0.0
        %2605 = vmatmul.mubr.f32.gmra.mrb[0].mxu0 %v2136
        %v2606 = vpop.f32.mrb[0].mxu0
        %v2607 = vadd.f32 %v2382, %v2606
        %v2608 = vpop.f32.mrb[0].mxu0
        %2609 = vmatprep.mubr.f32.mxu0 0.0
        %2610 = vmatmul.mubr.f32.gmra.mrb[0].mxu0 %v2139
        %v2611 = vpop.f32.mrb[0].mxu0
        %v2612 = vadd.f32 %v2387, %v2611
        %v2613 = vpop.f32.mrb[0].mxu0
        %2614 = vmatprep.mubr.f32.mxu0 0.0
        %2615 = vmatmul.mubr.f32.gmra.mrb[0].mxu0 %v2142
        %v2616 = vpop.f32.mrb[0].mxu0
        %v2617 = vadd.f32 %v2392, %v2616
        %v2618 = vpop.f32.mrb[0].mxu0
        %2619 = vmatprep.mubr.f32.mxu0 0.0
        %2620 = vmatmul.mubr.f32.gmra.mrb[0].mxu0 %v2145
        %v2621 = vpop.f32.mrb[0].mxu0
        %v2622 = vadd.f32 %v2397, %v2621
        %v2623 = vpop.f32.mrb[0].mxu0
        %2624 = vmatprep.mubr.f32.mxu0 0.0
        %2625 = vmatmul.mubr.f32.gmra.mrb[0].mxu0 %v2148
        %v2626 = vpop.f32.mrb[0].mxu0
        %v2627 = vadd.f32 %v2402, %v2626
        %v2628 = vpop.f32.mrb[0].mxu0
        %2629 = vmatprep.mubr.f32.mxu0 0.0
        %2630 = vmatmul.mubr.f32.gmra.mrb[0].mxu0 %v2151
        %v2631 = vpop.f32.mrb[0].mxu0
        %v2632 = vadd.f32 %v2407, %v2631
        %v2633 = vpop.f32.mrb[0].mxu0
        %2634 = vmatprep.mubr.f32.mxu0 0.0
        %2635 = vmatmul.mubr.f32.gmra.mrb[0].mxu0 %v2154
        %v2636 = vpop.f32.mrb[0].mxu0
        %v2637 = vadd.f32 %v2412, %v2636
        %v2638 = vpop.f32.mrb[0].mxu0
        %2639 = vmatprep.mubr.f32.mxu0 0.0
        %2640 = vmatmul.mubr.f32.gmra.mrb[0].mxu0 %v2157
        %v2641 = vpop.f32.mrb[0].mxu0
        %v2642 = vadd.f32 %v2417, %v2641
        %v2643 = vpop.f32.mrb[0].mxu0
        %2644 = vmatprep.mubr.f32.mxu0 0.0
        %2645 = vmatmul.mubr.f32.gmra.mrb[0].mxu0 %v2160
        %v2646 = vpop.f32.mrb[0].mxu0
        %v2647 = vadd.f32 %v2422, %v2646
        %v2648 = vpop.f32.mrb[0].mxu0
        %2649 = vmatprep.mubr.f32.mxu0 0.0
        %2650 = vmatmul.mubr.f32.gmra.mrb[0].mxu0 %v2163
        %v2651 = vpop.f32.mrb[0].mxu0
        %v2652 = vadd.f32 %v2427, %v2651
        %v2653 = vpop.f32.mrb[0].mxu0
        %2654 = vmatprep.mubr.f32.mxu0 0.0
        %2655 = vmatmul.mubr.f32.gmra.mrb[0].mxu0 %v2166
        %v2656 = vpop.f32.mrb[0].mxu0
        %v2657 = vadd.f32 %v2432, %v2656
        %v2658 = vpop.f32.mrb[0].mxu0
        %2659 = vmatprep.mubr.f32.mxu0 0.0
        %2660 = vmatmul.mubr.f32.gmra.mrb[0].mxu0 %v2169
        %v2661 = vpop.f32.mrb[0].mxu0
        %v2662 = vadd.f32 %v2437, %v2661
        %v2663 = vpop.f32.mrb[0].mxu0
        %2664 = vmatprep.mubr.f32.mxu0 0.0
        %2665 = vmatmul.mubr.f32.gmra.mrb[0].mxu0 %v2172
        %v2666 = vpop.f32.mrb[0].mxu0
        %v2667 = vadd.f32 %v2442, %v2666
        %v2668 = vpop.f32.mrb[0].mxu0
        %2669 = vmatprep.mubr.f32.mxu0 0.0
        %2670 = vmatmul.mubr.f32.gmra.mrb[0].mxu0 %v2175
        %v2671 = vpop.f32.mrb[0].mxu0
        %v2672 = vadd.f32 %v2447, %v2671
        %v2673 = vpop.f32.mrb[0].mxu0
        %2674 = vdwg.mxu0
        %v2675 = vld [vmem:[#allocation5] sm:$0xff]
        %v2676 = vld [vmem:[#allocation5 + $0x8] sm:$0xff]
        %v2677 = vld [vmem:[#allocation5 + $0x10] sm:$0xff]
        %v2678 = vld [vmem:[#allocation5 + $0x18] sm:$0xff]
        %v2679 = vld [vmem:[#allocation5 + $0x20] sm:$0xff]
        %v2680 = vld [vmem:[#allocation5 + $0x28] sm:$0xff]
        %v2681 = vld [vmem:[#allocation5 + $0x30] sm:$0xff]
        %v2682 = vld [vmem:[#allocation5 + $0x38] sm:$0xff]
        %v2683 = vld [vmem:[#allocation5 + $0x40] sm:$0xff]
        %v2684 = vld [vmem:[#allocation5 + $0x48] sm:$0xff]
        %v2685 = vld [vmem:[#allocation5 + $0x50] sm:$0xff]
        %v2686 = vld [vmem:[#allocation5 + $0x58] sm:$0xff]
        %v2687 = vld [vmem:[#allocation5 + $0x60] sm:$0xff]
        %v2688 = vld [vmem:[#allocation5 + $0x68] sm:$0xff]
        %v2689 = vld [vmem:[#allocation5 + $0x70] sm:$0xff]
        %v2690 = vld [vmem:[#allocation5 + $0x78] sm:$0xff]
        %v2691 = vld [vmem:[#allocation5 + $0x80] sm:$0xff]
        %v2692 = vld [vmem:[#allocation5 + $0x88] sm:$0xff]
        %v2693 = vld [vmem:[#allocation5 + $0x90] sm:$0xff]
        %v2694 = vld [vmem:[#allocation5 + $0x98] sm:$0xff]
        %v2695 = vld [vmem:[#allocation5 + $0xa0] sm:$0xff]
        %v2696 = vld [vmem:[#allocation5 + $0xa8] sm:$0xff]
        %v2697 = vld [vmem:[#allocation5 + $0xb0] sm:$0xff]
        %v2698 = vld [vmem:[#allocation5 + $0xb8] sm:$0xff]
        %v2699 = vld [vmem:[#allocation5 + $0xc0] sm:$0xff]
        %v2700 = vld [vmem:[#allocation5 + $0xc8] sm:$0xff]
        %v2701 = vld [vmem:[#allocation5 + $0xd0] sm:$0xff]
        %v2702 = vld [vmem:[#allocation5 + $0xd8] sm:$0xff]
        %v2703 = vld [vmem:[#allocation5 + $0xe0] sm:$0xff]
        %v2704 = vld [vmem:[#allocation5 + $0xe8] sm:$0xff]
        %v2705 = vld [vmem:[#allocation5 + $0xf0] sm:$0xff]
        %v2706 = vld [vmem:[#allocation5 + $0xf8] sm:$0xff]
        %v2707 = vadd.f32 %v2675, %v2517
        %v2708 = vadd.f32 %v2676, %v2522
        %v2709 = vadd.f32 %v2677, %v2527
        %v2710 = vadd.f32 %v2678, %v2532
        %v2711 = vadd.f32 %v2679, %v2537
        %v2712 = vadd.f32 %v2680, %v2542
        %v2713 = vadd.f32 %v2681, %v2547
        %v2714 = vadd.f32 %v2682, %v2552
        %v2715 = vadd.f32 %v2683, %v2557
        %v2716 = vadd.f32 %v2684, %v2562
        %v2717 = vadd.f32 %v2685, %v2567
        %v2718 = vadd.f32 %v2686, %v2572
        %v2719 = vadd.f32 %v2687, %v2577
        %v2720 = vadd.f32 %v2688, %v2582
        %v2721 = vadd.f32 %v2689, %v2587
        %v2722 = vadd.f32 %v2690, %v2592
        %v2723 = vadd.f32 %v2691, %v2597
        %v2724 = vadd.f32 %v2692, %v2602
        %v2725 = vadd.f32 %v2693, %v2607
        %v2726 = vadd.f32 %v2694, %v2612
        %v2727 = vadd.f32 %v2695, %v2617
        %v2728 = vadd.f32 %v2696, %v2622
        %v2729 = vadd.f32 %v2697, %v2627
        %v2730 = vadd.f32 %v2698, %v2632
        %v2731 = vadd.f32 %v2699, %v2637
        %v2732 = vadd.f32 %v2700, %v2642
        %v2733 = vadd.f32 %v2701, %v2647
        %v2734 = vadd.f32 %v2702, %v2652
        %v2735 = vadd.f32 %v2703, %v2657
        %v2736 = vadd.f32 %v2704, %v2662
        %v2737 = vadd.f32 %v2705, %v2667
        %v2738 = vadd.f32 %v2706, %v2672
        %2739 = vst [vmem:[#allocation5] sm:$0xff] %v2707
        %2740 = vst [vmem:[#allocation5 + $0x8] sm:$0xff] %v2708
        %2741 = vst [vmem:[#allocation5 + $0x10] sm:$0xff] %v2709
        %2742 = vst [vmem:[#allocation5 + $0x18] sm:$0xff] %v2710
        %2743 = vst [vmem:[#allocation5 + $0x20] sm:$0xff] %v2711
        %2744 = vst [vmem:[#allocation5 + $0x28] sm:$0xff] %v2712
        %2745 = vst [vmem:[#allocation5 + $0x30] sm:$0xff] %v2713
        %2746 = vst [vmem:[#allocation5 + $0x38] sm:$0xff] %v2714
        %2747 = vst [vmem:[#allocation5 + $0x40] sm:$0xff] %v2715
        %2748 = vst [vmem:[#allocation5 + $0x48] sm:$0xff] %v2716
        %2749 = vst [vmem:[#allocation5 + $0x50] sm:$0xff] %v2717
        %2750 = vst [vmem:[#allocation5 + $0x58] sm:$0xff] %v2718
        %2751 = vst [vmem:[#allocation5 + $0x60] sm:$0xff] %v2719
        %2752 = vst [vmem:[#allocation5 + $0x68] sm:$0xff] %v2720
        %2753 = vst [vmem:[#allocation5 + $0x70] sm:$0xff] %v2721
        %2754 = vst [vmem:[#allocation5 + $0x78] sm:$0xff] %v2722
        %2755 = vst [vmem:[#allocation5 + $0x80] sm:$0xff] %v2723
        %2756 = vst [vmem:[#allocation5 + $0x88] sm:$0xff] %v2724
        %2757 = vst [vmem:[#allocation5 + $0x90] sm:$0xff] %v2725
        %2758 = vst [vmem:[#allocation5 + $0x98] sm:$0xff] %v2726
        %2759 = vst [vmem:[#allocation5 + $0xa0] sm:$0xff] %v2727
        %2760 = vst [vmem:[#allocation5 + $0xa8] sm:$0xff] %v2728
        %2761 = vst [vmem:[#allocation5 + $0xb0] sm:$0xff] %v2729
        %2762 = vst [vmem:[#allocation5 + $0xb8] sm:$0xff] %v2730
        %2763 = vst [vmem:[#allocation5 + $0xc0] sm:$0xff] %v2731
        %2764 = vst [vmem:[#allocation5 + $0xc8] sm:$0xff] %v2732
        %2765 = vst [vmem:[#allocation5 + $0xd0] sm:$0xff] %v2733
        %2766 = vst [vmem:[#allocation5 + $0xd8] sm:$0xff] %v2734
        %2767 = vst [vmem:[#allocation5 + $0xe0] sm:$0xff] %v2735
        %2768 = vst [vmem:[#allocation5 + $0xe8] sm:$0xff] %v2736
        %2769 = vst [vmem:[#allocation5 + $0xf0] sm:$0xff] %v2737
        %2770 = vst [vmem:[#allocation5 + $0xf8] sm:$0xff] %v2738
        %v2771 = vld [vmem:[#allocation5] sm:$0xff]
        %v2772 = vld [vmem:[#allocation5 + $0x8] sm:$0xff]
        %v2773 = vld [vmem:[#allocation5 + $0x10] sm:$0xff]
        %v2774 = vld [vmem:[#allocation5 + $0x18] sm:$0xff]
        %v2775 = vld [vmem:[#allocation5 + $0x20] sm:$0xff]
        %v2776 = vld [vmem:[#allocation5 + $0x28] sm:$0xff]
        %v2777 = vld [vmem:[#allocation5 + $0x30] sm:$0xff]
        %v2778 = vld [vmem:[#allocation5 + $0x38] sm:$0xff]
        %v2779 = vld [vmem:[#allocation5 + $0x40] sm:$0xff]
        %v2780 = vld [vmem:[#allocation5 + $0x48] sm:$0xff]
        %v2781 = vld [vmem:[#allocation5 + $0x50] sm:$0xff]
        %v2782 = vld [vmem:[#allocation5 + $0x58] sm:$0xff]
        %v2783 = vld [vmem:[#allocation5 + $0x60] sm:$0xff]
        %v2784 = vld [vmem:[#allocation5 + $0x68] sm:$0xff]
        %v2785 = vld [vmem:[#allocation5 + $0x70] sm:$0xff]
        %v2786 = vld [vmem:[#allocation5 + $0x78] sm:$0xff]
        %v2787 = vld [vmem:[#allocation5 + $0x80] sm:$0xff]
        %v2788 = vld [vmem:[#allocation5 + $0x88] sm:$0xff]
        %v2789 = vld [vmem:[#allocation5 + $0x90] sm:$0xff]
        %v2790 = vld [vmem:[#allocation5 + $0x98] sm:$0xff]
        %v2791 = vld [vmem:[#allocation5 + $0xa0] sm:$0xff]
        %v2792 = vld [vmem:[#allocation5 + $0xa8] sm:$0xff]
        %v2793 = vld [vmem:[#allocation5 + $0xb0] sm:$0xff]
        %v2794 = vld [vmem:[#allocation5 + $0xb8] sm:$0xff]
        %v2795 = vld [vmem:[#allocation5 + $0xc0] sm:$0xff]
        %v2796 = vld [vmem:[#allocation5 + $0xc8] sm:$0xff]
        %v2797 = vld [vmem:[#allocation5 + $0xd0] sm:$0xff]
        %v2798 = vld [vmem:[#allocation5 + $0xd8] sm:$0xff]
        %v2799 = vld [vmem:[#allocation5 + $0xe0] sm:$0xff]
        %v2800 = vld [vmem:[#allocation5 + $0xe8] sm:$0xff]
        %v2801 = vld [vmem:[#allocation5 + $0xf0] sm:$0xff]
        %v2802 = vld [vmem:[#allocation5 + $0xf8] sm:$0xff]
        %v2803 = vld [vmem:[%s2] sm:$0x1]
        %v2805 = vlaneseq
        %v2806 = vshrl.u32 %v2805, 7
        %v2807 = vsub.s32 0, %v2806
        %v2808 = vrot.slane %v2803, %v2807
        %v2810 = vmul.f32 %v2771, %v2808
        %v2811 = vmul.f32 %v2772, %v2808
        %v2812 = vmul.f32 %v2773, %v2808
        %v2813 = vmul.f32 %v2774, %v2808
        %v2814 = vmul.f32 %v2775, %v2808
        %v2815 = vmul.f32 %v2776, %v2808
        %v2816 = vmul.f32 %v2777, %v2808
        %v2817 = vmul.f32 %v2778, %v2808
        %v2818 = vmul.f32 %v2779, %v2808
        %v2819 = vmul.f32 %v2780, %v2808
        %v2820 = vmul.f32 %v2781, %v2808
        %v2821 = vmul.f32 %v2782, %v2808
        %v2822 = vmul.f32 %v2783, %v2808
        %v2823 = vmul.f32 %v2784, %v2808
        %v2824 = vmul.f32 %v2785, %v2808
        %v2825 = vmul.f32 %v2786, %v2808
        %v2826 = vmul.f32 %v2787, %v2808
        %v2827 = vmul.f32 %v2788, %v2808
        %v2828 = vmul.f32 %v2789, %v2808
        %v2829 = vmul.f32 %v2790, %v2808
        %v2830 = vmul.f32 %v2791, %v2808
        %v2831 = vmul.f32 %v2792, %v2808
        %v2832 = vmul.f32 %v2793, %v2808
        %v2833 = vmul.f32 %v2794, %v2808
        %v2834 = vmul.f32 %v2795, %v2808
        %v2835 = vmul.f32 %v2796, %v2808
        %v2836 = vmul.f32 %v2797, %v2808
        %v2837 = vmul.f32 %v2798, %v2808
        %v2838 = vmul.f32 %v2799, %v2808
        %v2839 = vmul.f32 %v2800, %v2808
        %v2840 = vmul.f32 %v2801, %v2808
        %v2841 = vmul.f32 %v2802, %v2808
        %v2842 = vld [vmem:[%s3] sm:$0x1]
        %v2844 = vlaneseq
        %v2845 = vshrl.u32 %v2844, 7
        %v2846 = vsub.s32 0, %v2845
        %v2847 = vrot.slane %v2842, %v2846
        %v2849 = vadd.f32 %v2810, %v2847
        %v2850 = vadd.f32 %v2811, %v2847
        %v2851 = vadd.f32 %v2812, %v2847
        %v2852 = vadd.f32 %v2813, %v2847
        %v2853 = vadd.f32 %v2814, %v2847
        %v2854 = vadd.f32 %v2815, %v2847
        %v2855 = vadd.f32 %v2816, %v2847
        %v2856 = vadd.f32 %v2817, %v2847
        %v2857 = vadd.f32 %v2818, %v2847
        %v2858 = vadd.f32 %v2819, %v2847
        %v2859 = vadd.f32 %v2820, %v2847
        %v2860 = vadd.f32 %v2821, %v2847
        %v2861 = vadd.f32 %v2822, %v2847
        %v2862 = vadd.f32 %v2823, %v2847
        %v2863 = vadd.f32 %v2824, %v2847
        %v2864 = vadd.f32 %v2825, %v2847
        %v2865 = vadd.f32 %v2826, %v2847
        %v2866 = vadd.f32 %v2827, %v2847
        %v2867 = vadd.f32 %v2828, %v2847
        %v2868 = vadd.f32 %v2829, %v2847
        %v2869 = vadd.f32 %v2830, %v2847
        %v2870 = vadd.f32 %v2831, %v2847
        %v2871 = vadd.f32 %v2832, %v2847
        %v2872 = vadd.f32 %v2833, %v2847
        %v2873 = vadd.f32 %v2834, %v2847
        %v2874 = vadd.f32 %v2835, %v2847
        %v2875 = vadd.f32 %v2836, %v2847
        %v2876 = vadd.f32 %v2837, %v2847
        %v2877 = vadd.f32 %v2838, %v2847
        %v2878 = vadd.f32 %v2839, %v2847
        %v2879 = vadd.f32 %v2840, %v2847
        %v2880 = vadd.f32 %v2841, %v2847
        %v2881 = vmax.f32 %v2849, 0.0
        %v2882 = vmax.f32 %v2850, 0.0
        %v2883 = vmax.f32 %v2851, 0.0
        %v2884 = vmax.f32 %v2852, 0.0
        %v2885 = vmax.f32 %v2853, 0.0
        %v2886 = vmax.f32 %v2854, 0.0
        %v2887 = vmax.f32 %v2855, 0.0
        %v2888 = vmax.f32 %v2856, 0.0
        %v2889 = vmax.f32 %v2857, 0.0
        %v2890 = vmax.f32 %v2858, 0.0
        %v2891 = vmax.f32 %v2859, 0.0
        %v2892 = vmax.f32 %v2860, 0.0
        %v2893 = vmax.f32 %v2861, 0.0
        %v2894 = vmax.f32 %v2862, 0.0
        %v2895 = vmax.f32 %v2863, 0.0
        %v2896 = vmax.f32 %v2864, 0.0
        %v2897 = vmax.f32 %v2865, 0.0
        %v2898 = vmax.f32 %v2866, 0.0
        %v2899 = vmax.f32 %v2867, 0.0
        %v2900 = vmax.f32 %v2868, 0.0
        %v2901 = vmax.f32 %v2869, 0.0
        %v2902 = vmax.f32 %v2870, 0.0
        %v2903 = vmax.f32 %v2871, 0.0
        %v2904 = vmax.f32 %v2872, 0.0
        %v2905 = vmax.f32 %v2873, 0.0
        %v2906 = vmax.f32 %v2874, 0.0
        %v2907 = vmax.f32 %v2875, 0.0
        %v2908 = vmax.f32 %v2876, 0.0
        %v2909 = vmax.f32 %v2877, 0.0
        %v2910 = vmax.f32 %v2878, 0.0
        %v2911 = vmax.f32 %v2879, 0.0
        %v2912 = vmax.f32 %v2880, 0.0
        %2913 = vst [vmem:[%s512 + $0x1] sm:$0xff] %v2881
        %2914 = vst [vmem:[%s512 + $0x9] sm:$0xff] %v2882
        %2915 = vst [vmem:[%s512 + $0x19] sm:$0xff] %v2883
        %2916 = vst [vmem:[%s512 + $0x21] sm:$0xff] %v2884
        %2917 = vst [vmem:[%s512 + $0x31] sm:$0xff] %v2885
        %2918 = vst [vmem:[%s512 + $0x39] sm:$0xff] %v2886
        %2919 = vst [vmem:[%s512 + $0x49] sm:$0xff] %v2887
        %2920 = vst [vmem:[%s512 + $0x51] sm:$0xff] %v2888
        %2921 = vst [vmem:[%s512 + $0x61] sm:$0xff] %v2889
        %2922 = vst [vmem:[%s512 + $0x69] sm:$0xff] %v2890
        %2923 = vst [vmem:[%s512 + $0x79] sm:$0xff] %v2891
        %2924 = vst [vmem:[%s512 + $0x81] sm:$0xff] %v2892
        %2925 = vst [vmem:[%s512 + $0x91] sm:$0xff] %v2893
        %2926 = vst [vmem:[%s512 + $0x99] sm:$0xff] %v2894
        %2927 = vst [vmem:[%s512 + $0xa9] sm:$0xff] %v2895
        %2928 = vst [vmem:[%s512 + $0xb1] sm:$0xff] %v2896
        %2929 = vst [vmem:[%s512 + $0xc1] sm:$0xff] %v2897
        %2930 = vst [vmem:[%s512 + $0xc9] sm:$0xff] %v2898
        %2931 = vst [vmem:[%s512 + $0xd9] sm:$0xff] %v2899
        %2932 = vst [vmem:[%s512 + $0xe1] sm:$0xff] %v2900
        %2933 = vst [vmem:[%s512 + $0xf1] sm:$0xff] %v2901
        %2934 = vst [vmem:[%s512 + $0xf9] sm:$0xff] %v2902
        %2935 = vst [vmem:[%s512 + $0x109] sm:$0xff] %v2903
        %2936 = vst [vmem:[%s512 + $0x111] sm:$0xff] %v2904
        %2937 = vst [vmem:[%s512 + $0x121] sm:$0xff] %v2905
        %2938 = vst [vmem:[%s512 + $0x129] sm:$0xff] %v2906
        %2939 = vst [vmem:[%s512 + $0x139] sm:$0xff] %v2907
        %2940 = vst [vmem:[%s512 + $0x141] sm:$0xff] %v2908
        %2941 = vst [vmem:[%s512 + $0x151] sm:$0xff] %v2909
        %2942 = vst [vmem:[%s512 + $0x159] sm:$0xff] %v2910
        %2943 = vst [vmem:[%s512 + $0x169] sm:$0xff] %v2911
        %2944 = vst [vmem:[%s512 + $0x171] sm:$0xff] %v2912
        %v2945 = vld [vmem:[#allocation3] sm:$0xff]
        %v2946 = vld [vmem:[#allocation3 + $0x8] sm:$0xff]
        %v2947 = vld [vmem:[#allocation3 + $0x18] sm:$0xff]
        %v2948 = vld [vmem:[#allocation3 + $0x20] sm:$0xff]
        %v2949 = vld [vmem:[#allocation3 + $0x30] sm:$0xff]
        %v2950 = vld [vmem:[#allocation3 + $0x38] sm:$0xff]
        %v2951 = vld [vmem:[#allocation3 + $0x48] sm:$0xff]
        %v2952 = vld [vmem:[#allocation3 + $0x50] sm:$0xff]
        %v2953 = vld [vmem:[#allocation3 + $0x60] sm:$0xff]
        %v2954 = vld [vmem:[#allocation3 + $0x68] sm:$0xff]
        %v2955 = vld [vmem:[#allocation3 + $0x78] sm:$0xff]
        %v2956 = vld [vmem:[#allocation3 + $0x80] sm:$0xff]
        %v2957 = vld [vmem:[#allocation3 + $0x90] sm:$0xff]
        %v2958 = vld [vmem:[#allocation3 + $0x98] sm:$0xff]
        %v2959 = vld [vmem:[#allocation3 + $0xa8] sm:$0xff]
        %v2960 = vld [vmem:[#allocation3 + $0xb0] sm:$0xff]
        %v2961 = vld [vmem:[#allocation3 + $0xc0] sm:$0xff]
        %v2962 = vld [vmem:[#allocation3 + $0xc8] sm:$0xff]
        %v2963 = vld [vmem:[#allocation3 + $0xd8] sm:$0xff]
        %v2964 = vld [vmem:[#allocation3 + $0xe0] sm:$0xff]
        %v2965 = vld [vmem:[#allocation3 + $0xf0] sm:$0xff]
        %v2966 = vld [vmem:[#allocation3 + $0xf8] sm:$0xff]
        %v2967 = vld [vmem:[#allocation3 + $0x108] sm:$0xff]
        %v2968 = vld [vmem:[#allocation3 + $0x110] sm:$0xff]
        %v2969 = vld [vmem:[#allocation3 + $0x120] sm:$0xff]
        %v2970 = vld [vmem:[#allocation3 + $0x128] sm:$0xff]
        %v2971 = vld [vmem:[#allocation3 + $0x138] sm:$0xff]
        %v2972 = vld [vmem:[#allocation3 + $0x140] sm:$0xff]
        %v2973 = vld [vmem:[#allocation3 + $0x150] sm:$0xff]
        %v2974 = vld [vmem:[#allocation3 + $0x158] sm:$0xff]
        %v2975 = vld [vmem:[#allocation3 + $0x168] sm:$0xff]
        %v2976 = vld [vmem:[#allocation3 + $0x170] sm:$0xff]
        %v2977 = vld [vmem:[#allocation3 + $0x180] sm:$0xff]
        %v2978 = vld [vmem:[#allocation3 + $0x188] sm:$0xff]
        %v2979 = vld [vmem:[#allocation3 + $0x198] sm:$0xff]
        %v2980 = vld [vmem:[#allocation3 + $0x1a0] sm:$0xff]
        %2981 = vst [vmem:[#allocation4] sm:$0xff] %v2945
        %2982 = vst [vmem:[#allocation4 + $0x18] sm:$0xff] %v2946
        %2983 = vst [vmem:[#allocation4 + $0x30] sm:$0xff] %v2947
        %2984 = vst [vmem:[#allocation4 + $0x48] sm:$0xff] %v2948
        %2985 = vst [vmem:[#allocation4 + $0x60] sm:$0xff] %v2949
        %2986 = vst [vmem:[#allocation4 + $0x78] sm:$0xff] %v2950
        %2987 = vst [vmem:[#allocation4 + $0x90] sm:$0xff] %v2951
        %2988 = vst [vmem:[#allocation4 + $0xa8] sm:$0xff] %v2952
        %2989 = vst [vmem:[#allocation4 + $0xc0] sm:$0xff] %v2953
        %2990 = vst [vmem:[#allocation4 + $0xd8] sm:$0xff] %v2954
        %2991 = vst [vmem:[#allocation4 + $0xf0] sm:$0xff] %v2955
        %2992 = vst [vmem:[#allocation4 + $0x108] sm:$0xff] %v2956
        %2993 = vst [vmem:[#allocation4 + $0x120] sm:$0xff] %v2957
        %2994 = vst [vmem:[#allocation4 + $0x138] sm:$0xff] %v2958
        %2995 = vst [vmem:[#allocation4 + $0x150] sm:$0xff] %v2959
        %2996 = vst [vmem:[#allocation4 + $0x168] sm:$0xff] %v2960
        %2997 = vst [vmem:[#allocation4 + $0x180] sm:$0xff] %v2961
        %2998 = vst [vmem:[#allocation4 + $0x198] sm:$0xff] %v2962
        %2999 = vst [vmem:[#allocation4 + $0x1b0] sm:$0xff] %v2963
        %3000 = vst [vmem:[#allocation4 + $0x1c8] sm:$0xff] %v2964
        %3001 = vst [vmem:[#allocation4 + $0x1e0] sm:$0xff] %v2965
        %3002 = vst [vmem:[#allocation4 + $0x1f8] sm:$0xff] %v2966
        %3003 = vst [vmem:[#allocation4 + $0x210] sm:$0xff] %v2967
        %3004 = vst [vmem:[#allocation4 + $0x228] sm:$0xff] %v2968
        %3005 = vst [vmem:[#allocation4 + $0x240] sm:$0xff] %v2969
        %3006 = vst [vmem:[#allocation4 + $0x258] sm:$0xff] %v2970
        %3007 = vst [vmem:[#allocation4 + $0x270] sm:$0xff] %v2971
        %3008 = vst [vmem:[#allocation4 + $0x288] sm:$0xff] %v2972
        %3009 = vst [vmem:[#allocation4 + $0x2a0] sm:$0xff] %v2973
        %3010 = vst [vmem:[#allocation4 + $0x2b8] sm:$0xff] %v2974
        %3011 = vst [vmem:[#allocation4 + $0x2d0] sm:$0xff] %v2975
        %3012 = vst [vmem:[#allocation4 + $0x2e8] sm:$0xff] %v2976
        %3013 = vst [vmem:[#allocation4 + $0x300] sm:$0xff] %v2977
        %3014 = vst [vmem:[#allocation4 + $0x318] sm:$0xff] %v2978
        %3015 = vst [vmem:[#allocation4 + $0x330] sm:$0xff] %v2979
        %3016 = vst [vmem:[#allocation4 + $0x348] sm:$0xff] %v2980
        %v3017 = vld [vmem:[#allocation3 + $0x1] sm:$0xff]
        %v3018 = vld [vmem:[#allocation3 + $0x9] sm:$0xff]
        %v3019 = vld [vmem:[#allocation3 + $0x19] sm:$0xff]
        %v3020 = vld [vmem:[#allocation3 + $0x21] sm:$0xff]
        %v3021 = vld [vmem:[#allocation3 + $0x31] sm:$0xff]
        %v3022 = vld [vmem:[#allocation3 + $0x39] sm:$0xff]
        %v3023 = vld [vmem:[#allocation3 + $0x49] sm:$0xff]
        %v3024 = vld [vmem:[#allocation3 + $0x51] sm:$0xff]
        %v3025 = vld [vmem:[#allocation3 + $0x61] sm:$0xff]
        %v3026 = vld [vmem:[#allocation3 + $0x69] sm:$0xff]
        %v3027 = vld [vmem:[#allocation3 + $0x79] sm:$0xff]
        %v3028 = vld [vmem:[#allocation3 + $0x81] sm:$0xff]
        %v3029 = vld [vmem:[#allocation3 + $0x91] sm:$0xff]
        %v3030 = vld [vmem:[#allocation3 + $0x99] sm:$0xff]
        %v3031 = vld [vmem:[#allocation3 + $0xa9] sm:$0xff]
        %v3032 = vld [vmem:[#allocation3 + $0xb1] sm:$0xff]
        %v3033 = vld [vmem:[#allocation3 + $0xc1] sm:$0xff]
        %v3034 = vld [vmem:[#allocation3 + $0xc9] sm:$0xff]
        %v3035 = vld [vmem:[#allocation3 + $0xd9] sm:$0xff]
        %v3036 = vld [vmem:[#allocation3 + $0xe1] sm:$0xff]
        %v3037 = vld [vmem:[#allocation3 + $0xf1] sm:$0xff]
        %v3038 = vld [vmem:[#allocation3 + $0xf9] sm:$0xff]
        %v3039 = vld [vmem:[#allocation3 + $0x109] sm:$0xff]
        %v3040 = vld [vmem:[#allocation3 + $0x111] sm:$0xff]
        %v3041 = vld [vmem:[#allocation3 + $0x121] sm:$0xff]
        %v3042 = vld [vmem:[#allocation3 + $0x129] sm:$0xff]
        %v3043 = vld [vmem:[#allocation3 + $0x139] sm:$0xff]
        %v3044 = vld [vmem:[#allocation3 + $0x141] sm:$0xff]
        %v3045 = vld [vmem:[#allocation3 + $0x151] sm:$0xff]
        %v3046 = vld [vmem:[#allocation3 + $0x159] sm:$0xff]
        %v3047 = vld [vmem:[#allocation3 + $0x169] sm:$0xff]
        %v3048 = vld [vmem:[#allocation3 + $0x171] sm:$0xff]
        %v3049 = vld [vmem:[#allocation3 + $0x181] sm:$0xff]
        %v3050 = vld [vmem:[#allocation3 + $0x189] sm:$0xff]
        %v3051 = vld [vmem:[#allocation3 + $0x199] sm:$0xff]
        %v3052 = vld [vmem:[#allocation3 + $0x1a1] sm:$0xff]
        %3053 = vst [vmem:[#allocation4 + $0x8] sm:$0xff] %v3017
        %3054 = vst [vmem:[#allocation4 + $0x20] sm:$0xff] %v3018
        %3055 = vst [vmem:[#allocation4 + $0x38] sm:$0xff] %v3019
        %3056 = vst [vmem:[#allocation4 + $0x50] sm:$0xff] %v3020
        %3057 = vst [vmem:[#allocation4 + $0x68] sm:$0xff] %v3021
        %3058 = vst [vmem:[#allocation4 + $0x80] sm:$0xff] %v3022
        %3059 = vst [vmem:[#allocation4 + $0x98] sm:$0xff] %v3023
        %3060 = vst [vmem:[#allocation4 + $0xb0] sm:$0xff] %v3024
        %3061 = vst [vmem:[#allocation4 + $0xc8] sm:$0xff] %v3025
        %3062 = vst [vmem:[#allocation4 + $0xe0] sm:$0xff] %v3026
        %3063 = vst [vmem:[#allocation4 + $0xf8] sm:$0xff] %v3027
        %3064 = vst [vmem:[#allocation4 + $0x110] sm:$0xff] %v3028
        %3065 = vst [vmem:[#allocation4 + $0x128] sm:$0xff] %v3029
        %3066 = vst [vmem:[#allocation4 + $0x140] sm:$0xff] %v3030
        %3067 = vst [vmem:[#allocation4 + $0x158] sm:$0xff] %v3031
        %3068 = vst [vmem:[#allocation4 + $0x170] sm:$0xff] %v3032
        %3069 = vst [vmem:[#allocation4 + $0x188] sm:$0xff] %v3033
        %3070 = vst [vmem:[#allocation4 + $0x1a0] sm:$0xff] %v3034
        %3071 = vst [vmem:[#allocation4 + $0x1b8] sm:$0xff] %v3035
        %3072 = vst [vmem:[#allocation4 + $0x1d0] sm:$0xff] %v3036
        %3073 = vst [vmem:[#allocation4 + $0x1e8] sm:$0xff] %v3037
        %3074 = vst [vmem:[#allocation4 + $0x200] sm:$0xff] %v3038
        %3075 = vst [vmem:[#allocation4 + $0x218] sm:$0xff] %v3039
        %3076 = vst [vmem:[#allocation4 + $0x230] sm:$0xff] %v3040
        %3077 = vst [vmem:[#allocation4 + $0x248] sm:$0xff] %v3041
        %3078 = vst [vmem:[#allocation4 + $0x260] sm:$0xff] %v3042
        %3079 = vst [vmem:[#allocation4 + $0x278] sm:$0xff] %v3043
        %3080 = vst [vmem:[#allocation4 + $0x290] sm:$0xff] %v3044
        %3081 = vst [vmem:[#allocation4 + $0x2a8] sm:$0xff] %v3045
        %3082 = vst [vmem:[#allocation4 + $0x2c0] sm:$0xff] %v3046
        %3083 = vst [vmem:[#allocation4 + $0x2d8] sm:$0xff] %v3047
        %3084 = vst [vmem:[#allocation4 + $0x2f0] sm:$0xff] %v3048
        %3085 = vst [vmem:[#allocation4 + $0x308] sm:$0xff] %v3049
        %3086 = vst [vmem:[#allocation4 + $0x320] sm:$0xff] %v3050
        %3087 = vst [vmem:[#allocation4 + $0x338] sm:$0xff] %v3051
        %3088 = vst [vmem:[#allocation4 + $0x350] sm:$0xff] %v3052
        %v3089 = vld [vmem:[#allocation3 + $0x2] sm:$0xff]
        %v3090 = vld [vmem:[#allocation3 + $0xa] sm:$0xff]
        %v3091 = vld [vmem:[#allocation3 + $0x1a] sm:$0xff]
        %v3092 = vld [vmem:[#allocation3 + $0x22] sm:$0xff]
        %v3093 = vld [vmem:[#allocation3 + $0x32] sm:$0xff]
        %v3094 = vld [vmem:[#allocation3 + $0x3a] sm:$0xff]
        %v3095 = vld [vmem:[#allocation3 + $0x4a] sm:$0xff]
        %v3096 = vld [vmem:[#allocation3 + $0x52] sm:$0xff]
        %v3097 = vld [vmem:[#allocation3 + $0x62] sm:$0xff]
        %v3098 = vld [vmem:[#allocation3 + $0x6a] sm:$0xff]
        %v3099 = vld [vmem:[#allocation3 + $0x7a] sm:$0xff]
        %v3100 = vld [vmem:[#allocation3 + $0x82] sm:$0xff]
        %v3101 = vld [vmem:[#allocation3 + $0x92] sm:$0xff]
        %v3102 = vld [vmem:[#allocation3 + $0x9a] sm:$0xff]
        %v3103 = vld [vmem:[#allocation3 + $0xaa] sm:$0xff]
        %v3104 = vld [vmem:[#allocation3 + $0xb2] sm:$0xff]
        %v3105 = vld [vmem:[#allocation3 + $0xc2] sm:$0xff]
        %v3106 = vld [vmem:[#allocation3 + $0xca] sm:$0xff]
        %v3107 = vld [vmem:[#allocation3 + $0xda] sm:$0xff]
        %v3108 = vld [vmem:[#allocation3 + $0xe2] sm:$0xff]
        %v3109 = vld [vmem:[#allocation3 + $0xf2] sm:$0xff]
        %v3110 = vld [vmem:[#allocation3 + $0xfa] sm:$0xff]
        %v3111 = vld [vmem:[#allocation3 + $0x10a] sm:$0xff]
        %v3112 = vld [vmem:[#allocation3 + $0x112] sm:$0xff]
        %v3113 = vld [vmem:[#allocation3 + $0x122] sm:$0xff]
        %v3114 = vld [vmem:[#allocation3 + $0x12a] sm:$0xff]
        %v3115 = vld [vmem:[#allocation3 + $0x13a] sm:$0xff]
        %v3116 = vld [vmem:[#allocation3 + $0x142] sm:$0xff]
        %v3117 = vld [vmem:[#allocation3 + $0x152] sm:$0xff]
        %v3118 = vld [vmem:[#allocation3 + $0x15a] sm:$0xff]
        %v3119 = vld [vmem:[#allocation3 + $0x16a] sm:$0xff]
        %v3120 = vld [vmem:[#allocation3 + $0x172] sm:$0xff]
        %v3121 = vld [vmem:[#allocation3 + $0x182] sm:$0xff]
        %v3122 = vld [vmem:[#allocation3 + $0x18a] sm:$0xff]
        %v3123 = vld [vmem:[#allocation3 + $0x19a] sm:$0xff]
        %v3124 = vld [vmem:[#allocation3 + $0x1a2] sm:$0xff]
        %3125 = vst [vmem:[#allocation4 + $0x10] sm:$0xff] %v3089
        %3126 = vst [vmem:[#allocation4 + $0x28] sm:$0xff] %v3090
        %3127 = vst [vmem:[#allocation4 + $0x40] sm:$0xff] %v3091
        %3128 = vst [vmem:[#allocation4 + $0x58] sm:$0xff] %v3092
        %3129 = vst [vmem:[#allocation4 + $0x70] sm:$0xff] %v3093
        %3130 = vst [vmem:[#allocation4 + $0x88] sm:$0xff] %v3094
        %3131 = vst [vmem:[#allocation4 + $0xa0] sm:$0xff] %v3095
        %3132 = vst [vmem:[#allocation4 + $0xb8] sm:$0xff] %v3096
        %3133 = vst [vmem:[#allocation4 + $0xd0] sm:$0xff] %v3097
        %3134 = vst [vmem:[#allocation4 + $0xe8] sm:$0xff] %v3098
        %3135 = vst [vmem:[#allocation4 + $0x100] sm:$0xff] %v3099
        %3136 = vst [vmem:[#allocation4 + $0x118] sm:$0xff] %v3100
        %3137 = vst [vmem:[#allocation4 + $0x130] sm:$0xff] %v3101
        %3138 = vst [vmem:[#allocation4 + $0x148] sm:$0xff] %v3102
        %3139 = vst [vmem:[#allocation4 + $0x160] sm:$0xff] %v3103
        %3140 = vst [vmem:[#allocation4 + $0x178] sm:$0xff] %v3104
        %3141 = vst [vmem:[#allocation4 + $0x190] sm:$0xff] %v3105
        %3142 = vst [vmem:[#allocation4 + $0x1a8] sm:$0xff] %v3106
        %3143 = vst [vmem:[#allocation4 + $0x1c0] sm:$0xff] %v3107
        %3144 = vst [vmem:[#allocation4 + $0x1d8] sm:$0xff] %v3108
        %3145 = vst [vmem:[#allocation4 + $0x1f0] sm:$0xff] %v3109
        %3146 = vst [vmem:[#allocation4 + $0x208] sm:$0xff] %v3110
        %3147 = vst [vmem:[#allocation4 + $0x220] sm:$0xff] %v3111
        %3148 = vst [vmem:[#allocation4 + $0x238] sm:$0xff] %v3112
        %3149 = vst [vmem:[#allocation4 + $0x250] sm:$0xff] %v3113
        %3150 = vst [vmem:[#allocation4 + $0x268] sm:$0xff] %v3114
        %3151 = vst [vmem:[#allocation4 + $0x280] sm:$0xff] %v3115
        %3152 = vst [vmem:[#allocation4 + $0x298] sm:$0xff] %v3116
        %3153 = vst [vmem:[#allocation4 + $0x2b0] sm:$0xff] %v3117
        %3154 = vst [vmem:[#allocation4 + $0x2c8] sm:$0xff] %v3118
        %3155 = vst [vmem:[#allocation4 + $0x2e0] sm:$0xff] %v3119
        %3156 = vst [vmem:[#allocation4 + $0x2f8] sm:$0xff] %v3120
        %3157 = vst [vmem:[#allocation4 + $0x310] sm:$0xff] %v3121
        %3158 = vst [vmem:[#allocation4 + $0x328] sm:$0xff] %v3122
        %3159 = vst [vmem:[#allocation4 + $0x340] sm:$0xff] %v3123
        %3160 = vst [vmem:[#allocation4 + $0x358] sm:$0xff] %v3124
        %v3161 = vld [vmem:[#allocation4] sm:$0xff]
        %v3162 = vld [vmem:[#allocation4 + $0x8] sm:$0xff]
        %v3163 = vld [vmem:[#allocation4 + $0x10] sm:$0xff]
        %v3164 = vld [vmem:[#allocation4 + $0x18] sm:$0xff]
        %v3165 = vld [vmem:[#allocation4 + $0x20] sm:$0xff]
        %v3166 = vld [vmem:[#allocation4 + $0x28] sm:$0xff]
        %v3167 = vld [vmem:[#allocation4 + $0x30] sm:$0xff]
        %v3168 = vld [vmem:[#allocation4 + $0x38] sm:$0xff]
        %v3169 = vld [vmem:[#allocation4 + $0x40] sm:$0xff]
        %v3170 = vld [vmem:[#allocation4 + $0x48] sm:$0xff]
        %v3171 = vld [vmem:[#allocation4 + $0x50] sm:$0xff]
        %v3172 = vld [vmem:[#allocation4 + $0x58] sm:$0xff]
        %v3173 = vld [vmem:[#allocation4 + $0x60] sm:$0xff]
        %v3174 = vld [vmem:[#allocation4 + $0x68] sm:$0xff]
        %v3175 = vld [vmem:[#allocation4 + $0x70] sm:$0xff]
        %v3176 = vld [vmem:[#allocation4 + $0x78] sm:$0xff]
        %v3177 = vld [vmem:[#allocation4 + $0x80] sm:$0xff]
        %v3178 = vld [vmem:[#allocation4 + $0x88] sm:$0xff]
        %v3179 = vld [vmem:[#allocation4 + $0x90] sm:$0xff]
        %v3180 = vld [vmem:[#allocation4 + $0x98] sm:$0xff]
        %v3181 = vld [vmem:[#allocation4 + $0xa0] sm:$0xff]
        %v3182 = vld [vmem:[#allocation4 + $0xa8] sm:$0xff]
        %v3183 = vld [vmem:[#allocation4 + $0xb0] sm:$0xff]
        %v3184 = vld [vmem:[#allocation4 + $0xb8] sm:$0xff]
        %v3185 = vld [vmem:[#allocation4 + $0xc0] sm:$0xff]
        %v3186 = vld [vmem:[#allocation4 + $0xc8] sm:$0xff]
        %v3187 = vld [vmem:[#allocation4 + $0xd0] sm:$0xff]
        %v3188 = vld [vmem:[#allocation4 + $0xd8] sm:$0xff]
        %v3189 = vld [vmem:[#allocation4 + $0xe0] sm:$0xff]
        %v3190 = vld [vmem:[#allocation4 + $0xe8] sm:$0xff]
        %v3191 = vld [vmem:[#allocation4 + $0xf0] sm:$0xff]
        %v3192 = vld [vmem:[#allocation4 + $0xf8] sm:$0xff]
        %v3193 = vld [vmem:[#allocation4 + $0x100] sm:$0xff]
        %v3194 = vld [vmem:[#allocation4 + $0x108] sm:$0xff]
        %v3195 = vld [vmem:[#allocation4 + $0x110] sm:$0xff]
        %v3196 = vld [vmem:[#allocation4 + $0x118] sm:$0xff]
        %v3197 = vld [vmem:[#allocation4 + $0x120] sm:$0xff]
        %v3198 = vld [vmem:[#allocation4 + $0x128] sm:$0xff]
        %v3199 = vld [vmem:[#allocation4 + $0x130] sm:$0xff]
        %v3200 = vld [vmem:[#allocation4 + $0x138] sm:$0xff]
        %v3201 = vld [vmem:[#allocation4 + $0x140] sm:$0xff]
        %v3202 = vld [vmem:[#allocation4 + $0x148] sm:$0xff]
        %v3203 = vld [vmem:[#allocation4 + $0x150] sm:$0xff]
        %v3204 = vld [vmem:[#allocation4 + $0x158] sm:$0xff]
        %v3205 = vld [vmem:[#allocation4 + $0x160] sm:$0xff]
        %v3206 = vld [vmem:[#allocation4 + $0x168] sm:$0xff]
        %v3207 = vld [vmem:[#allocation4 + $0x170] sm:$0xff]
        %v3208 = vld [vmem:[#allocation4 + $0x178] sm:$0xff]
        %v3209 = vld [vmem:[#allocation4 + $0x180] sm:$0xff]
        %v3210 = vld [vmem:[#allocation4 + $0x188] sm:$0xff]
        %v3211 = vld [vmem:[#allocation4 + $0x190] sm:$0xff]
        %v3212 = vld [vmem:[#allocation4 + $0x198] sm:$0xff]
        %v3213 = vld [vmem:[#allocation4 + $0x1a0] sm:$0xff]
        %v3214 = vld [vmem:[#allocation4 + $0x1a8] sm:$0xff]
        %v3215 = vld [vmem:[#allocation4 + $0x1b0] sm:$0xff]
        %v3216 = vld [vmem:[#allocation4 + $0x1b8] sm:$0xff]
        %v3217 = vld [vmem:[#allocation4 + $0x1c0] sm:$0xff]
        %v3218 = vld [vmem:[#allocation4 + $0x1c8] sm:$0xff]
        %v3219 = vld [vmem:[#allocation4 + $0x1d0] sm:$0xff]
        %v3220 = vld [vmem:[#allocation4 + $0x1d8] sm:$0xff]
        %v3221 = vld [vmem:[#allocation4 + $0x1e0] sm:$0xff]
        %v3222 = vld [vmem:[#allocation4 + $0x1e8] sm:$0xff]
        %v3223 = vld [vmem:[#allocation4 + $0x1f0] sm:$0xff]
        %v3224 = vld [vmem:[#allocation4 + $0x1f8] sm:$0xff]
        %v3225 = vld [vmem:[#allocation4 + $0x200] sm:$0xff]
        %v3226 = vld [vmem:[#allocation4 + $0x208] sm:$0xff]
        %v3227 = vld [vmem:[#allocation4 + $0x210] sm:$0xff]
        %v3228 = vld [vmem:[#allocation4 + $0x218] sm:$0xff]
        %v3229 = vld [vmem:[#allocation4 + $0x220] sm:$0xff]
        %v3230 = vld [vmem:[#allocation4 + $0x228] sm:$0xff]
        %v3231 = vld [vmem:[#allocation4 + $0x230] sm:$0xff]
        %v3232 = vld [vmem:[#allocation4 + $0x238] sm:$0xff]
        %v3233 = vld [vmem:[#allocation4 + $0x240] sm:$0xff]
        %v3234 = vld [vmem:[#allocation4 + $0x248] sm:$0xff]
        %v3235 = vld [vmem:[#allocation4 + $0x250] sm:$0xff]
        %v3236 = vld [vmem:[#allocation4 + $0x258] sm:$0xff]
        %v3237 = vld [vmem:[#allocation4 + $0x260] sm:$0xff]
        %v3238 = vld [vmem:[#allocation4 + $0x268] sm:$0xff]
        %v3239 = vld [vmem:[#allocation4 + $0x270] sm:$0xff]
        %v3240 = vld [vmem:[#allocation4 + $0x278] sm:$0xff]
        %v3241 = vld [vmem:[#allocation4 + $0x280] sm:$0xff]
        %v3242 = vld [vmem:[#allocation4 + $0x288] sm:$0xff]
        %v3243 = vld [vmem:[#allocation4 + $0x290] sm:$0xff]
        %v3244 = vld [vmem:[#allocation4 + $0x298] sm:$0xff]
        %v3245 = vld [vmem:[#allocation4 + $0x2a0] sm:$0xff]
        %v3246 = vld [vmem:[#allocation4 + $0x2a8] sm:$0xff]
        %v3247 = vld [vmem:[#allocation4 + $0x2b0] sm:$0xff]
        %v3248 = vld [vmem:[#allocation4 + $0x2b8] sm:$0xff]
        %v3249 = vld [vmem:[#allocation4 + $0x2c0] sm:$0xff]
        %v3250 = vld [vmem:[#allocation4 + $0x2c8] sm:$0xff]
        %v3251 = vld [vmem:[#allocation4 + $0x2d0] sm:$0xff]
        %v3252 = vld [vmem:[#allocation4 + $0x2d8] sm:$0xff]
        %v3253 = vld [vmem:[#allocation4 + $0x2e0] sm:$0xff]
        %v3254 = vld [vmem:[#allocation4 + $0x2e8] sm:$0xff]
        %v3255 = vld [vmem:[#allocation4 + $0x2f0] sm:$0xff]
        %v3256 = vld [vmem:[#allocation4 + $0x2f8] sm:$0xff]
        %v3257 = vld [vmem:[#allocation11] sm:$0xff]
        %v3258 = vld [vmem:[#allocation11 + $0x8] sm:$0xff]
        %v3259 = vld [vmem:[#allocation11 + $0x10] sm:$0xff]
        %v3260 = vld [vmem:[#allocation11 + $0x18] sm:$0xff]
        %v3261 = vld [vmem:[#allocation11 + $0x20] sm:$0xff]
        %v3262 = vld [vmem:[#allocation11 + $0x28] sm:$0xff]
        %v3263 = vld [vmem:[#allocation11 + $0x30] sm:$0xff]
        %v3264 = vld [vmem:[#allocation11 + $0x38] sm:$0xff]
        %v3265 = vld [vmem:[#allocation11 + $0x40] sm:$0xff]
        %v3266 = vld [vmem:[#allocation11 + $0x48] sm:$0xff]
        %v3267 = vld [vmem:[#allocation11 + $0x50] sm:$0xff]
        %v3268 = vld [vmem:[#allocation11 + $0x58] sm:$0xff]
        %v3269 = vld [vmem:[#allocation11 + $0x60] sm:$0xff]
        %v3270 = vld [vmem:[#allocation11 + $0x68] sm:$0xff]
        %v3271 = vld [vmem:[#allocation11 + $0x70] sm:$0xff]
        %v3272 = vld [vmem:[#allocation11 + $0x78] sm:$0xff]
        %v3273 = vld [vmem:[#allocation11 + $0x80] sm:$0xff]
        %v3274 = vld [vmem:[#allocation11 + $0x88] sm:$0xff]
        %v3275 = vld [vmem:[#allocation11 + $0x90] sm:$0xff]
        %v3276 = vld [vmem:[#allocation11 + $0x98] sm:$0xff]
        %v3277 = vld [vmem:[#allocation11 + $0xa0] sm:$0xff]
        %v3278 = vld [vmem:[#allocation11 + $0xa8] sm:$0xff]
        %v3279 = vld [vmem:[#allocation11 + $0xb0] sm:$0xff]
        %v3280 = vld [vmem:[#allocation11 + $0xb8] sm:$0xff]
        %v3281 = vld [vmem:[#allocation11 + $0xc0] sm:$0xff]
        %v3282 = vld [vmem:[#allocation11 + $0xc8] sm:$0xff]
        %v3283 = vld [vmem:[#allocation11 + $0xd0] sm:$0xff]
        %v3284 = vld [vmem:[#allocation11 + $0xd8] sm:$0xff]
        %v3285 = vld [vmem:[#allocation11 + $0xe0] sm:$0xff]
        %v3286 = vld [vmem:[#allocation11 + $0xe8] sm:$0xff]
        %v3287 = vld [vmem:[#allocation11 + $0xf0] sm:$0xff]
        %v3288 = vld [vmem:[#allocation11 + $0xf8] sm:$0xff]
        %v3289 = vld [vmem:[#allocation11 + $0x100] sm:$0xff]
        %v3290 = vld [vmem:[#allocation11 + $0x108] sm:$0xff]
        %v3291 = vld [vmem:[#allocation11 + $0x110] sm:$0xff]
        %v3292 = vld [vmem:[#allocation11 + $0x118] sm:$0xff]
        %v3293 = vld [vmem:[#allocation11 + $0x120] sm:$0xff]
        %v3294 = vld [vmem:[#allocation11 + $0x128] sm:$0xff]
        %v3295 = vld [vmem:[#allocation11 + $0x130] sm:$0xff]
        %v3296 = vld [vmem:[#allocation11 + $0x138] sm:$0xff]
        %v3297 = vld [vmem:[#allocation11 + $0x140] sm:$0xff]
        %v3298 = vld [vmem:[#allocation11 + $0x148] sm:$0xff]
        %v3299 = vld [vmem:[#allocation11 + $0x150] sm:$0xff]
        %v3300 = vld [vmem:[#allocation11 + $0x158] sm:$0xff]
        %v3301 = vld [vmem:[#allocation11 + $0x160] sm:$0xff]
        %v3302 = vld [vmem:[#allocation11 + $0x168] sm:$0xff]
        %v3303 = vld [vmem:[#allocation11 + $0x170] sm:$0xff]
        %v3304 = vld [vmem:[#allocation11 + $0x178] sm:$0xff]
        %3305 = vmatprep.subr.mxu0 0.0
        %3306 = vmatpush1.msra.mxu0 %v3257
        %3307 = vmatprep.subr.mxu0 0.0
        %3308 = vmatpush1.msra.mxu0 %v3258
        %3309 = vmatprep.subr.mxu0 0.0
        %3310 = vmatpush1.msra.mxu0 %v3259
        %3311 = vmatprep.subr.mxu0 0.0
        %3312 = vmatpush1.msra.mxu0 %v3260
        %3313 = vmatprep.subr.mxu0 0.0
        %3314 = vmatpush1.msra.mxu0 %v3261
        %3315 = vmatprep.subr.mxu0 0.0
        %3316 = vmatpush1.msra.mxu0 %v3262
        %3317 = vmatprep.subr.mxu0 0.0
        %3318 = vmatpush1.msra.mxu0 %v3263
        %3319 = vmatprep.subr.mxu0 0.0
        %3320 = vmatpush1.msra.mxu0 %v3264
        %3321 = vmatprep.subr.mxu0 0.0
        %3322 = vmatpush1.msra.mxu0 %v3265
        %3323 = vmatprep.subr.mxu0 0.0
        %3324 = vmatpush1.msra.mxu0 %v3266
        %3325 = vmatprep.subr.mxu0 0.0
        %3326 = vmatpush1.msra.mxu0 %v3267
        %3327 = vmatprep.subr.mxu0 0.0
        %3328 = vmatpush1.msra.mxu0 %v3268
        %3329 = vmatprep.subr.mxu0 0.0
        %3330 = vmatpush1.msra.mxu0 %v3269
        %3331 = vmatprep.subr.mxu0 0.0
        %3332 = vmatpush1.msra.mxu0 %v3270
        %3333 = vmatprep.subr.mxu0 0.0
        %3334 = vmatpush1.msra.mxu0 %v3271
        %3335 = vmatprep.subr.mxu0 0.0
        %3336 = vmatpush1.msra.mxu0 %v3272
        %3337 = vmatprep.subr.mxu0 0.0
        %3338 = vmatpush1.msra.mxu0 %v3273
        %3339 = vmatprep.subr.mxu0 0.0
        %3340 = vmatpush1.msra.mxu0 %v3274
        %3341 = vmatprep.subr.mxu0 0.0
        %3342 = vmatpush1.msra.mxu0 %v3275
        %3343 = vmatprep.subr.mxu0 0.0
        %3344 = vmatpush1.msra.mxu0 %v3276
        %3345 = vmatprep.subr.mxu0 0.0
        %3346 = vmatpush1.msra.mxu0 %v3277
        %3347 = vmatprep.subr.mxu0 0.0
        %3348 = vmatpush1.msra.mxu0 %v3278
        %3349 = vmatprep.subr.mxu0 0.0
        %3350 = vmatpush1.msra.mxu0 %v3279
        %3351 = vmatprep.subr.mxu0 0.0
        %3352 = vmatpush1.msra.mxu0 %v3280
        %3353 = vmatprep.subr.mxu0 0.0
        %3354 = vmatpush1.msra.mxu0 %v3281
        %3355 = vmatprep.subr.mxu0 0.0
        %3356 = vmatpush1.msra.mxu0 %v3282
        %3357 = vmatprep.subr.mxu0 0.0
        %3358 = vmatpush1.msra.mxu0 %v3283
        %3359 = vmatprep.subr.mxu0 0.0
        %3360 = vmatpush1.msra.mxu0 %v3284
        %3361 = vmatprep.subr.mxu0 0.0
        %3362 = vmatpush1.msra.mxu0 %v3285
        %3363 = vmatprep.subr.mxu0 0.0
        %3364 = vmatpush1.msra.mxu0 %v3286
        %3365 = vmatprep.subr.mxu0 0.0
        %3366 = vmatpush1.msra.mxu0 %v3287
        %3367 = vmatprep.subr.mxu0 0.0
        %3368 = vmatpush1.msra.mxu0 %v3288
        %3369 = vmatprep.mubr.f32.mxu0 %v3162
        %3370 = vmatmul.mubr.f32.gmra.mrb[0].mxu0 %v3161
        %v3371 = vpop.f32.mrb[0].mxu0
        %v3372 = vadd.f32 0.0, %v3371
        %v3373 = vpop.f32.mrb[0].mxu0
        %3374 = vmatprep.mubr.f32.mxu0 %v3165
        %3375 = vmatmul.mubr.f32.gmra.mrb[0].mxu0 %v3164
        %v3376 = vpop.f32.mrb[0].mxu0
        %v3377 = vadd.f32 0.0, %v3376
        %v3378 = vpop.f32.mrb[0].mxu0
        %3379 = vmatprep.mubr.f32.mxu0 %v3168
        %3380 = vmatmul.mubr.f32.gmra.mrb[0].mxu0 %v3167
        %v3381 = vpop.f32.mrb[0].mxu0
        %v3382 = vadd.f32 0.0, %v3381
        %v3383 = vpop.f32.mrb[0].mxu0
        %3384 = vmatprep.mubr.f32.mxu0 %v3171
        %3385 = vmatmul.mubr.f32.gmra.mrb[0].mxu0 %v3170
        %v3386 = vpop.f32.mrb[0].mxu0
        %v3387 = vadd.f32 0.0, %v3386
        %v3388 = vpop.f32.mrb[0].mxu0
        %3389 = vmatprep.mubr.f32.mxu0 %v3174
        %3390 = vmatmul.mubr.f32.gmra.mrb[0].mxu0 %v3173
        %v3391 = vpop.f32.mrb[0].mxu0
        %v3392 = vadd.f32 0.0, %v3391
        %v3393 = vpop.f32.mrb[0].mxu0
        %3394 = vmatprep.mubr.f32.mxu0 %v3177
        %3395 = vmatmul.mubr.f32.gmra.mrb[0].mxu0 %v3176
        %v3396 = vpop.f32.mrb[0].mxu0
        %v3397 = vadd.f32 0.0, %v3396
        %v3398 = vpop.f32.mrb[0].mxu0
        %3399 = vmatprep.mubr.f32.mxu0 %v3180
        %3400 = vmatmul.mubr.f32.gmra.mrb[0].mxu0 %v3179
        %v3401 = vpop.f32.mrb[0].mxu0
        %v3402 = vadd.f32 0.0, %v3401
        %v3403 = vpop.f32.mrb[0].mxu0
        %3404 = vmatprep.mubr.f32.mxu0 %v3183
        %3405 = vmatmul.mubr.f32.gmra.mrb[0].mxu0 %v3182
        %v3406 = vpop.f32.mrb[0].mxu0
        %v3407 = vadd.f32 0.0, %v3406
        %v3408 = vpop.f32.mrb[0].mxu0
        %3409 = vmatprep.mubr.f32.mxu0 %v3186
        %3410 = vmatmul.mubr.f32.gmra.mrb[0].mxu0 %v3185
        %v3411 = vpop.f32.mrb[0].mxu0
        %v3412 = vadd.f32 0.0, %v3411
        %v3413 = vpop.f32.mrb[0].mxu0
        %3414 = vmatprep.mubr.f32.mxu0 %v3189
        %3415 = vmatmul.mubr.f32.gmra.mrb[0].mxu0 %v3188
        %v3416 = vpop.f32.mrb[0].mxu0
        %v3417 = vadd.f32 0.0, %v3416
        %v3418 = vpop.f32.mrb[0].mxu0
        %3419 = vmatprep.mubr.f32.mxu0 %v3192
        %3420 = vmatmul.mubr.f32.gmra.mrb[0].mxu0 %v3191
        %v3421 = vpop.f32.mrb[0].mxu0
        %v3422 = vadd.f32 0.0, %v3421
        %v3423 = vpop.f32.mrb[0].mxu0
        %3424 = vmatprep.mubr.f32.mxu0 %v3195
        %3425 = vmatmul.mubr.f32.gmra.mrb[0].mxu0 %v3194
        %v3426 = vpop.f32.mrb[0].mxu0
        %v3427 = vadd.f32 0.0, %v3426
        %v3428 = vpop.f32.mrb[0].mxu0
        %3429 = vmatprep.mubr.f32.mxu0 %v3198
        %3430 = vmatmul.mubr.f32.gmra.mrb[0].mxu0 %v3197
        %v3431 = vpop.f32.mrb[0].mxu0
        %v3432 = vadd.f32 0.0, %v3431
        %v3433 = vpop.f32.mrb[0].mxu0
        %3434 = vmatprep.mubr.f32.mxu0 %v3201
        %3435 = vmatmul.mubr.f32.gmra.mrb[0].mxu0 %v3200
        %v3436 = vpop.f32.mrb[0].mxu0
        %v3437 = vadd.f32 0.0, %v3436
        %v3438 = vpop.f32.mrb[0].mxu0
        %3439 = vmatprep.mubr.f32.mxu0 %v3204
        %3440 = vmatmul.mubr.f32.gmra.mrb[0].mxu0 %v3203
        %v3441 = vpop.f32.mrb[0].mxu0
        %v3442 = vadd.f32 0.0, %v3441
        %v3443 = vpop.f32.mrb[0].mxu0
        %3444 = vmatprep.mubr.f32.mxu0 %v3207
        %3445 = vmatmul.mubr.f32.gmra.mrb[0].mxu0 %v3206
        %v3446 = vpop.f32.mrb[0].mxu0
        %v3447 = vadd.f32 0.0, %v3446
        %v3448 = vpop.f32.mrb[0].mxu0
        %3449 = vmatprep.mubr.f32.mxu0 %v3210
        %3450 = vmatmul.mubr.f32.gmra.mrb[0].mxu0 %v3209
        %v3451 = vpop.f32.mrb[0].mxu0
        %v3452 = vadd.f32 0.0, %v3451
        %v3453 = vpop.f32.mrb[0].mxu0
        %3454 = vmatprep.mubr.f32.mxu0 %v3213
        %3455 = vmatmul.mubr.f32.gmra.mrb[0].mxu0 %v3212
        %v3456 = vpop.f32.mrb[0].mxu0
        %v3457 = vadd.f32 0.0, %v3456
        %v3458 = vpop.f32.mrb[0].mxu0
        %3459 = vmatprep.mubr.f32.mxu0 %v3216
        %3460 = vmatmul.mubr.f32.gmra.mrb[0].mxu0 %v3215
        %v3461 = vpop.f32.mrb[0].mxu0
        %v3462 = vadd.f32 0.0, %v3461
        %v3463 = vpop.f32.mrb[0].mxu0
        %3464 = vmatprep.mubr.f32.mxu0 %v3219
        %3465 = vmatmul.mubr.f32.gmra.mrb[0].mxu0 %v3218
        %v3466 = vpop.f32.mrb[0].mxu0
        %v3467 = vadd.f32 0.0, %v3466
        %v3468 = vpop.f32.mrb[0].mxu0
        %3469 = vmatprep.mubr.f32.mxu0 %v3222
        %3470 = vmatmul.mubr.f32.gmra.mrb[0].mxu0 %v3221
        %v3471 = vpop.f32.mrb[0].mxu0
        %v3472 = vadd.f32 0.0, %v3471
        %v3473 = vpop.f32.mrb[0].mxu0
        %3474 = vmatprep.mubr.f32.mxu0 %v3225
        %3475 = vmatmul.mubr.f32.gmra.mrb[0].mxu0 %v3224
        %v3476 = vpop.f32.mrb[0].mxu0
        %v3477 = vadd.f32 0.0, %v3476
        %v3478 = vpop.f32.mrb[0].mxu0
        %3479 = vmatprep.mubr.f32.mxu0 %v3228
        %3480 = vmatmul.mubr.f32.gmra.mrb[0].mxu0 %v3227
        %v3481 = vpop.f32.mrb[0].mxu0
        %v3482 = vadd.f32 0.0, %v3481
        %v3483 = vpop.f32.mrb[0].mxu0
        %3484 = vmatprep.mubr.f32.mxu0 %v3231
        %3485 = vmatmul.mubr.f32.gmra.mrb[0].mxu0 %v3230
        %v3486 = vpop.f32.mrb[0].mxu0
        %v3487 = vadd.f32 0.0, %v3486
        %v3488 = vpop.f32.mrb[0].mxu0
        %3489 = vmatprep.mubr.f32.mxu0 %v3234
        %3490 = vmatmul.mubr.f32.gmra.mrb[0].mxu0 %v3233
        %v3491 = vpop.f32.mrb[0].mxu0
        %v3492 = vadd.f32 0.0, %v3491
        %v3493 = vpop.f32.mrb[0].mxu0
        %3494 = vmatprep.mubr.f32.mxu0 %v3237
        %3495 = vmatmul.mubr.f32.gmra.mrb[0].mxu0 %v3236
        %v3496 = vpop.f32.mrb[0].mxu0
        %v3497 = vadd.f32 0.0, %v3496
        %v3498 = vpop.f32.mrb[0].mxu0
        %3499 = vmatprep.mubr.f32.mxu0 %v3240
        %3500 = vmatmul.mubr.f32.gmra.mrb[0].mxu0 %v3239
        %v3501 = vpop.f32.mrb[0].mxu0
        %v3502 = vadd.f32 0.0, %v3501
        %v3503 = vpop.f32.mrb[0].mxu0
        %3504 = vmatprep.mubr.f32.mxu0 %v3243
        %3505 = vmatmul.mubr.f32.gmra.mrb[0].mxu0 %v3242
        %v3506 = vpop.f32.mrb[0].mxu0
        %v3507 = vadd.f32 0.0, %v3506
        %v3508 = vpop.f32.mrb[0].mxu0
        %3509 = vmatprep.mubr.f32.mxu0 %v3246
        %3510 = vmatmul.mubr.f32.gmra.mrb[0].mxu0 %v3245
        %v3511 = vpop.f32.mrb[0].mxu0
        %v3512 = vadd.f32 0.0, %v3511
        %v3513 = vpop.f32.mrb[0].mxu0
        %3514 = vmatprep.mubr.f32.mxu0 %v3249
        %3515 = vmatmul.mubr.f32.gmra.mrb[0].mxu0 %v3248
        %v3516 = vpop.f32.mrb[0].mxu0
        %v3517 = vadd.f32 0.0, %v3516
        %v3518 = vpop.f32.mrb[0].mxu0
        %3519 = vmatprep.mubr.f32.mxu0 %v3252
        %3520 = vmatmul.mubr.f32.gmra.mrb[0].mxu0 %v3251
        %v3521 = vpop.f32.mrb[0].mxu0
        %v3522 = vadd.f32 0.0, %v3521
        %v3523 = vpop.f32.mrb[0].mxu0
        %3524 = vmatprep.mubr.f32.mxu0 %v3255
        %3525 = vmatmul.mubr.f32.gmra.mrb[0].mxu0 %v3254
        %v3526 = vpop.f32.mrb[0].mxu0
        %v3527 = vadd.f32 0.0, %v3526
        %v3528 = vpop.f32.mrb[0].mxu0
        %3529 = vdwg.mxu0
        %3530 = vmatprep.subr.mxu0 0.0
        %3531 = vmatpush1.msra.mxu0 %v3289
        %3532 = vmatprep.subr.mxu0 0.0
        %3533 = vmatpush1.msra.mxu0 %v3290
        %3534 = vmatprep.subr.mxu0 0.0
        %3535 = vmatpush1.msra.mxu0 %v3291
        %3536 = vmatprep.subr.mxu0 0.0
        %3537 = vmatpush1.msra.mxu0 %v3292
        %3538 = vmatprep.subr.mxu0 0.0
        %3539 = vmatpush1.msra.mxu0 %v3293
        %3540 = vmatprep.subr.mxu0 0.0
        %3541 = vmatpush1.msra.mxu0 %v3294
        %3542 = vmatprep.subr.mxu0 0.0
        %3543 = vmatpush1.msra.mxu0 %v3295
        %3544 = vmatprep.subr.mxu0 0.0
        %3545 = vmatpush1.msra.mxu0 %v3296
        %3546 = vmatprep.subr.mxu0 0.0
        %3547 = vmatpush1.msra.mxu0 %v3297
        %3548 = vmatprep.subr.mxu0 0.0
        %3549 = vmatpush1.msra.mxu0 %v3298
        %3550 = vmatprep.subr.mxu0 0.0
        %3551 = vmatpush1.msra.mxu0 %v3299
        %3552 = vmatprep.subr.mxu0 0.0
        %3553 = vmatpush1.msra.mxu0 %v3300
        %3554 = vmatprep.subr.mxu0 0.0
        %3555 = vmatpush1.msra.mxu0 %v3301
        %3556 = vmatprep.subr.mxu0 0.0
        %3557 = vmatpush1.msra.mxu0 %v3302
        %3558 = vmatprep.subr.mxu0 0.0
        %3559 = vmatpush1.msra.mxu0 %v3303
        %3560 = vmatprep.subr.mxu0 0.0
        %3561 = vmatpush1.msra.mxu0 %v3304
        %3562 = vmatprep.subr.mxu0 0.0
        %3563 = vmatpush1.msra.mxu0 0.0
        %3564 = vmatprep.subr.mxu0 0.0
        %3565 = vmatpush1.msra.mxu0 0.0
        %3566 = vmatprep.subr.mxu0 0.0
        %3567 = vmatpush1.msra.mxu0 0.0
        %3568 = vmatprep.subr.mxu0 0.0
        %3569 = vmatpush1.msra.mxu0 0.0
        %3570 = vmatprep.subr.mxu0 0.0
        %3571 = vmatpush1.msra.mxu0 0.0
        %3572 = vmatprep.subr.mxu0 0.0
        %3573 = vmatpush1.msra.mxu0 0.0
        %3574 = vmatprep.subr.mxu0 0.0
        %3575 = vmatpush1.msra.mxu0 0.0
        %3576 = vmatprep.subr.mxu0 0.0
        %3577 = vmatpush1.msra.mxu0 0.0
        %3578 = vmatprep.subr.mxu0 0.0
        %3579 = vmatpush1.msra.mxu0 0.0
        %3580 = vmatprep.subr.mxu0 0.0
        %3581 = vmatpush1.msra.mxu0 0.0
        %3582 = vmatprep.subr.mxu0 0.0
        %3583 = vmatpush1.msra.mxu0 0.0
        %3584 = vmatprep.subr.mxu0 0.0
        %3585 = vmatpush1.msra.mxu0 0.0
        %3586 = vmatprep.subr.mxu0 0.0
        %3587 = vmatpush1.msra.mxu0 0.0
        %3588 = vmatprep.subr.mxu0 0.0
        %3589 = vmatpush1.msra.mxu0 0.0
        %3590 = vmatprep.subr.mxu0 0.0
        %3591 = vmatpush1.msra.mxu0 0.0
        %3592 = vmatprep.subr.mxu0 0.0
        %3593 = vmatpush1.msra.mxu0 0.0
        %3594 = vmatprep.mubr.f32.mxu0 0.0
        %3595 = vmatmul.mubr.f32.gmra.mrb[0].mxu0 %v3163
        %v3596 = vpop.f32.mrb[0].mxu0
        %v3597 = vadd.f32 %v3372, %v3596
        %v3598 = vpop.f32.mrb[0].mxu0
        %3599 = vmatprep.mubr.f32.mxu0 0.0
        %3600 = vmatmul.mubr.f32.gmra.mrb[0].mxu0 %v3166
        %v3601 = vpop.f32.mrb[0].mxu0
        %v3602 = vadd.f32 %v3377, %v3601
        %v3603 = vpop.f32.mrb[0].mxu0
        %3604 = vmatprep.mubr.f32.mxu0 0.0
        %3605 = vmatmul.mubr.f32.gmra.mrb[0].mxu0 %v3169
        %v3606 = vpop.f32.mrb[0].mxu0
        %v3607 = vadd.f32 %v3382, %v3606
        %v3608 = vpop.f32.mrb[0].mxu0
        %3609 = vmatprep.mubr.f32.mxu0 0.0
        %3610 = vmatmul.mubr.f32.gmra.mrb[0].mxu0 %v3172
        %v3611 = vpop.f32.mrb[0].mxu0
        %v3612 = vadd.f32 %v3387, %v3611
        %v3613 = vpop.f32.mrb[0].mxu0
        %3614 = vmatprep.mubr.f32.mxu0 0.0
        %3615 = vmatmul.mubr.f32.gmra.mrb[0].mxu0 %v3175
        %v3616 = vpop.f32.mrb[0].mxu0
        %v3617 = vadd.f32 %v3392, %v3616
        %v3618 = vpop.f32.mrb[0].mxu0
        %3619 = vmatprep.mubr.f32.mxu0 0.0
        %3620 = vmatmul.mubr.f32.gmra.mrb[0].mxu0 %v3178
        %v3621 = vpop.f32.mrb[0].mxu0
        %v3622 = vadd.f32 %v3397, %v3621
        %v3623 = vpop.f32.mrb[0].mxu0
        %3624 = vmatprep.mubr.f32.mxu0 0.0
        %3625 = vmatmul.mubr.f32.gmra.mrb[0].mxu0 %v3181
        %v3626 = vpop.f32.mrb[0].mxu0
        %v3627 = vadd.f32 %v3402, %v3626
        %v3628 = vpop.f32.mrb[0].mxu0
        %3629 = vmatprep.mubr.f32.mxu0 0.0
        %3630 = vmatmul.mubr.f32.gmra.mrb[0].mxu0 %v3184
        %v3631 = vpop.f32.mrb[0].mxu0
        %v3632 = vadd.f32 %v3407, %v3631
        %v3633 = vpop.f32.mrb[0].mxu0
        %3634 = vmatprep.mubr.f32.mxu0 0.0
        %3635 = vmatmul.mubr.f32.gmra.mrb[0].mxu0 %v3187
        %v3636 = vpop.f32.mrb[0].mxu0
        %v3637 = vadd.f32 %v3412, %v3636
        %v3638 = vpop.f32.mrb[0].mxu0
        %3639 = vmatprep.mubr.f32.mxu0 0.0
        %3640 = vmatmul.mubr.f32.gmra.mrb[0].mxu0 %v3190
        %v3641 = vpop.f32.mrb[0].mxu0
        %v3642 = vadd.f32 %v3417, %v3641
        %v3643 = vpop.f32.mrb[0].mxu0
        %3644 = vmatprep.mubr.f32.mxu0 0.0
        %3645 = vmatmul.mubr.f32.gmra.mrb[0].mxu0 %v3193
        %v3646 = vpop.f32.mrb[0].mxu0
        %v3647 = vadd.f32 %v3422, %v3646
        %v3648 = vpop.f32.mrb[0].mxu0
        %3649 = vmatprep.mubr.f32.mxu0 0.0
        %3650 = vmatmul.mubr.f32.gmra.mrb[0].mxu0 %v3196
        %v3651 = vpop.f32.mrb[0].mxu0
        %v3652 = vadd.f32 %v3427, %v3651
        %v3653 = vpop.f32.mrb[0].mxu0
        %3654 = vmatprep.mubr.f32.mxu0 0.0
        %3655 = vmatmul.mubr.f32.gmra.mrb[0].mxu0 %v3199
        %v3656 = vpop.f32.mrb[0].mxu0
        %v3657 = vadd.f32 %v3432, %v3656
        %v3658 = vpop.f32.mrb[0].mxu0
        %3659 = vmatprep.mubr.f32.mxu0 0.0
        %3660 = vmatmul.mubr.f32.gmra.mrb[0].mxu0 %v3202
        %v3661 = vpop.f32.mrb[0].mxu0
        %v3662 = vadd.f32 %v3437, %v3661
        %v3663 = vpop.f32.mrb[0].mxu0
        %3664 = vmatprep.mubr.f32.mxu0 0.0
        %3665 = vmatmul.mubr.f32.gmra.mrb[0].mxu0 %v3205
        %v3666 = vpop.f32.mrb[0].mxu0
        %v3667 = vadd.f32 %v3442, %v3666
        %v3668 = vpop.f32.mrb[0].mxu0
        %3669 = vmatprep.mubr.f32.mxu0 0.0
        %3670 = vmatmul.mubr.f32.gmra.mrb[0].mxu0 %v3208
        %v3671 = vpop.f32.mrb[0].mxu0
        %v3672 = vadd.f32 %v3447, %v3671
        %v3673 = vpop.f32.mrb[0].mxu0
        %3674 = vmatprep.mubr.f32.mxu0 0.0
        %3675 = vmatmul.mubr.f32.gmra.mrb[0].mxu0 %v3211
        %v3676 = vpop.f32.mrb[0].mxu0
        %v3677 = vadd.f32 %v3452, %v3676
        %v3678 = vpop.f32.mrb[0].mxu0
        %3679 = vmatprep.mubr.f32.mxu0 0.0
        %3680 = vmatmul.mubr.f32.gmra.mrb[0].mxu0 %v3214
        %v3681 = vpop.f32.mrb[0].mxu0
        %v3682 = vadd.f32 %v3457, %v3681
        %v3683 = vpop.f32.mrb[0].mxu0
        %3684 = vmatprep.mubr.f32.mxu0 0.0
        %3685 = vmatmul.mubr.f32.gmra.mrb[0].mxu0 %v3217
        %v3686 = vpop.f32.mrb[0].mxu0
        %v3687 = vadd.f32 %v3462, %v3686
        %v3688 = vpop.f32.mrb[0].mxu0
        %3689 = vmatprep.mubr.f32.mxu0 0.0
        %3690 = vmatmul.mubr.f32.gmra.mrb[0].mxu0 %v3220
        %v3691 = vpop.f32.mrb[0].mxu0
        %v3692 = vadd.f32 %v3467, %v3691
        %v3693 = vpop.f32.mrb[0].mxu0
        %3694 = vmatprep.mubr.f32.mxu0 0.0
        %3695 = vmatmul.mubr.f32.gmra.mrb[0].mxu0 %v3223
        %v3696 = vpop.f32.mrb[0].mxu0
        %v3697 = vadd.f32 %v3472, %v3696
        %v3698 = vpop.f32.mrb[0].mxu0
        %3699 = vmatprep.mubr.f32.mxu0 0.0
        %3700 = vmatmul.mubr.f32.gmra.mrb[0].mxu0 %v3226
        %v3701 = vpop.f32.mrb[0].mxu0
        %v3702 = vadd.f32 %v3477, %v3701
        %v3703 = vpop.f32.mrb[0].mxu0
        %3704 = vmatprep.mubr.f32.mxu0 0.0
        %3705 = vmatmul.mubr.f32.gmra.mrb[0].mxu0 %v3229
        %v3706 = vpop.f32.mrb[0].mxu0
        %v3707 = vadd.f32 %v3482, %v3706
        %v3708 = vpop.f32.mrb[0].mxu0
        %3709 = vmatprep.mubr.f32.mxu0 0.0
        %3710 = vmatmul.mubr.f32.gmra.mrb[0].mxu0 %v3232
        %v3711 = vpop.f32.mrb[0].mxu0
        %v3712 = vadd.f32 %v3487, %v3711
        %v3713 = vpop.f32.mrb[0].mxu0
        %3714 = vmatprep.mubr.f32.mxu0 0.0
        %3715 = vmatmul.mubr.f32.gmra.mrb[0].mxu0 %v3235
        %v3716 = vpop.f32.mrb[0].mxu0
        %v3717 = vadd.f32 %v3492, %v3716
        %v3718 = vpop.f32.mrb[0].mxu0
        %3719 = vmatprep.mubr.f32.mxu0 0.0
        %3720 = vmatmul.mubr.f32.gmra.mrb[0].mxu0 %v3238
        %v3721 = vpop.f32.mrb[0].mxu0
        %v3722 = vadd.f32 %v3497, %v3721
        %v3723 = vpop.f32.mrb[0].mxu0
        %3724 = vmatprep.mubr.f32.mxu0 0.0
        %3725 = vmatmul.mubr.f32.gmra.mrb[0].mxu0 %v3241
        %v3726 = vpop.f32.mrb[0].mxu0
        %v3727 = vadd.f32 %v3502, %v3726
        %v3728 = vpop.f32.mrb[0].mxu0
        %3729 = vmatprep.mubr.f32.mxu0 0.0
        %3730 = vmatmul.mubr.f32.gmra.mrb[0].mxu0 %v3244
        %v3731 = vpop.f32.mrb[0].mxu0
        %v3732 = vadd.f32 %v3507, %v3731
        %v3733 = vpop.f32.mrb[0].mxu0
        %3734 = vmatprep.mubr.f32.mxu0 0.0
        %3735 = vmatmul.mubr.f32.gmra.mrb[0].mxu0 %v3247
        %v3736 = vpop.f32.mrb[0].mxu0
        %v3737 = vadd.f32 %v3512, %v3736
        %v3738 = vpop.f32.mrb[0].mxu0
        %3739 = vmatprep.mubr.f32.mxu0 0.0
        %3740 = vmatmul.mubr.f32.gmra.mrb[0].mxu0 %v3250
        %v3741 = vpop.f32.mrb[0].mxu0
        %v3742 = vadd.f32 %v3517, %v3741
        %v3743 = vpop.f32.mrb[0].mxu0
        %3744 = vmatprep.mubr.f32.mxu0 0.0
        %3745 = vmatmul.mubr.f32.gmra.mrb[0].mxu0 %v3253
        %v3746 = vpop.f32.mrb[0].mxu0
        %v3747 = vadd.f32 %v3522, %v3746
        %v3748 = vpop.f32.mrb[0].mxu0
        %3749 = vmatprep.mubr.f32.mxu0 0.0
        %3750 = vmatmul.mubr.f32.gmra.mrb[0].mxu0 %v3256
        %v3751 = vpop.f32.mrb[0].mxu0
        %v3752 = vadd.f32 %v3527, %v3751
        %v3753 = vpop.f32.mrb[0].mxu0
        %3754 = vdwg.mxu0
        %3755 = vst [vmem:[#allocation5] sm:$0xff] %v3597
        %3756 = vst [vmem:[#allocation5 + $0x8] sm:$0xff] %v3602
        %3757 = vst [vmem:[#allocation5 + $0x10] sm:$0xff] %v3607
        %3758 = vst [vmem:[#allocation5 + $0x18] sm:$0xff] %v3612
        %3759 = vst [vmem:[#allocation5 + $0x20] sm:$0xff] %v3617
        %3760 = vst [vmem:[#allocation5 + $0x28] sm:$0xff] %v3622
        %3761 = vst [vmem:[#allocation5 + $0x30] sm:$0xff] %v3627
        %3762 = vst [vmem:[#allocation5 + $0x38] sm:$0xff] %v3632
        %3763 = vst [vmem:[#allocation5 + $0x40] sm:$0xff] %v3637
        %3764 = vst [vmem:[#allocation5 + $0x48] sm:$0xff] %v3642
        %3765 = vst [vmem:[#allocation5 + $0x50] sm:$0xff] %v3647
        %3766 = vst [vmem:[#allocation5 + $0x58] sm:$0xff] %v3652
        %3767 = vst [vmem:[#allocation5 + $0x60] sm:$0xff] %v3657
        %3768 = vst [vmem:[#allocation5 + $0x68] sm:$0xff] %v3662
        %3769 = vst [vmem:[#allocation5 + $0x70] sm:$0xff] %v3667
        %3770 = vst [vmem:[#allocation5 + $0x78] sm:$0xff] %v3672
        %3771 = vst [vmem:[#allocation5 + $0x80] sm:$0xff] %v3677
        %3772 = vst [vmem:[#allocation5 + $0x88] sm:$0xff] %v3682
        %3773 = vst [vmem:[#allocation5 + $0x90] sm:$0xff] %v3687
        %3774 = vst [vmem:[#allocation5 + $0x98] sm:$0xff] %v3692
        %3775 = vst [vmem:[#allocation5 + $0xa0] sm:$0xff] %v3697
        %3776 = vst [vmem:[#allocation5 + $0xa8] sm:$0xff] %v3702
        %3777 = vst [vmem:[#allocation5 + $0xb0] sm:$0xff] %v3707
        %3778 = vst [vmem:[#allocation5 + $0xb8] sm:$0xff] %v3712
        %3779 = vst [vmem:[#allocation5 + $0xc0] sm:$0xff] %v3717
        %3780 = vst [vmem:[#allocation5 + $0xc8] sm:$0xff] %v3722
        %3781 = vst [vmem:[#allocation5 + $0xd0] sm:$0xff] %v3727
        %3782 = vst [vmem:[#allocation5 + $0xd8] sm:$0xff] %v3732
        %3783 = vst [vmem:[#allocation5 + $0xe0] sm:$0xff] %v3737
        %3784 = vst [vmem:[#allocation5 + $0xe8] sm:$0xff] %v3742
        %3785 = vst [vmem:[#allocation5 + $0xf0] sm:$0xff] %v3747
        %3786 = vst [vmem:[#allocation5 + $0xf8] sm:$0xff] %v3752
        %v3787 = vld [vmem:[%s1387] sm:$0xff]
        %v3788 = vld [vmem:[%s1387 + $0x8] sm:$0xff]
        %v3789 = vld [vmem:[%s1387 + $0x10] sm:$0xff]
        %v3790 = vld [vmem:[%s1387 + $0x18] sm:$0xff]
        %v3791 = vld [vmem:[%s1387 + $0x20] sm:$0xff]
        %v3792 = vld [vmem:[%s1387 + $0x28] sm:$0xff]
        %v3793 = vld [vmem:[%s1387 + $0x30] sm:$0xff]
        %v3794 = vld [vmem:[%s1387 + $0x38] sm:$0xff]
        %v3795 = vld [vmem:[%s1387 + $0x40] sm:$0xff]
        %v3796 = vld [vmem:[%s1387 + $0x48] sm:$0xff]
        %v3797 = vld [vmem:[%s1387 + $0x50] sm:$0xff]
        %v3798 = vld [vmem:[%s1387 + $0x58] sm:$0xff]
        %v3799 = vld [vmem:[%s1387 + $0x60] sm:$0xff]
        %v3800 = vld [vmem:[%s1387 + $0x68] sm:$0xff]
        %v3801 = vld [vmem:[%s1387 + $0x70] sm:$0xff]
        %v3802 = vld [vmem:[%s1387 + $0x78] sm:$0xff]
        %v3803 = vld [vmem:[%s1387 + $0x80] sm:$0xff]
        %v3804 = vld [vmem:[%s1387 + $0x88] sm:$0xff]
        %v3805 = vld [vmem:[%s1387 + $0x90] sm:$0xff]
        %v3806 = vld [vmem:[%s1387 + $0x98] sm:$0xff]
        %v3807 = vld [vmem:[%s1387 + $0xa0] sm:$0xff]
        %v3808 = vld [vmem:[%s1387 + $0xa8] sm:$0xff]
        %v3809 = vld [vmem:[%s1387 + $0xb0] sm:$0xff]
        %v3810 = vld [vmem:[%s1387 + $0xb8] sm:$0xff]
        %v3811 = vld [vmem:[%s1387 + $0xc0] sm:$0xff]
        %v3812 = vld [vmem:[%s1387 + $0xc8] sm:$0xff]
        %v3813 = vld [vmem:[%s1387 + $0xd0] sm:$0xff]
        %v3814 = vld [vmem:[%s1387 + $0xd8] sm:$0xff]
        %v3815 = vld [vmem:[%s1387 + $0xe0] sm:$0xff]
        %v3816 = vld [vmem:[%s1387 + $0xe8] sm:$0xff]
        %v3817 = vld [vmem:[%s1387 + $0xf0] sm:$0xff]
        %v3818 = vld [vmem:[%s1387 + $0xf8] sm:$0xff]
        %v3819 = vld [vmem:[%s1387 + $0x100] sm:$0xff]
        %v3820 = vld [vmem:[%s1387 + $0x108] sm:$0xff]
        %v3821 = vld [vmem:[%s1387 + $0x110] sm:$0xff]
        %v3822 = vld [vmem:[%s1387 + $0x118] sm:$0xff]
        %v3823 = vld [vmem:[%s1387 + $0x120] sm:$0xff]
        %v3824 = vld [vmem:[%s1387 + $0x128] sm:$0xff]
        %v3825 = vld [vmem:[%s1387 + $0x130] sm:$0xff]
        %v3826 = vld [vmem:[%s1387 + $0x138] sm:$0xff]
        %v3827 = vld [vmem:[%s1387 + $0x140] sm:$0xff]
        %v3828 = vld [vmem:[%s1387 + $0x148] sm:$0xff]
        %v3829 = vld [vmem:[%s1387 + $0x150] sm:$0xff]
        %v3830 = vld [vmem:[%s1387 + $0x158] sm:$0xff]
        %v3831 = vld [vmem:[%s1387 + $0x160] sm:$0xff]
        %v3832 = vld [vmem:[%s1387 + $0x168] sm:$0xff]
        %v3833 = vld [vmem:[%s1387 + $0x170] sm:$0xff]
        %v3834 = vld [vmem:[%s1387 + $0x178] sm:$0xff]
        %v3835 = vld [vmem:[%s1387 + $0x180] sm:$0xff]
        %v3836 = vld [vmem:[%s1387 + $0x188] sm:$0xff]
        %v3837 = vld [vmem:[%s1387 + $0x190] sm:$0xff]
        %v3838 = vld [vmem:[%s1387 + $0x198] sm:$0xff]
        %v3839 = vld [vmem:[%s1387 + $0x1a0] sm:$0xff]
        %v3840 = vld [vmem:[%s1387 + $0x1a8] sm:$0xff]
        %v3841 = vld [vmem:[%s1387 + $0x1b0] sm:$0xff]
        %v3842 = vld [vmem:[%s1387 + $0x1b8] sm:$0xff]
        %v3843 = vld [vmem:[%s1387 + $0x1c0] sm:$0xff]
        %v3844 = vld [vmem:[%s1387 + $0x1c8] sm:$0xff]
        %v3845 = vld [vmem:[%s1387 + $0x1d0] sm:$0xff]
        %v3846 = vld [vmem:[%s1387 + $0x1d8] sm:$0xff]
        %v3847 = vld [vmem:[%s1387 + $0x1e0] sm:$0xff]
        %v3848 = vld [vmem:[%s1387 + $0x1e8] sm:$0xff]
        %v3849 = vld [vmem:[%s1387 + $0x1f0] sm:$0xff]
        %v3850 = vld [vmem:[%s1387 + $0x1f8] sm:$0xff]
        %v3851 = vld [vmem:[%s1387 + $0x200] sm:$0xff]
        %v3852 = vld [vmem:[%s1387 + $0x208] sm:$0xff]
        %v3853 = vld [vmem:[%s1387 + $0x210] sm:$0xff]
        %v3854 = vld [vmem:[%s1387 + $0x218] sm:$0xff]
        %v3855 = vld [vmem:[%s1387 + $0x220] sm:$0xff]
        %v3856 = vld [vmem:[%s1387 + $0x228] sm:$0xff]
        %v3857 = vld [vmem:[%s1387 + $0x230] sm:$0xff]
        %v3858 = vld [vmem:[%s1387 + $0x238] sm:$0xff]
        %v3859 = vld [vmem:[%s1387 + $0x240] sm:$0xff]
        %v3860 = vld [vmem:[%s1387 + $0x248] sm:$0xff]
        %v3861 = vld [vmem:[%s1387 + $0x250] sm:$0xff]
        %v3862 = vld [vmem:[%s1387 + $0x258] sm:$0xff]
        %v3863 = vld [vmem:[%s1387 + $0x260] sm:$0xff]
        %v3864 = vld [vmem:[%s1387 + $0x268] sm:$0xff]
        %v3865 = vld [vmem:[%s1387 + $0x270] sm:$0xff]
        %v3866 = vld [vmem:[%s1387 + $0x278] sm:$0xff]
        %v3867 = vld [vmem:[%s1387 + $0x280] sm:$0xff]
        %v3868 = vld [vmem:[%s1387 + $0x288] sm:$0xff]
        %v3869 = vld [vmem:[%s1387 + $0x290] sm:$0xff]
        %v3870 = vld [vmem:[%s1387 + $0x298] sm:$0xff]
        %v3871 = vld [vmem:[%s1387 + $0x2a0] sm:$0xff]
        %v3872 = vld [vmem:[%s1387 + $0x2a8] sm:$0xff]
        %v3873 = vld [vmem:[%s1387 + $0x2b0] sm:$0xff]
        %v3874 = vld [vmem:[%s1387 + $0x2b8] sm:$0xff]
        %v3875 = vld [vmem:[%s1387 + $0x2c0] sm:$0xff]
        %v3876 = vld [vmem:[%s1387 + $0x2c8] sm:$0xff]
        %v3877 = vld [vmem:[%s1387 + $0x2d0] sm:$0xff]
        %v3878 = vld [vmem:[%s1387 + $0x2d8] sm:$0xff]
        %v3879 = vld [vmem:[%s1387 + $0x2e0] sm:$0xff]
        %v3880 = vld [vmem:[%s1387 + $0x2e8] sm:$0xff]
        %v3881 = vld [vmem:[%s1387 + $0x2f0] sm:$0xff]
        %v3882 = vld [vmem:[%s1387 + $0x2f8] sm:$0xff]
        %s3883 = scalar_lea.vmem [#allocation11], 384
        %v3884 = vld [vmem:[%s3883] sm:$0xff]
        %v3885 = vld [vmem:[%s3883 + $0x8] sm:$0xff]
        %v3886 = vld [vmem:[%s3883 + $0x10] sm:$0xff]
        %v3887 = vld [vmem:[%s3883 + $0x18] sm:$0xff]
        %v3888 = vld [vmem:[%s3883 + $0x20] sm:$0xff]
        %v3889 = vld [vmem:[%s3883 + $0x28] sm:$0xff]
        %v3890 = vld [vmem:[%s3883 + $0x30] sm:$0xff]
        %v3891 = vld [vmem:[%s3883 + $0x38] sm:$0xff]
        %v3892 = vld [vmem:[%s3883 + $0x40] sm:$0xff]
        %v3893 = vld [vmem:[%s3883 + $0x48] sm:$0xff]
        %v3894 = vld [vmem:[%s3883 + $0x50] sm:$0xff]
        %v3895 = vld [vmem:[%s3883 + $0x58] sm:$0xff]
        %v3896 = vld [vmem:[%s3883 + $0x60] sm:$0xff]
        %v3897 = vld [vmem:[%s3883 + $0x68] sm:$0xff]
        %v3898 = vld [vmem:[%s3883 + $0x70] sm:$0xff]
        %v3899 = vld [vmem:[%s3883 + $0x78] sm:$0xff]
        %v3900 = vld [vmem:[%s3883 + $0x80] sm:$0xff]
        %v3901 = vld [vmem:[%s3883 + $0x88] sm:$0xff]
        %v3902 = vld [vmem:[%s3883 + $0x90] sm:$0xff]
        %v3903 = vld [vmem:[%s3883 + $0x98] sm:$0xff]
        %v3904 = vld [vmem:[%s3883 + $0xa0] sm:$0xff]
        %v3905 = vld [vmem:[%s3883 + $0xa8] sm:$0xff]
        %v3906 = vld [vmem:[%s3883 + $0xb0] sm:$0xff]
        %v3907 = vld [vmem:[%s3883 + $0xb8] sm:$0xff]
        %v3908 = vld [vmem:[%s3883 + $0xc0] sm:$0xff]
        %v3909 = vld [vmem:[%s3883 + $0xc8] sm:$0xff]
        %v3910 = vld [vmem:[%s3883 + $0xd0] sm:$0xff]
        %v3911 = vld [vmem:[%s3883 + $0xd8] sm:$0xff]
        %v3912 = vld [vmem:[%s3883 + $0xe0] sm:$0xff]
        %v3913 = vld [vmem:[%s3883 + $0xe8] sm:$0xff]
        %v3914 = vld [vmem:[%s3883 + $0xf0] sm:$0xff]
        %v3915 = vld [vmem:[%s3883 + $0xf8] sm:$0xff]
        %v3916 = vld [vmem:[%s3883 + $0x100] sm:$0xff]
        %v3917 = vld [vmem:[%s3883 + $0x108] sm:$0xff]
        %v3918 = vld [vmem:[%s3883 + $0x110] sm:$0xff]
        %v3919 = vld [vmem:[%s3883 + $0x118] sm:$0xff]
        %v3920 = vld [vmem:[%s3883 + $0x120] sm:$0xff]
        %v3921 = vld [vmem:[%s3883 + $0x128] sm:$0xff]
        %v3922 = vld [vmem:[%s3883 + $0x130] sm:$0xff]
        %v3923 = vld [vmem:[%s3883 + $0x138] sm:$0xff]
        %v3924 = vld [vmem:[%s3883 + $0x140] sm:$0xff]
        %v3925 = vld [vmem:[%s3883 + $0x148] sm:$0xff]
        %v3926 = vld [vmem:[%s3883 + $0x150] sm:$0xff]
        %v3927 = vld [vmem:[%s3883 + $0x158] sm:$0xff]
        %v3928 = vld [vmem:[%s3883 + $0x160] sm:$0xff]
        %v3929 = vld [vmem:[%s3883 + $0x168] sm:$0xff]
        %v3930 = vld [vmem:[%s3883 + $0x170] sm:$0xff]
        %v3931 = vld [vmem:[%s3883 + $0x178] sm:$0xff]
        %3932 = vmatprep.subr.mxu0 0.0
        %3933 = vmatpush1.msra.mxu0 %v3884
        %3934 = vmatprep.subr.mxu0 0.0
        %3935 = vmatpush1.msra.mxu0 %v3885
        %3936 = vmatprep.subr.mxu0 0.0
        %3937 = vmatpush1.msra.mxu0 %v3886
        %3938 = vmatprep.subr.mxu0 0.0
        %3939 = vmatpush1.msra.mxu0 %v3887
        %3940 = vmatprep.subr.mxu0 0.0
        %3941 = vmatpush1.msra.mxu0 %v3888
        %3942 = vmatprep.subr.mxu0 0.0
        %3943 = vmatpush1.msra.mxu0 %v3889
        %3944 = vmatprep.subr.mxu0 0.0
        %3945 = vmatpush1.msra.mxu0 %v3890
        %3946 = vmatprep.subr.mxu0 0.0
        %3947 = vmatpush1.msra.mxu0 %v3891
        %3948 = vmatprep.subr.mxu0 0.0
        %3949 = vmatpush1.msra.mxu0 %v3892
        %3950 = vmatprep.subr.mxu0 0.0
        %3951 = vmatpush1.msra.mxu0 %v3893
        %3952 = vmatprep.subr.mxu0 0.0
        %3953 = vmatpush1.msra.mxu0 %v3894
        %3954 = vmatprep.subr.mxu0 0.0
        %3955 = vmatpush1.msra.mxu0 %v3895
        %3956 = vmatprep.subr.mxu0 0.0
        %3957 = vmatpush1.msra.mxu0 %v3896
        %3958 = vmatprep.subr.mxu0 0.0
        %3959 = vmatpush1.msra.mxu0 %v3897
        %3960 = vmatprep.subr.mxu0 0.0
        %3961 = vmatpush1.msra.mxu0 %v3898
        %3962 = vmatprep.subr.mxu0 0.0
        %3963 = vmatpush1.msra.mxu0 %v3899
        %3964 = vmatprep.subr.mxu0 0.0
        %3965 = vmatpush1.msra.mxu0 %v3900
        %3966 = vmatprep.subr.mxu0 0.0
        %3967 = vmatpush1.msra.mxu0 %v3901
        %3968 = vmatprep.subr.mxu0 0.0
        %3969 = vmatpush1.msra.mxu0 %v3902
        %3970 = vmatprep.subr.mxu0 0.0
        %3971 = vmatpush1.msra.mxu0 %v3903
        %3972 = vmatprep.subr.mxu0 0.0
        %3973 = vmatpush1.msra.mxu0 %v3904
        %3974 = vmatprep.subr.mxu0 0.0
        %3975 = vmatpush1.msra.mxu0 %v3905
        %3976 = vmatprep.subr.mxu0 0.0
        %3977 = vmatpush1.msra.mxu0 %v3906
        %3978 = vmatprep.subr.mxu0 0.0
        %3979 = vmatpush1.msra.mxu0 %v3907
        %3980 = vmatprep.subr.mxu0 0.0
        %3981 = vmatpush1.msra.mxu0 %v3908
        %3982 = vmatprep.subr.mxu0 0.0
        %3983 = vmatpush1.msra.mxu0 %v3909
        %3984 = vmatprep.subr.mxu0 0.0
        %3985 = vmatpush1.msra.mxu0 %v3910
        %3986 = vmatprep.subr.mxu0 0.0
        %3987 = vmatpush1.msra.mxu0 %v3911
        %3988 = vmatprep.subr.mxu0 0.0
        %3989 = vmatpush1.msra.mxu0 %v3912
        %3990 = vmatprep.subr.mxu0 0.0
        %3991 = vmatpush1.msra.mxu0 %v3913
        %3992 = vmatprep.subr.mxu0 0.0
        %3993 = vmatpush1.msra.mxu0 %v3914
        %3994 = vmatprep.subr.mxu0 0.0
        %3995 = vmatpush1.msra.mxu0 %v3915
        %3996 = vmatprep.mubr.f32.mxu0 %v3788
        %3997 = vmatmul.mubr.f32.gmra.mrb[0].mxu0 %v3787
        %v3998 = vpop.f32.mrb[0].mxu0
        %v3999 = vadd.f32 0.0, %v3998
        %v4000 = vpop.f32.mrb[0].mxu0
        %4001 = vmatprep.mubr.f32.mxu0 %v3791
        %4002 = vmatmul.mubr.f32.gmra.mrb[0].mxu0 %v3790
        %v4003 = vpop.f32.mrb[0].mxu0
        %v4004 = vadd.f32 0.0, %v4003
        %v4005 = vpop.f32.mrb[0].mxu0
        %4006 = vmatprep.mubr.f32.mxu0 %v3794
        %4007 = vmatmul.mubr.f32.gmra.mrb[0].mxu0 %v3793
        %v4008 = vpop.f32.mrb[0].mxu0
        %v4009 = vadd.f32 0.0, %v4008
        %v4010 = vpop.f32.mrb[0].mxu0
        %4011 = vmatprep.mubr.f32.mxu0 %v3797
        %4012 = vmatmul.mubr.f32.gmra.mrb[0].mxu0 %v3796
        %v4013 = vpop.f32.mrb[0].mxu0
        %v4014 = vadd.f32 0.0, %v4013
        %v4015 = vpop.f32.mrb[0].mxu0
        %4016 = vmatprep.mubr.f32.mxu0 %v3800
        %4017 = vmatmul.mubr.f32.gmra.mrb[0].mxu0 %v3799
        %v4018 = vpop.f32.mrb[0].mxu0
        %v4019 = vadd.f32 0.0, %v4018
        %v4020 = vpop.f32.mrb[0].mxu0
        %4021 = vmatprep.mubr.f32.mxu0 %v3803
        %4022 = vmatmul.mubr.f32.gmra.mrb[0].mxu0 %v3802
        %v4023 = vpop.f32.mrb[0].mxu0
        %v4024 = vadd.f32 0.0, %v4023
        %v4025 = vpop.f32.mrb[0].mxu0
        %4026 = vmatprep.mubr.f32.mxu0 %v3806
        %4027 = vmatmul.mubr.f32.gmra.mrb[0].mxu0 %v3805
        %v4028 = vpop.f32.mrb[0].mxu0
        %v4029 = vadd.f32 0.0, %v4028
        %v4030 = vpop.f32.mrb[0].mxu0
        %4031 = vmatprep.mubr.f32.mxu0 %v3809
        %4032 = vmatmul.mubr.f32.gmra.mrb[0].mxu0 %v3808
        %v4033 = vpop.f32.mrb[0].mxu0
        %v4034 = vadd.f32 0.0, %v4033
        %v4035 = vpop.f32.mrb[0].mxu0
        %4036 = vmatprep.mubr.f32.mxu0 %v3812
        %4037 = vmatmul.mubr.f32.gmra.mrb[0].mxu0 %v3811
        %v4038 = vpop.f32.mrb[0].mxu0
        %v4039 = vadd.f32 0.0, %v4038
        %v4040 = vpop.f32.mrb[0].mxu0
        %4041 = vmatprep.mubr.f32.mxu0 %v3815
        %4042 = vmatmul.mubr.f32.gmra.mrb[0].mxu0 %v3814
        %v4043 = vpop.f32.mrb[0].mxu0
        %v4044 = vadd.f32 0.0, %v4043
        %v4045 = vpop.f32.mrb[0].mxu0
        %4046 = vmatprep.mubr.f32.mxu0 %v3818
        %4047 = vmatmul.mubr.f32.gmra.mrb[0].mxu0 %v3817
        %v4048 = vpop.f32.mrb[0].mxu0
        %v4049 = vadd.f32 0.0, %v4048
        %v4050 = vpop.f32.mrb[0].mxu0
        %4051 = vmatprep.mubr.f32.mxu0 %v3821
        %4052 = vmatmul.mubr.f32.gmra.mrb[0].mxu0 %v3820
        %v4053 = vpop.f32.mrb[0].mxu0
        %v4054 = vadd.f32 0.0, %v4053
        %v4055 = vpop.f32.mrb[0].mxu0
        %4056 = vmatprep.mubr.f32.mxu0 %v3824
        %4057 = vmatmul.mubr.f32.gmra.mrb[0].mxu0 %v3823
        %v4058 = vpop.f32.mrb[0].mxu0
        %v4059 = vadd.f32 0.0, %v4058
        %v4060 = vpop.f32.mrb[0].mxu0
        %4061 = vmatprep.mubr.f32.mxu0 %v3827
        %4062 = vmatmul.mubr.f32.gmra.mrb[0].mxu0 %v3826
        %v4063 = vpop.f32.mrb[0].mxu0
        %v4064 = vadd.f32 0.0, %v4063
        %v4065 = vpop.f32.mrb[0].mxu0
        %4066 = vmatprep.mubr.f32.mxu0 %v3830
        %4067 = vmatmul.mubr.f32.gmra.mrb[0].mxu0 %v3829
        %v4068 = vpop.f32.mrb[0].mxu0
        %v4069 = vadd.f32 0.0, %v4068
        %v4070 = vpop.f32.mrb[0].mxu0
        %4071 = vmatprep.mubr.f32.mxu0 %v3833
        %4072 = vmatmul.mubr.f32.gmra.mrb[0].mxu0 %v3832
        %v4073 = vpop.f32.mrb[0].mxu0
        %v4074 = vadd.f32 0.0, %v4073
        %v4075 = vpop.f32.mrb[0].mxu0
        %4076 = vmatprep.mubr.f32.mxu0 %v3836
        %4077 = vmatmul.mubr.f32.gmra.mrb[0].mxu0 %v3835
        %v4078 = vpop.f32.mrb[0].mxu0
        %v4079 = vadd.f32 0.0, %v4078
        %v4080 = vpop.f32.mrb[0].mxu0
        %4081 = vmatprep.mubr.f32.mxu0 %v3839
        %4082 = vmatmul.mubr.f32.gmra.mrb[0].mxu0 %v3838
        %v4083 = vpop.f32.mrb[0].mxu0
        %v4084 = vadd.f32 0.0, %v4083
        %v4085 = vpop.f32.mrb[0].mxu0
        %4086 = vmatprep.mubr.f32.mxu0 %v3842
        %4087 = vmatmul.mubr.f32.gmra.mrb[0].mxu0 %v3841
        %v4088 = vpop.f32.mrb[0].mxu0
        %v4089 = vadd.f32 0.0, %v4088
        %v4090 = vpop.f32.mrb[0].mxu0
        %4091 = vmatprep.mubr.f32.mxu0 %v3845
        %4092 = vmatmul.mubr.f32.gmra.mrb[0].mxu0 %v3844
        %v4093 = vpop.f32.mrb[0].mxu0
        %v4094 = vadd.f32 0.0, %v4093
        %v4095 = vpop.f32.mrb[0].mxu0
        %4096 = vmatprep.mubr.f32.mxu0 %v3848
        %4097 = vmatmul.mubr.f32.gmra.mrb[0].mxu0 %v3847
        %v4098 = vpop.f32.mrb[0].mxu0
        %v4099 = vadd.f32 0.0, %v4098
        %v4100 = vpop.f32.mrb[0].mxu0
        %4101 = vmatprep.mubr.f32.mxu0 %v3851
        %4102 = vmatmul.mubr.f32.gmra.mrb[0].mxu0 %v3850
        %v4103 = vpop.f32.mrb[0].mxu0
        %v4104 = vadd.f32 0.0, %v4103
        %v4105 = vpop.f32.mrb[0].mxu0
        %4106 = vmatprep.mubr.f32.mxu0 %v3854
        %4107 = vmatmul.mubr.f32.gmra.mrb[0].mxu0 %v3853
        %v4108 = vpop.f32.mrb[0].mxu0
        %v4109 = vadd.f32 0.0, %v4108
        %v4110 = vpop.f32.mrb[0].mxu0
        %4111 = vmatprep.mubr.f32.mxu0 %v3857
        %4112 = vmatmul.mubr.f32.gmra.mrb[0].mxu0 %v3856
        %v4113 = vpop.f32.mrb[0].mxu0
        %v4114 = vadd.f32 0.0, %v4113
        %v4115 = vpop.f32.mrb[0].mxu0
        %4116 = vmatprep.mubr.f32.mxu0 %v3860
        %4117 = vmatmul.mubr.f32.gmra.mrb[0].mxu0 %v3859
        %v4118 = vpop.f32.mrb[0].mxu0
        %v4119 = vadd.f32 0.0, %v4118
        %v4120 = vpop.f32.mrb[0].mxu0
        %4121 = vmatprep.mubr.f32.mxu0 %v3863
        %4122 = vmatmul.mubr.f32.gmra.mrb[0].mxu0 %v3862
        %v4123 = vpop.f32.mrb[0].mxu0
        %v4124 = vadd.f32 0.0, %v4123
        %v4125 = vpop.f32.mrb[0].mxu0
        %4126 = vmatprep.mubr.f32.mxu0 %v3866
        %4127 = vmatmul.mubr.f32.gmra.mrb[0].mxu0 %v3865
        %v4128 = vpop.f32.mrb[0].mxu0
        %v4129 = vadd.f32 0.0, %v4128
        %v4130 = vpop.f32.mrb[0].mxu0
        %4131 = vmatprep.mubr.f32.mxu0 %v3869
        %4132 = vmatmul.mubr.f32.gmra.mrb[0].mxu0 %v3868
        %v4133 = vpop.f32.mrb[0].mxu0
        %v4134 = vadd.f32 0.0, %v4133
        %v4135 = vpop.f32.mrb[0].mxu0
        %4136 = vmatprep.mubr.f32.mxu0 %v3872
        %4137 = vmatmul.mubr.f32.gmra.mrb[0].mxu0 %v3871
        %v4138 = vpop.f32.mrb[0].mxu0
        %v4139 = vadd.f32 0.0, %v4138
        %v4140 = vpop.f32.mrb[0].mxu0
        %4141 = vmatprep.mubr.f32.mxu0 %v3875
        %4142 = vmatmul.mubr.f32.gmra.mrb[0].mxu0 %v3874
        %v4143 = vpop.f32.mrb[0].mxu0
        %v4144 = vadd.f32 0.0, %v4143
        %v4145 = vpop.f32.mrb[0].mxu0
        %4146 = vmatprep.mubr.f32.mxu0 %v3878
        %4147 = vmatmul.mubr.f32.gmra.mrb[0].mxu0 %v3877
        %v4148 = vpop.f32.mrb[0].mxu0
        %v4149 = vadd.f32 0.0, %v4148
        %v4150 = vpop.f32.mrb[0].mxu0
        %4151 = vmatprep.mubr.f32.mxu0 %v3881
        %4152 = vmatmul.mubr.f32.gmra.mrb[0].mxu0 %v3880
        %v4153 = vpop.f32.mrb[0].mxu0
        %v4154 = vadd.f32 0.0, %v4153
        %v4155 = vpop.f32.mrb[0].mxu0
        %4156 = vdwg.mxu0
        %4157 = vmatprep.subr.mxu0 0.0
        %4158 = vmatpush1.msra.mxu0 %v3916
        %4159 = vmatprep.subr.mxu0 0.0
        %4160 = vmatpush1.msra.mxu0 %v3917
        %4161 = vmatprep.subr.mxu0 0.0
        %4162 = vmatpush1.msra.mxu0 %v3918
        %4163 = vmatprep.subr.mxu0 0.0
        %4164 = vmatpush1.msra.mxu0 %v3919
        %4165 = vmatprep.subr.mxu0 0.0
        %4166 = vmatpush1.msra.mxu0 %v3920
        %4167 = vmatprep.subr.mxu0 0.0
        %4168 = vmatpush1.msra.mxu0 %v3921
        %4169 = vmatprep.subr.mxu0 0.0
        %4170 = vmatpush1.msra.mxu0 %v3922
        %4171 = vmatprep.subr.mxu0 0.0
        %4172 = vmatpush1.msra.mxu0 %v3923
        %4173 = vmatprep.subr.mxu0 0.0
        %4174 = vmatpush1.msra.mxu0 %v3924
        %4175 = vmatprep.subr.mxu0 0.0
        %4176 = vmatpush1.msra.mxu0 %v3925
        %4177 = vmatprep.subr.mxu0 0.0
        %4178 = vmatpush1.msra.mxu0 %v3926
        %4179 = vmatprep.subr.mxu0 0.0
        %4180 = vmatpush1.msra.mxu0 %v3927
        %4181 = vmatprep.subr.mxu0 0.0
        %4182 = vmatpush1.msra.mxu0 %v3928
        %4183 = vmatprep.subr.mxu0 0.0
        %4184 = vmatpush1.msra.mxu0 %v3929
        %4185 = vmatprep.subr.mxu0 0.0
        %4186 = vmatpush1.msra.mxu0 %v3930
        %4187 = vmatprep.subr.mxu0 0.0
        %4188 = vmatpush1.msra.mxu0 %v3931
        %4189 = vmatprep.subr.mxu0 0.0
        %4190 = vmatpush1.msra.mxu0 0.0
        %4191 = vmatprep.subr.mxu0 0.0
        %4192 = vmatpush1.msra.mxu0 0.0
        %4193 = vmatprep.subr.mxu0 0.0
        %4194 = vmatpush1.msra.mxu0 0.0
        %4195 = vmatprep.subr.mxu0 0.0
        %4196 = vmatpush1.msra.mxu0 0.0
        %4197 = vmatprep.subr.mxu0 0.0
        %4198 = vmatpush1.msra.mxu0 0.0
        %4199 = vmatprep.subr.mxu0 0.0
        %4200 = vmatpush1.msra.mxu0 0.0
        %4201 = vmatprep.subr.mxu0 0.0
        %4202 = vmatpush1.msra.mxu0 0.0
        %4203 = vmatprep.subr.mxu0 0.0
        %4204 = vmatpush1.msra.mxu0 0.0
        %4205 = vmatprep.subr.mxu0 0.0
        %4206 = vmatpush1.msra.mxu0 0.0
        %4207 = vmatprep.subr.mxu0 0.0
        %4208 = vmatpush1.msra.mxu0 0.0
        %4209 = vmatprep.subr.mxu0 0.0
        %4210 = vmatpush1.msra.mxu0 0.0
        %4211 = vmatprep.subr.mxu0 0.0
        %4212 = vmatpush1.msra.mxu0 0.0
        %4213 = vmatprep.subr.mxu0 0.0
        %4214 = vmatpush1.msra.mxu0 0.0
        %4215 = vmatprep.subr.mxu0 0.0
        %4216 = vmatpush1.msra.mxu0 0.0
        %4217 = vmatprep.subr.mxu0 0.0
        %4218 = vmatpush1.msra.mxu0 0.0
        %4219 = vmatprep.subr.mxu0 0.0
        %4220 = vmatpush1.msra.mxu0 0.0
        %4221 = vmatprep.mubr.f32.mxu0 0.0
        %4222 = vmatmul.mubr.f32.gmra.mrb[0].mxu0 %v3789
        %v4223 = vpop.f32.mrb[0].mxu0
        %v4224 = vadd.f32 %v3999, %v4223
        %v4225 = vpop.f32.mrb[0].mxu0
        %4226 = vmatprep.mubr.f32.mxu0 0.0
        %4227 = vmatmul.mubr.f32.gmra.mrb[0].mxu0 %v3792
        %v4228 = vpop.f32.mrb[0].mxu0
        %v4229 = vadd.f32 %v4004, %v4228
        %v4230 = vpop.f32.mrb[0].mxu0
        %4231 = vmatprep.mubr.f32.mxu0 0.0
        %4232 = vmatmul.mubr.f32.gmra.mrb[0].mxu0 %v3795
        %v4233 = vpop.f32.mrb[0].mxu0
        %v4234 = vadd.f32 %v4009, %v4233
        %v4235 = vpop.f32.mrb[0].mxu0
        %4236 = vmatprep.mubr.f32.mxu0 0.0
        %4237 = vmatmul.mubr.f32.gmra.mrb[0].mxu0 %v3798
        %v4238 = vpop.f32.mrb[0].mxu0
        %v4239 = vadd.f32 %v4014, %v4238
        %v4240 = vpop.f32.mrb[0].mxu0
        %4241 = vmatprep.mubr.f32.mxu0 0.0
        %4242 = vmatmul.mubr.f32.gmra.mrb[0].mxu0 %v3801
        %v4243 = vpop.f32.mrb[0].mxu0
        %v4244 = vadd.f32 %v4019, %v4243
        %v4245 = vpop.f32.mrb[0].mxu0
        %4246 = vmatprep.mubr.f32.mxu0 0.0
        %4247 = vmatmul.mubr.f32.gmra.mrb[0].mxu0 %v3804
        %v4248 = vpop.f32.mrb[0].mxu0
        %v4249 = vadd.f32 %v4024, %v4248
        %v4250 = vpop.f32.mrb[0].mxu0
        %4251 = vmatprep.mubr.f32.mxu0 0.0
        %4252 = vmatmul.mubr.f32.gmra.mrb[0].mxu0 %v3807
        %v4253 = vpop.f32.mrb[0].mxu0
        %v4254 = vadd.f32 %v4029, %v4253
        %v4255 = vpop.f32.mrb[0].mxu0
        %4256 = vmatprep.mubr.f32.mxu0 0.0
        %4257 = vmatmul.mubr.f32.gmra.mrb[0].mxu0 %v3810
        %v4258 = vpop.f32.mrb[0].mxu0
        %v4259 = vadd.f32 %v4034, %v4258
        %v4260 = vpop.f32.mrb[0].mxu0
        %4261 = vmatprep.mubr.f32.mxu0 0.0
        %4262 = vmatmul.mubr.f32.gmra.mrb[0].mxu0 %v3813
        %v4263 = vpop.f32.mrb[0].mxu0
        %v4264 = vadd.f32 %v4039, %v4263
        %v4265 = vpop.f32.mrb[0].mxu0
        %4266 = vmatprep.mubr.f32.mxu0 0.0
        %4267 = vmatmul.mubr.f32.gmra.mrb[0].mxu0 %v3816
        %v4268 = vpop.f32.mrb[0].mxu0
        %v4269 = vadd.f32 %v4044, %v4268
        %v4270 = vpop.f32.mrb[0].mxu0
        %4271 = vmatprep.mubr.f32.mxu0 0.0
        %4272 = vmatmul.mubr.f32.gmra.mrb[0].mxu0 %v3819
        %v4273 = vpop.f32.mrb[0].mxu0
        %v4274 = vadd.f32 %v4049, %v4273
        %v4275 = vpop.f32.mrb[0].mxu0
        %4276 = vmatprep.mubr.f32.mxu0 0.0
        %4277 = vmatmul.mubr.f32.gmra.mrb[0].mxu0 %v3822
        %v4278 = vpop.f32.mrb[0].mxu0
        %v4279 = vadd.f32 %v4054, %v4278
        %v4280 = vpop.f32.mrb[0].mxu0
        %4281 = vmatprep.mubr.f32.mxu0 0.0
        %4282 = vmatmul.mubr.f32.gmra.mrb[0].mxu0 %v3825
        %v4283 = vpop.f32.mrb[0].mxu0
        %v4284 = vadd.f32 %v4059, %v4283
        %v4285 = vpop.f32.mrb[0].mxu0
        %4286 = vmatprep.mubr.f32.mxu0 0.0
        %4287 = vmatmul.mubr.f32.gmra.mrb[0].mxu0 %v3828
        %v4288 = vpop.f32.mrb[0].mxu0
        %v4289 = vadd.f32 %v4064, %v4288
        %v4290 = vpop.f32.mrb[0].mxu0
        %4291 = vmatprep.mubr.f32.mxu0 0.0
        %4292 = vmatmul.mubr.f32.gmra.mrb[0].mxu0 %v3831
        %v4293 = vpop.f32.mrb[0].mxu0
        %v4294 = vadd.f32 %v4069, %v4293
        %v4295 = vpop.f32.mrb[0].mxu0
        %4296 = vmatprep.mubr.f32.mxu0 0.0
        %4297 = vmatmul.mubr.f32.gmra.mrb[0].mxu0 %v3834
        %v4298 = vpop.f32.mrb[0].mxu0
        %v4299 = vadd.f32 %v4074, %v4298
        %v4300 = vpop.f32.mrb[0].mxu0
        %4301 = vmatprep.mubr.f32.mxu0 0.0
        %4302 = vmatmul.mubr.f32.gmra.mrb[0].mxu0 %v3837
        %v4303 = vpop.f32.mrb[0].mxu0
        %v4304 = vadd.f32 %v4079, %v4303
        %v4305 = vpop.f32.mrb[0].mxu0
        %4306 = vmatprep.mubr.f32.mxu0 0.0
        %4307 = vmatmul.mubr.f32.gmra.mrb[0].mxu0 %v3840
        %v4308 = vpop.f32.mrb[0].mxu0
        %v4309 = vadd.f32 %v4084, %v4308
        %v4310 = vpop.f32.mrb[0].mxu0
        %4311 = vmatprep.mubr.f32.mxu0 0.0
        %4312 = vmatmul.mubr.f32.gmra.mrb[0].mxu0 %v3843
        %v4313 = vpop.f32.mrb[0].mxu0
        %v4314 = vadd.f32 %v4089, %v4313
        %v4315 = vpop.f32.mrb[0].mxu0
        %4316 = vmatprep.mubr.f32.mxu0 0.0
        %4317 = vmatmul.mubr.f32.gmra.mrb[0].mxu0 %v3846
        %v4318 = vpop.f32.mrb[0].mxu0
        %v4319 = vadd.f32 %v4094, %v4318
        %v4320 = vpop.f32.mrb[0].mxu0
        %4321 = vmatprep.mubr.f32.mxu0 0.0
        %4322 = vmatmul.mubr.f32.gmra.mrb[0].mxu0 %v3849
        %v4323 = vpop.f32.mrb[0].mxu0
        %v4324 = vadd.f32 %v4099, %v4323
        %v4325 = vpop.f32.mrb[0].mxu0
        %4326 = vmatprep.mubr.f32.mxu0 0.0
        %4327 = vmatmul.mubr.f32.gmra.mrb[0].mxu0 %v3852
        %v4328 = vpop.f32.mrb[0].mxu0
        %v4329 = vadd.f32 %v4104, %v4328
        %v4330 = vpop.f32.mrb[0].mxu0
        %4331 = vmatprep.mubr.f32.mxu0 0.0
        %4332 = vmatmul.mubr.f32.gmra.mrb[0].mxu0 %v3855
        %v4333 = vpop.f32.mrb[0].mxu0
        %v4334 = vadd.f32 %v4109, %v4333
        %v4335 = vpop.f32.mrb[0].mxu0
        %4336 = vmatprep.mubr.f32.mxu0 0.0
        %4337 = vmatmul.mubr.f32.gmra.mrb[0].mxu0 %v3858
        %v4338 = vpop.f32.mrb[0].mxu0
        %v4339 = vadd.f32 %v4114, %v4338
        %v4340 = vpop.f32.mrb[0].mxu0
        %4341 = vmatprep.mubr.f32.mxu0 0.0
        %4342 = vmatmul.mubr.f32.gmra.mrb[0].mxu0 %v3861
        %v4343 = vpop.f32.mrb[0].mxu0
        %v4344 = vadd.f32 %v4119, %v4343
        %v4345 = vpop.f32.mrb[0].mxu0
        %4346 = vmatprep.mubr.f32.mxu0 0.0
        %4347 = vmatmul.mubr.f32.gmra.mrb[0].mxu0 %v3864
        %v4348 = vpop.f32.mrb[0].mxu0
        %v4349 = vadd.f32 %v4124, %v4348
        %v4350 = vpop.f32.mrb[0].mxu0
        %4351 = vmatprep.mubr.f32.mxu0 0.0
        %4352 = vmatmul.mubr.f32.gmra.mrb[0].mxu0 %v3867
        %v4353 = vpop.f32.mrb[0].mxu0
        %v4354 = vadd.f32 %v4129, %v4353
        %v4355 = vpop.f32.mrb[0].mxu0
        %4356 = vmatprep.mubr.f32.mxu0 0.0
        %4357 = vmatmul.mubr.f32.gmra.mrb[0].mxu0 %v3870
        %v4358 = vpop.f32.mrb[0].mxu0
        %v4359 = vadd.f32 %v4134, %v4358
        %v4360 = vpop.f32.mrb[0].mxu0
        %4361 = vmatprep.mubr.f32.mxu0 0.0
        %4362 = vmatmul.mubr.f32.gmra.mrb[0].mxu0 %v3873
        %v4363 = vpop.f32.mrb[0].mxu0
        %v4364 = vadd.f32 %v4139, %v4363
        %v4365 = vpop.f32.mrb[0].mxu0
        %4366 = vmatprep.mubr.f32.mxu0 0.0
        %4367 = vmatmul.mubr.f32.gmra.mrb[0].mxu0 %v3876
        %v4368 = vpop.f32.mrb[0].mxu0
        %v4369 = vadd.f32 %v4144, %v4368
        %v4370 = vpop.f32.mrb[0].mxu0
        %4371 = vmatprep.mubr.f32.mxu0 0.0
        %4372 = vmatmul.mubr.f32.gmra.mrb[0].mxu0 %v3879
        %v4373 = vpop.f32.mrb[0].mxu0
        %v4374 = vadd.f32 %v4149, %v4373
        %v4375 = vpop.f32.mrb[0].mxu0
        %4376 = vmatprep.mubr.f32.mxu0 0.0
        %4377 = vmatmul.mubr.f32.gmra.mrb[0].mxu0 %v3882
        %v4378 = vpop.f32.mrb[0].mxu0
        %v4379 = vadd.f32 %v4154, %v4378
        %v4380 = vpop.f32.mrb[0].mxu0
        %4381 = vdwg.mxu0
        %v4382 = vld [vmem:[#allocation5] sm:$0xff]
        %v4383 = vld [vmem:[#allocation5 + $0x8] sm:$0xff]
        %v4384 = vld [vmem:[#allocation5 + $0x10] sm:$0xff]
        %v4385 = vld [vmem:[#allocation5 + $0x18] sm:$0xff]
        %v4386 = vld [vmem:[#allocation5 + $0x20] sm:$0xff]
        %v4387 = vld [vmem:[#allocation5 + $0x28] sm:$0xff]
        %v4388 = vld [vmem:[#allocation5 + $0x30] sm:$0xff]
        %v4389 = vld [vmem:[#allocation5 + $0x38] sm:$0xff]
        %v4390 = vld [vmem:[#allocation5 + $0x40] sm:$0xff]
        %v4391 = vld [vmem:[#allocation5 + $0x48] sm:$0xff]
        %v4392 = vld [vmem:[#allocation5 + $0x50] sm:$0xff]
        %v4393 = vld [vmem:[#allocation5 + $0x58] sm:$0xff]
        %v4394 = vld [vmem:[#allocation5 + $0x60] sm:$0xff]
        %v4395 = vld [vmem:[#allocation5 + $0x68] sm:$0xff]
        %v4396 = vld [vmem:[#allocation5 + $0x70] sm:$0xff]
        %v4397 = vld [vmem:[#allocation5 + $0x78] sm:$0xff]
        %v4398 = vld [vmem:[#allocation5 + $0x80] sm:$0xff]
        %v4399 = vld [vmem:[#allocation5 + $0x88] sm:$0xff]
        %v4400 = vld [vmem:[#allocation5 + $0x90] sm:$0xff]
        %v4401 = vld [vmem:[#allocation5 + $0x98] sm:$0xff]
        %v4402 = vld [vmem:[#allocation5 + $0xa0] sm:$0xff]
        %v4403 = vld [vmem:[#allocation5 + $0xa8] sm:$0xff]
        %v4404 = vld [vmem:[#allocation5 + $0xb0] sm:$0xff]
        %v4405 = vld [vmem:[#allocation5 + $0xb8] sm:$0xff]
        %v4406 = vld [vmem:[#allocation5 + $0xc0] sm:$0xff]
        %v4407 = vld [vmem:[#allocation5 + $0xc8] sm:$0xff]
        %v4408 = vld [vmem:[#allocation5 + $0xd0] sm:$0xff]
        %v4409 = vld [vmem:[#allocation5 + $0xd8] sm:$0xff]
        %v4410 = vld [vmem:[#allocation5 + $0xe0] sm:$0xff]
        %v4411 = vld [vmem:[#allocation5 + $0xe8] sm:$0xff]
        %v4412 = vld [vmem:[#allocation5 + $0xf0] sm:$0xff]
        %v4413 = vld [vmem:[#allocation5 + $0xf8] sm:$0xff]
        %v4414 = vadd.f32 %v4382, %v4224
        %v4415 = vadd.f32 %v4383, %v4229
        %v4416 = vadd.f32 %v4384, %v4234
        %v4417 = vadd.f32 %v4385, %v4239
        %v4418 = vadd.f32 %v4386, %v4244
        %v4419 = vadd.f32 %v4387, %v4249
        %v4420 = vadd.f32 %v4388, %v4254
        %v4421 = vadd.f32 %v4389, %v4259
        %v4422 = vadd.f32 %v4390, %v4264
        %v4423 = vadd.f32 %v4391, %v4269
        %v4424 = vadd.f32 %v4392, %v4274
        %v4425 = vadd.f32 %v4393, %v4279
        %v4426 = vadd.f32 %v4394, %v4284
        %v4427 = vadd.f32 %v4395, %v4289
        %v4428 = vadd.f32 %v4396, %v4294
        %v4429 = vadd.f32 %v4397, %v4299
        %v4430 = vadd.f32 %v4398, %v4304
        %v4431 = vadd.f32 %v4399, %v4309
        %v4432 = vadd.f32 %v4400, %v4314
        %v4433 = vadd.f32 %v4401, %v4319
        %v4434 = vadd.f32 %v4402, %v4324
        %v4435 = vadd.f32 %v4403, %v4329
        %v4436 = vadd.f32 %v4404, %v4334
        %v4437 = vadd.f32 %v4405, %v4339
        %v4438 = vadd.f32 %v4406, %v4344
        %v4439 = vadd.f32 %v4407, %v4349
        %v4440 = vadd.f32 %v4408, %v4354
        %v4441 = vadd.f32 %v4409, %v4359
        %v4442 = vadd.f32 %v4410, %v4364
        %v4443 = vadd.f32 %v4411, %v4369
        %v4444 = vadd.f32 %v4412, %v4374
        %v4445 = vadd.f32 %v4413, %v4379
        %4446 = vst [vmem:[#allocation5] sm:$0xff] %v4414
        %4447 = vst [vmem:[#allocation5 + $0x8] sm:$0xff] %v4415
        %4448 = vst [vmem:[#allocation5 + $0x10] sm:$0xff] %v4416
        %4449 = vst [vmem:[#allocation5 + $0x18] sm:$0xff] %v4417
        %4450 = vst [vmem:[#allocation5 + $0x20] sm:$0xff] %v4418
        %4451 = vst [vmem:[#allocation5 + $0x28] sm:$0xff] %v4419
        %4452 = vst [vmem:[#allocation5 + $0x30] sm:$0xff] %v4420
        %4453 = vst [vmem:[#allocation5 + $0x38] sm:$0xff] %v4421
        %4454 = vst [vmem:[#allocation5 + $0x40] sm:$0xff] %v4422
        %4455 = vst [vmem:[#allocation5 + $0x48] sm:$0xff] %v4423
        %4456 = vst [vmem:[#allocation5 + $0x50] sm:$0xff] %v4424
        %4457 = vst [vmem:[#allocation5 + $0x58] sm:$0xff] %v4425
        %4458 = vst [vmem:[#allocation5 + $0x60] sm:$0xff] %v4426
        %4459 = vst [vmem:[#allocation5 + $0x68] sm:$0xff] %v4427
        %4460 = vst [vmem:[#allocation5 + $0x70] sm:$0xff] %v4428
        %4461 = vst [vmem:[#allocation5 + $0x78] sm:$0xff] %v4429
        %4462 = vst [vmem:[#allocation5 + $0x80] sm:$0xff] %v4430
        %4463 = vst [vmem:[#allocation5 + $0x88] sm:$0xff] %v4431
        %4464 = vst [vmem:[#allocation5 + $0x90] sm:$0xff] %v4432
        %4465 = vst [vmem:[#allocation5 + $0x98] sm:$0xff] %v4433
        %4466 = vst [vmem:[#allocation5 + $0xa0] sm:$0xff] %v4434
        %4467 = vst [vmem:[#allocation5 + $0xa8] sm:$0xff] %v4435
        %4468 = vst [vmem:[#allocation5 + $0xb0] sm:$0xff] %v4436
        %4469 = vst [vmem:[#allocation5 + $0xb8] sm:$0xff] %v4437
        %4470 = vst [vmem:[#allocation5 + $0xc0] sm:$0xff] %v4438
        %4471 = vst [vmem:[#allocation5 + $0xc8] sm:$0xff] %v4439
        %4472 = vst [vmem:[#allocation5 + $0xd0] sm:$0xff] %v4440
        %4473 = vst [vmem:[#allocation5 + $0xd8] sm:$0xff] %v4441
        %4474 = vst [vmem:[#allocation5 + $0xe0] sm:$0xff] %v4442
        %4475 = vst [vmem:[#allocation5 + $0xe8] sm:$0xff] %v4443
        %4476 = vst [vmem:[#allocation5 + $0xf0] sm:$0xff] %v4444
        %4477 = vst [vmem:[#allocation5 + $0xf8] sm:$0xff] %v4445
        %v4478 = vld [vmem:[%s2079] sm:$0xff]
        %v4479 = vld [vmem:[%s2079 + $0x8] sm:$0xff]
        %v4480 = vld [vmem:[%s2079 + $0x10] sm:$0xff]
        %v4481 = vld [vmem:[%s2079 + $0x18] sm:$0xff]
        %v4482 = vld [vmem:[%s2079 + $0x20] sm:$0xff]
        %v4483 = vld [vmem:[%s2079 + $0x28] sm:$0xff]
        %v4484 = vld [vmem:[%s2079 + $0x30] sm:$0xff]
        %v4485 = vld [vmem:[%s2079 + $0x38] sm:$0xff]
        %v4486 = vld [vmem:[%s2079 + $0x40] sm:$0xff]
        %v4487 = vld [vmem:[%s2079 + $0x48] sm:$0xff]
        %v4488 = vld [vmem:[%s2079 + $0x50] sm:$0xff]
        %v4489 = vld [vmem:[%s2079 + $0x58] sm:$0xff]
        %v4490 = vld [vmem:[%s2079 + $0x60] sm:$0xff]
        %v4491 = vld [vmem:[%s2079 + $0x68] sm:$0xff]
        %v4492 = vld [vmem:[%s2079 + $0x70] sm:$0xff]
        %v4493 = vld [vmem:[%s2079 + $0x78] sm:$0xff]
        %v4494 = vld [vmem:[%s2079 + $0x80] sm:$0xff]
        %v4495 = vld [vmem:[%s2079 + $0x88] sm:$0xff]
        %v4496 = vld [vmem:[%s2079 + $0x90] sm:$0xff]
        %v4497 = vld [vmem:[%s2079 + $0x98] sm:$0xff]
        %v4498 = vld [vmem:[%s2079 + $0xa0] sm:$0xff]
        %v4499 = vld [vmem:[%s2079 + $0xa8] sm:$0xff]
        %v4500 = vld [vmem:[%s2079 + $0xb0] sm:$0xff]
        %v4501 = vld [vmem:[%s2079 + $0xb8] sm:$0xff]
        %v4502 = vld [vmem:[%s2079 + $0xc0] sm:$0xff]
        %v4503 = vld [vmem:[%s2079 + $0xc8] sm:$0xff]
        %v4504 = vld [vmem:[%s2079 + $0xd0] sm:$0xff]
        %v4505 = vld [vmem:[%s2079 + $0xd8] sm:$0xff]
        %v4506 = vld [vmem:[%s2079 + $0xe0] sm:$0xff]
        %v4507 = vld [vmem:[%s2079 + $0xe8] sm:$0xff]
        %v4508 = vld [vmem:[%s2079 + $0xf0] sm:$0xff]
        %v4509 = vld [vmem:[%s2079 + $0xf8] sm:$0xff]
        %v4510 = vld [vmem:[%s2079 + $0x100] sm:$0xff]
        %v4511 = vld [vmem:[%s2079 + $0x108] sm:$0xff]
        %v4512 = vld [vmem:[%s2079 + $0x110] sm:$0xff]
        %v4513 = vld [vmem:[%s2079 + $0x118] sm:$0xff]
        %v4514 = vld [vmem:[%s2079 + $0x120] sm:$0xff]
        %v4515 = vld [vmem:[%s2079 + $0x128] sm:$0xff]
        %v4516 = vld [vmem:[%s2079 + $0x130] sm:$0xff]
        %v4517 = vld [vmem:[%s2079 + $0x138] sm:$0xff]
        %v4518 = vld [vmem:[%s2079 + $0x140] sm:$0xff]
        %v4519 = vld [vmem:[%s2079 + $0x148] sm:$0xff]
        %v4520 = vld [vmem:[%s2079 + $0x150] sm:$0xff]
        %v4521 = vld [vmem:[%s2079 + $0x158] sm:$0xff]
        %v4522 = vld [vmem:[%s2079 + $0x160] sm:$0xff]
        %v4523 = vld [vmem:[%s2079 + $0x168] sm:$0xff]
        %v4524 = vld [vmem:[%s2079 + $0x170] sm:$0xff]
        %v4525 = vld [vmem:[%s2079 + $0x178] sm:$0xff]
        %v4526 = vld [vmem:[%s2079 + $0x180] sm:$0xff]
        %v4527 = vld [vmem:[%s2079 + $0x188] sm:$0xff]
        %v4528 = vld [vmem:[%s2079 + $0x190] sm:$0xff]
        %v4529 = vld [vmem:[%s2079 + $0x198] sm:$0xff]
        %v4530 = vld [vmem:[%s2079 + $0x1a0] sm:$0xff]
        %v4531 = vld [vmem:[%s2079 + $0x1a8] sm:$0xff]
        %v4532 = vld [vmem:[%s2079 + $0x1b0] sm:$0xff]
        %v4533 = vld [vmem:[%s2079 + $0x1b8] sm:$0xff]
        %v4534 = vld [vmem:[%s2079 + $0x1c0] sm:$0xff]
        %v4535 = vld [vmem:[%s2079 + $0x1c8] sm:$0xff]
        %v4536 = vld [vmem:[%s2079 + $0x1d0] sm:$0xff]
        %v4537 = vld [vmem:[%s2079 + $0x1d8] sm:$0xff]
        %v4538 = vld [vmem:[%s2079 + $0x1e0] sm:$0xff]
        %v4539 = vld [vmem:[%s2079 + $0x1e8] sm:$0xff]
        %v4540 = vld [vmem:[%s2079 + $0x1f0] sm:$0xff]
        %v4541 = vld [vmem:[%s2079 + $0x1f8] sm:$0xff]
        %v4542 = vld [vmem:[%s2079 + $0x200] sm:$0xff]
        %v4543 = vld [vmem:[%s2079 + $0x208] sm:$0xff]
        %v4544 = vld [vmem:[%s2079 + $0x210] sm:$0xff]
        %v4545 = vld [vmem:[%s2079 + $0x218] sm:$0xff]
        %v4546 = vld [vmem:[%s2079 + $0x220] sm:$0xff]
        %v4547 = vld [vmem:[%s2079 + $0x228] sm:$0xff]
        %v4548 = vld [vmem:[%s2079 + $0x230] sm:$0xff]
        %v4549 = vld [vmem:[%s2079 + $0x238] sm:$0xff]
        %v4550 = vld [vmem:[%s2079 + $0x240] sm:$0xff]
        %v4551 = vld [vmem:[%s2079 + $0x248] sm:$0xff]
        %v4552 = vld [vmem:[%s2079 + $0x250] sm:$0xff]
        %v4553 = vld [vmem:[%s2079 + $0x258] sm:$0xff]
        %v4554 = vld [vmem:[%s2079 + $0x260] sm:$0xff]
        %v4555 = vld [vmem:[%s2079 + $0x268] sm:$0xff]
        %v4556 = vld [vmem:[%s2079 + $0x270] sm:$0xff]
        %v4557 = vld [vmem:[%s2079 + $0x278] sm:$0xff]
        %v4558 = vld [vmem:[%s2079 + $0x280] sm:$0xff]
        %v4559 = vld [vmem:[%s2079 + $0x288] sm:$0xff]
        %v4560 = vld [vmem:[%s2079 + $0x290] sm:$0xff]
        %v4561 = vld [vmem:[%s2079 + $0x298] sm:$0xff]
        %v4562 = vld [vmem:[%s2079 + $0x2a0] sm:$0xff]
        %v4563 = vld [vmem:[%s2079 + $0x2a8] sm:$0xff]
        %v4564 = vld [vmem:[%s2079 + $0x2b0] sm:$0xff]
        %v4565 = vld [vmem:[%s2079 + $0x2b8] sm:$0xff]
        %v4566 = vld [vmem:[%s2079 + $0x2c0] sm:$0xff]
        %v4567 = vld [vmem:[%s2079 + $0x2c8] sm:$0xff]
        %v4568 = vld [vmem:[%s2079 + $0x2d0] sm:$0xff]
        %v4569 = vld [vmem:[%s2079 + $0x2d8] sm:$0xff]
        %v4570 = vld [vmem:[%s2079 + $0x2e0] sm:$0xff]
        %v4571 = vld [vmem:[%s2079 + $0x2e8] sm:$0xff]
        %v4572 = vld [vmem:[%s2079 + $0x2f0] sm:$0xff]
        %v4573 = vld [vmem:[%s2079 + $0x2f8] sm:$0xff]
        %s4574 = scalar_lea.vmem [#allocation11], 768
        %v4575 = vld [vmem:[%s4574] sm:$0xff]
        %v4576 = vld [vmem:[%s4574 + $0x8] sm:$0xff]
        %v4577 = vld [vmem:[%s4574 + $0x10] sm:$0xff]
        %v4578 = vld [vmem:[%s4574 + $0x18] sm:$0xff]
        %v4579 = vld [vmem:[%s4574 + $0x20] sm:$0xff]
        %v4580 = vld [vmem:[%s4574 + $0x28] sm:$0xff]
        %v4581 = vld [vmem:[%s4574 + $0x30] sm:$0xff]
        %v4582 = vld [vmem:[%s4574 + $0x38] sm:$0xff]
        %v4583 = vld [vmem:[%s4574 + $0x40] sm:$0xff]
        %v4584 = vld [vmem:[%s4574 + $0x48] sm:$0xff]
        %v4585 = vld [vmem:[%s4574 + $0x50] sm:$0xff]
        %v4586 = vld [vmem:[%s4574 + $0x58] sm:$0xff]
        %v4587 = vld [vmem:[%s4574 + $0x60] sm:$0xff]
        %v4588 = vld [vmem:[%s4574 + $0x68] sm:$0xff]
        %v4589 = vld [vmem:[%s4574 + $0x70] sm:$0xff]
        %v4590 = vld [vmem:[%s4574 + $0x78] sm:$0xff]
        %v4591 = vld [vmem:[%s4574 + $0x80] sm:$0xff]
        %v4592 = vld [vmem:[%s4574 + $0x88] sm:$0xff]
        %v4593 = vld [vmem:[%s4574 + $0x90] sm:$0xff]
        %v4594 = vld [vmem:[%s4574 + $0x98] sm:$0xff]
        %v4595 = vld [vmem:[%s4574 + $0xa0] sm:$0xff]
        %v4596 = vld [vmem:[%s4574 + $0xa8] sm:$0xff]
        %v4597 = vld [vmem:[%s4574 + $0xb0] sm:$0xff]
        %v4598 = vld [vmem:[%s4574 + $0xb8] sm:$0xff]
        %v4599 = vld [vmem:[%s4574 + $0xc0] sm:$0xff]
        %v4600 = vld [vmem:[%s4574 + $0xc8] sm:$0xff]
        %v4601 = vld [vmem:[%s4574 + $0xd0] sm:$0xff]
        %v4602 = vld [vmem:[%s4574 + $0xd8] sm:$0xff]
        %v4603 = vld [vmem:[%s4574 + $0xe0] sm:$0xff]
        %v4604 = vld [vmem:[%s4574 + $0xe8] sm:$0xff]
        %v4605 = vld [vmem:[%s4574 + $0xf0] sm:$0xff]
        %v4606 = vld [vmem:[%s4574 + $0xf8] sm:$0xff]
        %v4607 = vld [vmem:[%s4574 + $0x100] sm:$0xff]
        %v4608 = vld [vmem:[%s4574 + $0x108] sm:$0xff]
        %v4609 = vld [vmem:[%s4574 + $0x110] sm:$0xff]
        %v4610 = vld [vmem:[%s4574 + $0x118] sm:$0xff]
        %v4611 = vld [vmem:[%s4574 + $0x120] sm:$0xff]
        %v4612 = vld [vmem:[%s4574 + $0x128] sm:$0xff]
        %v4613 = vld [vmem:[%s4574 + $0x130] sm:$0xff]
        %v4614 = vld [vmem:[%s4574 + $0x138] sm:$0xff]
        %v4615 = vld [vmem:[%s4574 + $0x140] sm:$0xff]
        %v4616 = vld [vmem:[%s4574 + $0x148] sm:$0xff]
        %v4617 = vld [vmem:[%s4574 + $0x150] sm:$0xff]
        %v4618 = vld [vmem:[%s4574 + $0x158] sm:$0xff]
        %v4619 = vld [vmem:[%s4574 + $0x160] sm:$0xff]
        %v4620 = vld [vmem:[%s4574 + $0x168] sm:$0xff]
        %v4621 = vld [vmem:[%s4574 + $0x170] sm:$0xff]
        %v4622 = vld [vmem:[%s4574 + $0x178] sm:$0xff]
        %4623 = vmatprep.subr.mxu0 0.0
        %4624 = vmatpush1.msra.mxu0 %v4575
        %4625 = vmatprep.subr.mxu0 0.0
        %4626 = vmatpush1.msra.mxu0 %v4576
        %4627 = vmatprep.subr.mxu0 0.0
        %4628 = vmatpush1.msra.mxu0 %v4577
        %4629 = vmatprep.subr.mxu0 0.0
        %4630 = vmatpush1.msra.mxu0 %v4578
        %4631 = vmatprep.subr.mxu0 0.0
        %4632 = vmatpush1.msra.mxu0 %v4579
        %4633 = vmatprep.subr.mxu0 0.0
        %4634 = vmatpush1.msra.mxu0 %v4580
        %4635 = vmatprep.subr.mxu0 0.0
        %4636 = vmatpush1.msra.mxu0 %v4581
        %4637 = vmatprep.subr.mxu0 0.0
        %4638 = vmatpush1.msra.mxu0 %v4582
        %4639 = vmatprep.subr.mxu0 0.0
        %4640 = vmatpush1.msra.mxu0 %v4583
        %4641 = vmatprep.subr.mxu0 0.0
        %4642 = vmatpush1.msra.mxu0 %v4584
        %4643 = vmatprep.subr.mxu0 0.0
        %4644 = vmatpush1.msra.mxu0 %v4585
        %4645 = vmatprep.subr.mxu0 0.0
        %4646 = vmatpush1.msra.mxu0 %v4586
        %4647 = vmatprep.subr.mxu0 0.0
        %4648 = vmatpush1.msra.mxu0 %v4587
        %4649 = vmatprep.subr.mxu0 0.0
        %4650 = vmatpush1.msra.mxu0 %v4588
        %4651 = vmatprep.subr.mxu0 0.0
        %4652 = vmatpush1.msra.mxu0 %v4589
        %4653 = vmatprep.subr.mxu0 0.0
        %4654 = vmatpush1.msra.mxu0 %v4590
        %4655 = vmatprep.subr.mxu0 0.0
        %4656 = vmatpush1.msra.mxu0 %v4591
        %4657 = vmatprep.subr.mxu0 0.0
        %4658 = vmatpush1.msra.mxu0 %v4592
        %4659 = vmatprep.subr.mxu0 0.0
        %4660 = vmatpush1.msra.mxu0 %v4593
        %4661 = vmatprep.subr.mxu0 0.0
        %4662 = vmatpush1.msra.mxu0 %v4594
        %4663 = vmatprep.subr.mxu0 0.0
        %4664 = vmatpush1.msra.mxu0 %v4595
        %4665 = vmatprep.subr.mxu0 0.0
        %4666 = vmatpush1.msra.mxu0 %v4596
        %4667 = vmatprep.subr.mxu0 0.0
        %4668 = vmatpush1.msra.mxu0 %v4597
        %4669 = vmatprep.subr.mxu0 0.0
        %4670 = vmatpush1.msra.mxu0 %v4598
        %4671 = vmatprep.subr.mxu0 0.0
        %4672 = vmatpush1.msra.mxu0 %v4599
        %4673 = vmatprep.subr.mxu0 0.0
        %4674 = vmatpush1.msra.mxu0 %v4600
        %4675 = vmatprep.subr.mxu0 0.0
        %4676 = vmatpush1.msra.mxu0 %v4601
        %4677 = vmatprep.subr.mxu0 0.0
        %4678 = vmatpush1.msra.mxu0 %v4602
        %4679 = vmatprep.subr.mxu0 0.0
        %4680 = vmatpush1.msra.mxu0 %v4603
        %4681 = vmatprep.subr.mxu0 0.0
        %4682 = vmatpush1.msra.mxu0 %v4604
        %4683 = vmatprep.subr.mxu0 0.0
        %4684 = vmatpush1.msra.mxu0 %v4605
        %4685 = vmatprep.subr.mxu0 0.0
        %4686 = vmatpush1.msra.mxu0 %v4606
        %4687 = vmatprep.mubr.f32.mxu0 %v4479
        %4688 = vmatmul.mubr.f32.gmra.mrb[0].mxu0 %v4478
        %v4689 = vpop.f32.mrb[0].mxu0
        %v4690 = vadd.f32 0.0, %v4689
        %v4691 = vpop.f32.mrb[0].mxu0
        %4692 = vmatprep.mubr.f32.mxu0 %v4482
        %4693 = vmatmul.mubr.f32.gmra.mrb[0].mxu0 %v4481
        %v4694 = vpop.f32.mrb[0].mxu0
        %v4695 = vadd.f32 0.0, %v4694
        %v4696 = vpop.f32.mrb[0].mxu0
        %4697 = vmatprep.mubr.f32.mxu0 %v4485
        %4698 = vmatmul.mubr.f32.gmra.mrb[0].mxu0 %v4484
        %v4699 = vpop.f32.mrb[0].mxu0
        %v4700 = vadd.f32 0.0, %v4699
        %v4701 = vpop.f32.mrb[0].mxu0
        %4702 = vmatprep.mubr.f32.mxu0 %v4488
        %4703 = vmatmul.mubr.f32.gmra.mrb[0].mxu0 %v4487
        %v4704 = vpop.f32.mrb[0].mxu0
        %v4705 = vadd.f32 0.0, %v4704
        %v4706 = vpop.f32.mrb[0].mxu0
        %4707 = vmatprep.mubr.f32.mxu0 %v4491
        %4708 = vmatmul.mubr.f32.gmra.mrb[0].mxu0 %v4490
        %v4709 = vpop.f32.mrb[0].mxu0
        %v4710 = vadd.f32 0.0, %v4709
        %v4711 = vpop.f32.mrb[0].mxu0
        %4712 = vmatprep.mubr.f32.mxu0 %v4494
        %4713 = vmatmul.mubr.f32.gmra.mrb[0].mxu0 %v4493
        %v4714 = vpop.f32.mrb[0].mxu0
        %v4715 = vadd.f32 0.0, %v4714
        %v4716 = vpop.f32.mrb[0].mxu0
        %4717 = vmatprep.mubr.f32.mxu0 %v4497
        %4718 = vmatmul.mubr.f32.gmra.mrb[0].mxu0 %v4496
        %v4719 = vpop.f32.mrb[0].mxu0
        %v4720 = vadd.f32 0.0, %v4719
        %v4721 = vpop.f32.mrb[0].mxu0
        %4722 = vmatprep.mubr.f32.mxu0 %v4500
        %4723 = vmatmul.mubr.f32.gmra.mrb[0].mxu0 %v4499
        %v4724 = vpop.f32.mrb[0].mxu0
        %v4725 = vadd.f32 0.0, %v4724
        %v4726 = vpop.f32.mrb[0].mxu0
        %4727 = vmatprep.mubr.f32.mxu0 %v4503
        %4728 = vmatmul.mubr.f32.gmra.mrb[0].mxu0 %v4502
        %v4729 = vpop.f32.mrb[0].mxu0
        %v4730 = vadd.f32 0.0, %v4729
        %v4731 = vpop.f32.mrb[0].mxu0
        %4732 = vmatprep.mubr.f32.mxu0 %v4506
        %4733 = vmatmul.mubr.f32.gmra.mrb[0].mxu0 %v4505
        %v4734 = vpop.f32.mrb[0].mxu0
        %v4735 = vadd.f32 0.0, %v4734
        %v4736 = vpop.f32.mrb[0].mxu0
        %4737 = vmatprep.mubr.f32.mxu0 %v4509
        %4738 = vmatmul.mubr.f32.gmra.mrb[0].mxu0 %v4508
        %v4739 = vpop.f32.mrb[0].mxu0
        %v4740 = vadd.f32 0.0, %v4739
        %v4741 = vpop.f32.mrb[0].mxu0
        %4742 = vmatprep.mubr.f32.mxu0 %v4512
        %4743 = vmatmul.mubr.f32.gmra.mrb[0].mxu0 %v4511
        %v4744 = vpop.f32.mrb[0].mxu0
        %v4745 = vadd.f32 0.0, %v4744
        %v4746 = vpop.f32.mrb[0].mxu0
        %4747 = vmatprep.mubr.f32.mxu0 %v4515
        %4748 = vmatmul.mubr.f32.gmra.mrb[0].mxu0 %v4514
        %v4749 = vpop.f32.mrb[0].mxu0
        %v4750 = vadd.f32 0.0, %v4749
        %v4751 = vpop.f32.mrb[0].mxu0
        %4752 = vmatprep.mubr.f32.mxu0 %v4518
        %4753 = vmatmul.mubr.f32.gmra.mrb[0].mxu0 %v4517
        %v4754 = vpop.f32.mrb[0].mxu0
        %v4755 = vadd.f32 0.0, %v4754
        %v4756 = vpop.f32.mrb[0].mxu0
        %4757 = vmatprep.mubr.f32.mxu0 %v4521
        %4758 = vmatmul.mubr.f32.gmra.mrb[0].mxu0 %v4520
        %v4759 = vpop.f32.mrb[0].mxu0
        %v4760 = vadd.f32 0.0, %v4759
        %v4761 = vpop.f32.mrb[0].mxu0
        %4762 = vmatprep.mubr.f32.mxu0 %v4524
        %4763 = vmatmul.mubr.f32.gmra.mrb[0].mxu0 %v4523
        %v4764 = vpop.f32.mrb[0].mxu0
        %v4765 = vadd.f32 0.0, %v4764
        %v4766 = vpop.f32.mrb[0].mxu0
        %4767 = vmatprep.mubr.f32.mxu0 %v4527
        %4768 = vmatmul.mubr.f32.gmra.mrb[0].mxu0 %v4526
        %v4769 = vpop.f32.mrb[0].mxu0
        %v4770 = vadd.f32 0.0, %v4769
        %v4771 = vpop.f32.mrb[0].mxu0
        %4772 = vmatprep.mubr.f32.mxu0 %v4530
        %4773 = vmatmul.mubr.f32.gmra.mrb[0].mxu0 %v4529
        %v4774 = vpop.f32.mrb[0].mxu0
        %v4775 = vadd.f32 0.0, %v4774
        %v4776 = vpop.f32.mrb[0].mxu0
        %4777 = vmatprep.mubr.f32.mxu0 %v4533
        %4778 = vmatmul.mubr.f32.gmra.mrb[0].mxu0 %v4532
        %v4779 = vpop.f32.mrb[0].mxu0
        %v4780 = vadd.f32 0.0, %v4779
        %v4781 = vpop.f32.mrb[0].mxu0
        %4782 = vmatprep.mubr.f32.mxu0 %v4536
        %4783 = vmatmul.mubr.f32.gmra.mrb[0].mxu0 %v4535
        %v4784 = vpop.f32.mrb[0].mxu0
        %v4785 = vadd.f32 0.0, %v4784
        %v4786 = vpop.f32.mrb[0].mxu0
        %4787 = vmatprep.mubr.f32.mxu0 %v4539
        %4788 = vmatmul.mubr.f32.gmra.mrb[0].mxu0 %v4538
        %v4789 = vpop.f32.mrb[0].mxu0
        %v4790 = vadd.f32 0.0, %v4789
        %v4791 = vpop.f32.mrb[0].mxu0
        %4792 = vmatprep.mubr.f32.mxu0 %v4542
        %4793 = vmatmul.mubr.f32.gmra.mrb[0].mxu0 %v4541
        %v4794 = vpop.f32.mrb[0].mxu0
        %v4795 = vadd.f32 0.0, %v4794
        %v4796 = vpop.f32.mrb[0].mxu0
        %4797 = vmatprep.mubr.f32.mxu0 %v4545
        %4798 = vmatmul.mubr.f32.gmra.mrb[0].mxu0 %v4544
        %v4799 = vpop.f32.mrb[0].mxu0
        %v4800 = vadd.f32 0.0, %v4799
        %v4801 = vpop.f32.mrb[0].mxu0
        %4802 = vmatprep.mubr.f32.mxu0 %v4548
        %4803 = vmatmul.mubr.f32.gmra.mrb[0].mxu0 %v4547
        %v4804 = vpop.f32.mrb[0].mxu0
        %v4805 = vadd.f32 0.0, %v4804
        %v4806 = vpop.f32.mrb[0].mxu0
        %4807 = vmatprep.mubr.f32.mxu0 %v4551
        %4808 = vmatmul.mubr.f32.gmra.mrb[0].mxu0 %v4550
        %v4809 = vpop.f32.mrb[0].mxu0
        %v4810 = vadd.f32 0.0, %v4809
        %v4811 = vpop.f32.mrb[0].mxu0
        %4812 = vmatprep.mubr.f32.mxu0 %v4554
        %4813 = vmatmul.mubr.f32.gmra.mrb[0].mxu0 %v4553
        %v4814 = vpop.f32.mrb[0].mxu0
        %v4815 = vadd.f32 0.0, %v4814
        %v4816 = vpop.f32.mrb[0].mxu0
        %4817 = vmatprep.mubr.f32.mxu0 %v4557
        %4818 = vmatmul.mubr.f32.gmra.mrb[0].mxu0 %v4556
        %v4819 = vpop.f32.mrb[0].mxu0
        %v4820 = vadd.f32 0.0, %v4819
        %v4821 = vpop.f32.mrb[0].mxu0
        %4822 = vmatprep.mubr.f32.mxu0 %v4560
        %4823 = vmatmul.mubr.f32.gmra.mrb[0].mxu0 %v4559
        %v4824 = vpop.f32.mrb[0].mxu0
        %v4825 = vadd.f32 0.0, %v4824
        %v4826 = vpop.f32.mrb[0].mxu0
        %4827 = vmatprep.mubr.f32.mxu0 %v4563
        %4828 = vmatmul.mubr.f32.gmra.mrb[0].mxu0 %v4562
        %v4829 = vpop.f32.mrb[0].mxu0
        %v4830 = vadd.f32 0.0, %v4829
        %v4831 = vpop.f32.mrb[0].mxu0
        %4832 = vmatprep.mubr.f32.mxu0 %v4566
        %4833 = vmatmul.mubr.f32.gmra.mrb[0].mxu0 %v4565
        %v4834 = vpop.f32.mrb[0].mxu0
        %v4835 = vadd.f32 0.0, %v4834
        %v4836 = vpop.f32.mrb[0].mxu0
        %4837 = vmatprep.mubr.f32.mxu0 %v4569
        %4838 = vmatmul.mubr.f32.gmra.mrb[0].mxu0 %v4568
        %v4839 = vpop.f32.mrb[0].mxu0
        %v4840 = vadd.f32 0.0, %v4839
        %v4841 = vpop.f32.mrb[0].mxu0
        %4842 = vmatprep.mubr.f32.mxu0 %v4572
        %4843 = vmatmul.mubr.f32.gmra.mrb[0].mxu0 %v4571
        %v4844 = vpop.f32.mrb[0].mxu0
        %v4845 = vadd.f32 0.0, %v4844
        %v4846 = vpop.f32.mrb[0].mxu0
        %4847 = vdwg.mxu0
        %4848 = vmatprep.subr.mxu0 0.0
        %4849 = vmatpush1.msra.mxu0 %v4607
        %4850 = vmatprep.subr.mxu0 0.0
        %4851 = vmatpush1.msra.mxu0 %v4608
        %4852 = vmatprep.subr.mxu0 0.0
        %4853 = vmatpush1.msra.mxu0 %v4609
        %4854 = vmatprep.subr.mxu0 0.0
        %4855 = vmatpush1.msra.mxu0 %v4610
        %4856 = vmatprep.subr.mxu0 0.0
        %4857 = vmatpush1.msra.mxu0 %v4611
        %4858 = vmatprep.subr.mxu0 0.0
        %4859 = vmatpush1.msra.mxu0 %v4612
        %4860 = vmatprep.subr.mxu0 0.0
        %4861 = vmatpush1.msra.mxu0 %v4613
        %4862 = vmatprep.subr.mxu0 0.0
        %4863 = vmatpush1.msra.mxu0 %v4614
        %4864 = vmatprep.subr.mxu0 0.0
        %4865 = vmatpush1.msra.mxu0 %v4615
        %4866 = vmatprep.subr.mxu0 0.0
        %4867 = vmatpush1.msra.mxu0 %v4616
        %4868 = vmatprep.subr.mxu0 0.0
        %4869 = vmatpush1.msra.mxu0 %v4617
        %4870 = vmatprep.subr.mxu0 0.0
        %4871 = vmatpush1.msra.mxu0 %v4618
        %4872 = vmatprep.subr.mxu0 0.0
        %4873 = vmatpush1.msra.mxu0 %v4619
        %4874 = vmatprep.subr.mxu0 0.0
        %4875 = vmatpush1.msra.mxu0 %v4620
        %4876 = vmatprep.subr.mxu0 0.0
        %4877 = vmatpush1.msra.mxu0 %v4621
        %4878 = vmatprep.subr.mxu0 0.0
        %4879 = vmatpush1.msra.mxu0 %v4622
        %4880 = vmatprep.subr.mxu0 0.0
        %4881 = vmatpush1.msra.mxu0 0.0
        %4882 = vmatprep.subr.mxu0 0.0
        %4883 = vmatpush1.msra.mxu0 0.0
        %4884 = vmatprep.subr.mxu0 0.0
        %4885 = vmatpush1.msra.mxu0 0.0
        %4886 = vmatprep.subr.mxu0 0.0
        %4887 = vmatpush1.msra.mxu0 0.0
        %4888 = vmatprep.subr.mxu0 0.0
        %4889 = vmatpush1.msra.mxu0 0.0
        %4890 = vmatprep.subr.mxu0 0.0
        %4891 = vmatpush1.msra.mxu0 0.0
        %4892 = vmatprep.subr.mxu0 0.0
        %4893 = vmatpush1.msra.mxu0 0.0
        %4894 = vmatprep.subr.mxu0 0.0
        %4895 = vmatpush1.msra.mxu0 0.0
        %4896 = vmatprep.subr.mxu0 0.0
        %4897 = vmatpush1.msra.mxu0 0.0
        %4898 = vmatprep.subr.mxu0 0.0
        %4899 = vmatpush1.msra.mxu0 0.0
        %4900 = vmatprep.subr.mxu0 0.0
        %4901 = vmatpush1.msra.mxu0 0.0
        %4902 = vmatprep.subr.mxu0 0.0
        %4903 = vmatpush1.msra.mxu0 0.0
        %4904 = vmatprep.subr.mxu0 0.0
        %4905 = vmatpush1.msra.mxu0 0.0
        %4906 = vmatprep.subr.mxu0 0.0
        %4907 = vmatpush1.msra.mxu0 0.0
        %4908 = vmatprep.subr.mxu0 0.0
        %4909 = vmatpush1.msra.mxu0 0.0
        %4910 = vmatprep.subr.mxu0 0.0
        %4911 = vmatpush1.msra.mxu0 0.0
        %4912 = vmatprep.mubr.f32.mxu0 0.0
        %4913 = vmatmul.mubr.f32.gmra.mrb[0].mxu0 %v4480
        %v4914 = vpop.f32.mrb[0].mxu0
        %v4915 = vadd.f32 %v4690, %v4914
        %v4916 = vpop.f32.mrb[0].mxu0
        %4917 = vmatprep.mubr.f32.mxu0 0.0
        %4918 = vmatmul.mubr.f32.gmra.mrb[0].mxu0 %v4483
        %v4919 = vpop.f32.mrb[0].mxu0
        %v4920 = vadd.f32 %v4695, %v4919
        %v4921 = vpop.f32.mrb[0].mxu0
        %4922 = vmatprep.mubr.f32.mxu0 0.0
        %4923 = vmatmul.mubr.f32.gmra.mrb[0].mxu0 %v4486
        %v4924 = vpop.f32.mrb[0].mxu0
        %v4925 = vadd.f32 %v4700, %v4924
        %v4926 = vpop.f32.mrb[0].mxu0
        %4927 = vmatprep.mubr.f32.mxu0 0.0
        %4928 = vmatmul.mubr.f32.gmra.mrb[0].mxu0 %v4489
        %v4929 = vpop.f32.mrb[0].mxu0
        %v4930 = vadd.f32 %v4705, %v4929
        %v4931 = vpop.f32.mrb[0].mxu0
        %4932 = vmatprep.mubr.f32.mxu0 0.0
        %4933 = vmatmul.mubr.f32.gmra.mrb[0].mxu0 %v4492
        %v4934 = vpop.f32.mrb[0].mxu0
        %v4935 = vadd.f32 %v4710, %v4934
        %v4936 = vpop.f32.mrb[0].mxu0
        %4937 = vmatprep.mubr.f32.mxu0 0.0
        %4938 = vmatmul.mubr.f32.gmra.mrb[0].mxu0 %v4495
        %v4939 = vpop.f32.mrb[0].mxu0
        %v4940 = vadd.f32 %v4715, %v4939
        %v4941 = vpop.f32.mrb[0].mxu0
        %4942 = vmatprep.mubr.f32.mxu0 0.0
        %4943 = vmatmul.mubr.f32.gmra.mrb[0].mxu0 %v4498
        %v4944 = vpop.f32.mrb[0].mxu0
        %v4945 = vadd.f32 %v4720, %v4944
        %v4946 = vpop.f32.mrb[0].mxu0
        %4947 = vmatprep.mubr.f32.mxu0 0.0
        %4948 = vmatmul.mubr.f32.gmra.mrb[0].mxu0 %v4501
        %v4949 = vpop.f32.mrb[0].mxu0
        %v4950 = vadd.f32 %v4725, %v4949
        %v4951 = vpop.f32.mrb[0].mxu0
        %4952 = vmatprep.mubr.f32.mxu0 0.0
        %4953 = vmatmul.mubr.f32.gmra.mrb[0].mxu0 %v4504
        %v4954 = vpop.f32.mrb[0].mxu0
        %v4955 = vadd.f32 %v4730, %v4954
        %v4956 = vpop.f32.mrb[0].mxu0
        %4957 = vmatprep.mubr.f32.mxu0 0.0
        %4958 = vmatmul.mubr.f32.gmra.mrb[0].mxu0 %v4507
        %v4959 = vpop.f32.mrb[0].mxu0
        %v4960 = vadd.f32 %v4735, %v4959
        %v4961 = vpop.f32.mrb[0].mxu0
        %4962 = vmatprep.mubr.f32.mxu0 0.0
        %4963 = vmatmul.mubr.f32.gmra.mrb[0].mxu0 %v4510
        %v4964 = vpop.f32.mrb[0].mxu0
        %v4965 = vadd.f32 %v4740, %v4964
        %v4966 = vpop.f32.mrb[0].mxu0
        %4967 = vmatprep.mubr.f32.mxu0 0.0
        %4968 = vmatmul.mubr.f32.gmra.mrb[0].mxu0 %v4513
        %v4969 = vpop.f32.mrb[0].mxu0
        %v4970 = vadd.f32 %v4745, %v4969
        %v4971 = vpop.f32.mrb[0].mxu0
        %4972 = vmatprep.mubr.f32.mxu0 0.0
        %4973 = vmatmul.mubr.f32.gmra.mrb[0].mxu0 %v4516
        %v4974 = vpop.f32.mrb[0].mxu0
        %v4975 = vadd.f32 %v4750, %v4974
        %v4976 = vpop.f32.mrb[0].mxu0
        %4977 = vmatprep.mubr.f32.mxu0 0.0
        %4978 = vmatmul.mubr.f32.gmra.mrb[0].mxu0 %v4519
        %v4979 = vpop.f32.mrb[0].mxu0
        %v4980 = vadd.f32 %v4755, %v4979
        %v4981 = vpop.f32.mrb[0].mxu0
        %4982 = vmatprep.mubr.f32.mxu0 0.0
        %4983 = vmatmul.mubr.f32.gmra.mrb[0].mxu0 %v4522
        %v4984 = vpop.f32.mrb[0].mxu0
        %v4985 = vadd.f32 %v4760, %v4984
        %v4986 = vpop.f32.mrb[0].mxu0
        %4987 = vmatprep.mubr.f32.mxu0 0.0
        %4988 = vmatmul.mubr.f32.gmra.mrb[0].mxu0 %v4525
        %v4989 = vpop.f32.mrb[0].mxu0
        %v4990 = vadd.f32 %v4765, %v4989
        %v4991 = vpop.f32.mrb[0].mxu0
        %4992 = vmatprep.mubr.f32.mxu0 0.0
        %4993 = vmatmul.mubr.f32.gmra.mrb[0].mxu0 %v4528
        %v4994 = vpop.f32.mrb[0].mxu0
        %v4995 = vadd.f32 %v4770, %v4994
        %v4996 = vpop.f32.mrb[0].mxu0
        %4997 = vmatprep.mubr.f32.mxu0 0.0
        %4998 = vmatmul.mubr.f32.gmra.mrb[0].mxu0 %v4531
        %v4999 = vpop.f32.mrb[0].mxu0
        %v5000 = vadd.f32 %v4775, %v4999
        %v5001 = vpop.f32.mrb[0].mxu0
        %5002 = vmatprep.mubr.f32.mxu0 0.0
        %5003 = vmatmul.mubr.f32.gmra.mrb[0].mxu0 %v4534
        %v5004 = vpop.f32.mrb[0].mxu0
        %v5005 = vadd.f32 %v4780, %v5004
        %v5006 = vpop.f32.mrb[0].mxu0
        %5007 = vmatprep.mubr.f32.mxu0 0.0
        %5008 = vmatmul.mubr.f32.gmra.mrb[0].mxu0 %v4537
        %v5009 = vpop.f32.mrb[0].mxu0
        %v5010 = vadd.f32 %v4785, %v5009
        %v5011 = vpop.f32.mrb[0].mxu0
        %5012 = vmatprep.mubr.f32.mxu0 0.0
        %5013 = vmatmul.mubr.f32.gmra.mrb[0].mxu0 %v4540
        %v5014 = vpop.f32.mrb[0].mxu0
        %v5015 = vadd.f32 %v4790, %v5014
        %v5016 = vpop.f32.mrb[0].mxu0
        %5017 = vmatprep.mubr.f32.mxu0 0.0
        %5018 = vmatmul.mubr.f32.gmra.mrb[0].mxu0 %v4543
        %v5019 = vpop.f32.mrb[0].mxu0
        %v5020 = vadd.f32 %v4795, %v5019
        %v5021 = vpop.f32.mrb[0].mxu0
        %5022 = vmatprep.mubr.f32.mxu0 0.0
        %5023 = vmatmul.mubr.f32.gmra.mrb[0].mxu0 %v4546
        %v5024 = vpop.f32.mrb[0].mxu0
        %v5025 = vadd.f32 %v4800, %v5024
        %v5026 = vpop.f32.mrb[0].mxu0
        %5027 = vmatprep.mubr.f32.mxu0 0.0
        %5028 = vmatmul.mubr.f32.gmra.mrb[0].mxu0 %v4549
        %v5029 = vpop.f32.mrb[0].mxu0
        %v5030 = vadd.f32 %v4805, %v5029
        %v5031 = vpop.f32.mrb[0].mxu0
        %5032 = vmatprep.mubr.f32.mxu0 0.0
        %5033 = vmatmul.mubr.f32.gmra.mrb[0].mxu0 %v4552
        %v5034 = vpop.f32.mrb[0].mxu0
        %v5035 = vadd.f32 %v4810, %v5034
        %v5036 = vpop.f32.mrb[0].mxu0
        %5037 = vmatprep.mubr.f32.mxu0 0.0
        %5038 = vmatmul.mubr.f32.gmra.mrb[0].mxu0 %v4555
        %v5039 = vpop.f32.mrb[0].mxu0
        %v5040 = vadd.f32 %v4815, %v5039
        %v5041 = vpop.f32.mrb[0].mxu0
        %5042 = vmatprep.mubr.f32.mxu0 0.0
        %5043 = vmatmul.mubr.f32.gmra.mrb[0].mxu0 %v4558
        %v5044 = vpop.f32.mrb[0].mxu0
        %v5045 = vadd.f32 %v4820, %v5044
        %v5046 = vpop.f32.mrb[0].mxu0
        %5047 = vmatprep.mubr.f32.mxu0 0.0
        %5048 = vmatmul.mubr.f32.gmra.mrb[0].mxu0 %v4561
        %v5049 = vpop.f32.mrb[0].mxu0
        %v5050 = vadd.f32 %v4825, %v5049
        %v5051 = vpop.f32.mrb[0].mxu0
        %5052 = vmatprep.mubr.f32.mxu0 0.0
        %5053 = vmatmul.mubr.f32.gmra.mrb[0].mxu0 %v4564
        %v5054 = vpop.f32.mrb[0].mxu0
        %v5055 = vadd.f32 %v4830, %v5054
        %v5056 = vpop.f32.mrb[0].mxu0
        %5057 = vmatprep.mubr.f32.mxu0 0.0
        %5058 = vmatmul.mubr.f32.gmra.mrb[0].mxu0 %v4567
        %v5059 = vpop.f32.mrb[0].mxu0
        %v5060 = vadd.f32 %v4835, %v5059
        %v5061 = vpop.f32.mrb[0].mxu0
        %5062 = vmatprep.mubr.f32.mxu0 0.0
        %5063 = vmatmul.mubr.f32.gmra.mrb[0].mxu0 %v4570
        %v5064 = vpop.f32.mrb[0].mxu0
        %v5065 = vadd.f32 %v4840, %v5064
        %v5066 = vpop.f32.mrb[0].mxu0
        %5067 = vmatprep.mubr.f32.mxu0 0.0
        %5068 = vmatmul.mubr.f32.gmra.mrb[0].mxu0 %v4573
        %v5069 = vpop.f32.mrb[0].mxu0
        %v5070 = vadd.f32 %v4845, %v5069
        %v5071 = vpop.f32.mrb[0].mxu0
        %5072 = vdwg.mxu0
        %v5073 = vld [vmem:[#allocation5] sm:$0xff]
        %v5074 = vld [vmem:[#allocation5 + $0x8] sm:$0xff]
        %v5075 = vld [vmem:[#allocation5 + $0x10] sm:$0xff]
        %v5076 = vld [vmem:[#allocation5 + $0x18] sm:$0xff]
        %v5077 = vld [vmem:[#allocation5 + $0x20] sm:$0xff]
        %v5078 = vld [vmem:[#allocation5 + $0x28] sm:$0xff]
        %v5079 = vld [vmem:[#allocation5 + $0x30] sm:$0xff]
        %v5080 = vld [vmem:[#allocation5 + $0x38] sm:$0xff]
        %v5081 = vld [vmem:[#allocation5 + $0x40] sm:$0xff]
        %v5082 = vld [vmem:[#allocation5 + $0x48] sm:$0xff]
        %v5083 = vld [vmem:[#allocation5 + $0x50] sm:$0xff]
        %v5084 = vld [vmem:[#allocation5 + $0x58] sm:$0xff]
        %v5085 = vld [vmem:[#allocation5 + $0x60] sm:$0xff]
        %v5086 = vld [vmem:[#allocation5 + $0x68] sm:$0xff]
        %v5087 = vld [vmem:[#allocation5 + $0x70] sm:$0xff]
        %v5088 = vld [vmem:[#allocation5 + $0x78] sm:$0xff]
        %v5089 = vld [vmem:[#allocation5 + $0x80] sm:$0xff]
        %v5090 = vld [vmem:[#allocation5 + $0x88] sm:$0xff]
        %v5091 = vld [vmem:[#allocation5 + $0x90] sm:$0xff]
        %v5092 = vld [vmem:[#allocation5 + $0x98] sm:$0xff]
        %v5093 = vld [vmem:[#allocation5 + $0xa0] sm:$0xff]
        %v5094 = vld [vmem:[#allocation5 + $0xa8] sm:$0xff]
        %v5095 = vld [vmem:[#allocation5 + $0xb0] sm:$0xff]
        %v5096 = vld [vmem:[#allocation5 + $0xb8] sm:$0xff]
        %v5097 = vld [vmem:[#allocation5 + $0xc0] sm:$0xff]
        %v5098 = vld [vmem:[#allocation5 + $0xc8] sm:$0xff]
        %v5099 = vld [vmem:[#allocation5 + $0xd0] sm:$0xff]
        %v5100 = vld [vmem:[#allocation5 + $0xd8] sm:$0xff]
        %v5101 = vld [vmem:[#allocation5 + $0xe0] sm:$0xff]
        %v5102 = vld [vmem:[#allocation5 + $0xe8] sm:$0xff]
        %v5103 = vld [vmem:[#allocation5 + $0xf0] sm:$0xff]
        %v5104 = vld [vmem:[#allocation5 + $0xf8] sm:$0xff]
        %v5105 = vadd.f32 %v5073, %v4915
        %v5106 = vadd.f32 %v5074, %v4920
        %v5107 = vadd.f32 %v5075, %v4925
        %v5108 = vadd.f32 %v5076, %v4930
        %v5109 = vadd.f32 %v5077, %v4935
        %v5110 = vadd.f32 %v5078, %v4940
        %v5111 = vadd.f32 %v5079, %v4945
        %v5112 = vadd.f32 %v5080, %v4950
        %v5113 = vadd.f32 %v5081, %v4955
        %v5114 = vadd.f32 %v5082, %v4960
        %v5115 = vadd.f32 %v5083, %v4965
        %v5116 = vadd.f32 %v5084, %v4970
        %v5117 = vadd.f32 %v5085, %v4975
        %v5118 = vadd.f32 %v5086, %v4980
        %v5119 = vadd.f32 %v5087, %v4985
        %v5120 = vadd.f32 %v5088, %v4990
        %v5121 = vadd.f32 %v5089, %v4995
        %v5122 = vadd.f32 %v5090, %v5000
        %v5123 = vadd.f32 %v5091, %v5005
        %v5124 = vadd.f32 %v5092, %v5010
        %v5125 = vadd.f32 %v5093, %v5015
        %v5126 = vadd.f32 %v5094, %v5020
        %v5127 = vadd.f32 %v5095, %v5025
        %v5128 = vadd.f32 %v5096, %v5030
        %v5129 = vadd.f32 %v5097, %v5035
        %v5130 = vadd.f32 %v5098, %v5040
        %v5131 = vadd.f32 %v5099, %v5045
        %v5132 = vadd.f32 %v5100, %v5050
        %v5133 = vadd.f32 %v5101, %v5055
        %v5134 = vadd.f32 %v5102, %v5060
        %v5135 = vadd.f32 %v5103, %v5065
        %v5136 = vadd.f32 %v5104, %v5070
        %5137 = vst [vmem:[#allocation5] sm:$0xff] %v5105
        %5138 = vst [vmem:[#allocation5 + $0x8] sm:$0xff] %v5106
        %5139 = vst [vmem:[#allocation5 + $0x10] sm:$0xff] %v5107
        %5140 = vst [vmem:[#allocation5 + $0x18] sm:$0xff] %v5108
        %5141 = vst [vmem:[#allocation5 + $0x20] sm:$0xff] %v5109
        %5142 = vst [vmem:[#allocation5 + $0x28] sm:$0xff] %v5110
        %5143 = vst [vmem:[#allocation5 + $0x30] sm:$0xff] %v5111
        %5144 = vst [vmem:[#allocation5 + $0x38] sm:$0xff] %v5112
        %5145 = vst [vmem:[#allocation5 + $0x40] sm:$0xff] %v5113
        %5146 = vst [vmem:[#allocation5 + $0x48] sm:$0xff] %v5114
        %5147 = vst [vmem:[#allocation5 + $0x50] sm:$0xff] %v5115
        %5148 = vst [vmem:[#allocation5 + $0x58] sm:$0xff] %v5116
        %5149 = vst [vmem:[#allocation5 + $0x60] sm:$0xff] %v5117
        %5150 = vst [vmem:[#allocation5 + $0x68] sm:$0xff] %v5118
        %5151 = vst [vmem:[#allocation5 + $0x70] sm:$0xff] %v5119
        %5152 = vst [vmem:[#allocation5 + $0x78] sm:$0xff] %v5120
        %5153 = vst [vmem:[#allocation5 + $0x80] sm:$0xff] %v5121
        %5154 = vst [vmem:[#allocation5 + $0x88] sm:$0xff] %v5122
        %5155 = vst [vmem:[#allocation5 + $0x90] sm:$0xff] %v5123
        %5156 = vst [vmem:[#allocation5 + $0x98] sm:$0xff] %v5124
        %5157 = vst [vmem:[#allocation5 + $0xa0] sm:$0xff] %v5125
        %5158 = vst [vmem:[#allocation5 + $0xa8] sm:$0xff] %v5126
        %5159 = vst [vmem:[#allocation5 + $0xb0] sm:$0xff] %v5127
        %5160 = vst [vmem:[#allocation5 + $0xb8] sm:$0xff] %v5128
        %5161 = vst [vmem:[#allocation5 + $0xc0] sm:$0xff] %v5129
        %5162 = vst [vmem:[#allocation5 + $0xc8] sm:$0xff] %v5130
        %5163 = vst [vmem:[#allocation5 + $0xd0] sm:$0xff] %v5131
        %5164 = vst [vmem:[#allocation5 + $0xd8] sm:$0xff] %v5132
        %5165 = vst [vmem:[#allocation5 + $0xe0] sm:$0xff] %v5133
        %5166 = vst [vmem:[#allocation5 + $0xe8] sm:$0xff] %v5134
        %5167 = vst [vmem:[#allocation5 + $0xf0] sm:$0xff] %v5135
        %5168 = vst [vmem:[#allocation5 + $0xf8] sm:$0xff] %v5136
        %v5169 = vld [vmem:[#allocation5] sm:$0xff]
        %v5170 = vld [vmem:[#allocation5 + $0x8] sm:$0xff]
        %v5171 = vld [vmem:[#allocation5 + $0x10] sm:$0xff]
        %v5172 = vld [vmem:[#allocation5 + $0x18] sm:$0xff]
        %v5173 = vld [vmem:[#allocation5 + $0x20] sm:$0xff]
        %v5174 = vld [vmem:[#allocation5 + $0x28] sm:$0xff]
        %v5175 = vld [vmem:[#allocation5 + $0x30] sm:$0xff]
        %v5176 = vld [vmem:[#allocation5 + $0x38] sm:$0xff]
        %v5177 = vld [vmem:[#allocation5 + $0x40] sm:$0xff]
        %v5178 = vld [vmem:[#allocation5 + $0x48] sm:$0xff]
        %v5179 = vld [vmem:[#allocation5 + $0x50] sm:$0xff]
        %v5180 = vld [vmem:[#allocation5 + $0x58] sm:$0xff]
        %v5181 = vld [vmem:[#allocation5 + $0x60] sm:$0xff]
        %v5182 = vld [vmem:[#allocation5 + $0x68] sm:$0xff]
        %v5183 = vld [vmem:[#allocation5 + $0x70] sm:$0xff]
        %v5184 = vld [vmem:[#allocation5 + $0x78] sm:$0xff]
        %v5185 = vld [vmem:[#allocation5 + $0x80] sm:$0xff]
        %v5186 = vld [vmem:[#allocation5 + $0x88] sm:$0xff]
        %v5187 = vld [vmem:[#allocation5 + $0x90] sm:$0xff]
        %v5188 = vld [vmem:[#allocation5 + $0x98] sm:$0xff]
        %v5189 = vld [vmem:[#allocation5 + $0xa0] sm:$0xff]
        %v5190 = vld [vmem:[#allocation5 + $0xa8] sm:$0xff]
        %v5191 = vld [vmem:[#allocation5 + $0xb0] sm:$0xff]
        %v5192 = vld [vmem:[#allocation5 + $0xb8] sm:$0xff]
        %v5193 = vld [vmem:[#allocation5 + $0xc0] sm:$0xff]
        %v5194 = vld [vmem:[#allocation5 + $0xc8] sm:$0xff]
        %v5195 = vld [vmem:[#allocation5 + $0xd0] sm:$0xff]
        %v5196 = vld [vmem:[#allocation5 + $0xd8] sm:$0xff]
        %v5197 = vld [vmem:[#allocation5 + $0xe0] sm:$0xff]
        %v5198 = vld [vmem:[#allocation5 + $0xe8] sm:$0xff]
        %v5199 = vld [vmem:[#allocation5 + $0xf0] sm:$0xff]
        %v5200 = vld [vmem:[#allocation5 + $0xf8] sm:$0xff]
        %v5201 = vld [vmem:[%s5] sm:$0x1]
        %v5203 = vlaneseq
        %v5204 = vshrl.u32 %v5203, 7
        %v5205 = vsub.s32 0, %v5204
        %v5206 = vrot.slane %v5201, %v5205
        %v5208 = vmul.f32 %v5169, %v5206
        %v5209 = vmul.f32 %v5170, %v5206
        %v5210 = vmul.f32 %v5171, %v5206
        %v5211 = vmul.f32 %v5172, %v5206
        %v5212 = vmul.f32 %v5173, %v5206
        %v5213 = vmul.f32 %v5174, %v5206
        %v5214 = vmul.f32 %v5175, %v5206
        %v5215 = vmul.f32 %v5176, %v5206
        %v5216 = vmul.f32 %v5177, %v5206
        %v5217 = vmul.f32 %v5178, %v5206
        %v5218 = vmul.f32 %v5179, %v5206
        %v5219 = vmul.f32 %v5180, %v5206
        %v5220 = vmul.f32 %v5181, %v5206
        %v5221 = vmul.f32 %v5182, %v5206
        %v5222 = vmul.f32 %v5183, %v5206
        %v5223 = vmul.f32 %v5184, %v5206
        %v5224 = vmul.f32 %v5185, %v5206
        %v5225 = vmul.f32 %v5186, %v5206
        %v5226 = vmul.f32 %v5187, %v5206
        %v5227 = vmul.f32 %v5188, %v5206
        %v5228 = vmul.f32 %v5189, %v5206
        %v5229 = vmul.f32 %v5190, %v5206
        %v5230 = vmul.f32 %v5191, %v5206
        %v5231 = vmul.f32 %v5192, %v5206
        %v5232 = vmul.f32 %v5193, %v5206
        %v5233 = vmul.f32 %v5194, %v5206
        %v5234 = vmul.f32 %v5195, %v5206
        %v5235 = vmul.f32 %v5196, %v5206
        %v5236 = vmul.f32 %v5197, %v5206
        %v5237 = vmul.f32 %v5198, %v5206
        %v5238 = vmul.f32 %v5199, %v5206
        %v5239 = vmul.f32 %v5200, %v5206
        %v5240 = vld [vmem:[%s6] sm:$0x1]
        %v5242 = vlaneseq
        %v5243 = vshrl.u32 %v5242, 7
        %v5244 = vsub.s32 0, %v5243
        %v5245 = vrot.slane %v5240, %v5244
        %v5247 = vadd.f32 %v5208, %v5245
        %v5248 = vadd.f32 %v5209, %v5245
        %v5249 = vadd.f32 %v5210, %v5245
        %v5250 = vadd.f32 %v5211, %v5245
        %v5251 = vadd.f32 %v5212, %v5245
        %v5252 = vadd.f32 %v5213, %v5245
        %v5253 = vadd.f32 %v5214, %v5245
        %v5254 = vadd.f32 %v5215, %v5245
        %v5255 = vadd.f32 %v5216, %v5245
        %v5256 = vadd.f32 %v5217, %v5245
        %v5257 = vadd.f32 %v5218, %v5245
        %v5258 = vadd.f32 %v5219, %v5245
        %v5259 = vadd.f32 %v5220, %v5245
        %v5260 = vadd.f32 %v5221, %v5245
        %v5261 = vadd.f32 %v5222, %v5245
        %v5262 = vadd.f32 %v5223, %v5245
        %v5263 = vadd.f32 %v5224, %v5245
        %v5264 = vadd.f32 %v5225, %v5245
        %v5265 = vadd.f32 %v5226, %v5245
        %v5266 = vadd.f32 %v5227, %v5245
        %v5267 = vadd.f32 %v5228, %v5245
        %v5268 = vadd.f32 %v5229, %v5245
        %v5269 = vadd.f32 %v5230, %v5245
        %v5270 = vadd.f32 %v5231, %v5245
        %v5271 = vadd.f32 %v5232, %v5245
        %v5272 = vadd.f32 %v5233, %v5245
        %v5273 = vadd.f32 %v5234, %v5245
        %v5274 = vadd.f32 %v5235, %v5245
        %v5275 = vadd.f32 %v5236, %v5245
        %v5276 = vadd.f32 %v5237, %v5245
        %v5277 = vadd.f32 %v5238, %v5245
        %v5278 = vadd.f32 %v5239, %v5245
        %5279 = vxpose.xlu0.b32.start [1/16] %v5247, 128
        %5280 = vxpose.xlu0.b32.cont [2/16] %v5248, 128
        %5281 = vxpose.xlu0.b32.cont [3/16] %v5249, 128
        %5282 = vxpose.xlu0.b32.cont [4/16] %v5250, 128
        %5283 = vxpose.xlu0.b32.cont [5/16] %v5251, 128
        %5284 = vxpose.xlu0.b32.cont [6/16] %v5252, 128
        %5285 = vxpose.xlu0.b32.cont [7/16] %v5253, 128
        %5286 = vxpose.xlu0.b32.cont [8/16] %v5254, 128
        %5287 = vxpose.xlu0.b32.cont [9/16] %v5255, 128
        %5288 = vxpose.xlu0.b32.cont [10/16] %v5256, 128
        %5289 = vxpose.xlu0.b32.cont [11/16] %v5257, 128
        %5290 = vxpose.xlu0.b32.cont [12/16] %v5258, 128
        %5291 = vxpose.xlu0.b32.cont [13/16] %v5259, 128
        %5292 = vxpose.xlu0.b32.cont [14/16] %v5260, 128
        %5293 = vxpose.xlu0.b32.cont [15/16] %v5261, 128
        %5294 = vxpose.xlu0.b32.end [16/16] %v5262, 128
        %v5295 = vpop.trf.xlu0
        %v5296 = vpop.trf.xlu0
        %v5297 = vpop.trf.xlu0
        %v5298 = vpop.trf.xlu0
        %v5299 = vpop.trf.xlu0
        %v5300 = vpop.trf.xlu0
        %v5301 = vpop.trf.xlu0
        %v5302 = vpop.trf.xlu0
        %v5303 = vpop.trf.xlu0
        %v5304 = vpop.trf.xlu0
        %v5305 = vpop.trf.xlu0
        %v5306 = vpop.trf.xlu0
        %v5307 = vpop.trf.xlu0
        %v5308 = vpop.trf.xlu0
        %v5309 = vpop.trf.xlu0
        %v5310 = vpop.trf.xlu0
        %5311 = vxpose.xlu0.b32.start [1/16] %v5263, 128
        %5312 = vxpose.xlu0.b32.cont [2/16] %v5264, 128
        %5313 = vxpose.xlu0.b32.cont [3/16] %v5265, 128
        %5314 = vxpose.xlu0.b32.cont [4/16] %v5266, 128
        %5315 = vxpose.xlu0.b32.cont [5/16] %v5267, 128
        %5316 = vxpose.xlu0.b32.cont [6/16] %v5268, 128
        %5317 = vxpose.xlu0.b32.cont [7/16] %v5269, 128
        %5318 = vxpose.xlu0.b32.cont [8/16] %v5270, 128
        %5319 = vxpose.xlu0.b32.cont [9/16] %v5271, 128
        %5320 = vxpose.xlu0.b32.cont [10/16] %v5272, 128
        %5321 = vxpose.xlu0.b32.cont [11/16] %v5273, 128
        %5322 = vxpose.xlu0.b32.cont [12/16] %v5274, 128
        %5323 = vxpose.xlu0.b32.cont [13/16] %v5275, 128
        %5324 = vxpose.xlu0.b32.cont [14/16] %v5276, 128
        %5325 = vxpose.xlu0.b32.cont [15/16] %v5277, 128
        %5326 = vxpose.xlu0.b32.end [16/16] %v5278, 128
        %v5327 = vpop.trf.xlu0
        %v5328 = vpop.trf.xlu0
        %v5329 = vpop.trf.xlu0
        %v5330 = vpop.trf.xlu0
        %v5331 = vpop.trf.xlu0
        %v5332 = vpop.trf.xlu0
        %v5333 = vpop.trf.xlu0
        %v5334 = vpop.trf.xlu0
        %v5335 = vpop.trf.xlu0
        %v5336 = vpop.trf.xlu0
        %v5337 = vpop.trf.xlu0
        %v5338 = vpop.trf.xlu0
        %v5339 = vpop.trf.xlu0
        %v5340 = vpop.trf.xlu0
        %v5341 = vpop.trf.xlu0
        %v5342 = vpop.trf.xlu0
        %v5343 = vld [vmem:[%s285] sm:$0xff]
        %v5345 = vcombine.high %v5343, %v5343
        %v5347 = vadd.f32 %v5295, %v5343
        %v5348 = vadd.f32 %v5327, %v5345
        %v5349 = vmax.f32 %v5347, 0.0
        %v5350 = vmax.f32 %v5348, 0.0
        %v5353 = vcombine.low %v5349, %v5350
        %5355 = vst [vmem:[%s323] sm:$0xff] %v5353
        %s5356 = sand.u32 %s185, 1
        %s5357 = scalar_lea.sflag [#allocation8], %s5356
        %s5358 = sand.u32 %s185, 1
        %s5359 = smul.addr %s5358, 8
        %s5360 = scalar_lea.vmem [#allocation12], %s5359
        // Predicated region
        $region61: #{tpu_custom_call.1} parent=47 // pred_check
          %p5361 = pneg %p195
        $region62: #{tpu_custom_call.1} parent=47 // pred_check_branch
          %5363 = sbr.rel (%p5361) target = $region64
        $region63: #{tpu_custom_call.1} parent=47 // pred_region
          %s5365 = ssub.s32 128, 128
          %5366 = vsyncadd %s5357, %s5365
          %s5367 = smul.addr %s25, 2
          %s5368 = smul.addr %s5367, 64
          %s5369 = scalar_lea.hbm %s7, %s5368
          %s5371 = sshll.u32 %s5360, 4
          %s5372 = int_to_ptr.vmem [resolvable:$true] %s5371
          %5374 = dma.vmem_to_hbm [thread:$0]  %s5372, 128, %s5369, %s5357
        $region64: #{tpu_custom_call.1} parent=47 // pred_fallthru
          _
      $region48: #{tpu_custom_call.1} parent=5 // pred_fallthru
        _
      %p5375 = scmp.le.s32.totalorder 2, %s20
      // Predicated region
      $region65: #{tpu_custom_call.1} parent=5 // pred_check
        %p5376 = pneg %p5375
      $region66: #{tpu_custom_call.1} parent=5 // pred_check_branch
        %5378 = sbr.rel (%p5376) target = $region68
      $region67: #{tpu_custom_call.1} parent=5 // pred_region
        %s5379 = ssub.s32 %s20, 2
        // Predicated region
        $region69: #{tpu_custom_call.1} parent=67 // pred_check
          %p5380 = pneg %p201
        $region70: #{tpu_custom_call.1} parent=67 // pred_check_branch
          %5382 = sbr.rel (%p5380) target = $region72
        $region71: #{tpu_custom_call.1} parent=67 // pred_region
          %s5383 = sand.u32 %s186, 1
          %s5384 = scalar_lea.sflag [#allocation8], %s5383
          %s5385 = sand.u32 %s186, 1
          %s5386 = smul.addr %s5385, 8
          %s5387 = scalar_lea.vmem [#allocation12], %s5386
          %5388 = dma.done %s5384, 128
        $region72: #{tpu_custom_call.1} parent=67 // pred_fallthru
          _
      $region68: #{tpu_custom_call.1} parent=5 // pred_fallthru
        _
    $region6: #{tpu_custom_call.1} parent=1 // loop_footer
      %s24 = sadd.s32 1, %s20
    $region7: #{tpu_custom_call.1} parent=1 // loop_footer_branch
      %19 = sbr.rel target = $region3
    $region8: #{tpu_custom_call.1} parent=1 // loop_exit
      _
    %5389 = vsyncpa [#allocation7], 1
    %s5390 = scalar_lea.sflag [#allocation7], 1
    %5391 = vsyncpa %s5390, 1
    %5392 = vsyncpa [#allocation10], 1
    %5393 = vsyncpa [#allocation8], 1
    %s5394 = scalar_lea.sflag [#allocation8], 1
    %5395 = vsyncpa %s5394, 1

</llo_original>
